<compile_context>
chip_gen: v5e
topology: v5e:2x2
jax: 0.10.0
libtpu: 0.0.40
codegen_flags: <defaults>
</compile_context>

<pallas_src>
import functools
import math

import jax
import jax.numpy as jnp
from jax.experimental import pallas as pl
from jax.experimental.pallas import tpu as pltpu

LANE = 128  # vreg lane width; atom padding granularity and hidden-dim padding


def _silu(x):
    return x * jax.nn.sigmoid(x)


def _pad_to(a, shape):
    pads = [(0, t - s) for s, t in zip(a.shape, shape)]
    return jnp.pad(a, pads)


def alphanet_kernel(
    xc_ref, yc_ref, zc_ref,          # coords as [N,1] f32 columns (resident)
    xr_ref, yr_ref, zr_ref,          # coords as [1,NJ] f32 rows (j-tiled)
    b_col_ref,                       # molecule id [N,1] f32
    b_row_ref,                       # molecule id [1,NJ] f32 (j-tiled)
    z_oh_ref,                        # [N, ZMAX] bf16 one-hot atom types
    mol_mask_ref,                    # [B, N] bf16 molecule membership mask
    emb_ref,                         # [ZMAX, H] bf16
    wm_ref, wf_ref, wu_ref, bu_ref,  # per-interaction-block weights (i-indexed)
    w1_ref, b1_ref, w2t_ref,         # readout
    energy_ref,                      # out: [B, 1] f32
    h_sc, msg_sc, agg_sc,            # [N,H] f32 scratch (carried across grid)
    acat_sc, mstk_sc,                # bf16 tiles for the deep MXU contraction
    *, cutoff, n_rbf, nj,
):
    f32 = jnp.float32
    bf16 = jnp.bfloat16
    i = pl.program_id(0)             # interaction-block index (sequential)
    j = pl.program_id(1)             # neighbor-column tile (sequential, accum)
    last_i = pl.num_programs(0) - 1
    last_j = pl.num_programs(1) - 1

    # ---- one-time atom-type embedding ---------------------------------------
    @pl.when((i == 0) & (j == 0))
    def _():
        h_sc[...] = jnp.dot(z_oh_ref[...], emb_ref[...],
                            preferred_element_type=f32)          # [N, H]

    # ---- per-interaction-block init (first neighbor tile) --------------------
    @pl.when(j == 0)
    def _():
        agg_sc[...] = jnp.zeros_like(agg_sc)
        msg_sc[...] = jnp.dot(h_sc[...].astype(bf16), wm_ref[0],
                              preferred_element_type=f32)        # [N, H]

    # ---- radius graph for this neighbor tile (f32 VPU math) ------------------
    dx = xc_ref[...] - xr_ref[...]                               # [N,1]-[1,NJ]
    dy = yc_ref[...] - yr_ref[...]
    dz = zc_ref[...] - zr_ref[...]
    d2 = dx * dx + dy * dy + dz * dz
    d = jnp.sqrt(jnp.maximum(d2, 1e-12))                         # [N, NJ]
    n = d.shape[0]
    rid = jax.lax.broadcasted_iota(jnp.int32, (n, 1), 0)
    cid = jax.lax.broadcasted_iota(jnp.int32, (1, nj), 1) + j * nj
    same_mol = b_col_ref[...] == b_row_ref[...]                  # VPU broadcast
    adj = (d < cutoff) & same_mol & (rid != cid)
    fcut = 0.5 * (jnp.cos((math.pi / cutoff) * d) + 1.0)
    w_edge = jnp.where(adj, fcut, 0.0)                           # [N, NJ] f32

    # ---- RBF expansion + message stack, filled in place (no f32 concats) -----
    delta = cutoff / (n_rbf - 1)
    gamma = 1.0 / (2.0 * delta * delta)
    j_start = pl.multiple_of(j * nj, nj)
    msg_j = msg_sc[pl.ds(j_start, nj), :]                        # [NJ, H] f32
    wf = wf_ref[0]                                               # [K, H] bf16
    for k in range(n_rbf):                                       # unrolled
        shifted = d - (k * delta)
        acat_sc[:, k * nj:(k + 1) * nj] = (
            w_edge * jnp.exp(-gamma * shifted * shifted)).astype(bf16)
        mstk_sc[k * nj:(k + 1) * nj, :] = (msg_j * wf[k:k + 1, :]).astype(bf16)

    # ---- deep MXU contraction: agg += A_blk @ (msg_blk * wf) -----------------
    agg_sc[...] += jnp.dot(acat_sc[...], mstk_sc[...],
                           preferred_element_type=f32)           # [N, H]

    # ---- finalize interaction block ------------------------------------------
    @pl.when(j == last_j)
    def _():
        upd = jnp.dot(agg_sc[...].astype(bf16), wu_ref[0],
                      preferred_element_type=f32) + bu_ref[0]
        h_sc[...] = h_sc[...] + _silu(upd)

    # ---- fused per-molecule readout (last grid step only) --------------------
    @pl.when((i == last_i) & (j == last_j))
    def _():
        hid = _silu(jnp.dot(h_sc[...].astype(bf16), w1_ref[...],
                            preferred_element_type=f32) + b1_ref[...])
        mol_hid = jnp.dot(mol_mask_ref[...], hid.astype(bf16),
                          preferred_element_type=f32)            # [B, H]
        energy_ref[...] = jnp.sum(mol_hid * w2t_ref[...], axis=1, keepdims=True)


def make_params(key, zmax, hidden, n_rbf):
    ks = jax.random.split(key, 12)
    s = lambda k, shape, fan: (jax.random.normal(k, shape, jnp.float32)
                               / math.sqrt(fan))
    return dict(
        emb=s(ks[0], (zmax, hidden), zmax),
        wm1=s(ks[1], (hidden, hidden), hidden),
        wf1=s(ks[2], (n_rbf, hidden), n_rbf),
        wu1=s(ks[3], (hidden, hidden), hidden),
        bu1=jnp.zeros((1, hidden), jnp.float32),
        wm2=s(ks[4], (hidden, hidden), hidden),
        wf2=s(ks[5], (n_rbf, hidden), n_rbf),
        wu2=s(ks[6], (hidden, hidden), hidden),
        bu2=jnp.zeros((1, hidden), jnp.float32),
        w1=s(ks[7], (hidden, hidden), hidden),
        b1=jnp.zeros((1, hidden), jnp.float32),
        w2=s(ks[8], (hidden, 1), hidden),
    )


def alphanet_forward(pos, z, batch, natoms, params, *, cutoff, zmax, n_rbf,
                     n_mols, cell=None, prefix="infer", block_j=LANE):
    """Mirrors AlphaNetWrapper.forward (energy only). Returns [n_mols, 1]."""
    del natoms, prefix                  # molecule membership comes from `batch`
    assert cell is None                 # TODO(synk): PBC not supported here.
    assert block_j % LANE == 0

    f32, bf16 = jnp.float32, jnp.bfloat16

    # ---- atom padding: unique out-of-range molecule ids for padded atoms ----
    n_real = pos.shape[0]
    n_pad = ((n_real + block_j - 1) // block_j) * block_j
    pad = n_pad - n_real
    assert n_pad + n_mols < (1 << 24)   # molecule-id equality done in f32

    pos_p = jnp.pad(pos.astype(f32), ((0, pad), (0, 0)))
    z_p = jnp.pad(z.astype(jnp.int32), (0, pad))
    batch_p = jnp.concatenate(
        [batch.astype(jnp.int32), n_mols + jnp.arange(pad, dtype=jnp.int32)])

    bfl = batch_p.astype(f32)
    xc, yc, zc = (pos_p[:, k:k + 1] for k in range(3))
    xr, yr, zr = (pos_p[:, k].reshape(1, n_pad) for k in range(3))
    b_col = bfl.reshape(n_pad, 1)
    b_row = bfl.reshape(1, n_pad)

    z_oh = jax.nn.one_hot(z_p, zmax, dtype=bf16)                     # [N, ZMAX]
    mol_mask = (jnp.arange(n_mols, dtype=jnp.int32)[:, None]
                == batch_p[None, :]).astype(bf16)                    # [B, N]

    # ---- weight preprocessing: zero-pad hidden dim to 128 lanes, pre-cast ---
    hidden = params["emb"].shape[1]
    hp = max(LANE, ((hidden + LANE - 1) // LANE) * LANE)
    wpad = lambda w, r, c, dt: _pad_to(w, (r, c)).astype(dt)

    emb = wpad(params["emb"], zmax, hp, bf16)
    wm_s = jnp.stack([wpad(params["wm1"], hp, hp, bf16),
                      wpad(params["wm2"], hp, hp, bf16)])            # [2, H, H]
    wf_s = jnp.stack([wpad(params["wf1"], n_rbf, hp, bf16),
                      wpad(params["wf2"], n_rbf, hp, bf16)])         # [2, K, H]
    wu_s = jnp.stack([wpad(params["wu1"], hp, hp, bf16),
                      wpad(params["wu2"], hp, hp, bf16)])            # [2, H, H]
    bu_s = jnp.stack([wpad(params["bu1"], 1, hp, f32),
                      wpad(params["bu2"], 1, hp, f32)])              # [2, 1, H]
    w1 = wpad(params["w1"], hp, hp, bf16)
    b1 = wpad(params["b1"], 1, hp, f32)
    w2t = wpad(params["w2"].reshape(1, -1), 1, hp, f32)

    n_blocks = 2
    n_j = n_pad // block_j

    # ---- BlockSpecs -----------------------------------------------------------
    col_spec = pl.BlockSpec((n_pad, 1), lambda i, j: (0, 0))
    row_spec = pl.BlockSpec((1, block_j), lambda i, j: (0, j))
    full = lambda shape: pl.BlockSpec(shape, lambda i, j: (0,) * len(shape))
    blk = lambda shape: pl.BlockSpec((1,) + shape, lambda i, j: (i, 0, 0))

    in_specs = [
        col_spec, col_spec, col_spec,            # xc, yc, zc
        row_spec, row_spec, row_spec,            # xr, yr, zr
        col_spec,                                # b_col
        row_spec,                                # b_row
        full((n_pad, zmax)),                     # z_oh
        full((n_mols, n_pad)),                   # mol_mask
        full((zmax, hp)),                        # emb
        blk((hp, hp)), blk((n_rbf, hp)),         # wm, wf
        blk((hp, hp)), blk((1, hp)),             # wu, bu
        full((hp, hp)), full((1, hp)), full((1, hp)),   # w1, b1, w2t
    ]
    out_specs = pl.BlockSpec((n_mols, 1), lambda i, j: (0, 0))

    scratch_shapes = [
        pltpu.VMEM((n_pad, hp), f32),                    # h
        pltpu.VMEM((n_pad, hp), f32),                    # msg
        pltpu.VMEM((n_pad, hp), f32),                    # agg
        pltpu.VMEM((n_pad, n_rbf * block_j), bf16),      # a_cat tile
        pltpu.VMEM((n_rbf * block_j, hp), bf16),         # msg-stack tile
    ]

    # ---- explicit VMEM limit sized to the working set -------------------------
    vmem_bytes = (
        3 * n_pad * hp * 4
        + n_pad * n_rbf * block_j * 2
        + n_rbf * block_j * hp * 2
        + n_pad * (zmax * 2 + 4 * 4)
        + n_mols * n_pad * 2
        + 2 * 2 * (2 * hp * hp + n_rbf * hp + hp) * 2
        + (zmax + hp + 2) * hp * 2
        + 8 * block_j * 4 * 2
    )
    vmem_limit = int(min(max(2 * vmem_bytes, 24 << 20), 96 << 20))

    kernel = functools.partial(alphanet_kernel, cutoff=cutoff, n_rbf=n_rbf,
                               nj=block_j)
    inputs = (xc, yc, zc, xr, yr, zr, b_col, b_row, z_oh, mol_mask, emb,
              wm_s, wf_s, wu_s, bu_s, w1, b1, w2t)

    return pl.pallas_call(
        kernel,
        out_shape=jax.ShapeDtypeStruct((n_mols, 1), f32),
        grid=(n_blocks, n_j),
        in_specs=in_specs,
        out_specs=out_specs,
        scratch_shapes=scratch_shapes,
        compiler_params=pltpu.CompilerParams(
            dimension_semantics=("arbitrary", "arbitrary"),
            vmem_limit_bytes=vmem_limit),
    )(*inputs)


if __name__ == "__main__":
    CUTOFF = 5.0
    HIDDEN = 32
    N_RBF = 16
    ZMAX = 10
    N_ATOMS = 16           # 2 molecules x 8 atoms (padded to 128 internally)
    N_MOLS = 2

    key = jax.random.PRNGKey(0)
    kp, kz, kparams = jax.random.split(key, 3)

    # Two molecules of 8 atoms each inside a 4 A box (so edges exist < cutoff).
    pos = jax.random.uniform(kp, (N_ATOMS, 3), jnp.float32, 0.0, 4.0)
    z = jax.random.randint(kz, (N_ATOMS,), 1, ZMAX)
    batch = jnp.concatenate([jnp.zeros(8, jnp.int32), jnp.ones(8, jnp.int32)])
    natoms = jnp.array([8, 8], jnp.int32)

    params = make_params(kparams, ZMAX, HIDDEN, N_RBF)

    energy = alphanet_forward(pos, z, batch, natoms, params,
                              cutoff=CUTOFF, zmax=ZMAX, n_rbf=N_RBF,
                              n_mols=N_MOLS)
    jax.block_until_ready(energy)
    assert energy.shape == (N_MOLS, 1)
    assert bool(jnp.all(jnp.isfinite(energy)))
    print("KERNEL_OK")
</pallas_src>

<mosaic_0001>
module attributes {stable_mosaic.version = 11 : i64} {
  func.func @alphanet_kernel(%arg0: i32, %arg1: i32, %arg2: memref<128x1xf32, #tpu.memory_space<vmem>>, %arg3: memref<128x1xf32, #tpu.memory_space<vmem>>, %arg4: memref<128x1xf32, #tpu.memory_space<vmem>>, %arg5: memref<1x128xf32, #tpu.memory_space<vmem>>, %arg6: memref<1x128xf32, #tpu.memory_space<vmem>>, %arg7: memref<1x128xf32, #tpu.memory_space<vmem>>, %arg8: memref<128x1xf32, #tpu.memory_space<vmem>>, %arg9: memref<1x128xf32, #tpu.memory_space<vmem>>, %arg10: memref<128x10xbf16, #tpu.memory_space<vmem>>, %arg11: memref<2x128xbf16, #tpu.memory_space<vmem>>, %arg12: memref<10x128xbf16, #tpu.memory_space<vmem>>, %arg13: memref<1x128x128xbf16, #tpu.memory_space<vmem>>, %arg14: memref<1x16x128xbf16, #tpu.memory_space<vmem>>, %arg15: memref<1x128x128xbf16, #tpu.memory_space<vmem>>, %arg16: memref<1x1x128xf32, #tpu.memory_space<vmem>>, %arg17: memref<128x128xbf16, #tpu.memory_space<vmem>>, %arg18: memref<1x128xf32, #tpu.memory_space<vmem>>, %arg19: memref<1x128xf32, #tpu.memory_space<vmem>>, %arg20: memref<2x1xf32, #tpu.memory_space<vmem>>, %arg21: memref<128x128xf32, #tpu.memory_space<vmem>>, %arg22: memref<128x128xf32, #tpu.memory_space<vmem>>, %arg23: memref<128x128xf32, #tpu.memory_space<vmem>>, %arg24: memref<128x2048xbf16, #tpu.memory_space<vmem>>, %arg25: memref<2048x128xbf16, #tpu.memory_space<vmem>>) attributes {dimension_semantics = [#tpu.dimension_semantics<arbitrary>, #tpu.dimension_semantics<arbitrary>], iteration_bounds = array<i64: 2, 1>, scalar_prefetch = 0 : i64, scratch_operands = 5 : i64, tpu.core_type = #tpu.core_type<tc>, window_params = [{pipeline_mode = #tpu.pipeline_mode<synchronous>, transform_indices = @transform_0, window_bounds = array<i64: 128, 1>}, {pipeline_mode = #tpu.pipeline_mode<synchronous>, transform_indices = @transform_1, window_bounds = array<i64: 128, 1>}, {pipeline_mode = #tpu.pipeline_mode<synchronous>, transform_indices = @transform_2, window_bounds = array<i64: 128, 1>}, {transform_indices = @transform_3, window_bounds = array<i64: 1, 128>}, {transform_indices = @transform_4, window_bounds = array<i64: 1, 128>}, {transform_indices = @transform_5, window_bounds = array<i64: 1, 128>}, {pipeline_mode = #tpu.pipeline_mode<synchronous>, transform_indices = @transform_6, window_bounds = array<i64: 128, 1>}, {transform_indices = @transform_7, window_bounds = array<i64: 1, 128>}, {pipeline_mode = #tpu.pipeline_mode<synchronous>, transform_indices = @transform_8, window_bounds = array<i64: 128, 10>}, {pipeline_mode = #tpu.pipeline_mode<synchronous>, transform_indices = @transform_9, window_bounds = array<i64: 2, 128>}, {pipeline_mode = #tpu.pipeline_mode<synchronous>, transform_indices = @transform_10, window_bounds = array<i64: 10, 128>}, {transform_indices = @transform_11, window_bounds = array<i64: 1, 128, 128>}, {transform_indices = @transform_12, window_bounds = array<i64: 1, 16, 128>}, {transform_indices = @transform_13, window_bounds = array<i64: 1, 128, 128>}, {transform_indices = @transform_14, window_bounds = array<i64: 1, 1, 128>}, {pipeline_mode = #tpu.pipeline_mode<synchronous>, transform_indices = @transform_15, window_bounds = array<i64: 128, 128>}, {pipeline_mode = #tpu.pipeline_mode<synchronous>, transform_indices = @transform_16, window_bounds = array<i64: 1, 128>}, {pipeline_mode = #tpu.pipeline_mode<synchronous>, transform_indices = @transform_17, window_bounds = array<i64: 1, 128>}, {pipeline_mode = #tpu.pipeline_mode<synchronous>, transform_indices = @transform_18, window_bounds = array<i64: 2, 1>}]} {
    %c0_i32 = arith.constant 0 : i32
    %0 = arith.cmpi eq, %arg0, %c0_i32 : i32
    %c0_i32_0 = arith.constant 0 : i32
    %1 = arith.cmpi eq, %arg1, %c0_i32_0 : i32
    %2 = arith.andi %0, %1 : i1
    %3 = arith.extui %2 : i1 to i32
    %c0_i32_1 = arith.constant 0 : i32
    %4 = arith.cmpi ne, %3, %c0_i32_1 : i32
    scf.if %4 {
      %c0_123 = arith.constant 0 : index
      %c0_124 = arith.constant 0 : index
      %317 = vector.load %arg10[%c0_123, %c0_124] : memref<128x10xbf16, #tpu.memory_space<vmem>>, vector<128x10xbf16>
      %c0_125 = arith.constant 0 : index
      %c0_126 = arith.constant 0 : index
      %318 = vector.load %arg12[%c0_125, %c0_126] : memref<10x128xbf16, #tpu.memory_space<vmem>>, vector<10x128xbf16>
      %cst_127 = arith.constant dense<0.000000e+00> : vector<128x128xf32>
      %319 = tpu.matmul %317, %318, %cst_127 {dimension_numbers = #tpu.dot_dimension_numbers<[1], [0], [0], [1], [0, 0, 1, 1], [], []>} : vector<128x10xbf16>, vector<10x128xbf16>, vector<128x128xf32> -> vector<128x128xf32>
      %c0_128 = arith.constant 0 : index
      %c0_129 = arith.constant 0 : index
      %320 = vector.load %arg21[%c0_128, %c0_129] : memref<128x128xf32, #tpu.memory_space<vmem>>, vector<128x128xf32>
      tpu.vector_store %arg21[%c0_128, %c0_129], %319 {strides = array<i32>} : memref<128x128xf32, #tpu.memory_space<vmem>>, vector<128x128xf32>,
    } else {
    }
    %c0_i32_2 = arith.constant 0 : i32
    %5 = arith.cmpi eq, %arg1, %c0_i32_2 : i32
    %6 = arith.extui %5 : i1 to i32
    %c0_i32_3 = arith.constant 0 : i32
    %7 = arith.cmpi ne, %6, %c0_i32_3 : i32
    scf.if %7 {
      %cst_123 = arith.constant 0.000000e+00 : f32
      %317 = vector.broadcast %cst_123 : f32 to vector<128x128xf32>
      %c0_124 = arith.constant 0 : index
      %c0_125 = arith.constant 0 : index
      %318 = vector.load %arg23[%c0_124, %c0_125] : memref<128x128xf32, #tpu.memory_space<vmem>>, vector<128x128xf32>
      tpu.vector_store %arg23[%c0_124, %c0_125], %317 {strides = array<i32>} : memref<128x128xf32, #tpu.memory_space<vmem>>, vector<128x128xf32>,
      %c0_126 = arith.constant 0 : index
      %c0_127 = arith.constant 0 : index
      %319 = vector.load %arg21[%c0_126, %c0_127] : memref<128x128xf32, #tpu.memory_space<vmem>>, vector<128x128xf32>
      %320 = arith.truncf %319 : vector<128x128xf32> to vector<128x128xbf16>
      %c0_128 = arith.constant 0 : index
      %c0_129 = arith.constant 0 : index
      %c0_130 = arith.constant 0 : index
      %321 = vector.load %arg13[%c0_128, %c0_129, %c0_130] : memref<1x128x128xbf16, #tpu.memory_space<vmem>>, vector<1x128x128xbf16>
      %322 = vector.shape_cast %321 : vector<1x128x128xbf16> to vector<128x128xbf16>
      %cst_131 = arith.constant dense<0.000000e+00> : vector<128x128xf32>
      %323 = tpu.matmul %320, %322, %cst_131 {dimension_numbers = #tpu.dot_dimension_numbers<[1], [0], [0], [1], [0, 0, 1, 1], [], []>} : vector<128x128xbf16>, vector<128x128xbf16>, vector<128x128xf32> -> vector<128x128xf32>
      %c0_132 = arith.constant 0 : index
      %c0_133 = arith.constant 0 : index
      %324 = vector.load %arg22[%c0_132, %c0_133] : memref<128x128xf32, #tpu.memory_space<vmem>>, vector<128x128xf32>
      tpu.vector_store %arg22[%c0_132, %c0_133], %323 {strides = array<i32>} : memref<128x128xf32, #tpu.memory_space<vmem>>, vector<128x128xf32>,
    } else {
    }
    %c0 = arith.constant 0 : index
    %c0_4 = arith.constant 0 : index
    %8 = vector.load %arg2[%c0, %c0_4] : memref<128x1xf32, #tpu.memory_space<vmem>>, vector<128x1xf32>
    %c0_5 = arith.constant 0 : index
    %c0_6 = arith.constant 0 : index
    %9 = vector.load %arg5[%c0_5, %c0_6] : memref<1x128xf32, #tpu.memory_space<vmem>>, vector<1x128xf32>
    %10 = vector.broadcast %8 : vector<128x1xf32> to vector<128x128xf32>
    %11 = vector.broadcast %9 : vector<1x128xf32> to vector<128x128xf32>
    %12 = arith.subf %10, %11 : vector<128x128xf32>
    %c0_7 = arith.constant 0 : index
    %c0_8 = arith.constant 0 : index
    %13 = vector.load %arg3[%c0_7, %c0_8] : memref<128x1xf32, #tpu.memory_space<vmem>>, vector<128x1xf32>
    %c0_9 = arith.constant 0 : index
    %c0_10 = arith.constant 0 : index
    %14 = vector.load %arg6[%c0_9, %c0_10] : memref<1x128xf32, #tpu.memory_space<vmem>>, vector<1x128xf32>
    %15 = vector.broadcast %13 : vector<128x1xf32> to vector<128x128xf32>
    %16 = vector.broadcast %14 : vector<1x128xf32> to vector<128x128xf32>
    %17 = arith.subf %15, %16 : vector<128x128xf32>
    %c0_11 = arith.constant 0 : index
    %c0_12 = arith.constant 0 : index
    %18 = vector.load %arg4[%c0_11, %c0_12] : memref<128x1xf32, #tpu.memory_space<vmem>>, vector<128x1xf32>
    %c0_13 = arith.constant 0 : index
    %c0_14 = arith.constant 0 : index
    %19 = vector.load %arg7[%c0_13, %c0_14] : memref<1x128xf32, #tpu.memory_space<vmem>>, vector<1x128xf32>
    %20 = vector.broadcast %18 : vector<128x1xf32> to vector<128x128xf32>
    %21 = vector.broadcast %19 : vector<1x128xf32> to vector<128x128xf32>
    %22 = arith.subf %20, %21 : vector<128x128xf32>
    %23 = arith.mulf %12, %12 : vector<128x128xf32>
    %24 = arith.mulf %17, %17 : vector<128x128xf32>
    %25 = arith.addf %23, %24 : vector<128x128xf32>
    %26 = arith.mulf %22, %22 : vector<128x128xf32>
    %27 = arith.addf %25, %26 : vector<128x128xf32>
    %cst = arith.constant 9.99999996E-13 : f32
    %28 = vector.broadcast %cst : f32 to vector<128x128xf32>
    %29 = arith.maximumf %27, %28 : vector<128x128xf32>
    %30 = math.sqrt %29 : vector<128x128xf32>
    %31 = tpu.iota {dimensions = array<i32: 0>} : vector<128x1xi32>
    %32 = tpu.iota {dimensions = array<i32: 1>} : vector<1x128xi32>
    %c128_i32 = arith.constant 128 : i32
    %33 = arith.muli %arg1, %c128_i32 : i32
    %34 = vector.broadcast %33 : i32 to vector<1x128xi32>
    %35 = arith.addi %32, %34 : vector<1x128xi32>
    %c0_15 = arith.constant 0 : index
    %c0_16 = arith.constant 0 : index
    %36 = vector.load %arg8[%c0_15, %c0_16] : memref<128x1xf32, #tpu.memory_space<vmem>>, vector<128x1xf32>
    %c0_17 = arith.constant 0 : index
    %c0_18 = arith.constant 0 : index
    %37 = vector.load %arg9[%c0_17, %c0_18] : memref<1x128xf32, #tpu.memory_space<vmem>>, vector<1x128xf32>
    %38 = vector.broadcast %36 : vector<128x1xf32> to vector<128x128xf32>
    %39 = vector.broadcast %37 : vector<1x128xf32> to vector<128x128xf32>
    %40 = arith.cmpf oeq, %38, %39 : vector<128x128xf32>
    %cst_19 = arith.constant 5.000000e+00 : f32
    %41 = vector.broadcast %cst_19 : f32 to vector<128x128xf32>
    %42 = arith.cmpf olt, %30, %41 : vector<128x128xf32>
    %43 = arith.andi %42, %40 : vector<128x128xi1>
    %44 = vector.broadcast %31 : vector<128x1xi32> to vector<128x128xi32>
    %45 = vector.broadcast %35 : vector<1x128xi32> to vector<128x128xi32>
    %46 = arith.cmpi ne, %44, %45 : vector<128x128xi32>
    %47 = arith.andi %43, %46 : vector<128x128xi1>
    %cst_20 = arith.constant 0.628318548 : f32
    %48 = vector.broadcast %cst_20 : f32 to vector<128x128xf32>
    %49 = arith.mulf %48, %30 : vector<128x128xf32>
    %50 = math.cos %49 : vector<128x128xf32>
    %cst_21 = arith.constant 1.000000e+00 : f32
    %51 = vector.broadcast %cst_21 : f32 to vector<128x128xf32>
    %52 = arith.addf %50, %51 : vector<128x128xf32>
    %cst_22 = arith.constant 5.000000e-01 : f32
    %53 = vector.broadcast %cst_22 : f32 to vector<128x128xf32>
    %54 = arith.mulf %53, %52 : vector<128x128xf32>
    %cst_23 = arith.constant 0.000000e+00 : f32
    %55 = vector.broadcast %cst_23 : f32 to vector<128x128xf32>
    %56 = arith.select %47, %54, %55 : vector<128x128xi1>, vector<128x128xf32>
    %c128_i32_24 = arith.constant 128 : i32
    %57 = arith.muli %arg1, %c128_i32_24 : i32
    %58 = tpu.assume_multiple %57, 128 : i32
    %59 = arith.index_cast %58 : i32 to index
    %c0_25 = arith.constant 0 : index
    %60 = vector.load %arg22[%59, %c0_25] : memref<128x128xf32, #tpu.memory_space<vmem>>, vector<128x128xf32>
    %c0_26 = arith.constant 0 : index
    %c0_27 = arith.constant 0 : index
    %c0_28 = arith.constant 0 : index
    %61 = vector.load %arg14[%c0_26, %c0_27, %c0_28] : memref<1x16x128xbf16, #tpu.memory_space<vmem>>, vector<1x16x128xbf16>
    %62 = vector.shape_cast %61 : vector<1x16x128xbf16> to vector<16x128xbf16>
    %cst_29 = arith.constant 0.000000e+00 : f32
    %63 = vector.broadcast %cst_29 : f32 to vector<128x128xf32>
    %64 = arith.subf %30, %63 : vector<128x128xf32>
    %cst_30 = arith.constant -4.500000e+00 : f32
    %65 = vector.broadcast %cst_30 : f32 to vector<128x128xf32>
    %66 = arith.mulf %65, %64 : vector<128x128xf32>
    %67 = arith.mulf %66, %64 : vector<128x128xf32>
    %68 = math.exp %67 : vector<128x128xf32>
    %69 = arith.mulf %56, %68 : vector<128x128xf32>
    %70 = arith.truncf %69 : vector<128x128xf32> to vector<128x128xbf16>
    %c0_31 = arith.constant 0 : index
    %c0_32 = arith.constant 0 : index
    %71 = vector.load %arg24[%c0_31, %c0_32] : memref<128x2048xbf16, #tpu.memory_space<vmem>>, vector<128x128xbf16>
    tpu.vector_store %arg24[%c0_31, %c0_32], %70 {strides = array<i32>} : memref<128x2048xbf16, #tpu.memory_space<vmem>>, vector<128x128xbf16>,
    %72 = vector.extract_strided_slice %62 {offsets = [0, 0], sizes = [1, 128], strides = [1, 1]} : vector<16x128xbf16> to vector<1x128xbf16>
    %73 = arith.extf %72 : vector<1x128xbf16> to vector<1x128xf32>
    %74 = vector.broadcast %73 : vector<1x128xf32> to vector<128x128xf32>
    %75 = arith.mulf %60, %74 : vector<128x128xf32>
    %76 = arith.truncf %75 : vector<128x128xf32> to vector<128x128xbf16>
    %c0_33 = arith.constant 0 : index
    %c0_34 = arith.constant 0 : index
    %77 = vector.load %arg25[%c0_33, %c0_34] : memref<2048x128xbf16, #tpu.memory_space<vmem>>, vector<128x128xbf16>
    tpu.vector_store %arg25[%c0_33, %c0_34], %76 {strides = array<i32>} : memref<2048x128xbf16, #tpu.memory_space<vmem>>, vector<128x128xbf16>,
    %cst_35 = arith.constant 0.333333343 : f32
    %78 = vector.broadcast %cst_35 : f32 to vector<128x128xf32>
    %79 = arith.subf %30, %78 : vector<128x128xf32>
    %cst_36 = arith.constant -4.500000e+00 : f32
    %80 = vector.broadcast %cst_36 : f32 to vector<128x128xf32>
    %81 = arith.mulf %80, %79 : vector<128x128xf32>
    %82 = arith.mulf %81, %79 : vector<128x128xf32>
    %83 = math.exp %82 : vector<128x128xf32>
    %84 = arith.mulf %56, %83 : vector<128x128xf32>
    %85 = arith.truncf %84 : vector<128x128xf32> to vector<128x128xbf16>
    %c0_37 = arith.constant 0 : index
    %c128 = arith.constant 128 : index
    %86 = vector.load %arg24[%c0_37, %c128] : memref<128x2048xbf16, #tpu.memory_space<vmem>>, vector<128x128xbf16>
    tpu.vector_store %arg24[%c0_37, %c128], %85 {strides = array<i32>} : memref<128x2048xbf16, #tpu.memory_space<vmem>>, vector<128x128xbf16>,
    %87 = vector.extract_strided_slice %62 {offsets = [1, 0], sizes = [1, 128], strides = [1, 1]} : vector<16x128xbf16> to vector<1x128xbf16>
    %88 = arith.extf %87 : vector<1x128xbf16> to vector<1x128xf32>
    %89 = vector.broadcast %88 : vector<1x128xf32> to vector<128x128xf32>
    %90 = arith.mulf %60, %89 : vector<128x128xf32>
    %91 = arith.truncf %90 : vector<128x128xf32> to vector<128x128xbf16>
    %c128_38 = arith.constant 128 : index
    %c0_39 = arith.constant 0 : index
    %92 = vector.load %arg25[%c128_38, %c0_39] : memref<2048x128xbf16, #tpu.memory_space<vmem>>, vector<128x128xbf16>
    tpu.vector_store %arg25[%c128_38, %c0_39], %91 {strides = array<i32>} : memref<2048x128xbf16, #tpu.memory_space<vmem>>, vector<128x128xbf16>,
    %cst_40 = arith.constant 0.666666686 : f32
    %93 = vector.broadcast %cst_40 : f32 to vector<128x128xf32>
    %94 = arith.subf %30, %93 : vector<128x128xf32>
    %cst_41 = arith.constant -4.500000e+00 : f32
    %95 = vector.broadcast %cst_41 : f32 to vector<128x128xf32>
    %96 = arith.mulf %95, %94 : vector<128x128xf32>
    %97 = arith.mulf %96, %94 : vector<128x128xf32>
    %98 = math.exp %97 : vector<128x128xf32>
    %99 = arith.mulf %56, %98 : vector<128x128xf32>
    %100 = arith.truncf %99 : vector<128x128xf32> to vector<128x128xbf16>
    %c0_42 = arith.constant 0 : index
    %c256 = arith.constant 256 : index
    %101 = vector.load %arg24[%c0_42, %c256] : memref<128x2048xbf16, #tpu.memory_space<vmem>>, vector<128x128xbf16>
    tpu.vector_store %arg24[%c0_42, %c256], %100 {strides = array<i32>} : memref<128x2048xbf16, #tpu.memory_space<vmem>>, vector<128x128xbf16>,
    %102 = vector.extract_strided_slice %62 {offsets = [2, 0], sizes = [1, 128], strides = [1, 1]} : vector<16x128xbf16> to vector<1x128xbf16>
    %103 = arith.extf %102 : vector<1x128xbf16> to vector<1x128xf32>
    %104 = vector.broadcast %103 : vector<1x128xf32> to vector<128x128xf32>
    %105 = arith.mulf %60, %104 : vector<128x128xf32>
    %106 = arith.truncf %105 : vector<128x128xf32> to vector<128x128xbf16>
    %c256_43 = arith.constant 256 : index
    %c0_44 = arith.constant 0 : index
    %107 = vector.load %arg25[%c256_43, %c0_44] : memref<2048x128xbf16, #tpu.memory_space<vmem>>, vector<128x128xbf16>
    tpu.vector_store %arg25[%c256_43, %c0_44], %106 {strides = array<i32>} : memref<2048x128xbf16, #tpu.memory_space<vmem>>, vector<128x128xbf16>,
    %cst_45 = arith.constant 1.000000e+00 : f32
    %108 = vector.broadcast %cst_45 : f32 to vector<128x128xf32>
    %109 = arith.subf %30, %108 : vector<128x128xf32>
    %cst_46 = arith.constant -4.500000e+00 : f32
    %110 = vector.broadcast %cst_46 : f32 to vector<128x128xf32>
    %111 = arith.mulf %110, %109 : vector<128x128xf32>
    %112 = arith.mulf %111, %109 : vector<128x128xf32>
    %113 = math.exp %112 : vector<128x128xf32>
    %114 = arith.mulf %56, %113 : vector<128x128xf32>
    %115 = arith.truncf %114 : vector<128x128xf32> to vector<128x128xbf16>
    %c0_47 = arith.constant 0 : index
    %c384 = arith.constant 384 : index
    %116 = vector.load %arg24[%c0_47, %c384] : memref<128x2048xbf16, #tpu.memory_space<vmem>>, vector<128x128xbf16>
    tpu.vector_store %arg24[%c0_47, %c384], %115 {strides = array<i32>} : memref<128x2048xbf16, #tpu.memory_space<vmem>>, vector<128x128xbf16>,
    %117 = vector.extract_strided_slice %62 {offsets = [3, 0], sizes = [1, 128], strides = [1, 1]} : vector<16x128xbf16> to vector<1x128xbf16>
    %118 = arith.extf %117 : vector<1x128xbf16> to vector<1x128xf32>
    %119 = vector.broadcast %118 : vector<1x128xf32> to vector<128x128xf32>
    %120 = arith.mulf %60, %119 : vector<128x128xf32>
    %121 = arith.truncf %120 : vector<128x128xf32> to vector<128x128xbf16>
    %c384_48 = arith.constant 384 : index
    %c0_49 = arith.constant 0 : index
    %122 = vector.load %arg25[%c384_48, %c0_49] : memref<2048x128xbf16, #tpu.memory_space<vmem>>, vector<128x128xbf16>
    tpu.vector_store %arg25[%c384_48, %c0_49], %121 {strides = array<i32>} : memref<2048x128xbf16, #tpu.memory_space<vmem>>, vector<128x128xbf16>,
    %cst_50 = arith.constant 1.33333337 : f32
    %123 = vector.broadcast %cst_50 : f32 to vector<128x128xf32>
    %124 = arith.subf %30, %123 : vector<128x128xf32>
    %cst_51 = arith.constant -4.500000e+00 : f32
    %125 = vector.broadcast %cst_51 : f32 to vector<128x128xf32>
    %126 = arith.mulf %125, %124 : vector<128x128xf32>
    %127 = arith.mulf %126, %124 : vector<128x128xf32>
    %128 = math.exp %127 : vector<128x128xf32>
    %129 = arith.mulf %56, %128 : vector<128x128xf32>
    %130 = arith.truncf %129 : vector<128x128xf32> to vector<128x128xbf16>
    %c0_52 = arith.constant 0 : index
    %c512 = arith.constant 512 : index
    %131 = vector.load %arg24[%c0_52, %c512] : memref<128x2048xbf16, #tpu.memory_space<vmem>>, vector<128x128xbf16>
    tpu.vector_store %arg24[%c0_52, %c512], %130 {strides = array<i32>} : memref<128x2048xbf16, #tpu.memory_space<vmem>>, vector<128x128xbf16>,
    %132 = vector.extract_strided_slice %62 {offsets = [4, 0], sizes = [1, 128], strides = [1, 1]} : vector<16x128xbf16> to vector<1x128xbf16>
    %133 = arith.extf %132 : vector<1x128xbf16> to vector<1x128xf32>
    %134 = vector.broadcast %133 : vector<1x128xf32> to vector<128x128xf32>
    %135 = arith.mulf %60, %134 : vector<128x128xf32>
    %136 = arith.truncf %135 : vector<128x128xf32> to vector<128x128xbf16>
    %c512_53 = arith.constant 512 : index
    %c0_54 = arith.constant 0 : index
    %137 = vector.load %arg25[%c512_53, %c0_54] : memref<2048x128xbf16, #tpu.memory_space<vmem>>, vector<128x128xbf16>
    tpu.vector_store %arg25[%c512_53, %c0_54], %136 {strides = array<i32>} : memref<2048x128xbf16, #tpu.memory_space<vmem>>, vector<128x128xbf16>,
    %cst_55 = arith.constant 1.66666663 : f32
    %138 = vector.broadcast %cst_55 : f32 to vector<128x128xf32>
    %139 = arith.subf %30, %138 : vector<128x128xf32>
    %cst_56 = arith.constant -4.500000e+00 : f32
    %140 = vector.broadcast %cst_56 : f32 to vector<128x128xf32>
    %141 = arith.mulf %140, %139 : vector<128x128xf32>
    %142 = arith.mulf %141, %139 : vector<128x128xf32>
    %143 = math.exp %142 : vector<128x128xf32>
    %144 = arith.mulf %56, %143 : vector<128x128xf32>
    %145 = arith.truncf %144 : vector<128x128xf32> to vector<128x128xbf16>
    %c0_57 = arith.constant 0 : index
    %c640 = arith.constant 640 : index
    %146 = vector.load %arg24[%c0_57, %c640] : memref<128x2048xbf16, #tpu.memory_space<vmem>>, vector<128x128xbf16>
    tpu.vector_store %arg24[%c0_57, %c640], %145 {strides = array<i32>} : memref<128x2048xbf16, #tpu.memory_space<vmem>>, vector<128x128xbf16>,
    %147 = vector.extract_strided_slice %62 {offsets = [5, 0], sizes = [1, 128], strides = [1, 1]} : vector<16x128xbf16> to vector<1x128xbf16>
    %148 = arith.extf %147 : vector<1x128xbf16> to vector<1x128xf32>
    %149 = vector.broadcast %148 : vector<1x128xf32> to vector<128x128xf32>
    %150 = arith.mulf %60, %149 : vector<128x128xf32>
    %151 = arith.truncf %150 : vector<128x128xf32> to vector<128x128xbf16>
    %c640_58 = arith.constant 640 : index
    %c0_59 = arith.constant 0 : index
    %152 = vector.load %arg25[%c640_58, %c0_59] : memref<2048x128xbf16, #tpu.memory_space<vmem>>, vector<128x128xbf16>
    tpu.vector_store %arg25[%c640_58, %c0_59], %151 {strides = array<i32>} : memref<2048x128xbf16, #tpu.memory_space<vmem>>, vector<128x128xbf16>,
    %cst_60 = arith.constant 2.000000e+00 : f32
    %153 = vector.broadcast %cst_60 : f32 to vector<128x128xf32>
    %154 = arith.subf %30, %153 : vector<128x128xf32>
    %cst_61 = arith.constant -4.500000e+00 : f32
    %155 = vector.broadcast %cst_61 : f32 to vector<128x128xf32>
    %156 = arith.mulf %155, %154 : vector<128x128xf32>
    %157 = arith.mulf %156, %154 : vector<128x128xf32>
    %158 = math.exp %157 : vector<128x128xf32>
    %159 = arith.mulf %56, %158 : vector<128x128xf32>
    %160 = arith.truncf %159 : vector<128x128xf32> to vector<128x128xbf16>
    %c0_62 = arith.constant 0 : index
    %c768 = arith.constant 768 : index
    %161 = vector.load %arg24[%c0_62, %c768] : memref<128x2048xbf16, #tpu.memory_space<vmem>>, vector<128x128xbf16>
    tpu.vector_store %arg24[%c0_62, %c768], %160 {strides = array<i32>} : memref<128x2048xbf16, #tpu.memory_space<vmem>>, vector<128x128xbf16>,
    %162 = vector.extract_strided_slice %62 {offsets = [6, 0], sizes = [1, 128], strides = [1, 1]} : vector<16x128xbf16> to vector<1x128xbf16>
    %163 = arith.extf %162 : vector<1x128xbf16> to vector<1x128xf32>
    %164 = vector.broadcast %163 : vector<1x128xf32> to vector<128x128xf32>
    %165 = arith.mulf %60, %164 : vector<128x128xf32>
    %166 = arith.truncf %165 : vector<128x128xf32> to vector<128x128xbf16>
    %c768_63 = arith.constant 768 : index
    %c0_64 = arith.constant 0 : index
    %167 = vector.load %arg25[%c768_63, %c0_64] : memref<2048x128xbf16, #tpu.memory_space<vmem>>, vector<128x128xbf16>
    tpu.vector_store %arg25[%c768_63, %c0_64], %166 {strides = array<i32>} : memref<2048x128xbf16, #tpu.memory_space<vmem>>, vector<128x128xbf16>,
    %cst_65 = arith.constant 2.33333325 : f32
    %168 = vector.broadcast %cst_65 : f32 to vector<128x128xf32>
    %169 = arith.subf %30, %168 : vector<128x128xf32>
    %cst_66 = arith.constant -4.500000e+00 : f32
    %170 = vector.broadcast %cst_66 : f32 to vector<128x128xf32>
    %171 = arith.mulf %170, %169 : vector<128x128xf32>
    %172 = arith.mulf %171, %169 : vector<128x128xf32>
    %173 = math.exp %172 : vector<128x128xf32>
    %174 = arith.mulf %56, %173 : vector<128x128xf32>
    %175 = arith.truncf %174 : vector<128x128xf32> to vector<128x128xbf16>
    %c0_67 = arith.constant 0 : index
    %c896 = arith.constant 896 : index
    %176 = vector.load %arg24[%c0_67, %c896] : memref<128x2048xbf16, #tpu.memory_space<vmem>>, vector<128x128xbf16>
    tpu.vector_store %arg24[%c0_67, %c896], %175 {strides = array<i32>} : memref<128x2048xbf16, #tpu.memory_space<vmem>>, vector<128x128xbf16>,
    %177 = vector.extract_strided_slice %62 {offsets = [7, 0], sizes = [1, 128], strides = [1, 1]} : vector<16x128xbf16> to vector<1x128xbf16>
    %178 = arith.extf %177 : vector<1x128xbf16> to vector<1x128xf32>
    %179 = vector.broadcast %178 : vector<1x128xf32> to vector<128x128xf32>
    %180 = arith.mulf %60, %179 : vector<128x128xf32>
    %181 = arith.truncf %180 : vector<128x128xf32> to vector<128x128xbf16>
    %c896_68 = arith.constant 896 : index
    %c0_69 = arith.constant 0 : index
    %182 = vector.load %arg25[%c896_68, %c0_69] : memref<2048x128xbf16, #tpu.memory_space<vmem>>, vector<128x128xbf16>
    tpu.vector_store %arg25[%c896_68, %c0_69], %181 {strides = array<i32>} : memref<2048x128xbf16, #tpu.memory_space<vmem>>, vector<128x128xbf16>,
    %cst_70 = arith.constant 2.66666675 : f32
    %183 = vector.broadcast %cst_70 : f32 to vector<128x128xf32>
    %184 = arith.subf %30, %183 : vector<128x128xf32>
    %cst_71 = arith.constant -4.500000e+00 : f32
    %185 = vector.broadcast %cst_71 : f32 to vector<128x128xf32>
    %186 = arith.mulf %185, %184 : vector<128x128xf32>
    %187 = arith.mulf %186, %184 : vector<128x128xf32>
    %188 = math.exp %187 : vector<128x128xf32>
    %189 = arith.mulf %56, %188 : vector<128x128xf32>
    %190 = arith.truncf %189 : vector<128x128xf32> to vector<128x128xbf16>
    %c0_72 = arith.constant 0 : index
    %c1024 = arith.constant 1024 : index
    %191 = vector.load %arg24[%c0_72, %c1024] : memref<128x2048xbf16, #tpu.memory_space<vmem>>, vector<128x128xbf16>
    tpu.vector_store %arg24[%c0_72, %c1024], %190 {strides = array<i32>} : memref<128x2048xbf16, #tpu.memory_space<vmem>>, vector<128x128xbf16>,
    %192 = vector.extract_strided_slice %62 {offsets = [8, 0], sizes = [1, 128], strides = [1, 1]} : vector<16x128xbf16> to vector<1x128xbf16>
    %193 = arith.extf %192 : vector<1x128xbf16> to vector<1x128xf32>
    %194 = vector.broadcast %193 : vector<1x128xf32> to vector<128x128xf32>
    %195 = arith.mulf %60, %194 : vector<128x128xf32>
    %196 = arith.truncf %195 : vector<128x128xf32> to vector<128x128xbf16>
    %c1024_73 = arith.constant 1024 : index
    %c0_74 = arith.constant 0 : index
    %197 = vector.load %arg25[%c1024_73, %c0_74] : memref<2048x128xbf16, #tpu.memory_space<vmem>>, vector<128x128xbf16>
    tpu.vector_store %arg25[%c1024_73, %c0_74], %196 {strides = array<i32>} : memref<2048x128xbf16, #tpu.memory_space<vmem>>, vector<128x128xbf16>,
    %cst_75 = arith.constant 3.000000e+00 : f32
    %198 = vector.broadcast %cst_75 : f32 to vector<128x128xf32>
    %199 = arith.subf %30, %198 : vector<128x128xf32>
    %cst_76 = arith.constant -4.500000e+00 : f32
    %200 = vector.broadcast %cst_76 : f32 to vector<128x128xf32>
    %201 = arith.mulf %200, %199 : vector<128x128xf32>
    %202 = arith.mulf %201, %199 : vector<128x128xf32>
    %203 = math.exp %202 : vector<128x128xf32>
    %204 = arith.mulf %56, %203 : vector<128x128xf32>
    %205 = arith.truncf %204 : vector<128x128xf32> to vector<128x128xbf16>
    %c0_77 = arith.constant 0 : index
    %c1152 = arith.constant 1152 : index
    %206 = vector.load %arg24[%c0_77, %c1152] : memref<128x2048xbf16, #tpu.memory_space<vmem>>, vector<128x128xbf16>
    tpu.vector_store %arg24[%c0_77, %c1152], %205 {strides = array<i32>} : memref<128x2048xbf16, #tpu.memory_space<vmem>>, vector<128x128xbf16>,
    %207 = vector.extract_strided_slice %62 {offsets = [9, 0], sizes = [1, 128], strides = [1, 1]} : vector<16x128xbf16> to vector<1x128xbf16>
    %208 = arith.extf %207 : vector<1x128xbf16> to vector<1x128xf32>
    %209 = vector.broadcast %208 : vector<1x128xf32> to vector<128x128xf32>
    %210 = arith.mulf %60, %209 : vector<128x128xf32>
    %211 = arith.truncf %210 : vector<128x128xf32> to vector<128x128xbf16>
    %c1152_78 = arith.constant 1152 : index
    %c0_79 = arith.constant 0 : index
    %212 = vector.load %arg25[%c1152_78, %c0_79] : memref<2048x128xbf16, #tpu.memory_space<vmem>>, vector<128x128xbf16>
    tpu.vector_store %arg25[%c1152_78, %c0_79], %211 {strides = array<i32>} : memref<2048x128xbf16, #tpu.memory_space<vmem>>, vector<128x128xbf16>,
    %cst_80 = arith.constant 3.33333325 : f32
    %213 = vector.broadcast %cst_80 : f32 to vector<128x128xf32>
    %214 = arith.subf %30, %213 : vector<128x128xf32>
    %cst_81 = arith.constant -4.500000e+00 : f32
    %215 = vector.broadcast %cst_81 : f32 to vector<128x128xf32>
    %216 = arith.mulf %215, %214 : vector<128x128xf32>
    %217 = arith.mulf %216, %214 : vector<128x128xf32>
    %218 = math.exp %217 : vector<128x128xf32>
    %219 = arith.mulf %56, %218 : vector<128x128xf32>
    %220 = arith.truncf %219 : vector<128x128xf32> to vector<128x128xbf16>
    %c0_82 = arith.constant 0 : index
    %c1280 = arith.constant 1280 : index
    %221 = vector.load %arg24[%c0_82, %c1280] : memref<128x2048xbf16, #tpu.memory_space<vmem>>, vector<128x128xbf16>
    tpu.vector_store %arg24[%c0_82, %c1280], %220 {strides = array<i32>} : memref<128x2048xbf16, #tpu.memory_space<vmem>>, vector<128x128xbf16>,
    %222 = vector.extract_strided_slice %62 {offsets = [10, 0], sizes = [1, 128], strides = [1, 1]} : vector<16x128xbf16> to vector<1x128xbf16>
    %223 = arith.extf %222 : vector<1x128xbf16> to vector<1x128xf32>
    %224 = vector.broadcast %223 : vector<1x128xf32> to vector<128x128xf32>
    %225 = arith.mulf %60, %224 : vector<128x128xf32>
    %226 = arith.truncf %225 : vector<128x128xf32> to vector<128x128xbf16>
    %c1280_83 = arith.constant 1280 : index
    %c0_84 = arith.constant 0 : index
    %227 = vector.load %arg25[%c1280_83, %c0_84] : memref<2048x128xbf16, #tpu.memory_space<vmem>>, vector<128x128xbf16>
    tpu.vector_store %arg25[%c1280_83, %c0_84], %226 {strides = array<i32>} : memref<2048x128xbf16, #tpu.memory_space<vmem>>, vector<128x128xbf16>,
    %cst_85 = arith.constant 3.66666675 : f32
    %228 = vector.broadcast %cst_85 : f32 to vector<128x128xf32>
    %229 = arith.subf %30, %228 : vector<128x128xf32>
    %cst_86 = arith.constant -4.500000e+00 : f32
    %230 = vector.broadcast %cst_86 : f32 to vector<128x128xf32>
    %231 = arith.mulf %230, %229 : vector<128x128xf32>
    %232 = arith.mulf %231, %229 : vector<128x128xf32>
    %233 = math.exp %232 : vector<128x128xf32>
    %234 = arith.mulf %56, %233 : vector<128x128xf32>
    %235 = arith.truncf %234 : vector<128x128xf32> to vector<128x128xbf16>
    %c0_87 = arith.constant 0 : index
    %c1408 = arith.constant 1408 : index
    %236 = vector.load %arg24[%c0_87, %c1408] : memref<128x2048xbf16, #tpu.memory_space<vmem>>, vector<128x128xbf16>
    tpu.vector_store %arg24[%c0_87, %c1408], %235 {strides = array<i32>} : memref<128x2048xbf16, #tpu.memory_space<vmem>>, vector<128x128xbf16>,
    %237 = vector.extract_strided_slice %62 {offsets = [11, 0], sizes = [1, 128], strides = [1, 1]} : vector<16x128xbf16> to vector<1x128xbf16>
    %238 = arith.extf %237 : vector<1x128xbf16> to vector<1x128xf32>
    %239 = vector.broadcast %238 : vector<1x128xf32> to vector<128x128xf32>
    %240 = arith.mulf %60, %239 : vector<128x128xf32>
    %241 = arith.truncf %240 : vector<128x128xf32> to vector<128x128xbf16>
    %c1408_88 = arith.constant 1408 : index
    %c0_89 = arith.constant 0 : index
    %242 = vector.load %arg25[%c1408_88, %c0_89] : memref<2048x128xbf16, #tpu.memory_space<vmem>>, vector<128x128xbf16>
    tpu.vector_store %arg25[%c1408_88, %c0_89], %241 {strides = array<i32>} : memref<2048x128xbf16, #tpu.memory_space<vmem>>, vector<128x128xbf16>,
    %cst_90 = arith.constant 4.000000e+00 : f32
    %243 = vector.broadcast %cst_90 : f32 to vector<128x128xf32>
    %244 = arith.subf %30, %243 : vector<128x128xf32>
    %cst_91 = arith.constant -4.500000e+00 : f32
    %245 = vector.broadcast %cst_91 : f32 to vector<128x128xf32>
    %246 = arith.mulf %245, %244 : vector<128x128xf32>
    %247 = arith.mulf %246, %244 : vector<128x128xf32>
    %248 = math.exp %247 : vector<128x128xf32>
    %249 = arith.mulf %56, %248 : vector<128x128xf32>
    %250 = arith.truncf %249 : vector<128x128xf32> to vector<128x128xbf16>
    %c0_92 = arith.constant 0 : index
    %c1536 = arith.constant 1536 : index
    %251 = vector.load %arg24[%c0_92, %c1536] : memref<128x2048xbf16, #tpu.memory_space<vmem>>, vector<128x128xbf16>
    tpu.vector_store %arg24[%c0_92, %c1536], %250 {strides = array<i32>} : memref<128x2048xbf16, #tpu.memory_space<vmem>>, vector<128x128xbf16>,
    %252 = vector.extract_strided_slice %62 {offsets = [12, 0], sizes = [1, 128], strides = [1, 1]} : vector<16x128xbf16> to vector<1x128xbf16>
    %253 = arith.extf %252 : vector<1x128xbf16> to vector<1x128xf32>
    %254 = vector.broadcast %253 : vector<1x128xf32> to vector<128x128xf32>
    %255 = arith.mulf %60, %254 : vector<128x128xf32>
    %256 = arith.truncf %255 : vector<128x128xf32> to vector<128x128xbf16>
    %c1536_93 = arith.constant 1536 : index
    %c0_94 = arith.constant 0 : index
    %257 = vector.load %arg25[%c1536_93, %c0_94] : memref<2048x128xbf16, #tpu.memory_space<vmem>>, vector<128x128xbf16>
    tpu.vector_store %arg25[%c1536_93, %c0_94], %256 {strides = array<i32>} : memref<2048x128xbf16, #tpu.memory_space<vmem>>, vector<128x128xbf16>,
    %cst_95 = arith.constant 4.33333349 : f32
    %258 = vector.broadcast %cst_95 : f32 to vector<128x128xf32>
    %259 = arith.subf %30, %258 : vector<128x128xf32>
    %cst_96 = arith.constant -4.500000e+00 : f32
    %260 = vector.broadcast %cst_96 : f32 to vector<128x128xf32>
    %261 = arith.mulf %260, %259 : vector<128x128xf32>
    %262 = arith.mulf %261, %259 : vector<128x128xf32>
    %263 = math.exp %262 : vector<128x128xf32>
    %264 = arith.mulf %56, %263 : vector<128x128xf32>
    %265 = arith.truncf %264 : vector<128x128xf32> to vector<128x128xbf16>
    %c0_97 = arith.constant 0 : index
    %c1664 = arith.constant 1664 : index
    %266 = vector.load %arg24[%c0_97, %c1664] : memref<128x2048xbf16, #tpu.memory_space<vmem>>, vector<128x128xbf16>
    tpu.vector_store %arg24[%c0_97, %c1664], %265 {strides = array<i32>} : memref<128x2048xbf16, #tpu.memory_space<vmem>>, vector<128x128xbf16>,
    %267 = vector.extract_strided_slice %62 {offsets = [13, 0], sizes = [1, 128], strides = [1, 1]} : vector<16x128xbf16> to vector<1x128xbf16>
    %268 = arith.extf %267 : vector<1x128xbf16> to vector<1x128xf32>
    %269 = vector.broadcast %268 : vector<1x128xf32> to vector<128x128xf32>
    %270 = arith.mulf %60, %269 : vector<128x128xf32>
    %271 = arith.truncf %270 : vector<128x128xf32> to vector<128x128xbf16>
    %c1664_98 = arith.constant 1664 : index
    %c0_99 = arith.constant 0 : index
    %272 = vector.load %arg25[%c1664_98, %c0_99] : memref<2048x128xbf16, #tpu.memory_space<vmem>>, vector<128x128xbf16>
    tpu.vector_store %arg25[%c1664_98, %c0_99], %271 {strides = array<i32>} : memref<2048x128xbf16, #tpu.memory_space<vmem>>, vector<128x128xbf16>,
    %cst_100 = arith.constant 4.66666651 : f32
    %273 = vector.broadcast %cst_100 : f32 to vector<128x128xf32>
    %274 = arith.subf %30, %273 : vector<128x128xf32>
    %cst_101 = arith.constant -4.500000e+00 : f32
    %275 = vector.broadcast %cst_101 : f32 to vector<128x128xf32>
    %276 = arith.mulf %275, %274 : vector<128x128xf32>
    %277 = arith.mulf %276, %274 : vector<128x128xf32>
    %278 = math.exp %277 : vector<128x128xf32>
    %279 = arith.mulf %56, %278 : vector<128x128xf32>
    %280 = arith.truncf %279 : vector<128x128xf32> to vector<128x128xbf16>
    %c0_102 = arith.constant 0 : index
    %c1792 = arith.constant 1792 : index
    %281 = vector.load %arg24[%c0_102, %c1792] : memref<128x2048xbf16, #tpu.memory_space<vmem>>, vector<128x128xbf16>
    tpu.vector_store %arg24[%c0_102, %c1792], %280 {strides = array<i32>} : memref<128x2048xbf16, #tpu.memory_space<vmem>>, vector<128x128xbf16>,
    %282 = vector.extract_strided_slice %62 {offsets = [14, 0], sizes = [1, 128], strides = [1, 1]} : vector<16x128xbf16> to vector<1x128xbf16>
    %283 = arith.extf %282 : vector<1x128xbf16> to vector<1x128xf32>
    %284 = vector.broadcast %283 : vector<1x128xf32> to vector<128x128xf32>
    %285 = arith.mulf %60, %284 : vector<128x128xf32>
    %286 = arith.truncf %285 : vector<128x128xf32> to vector<128x128xbf16>
    %c1792_103 = arith.constant 1792 : index
    %c0_104 = arith.constant 0 : index
    %287 = vector.load %arg25[%c1792_103, %c0_104] : memref<2048x128xbf16, #tpu.memory_space<vmem>>, vector<128x128xbf16>
    tpu.vector_store %arg25[%c1792_103, %c0_104], %286 {strides = array<i32>} : memref<2048x128xbf16, #tpu.memory_space<vmem>>, vector<128x128xbf16>,
    %cst_105 = arith.constant 5.000000e+00 : f32
    %288 = vector.broadcast %cst_105 : f32 to vector<128x128xf32>
    %289 = arith.subf %30, %288 : vector<128x128xf32>
    %cst_106 = arith.constant -4.500000e+00 : f32
    %290 = vector.broadcast %cst_106 : f32 to vector<128x128xf32>
    %291 = arith.mulf %290, %289 : vector<128x128xf32>
    %292 = arith.mulf %291, %289 : vector<128x128xf32>
    %293 = math.exp %292 : vector<128x128xf32>
    %294 = arith.mulf %56, %293 : vector<128x128xf32>
    %295 = arith.truncf %294 : vector<128x128xf32> to vector<128x128xbf16>
    %c0_107 = arith.constant 0 : index
    %c1920 = arith.constant 1920 : index
    %296 = vector.load %arg24[%c0_107, %c1920] : memref<128x2048xbf16, #tpu.memory_space<vmem>>, vector<128x128xbf16>
    tpu.vector_store %arg24[%c0_107, %c1920], %295 {strides = array<i32>} : memref<128x2048xbf16, #tpu.memory_space<vmem>>, vector<128x128xbf16>,
    %297 = vector.extract_strided_slice %62 {offsets = [15, 0], sizes = [1, 128], strides = [1, 1]} : vector<16x128xbf16> to vector<1x128xbf16>
    %298 = arith.extf %297 : vector<1x128xbf16> to vector<1x128xf32>
    %299 = vector.broadcast %298 : vector<1x128xf32> to vector<128x128xf32>
    %300 = arith.mulf %60, %299 : vector<128x128xf32>
    %301 = arith.truncf %300 : vector<128x128xf32> to vector<128x128xbf16>
    %c1920_108 = arith.constant 1920 : index
    %c0_109 = arith.constant 0 : index
    %302 = vector.load %arg25[%c1920_108, %c0_109] : memref<2048x128xbf16, #tpu.memory_space<vmem>>, vector<128x128xbf16>
    tpu.vector_store %arg25[%c1920_108, %c0_109], %301 {strides = array<i32>} : memref<2048x128xbf16, #tpu.memory_space<vmem>>, vector<128x128xbf16>,
    %c0_110 = arith.constant 0 : index
    %c0_111 = arith.constant 0 : index
    %303 = vector.load %arg23[%c0_110, %c0_111] : memref<128x128xf32, #tpu.memory_space<vmem>>, vector<128x128xf32>
    %c0_112 = arith.constant 0 : index
    %c0_113 = arith.constant 0 : index
    %304 = vector.load %arg24[%c0_112, %c0_113] : memref<128x2048xbf16, #tpu.memory_space<vmem>>, vector<128x2048xbf16>
    %c0_114 = arith.constant 0 : index
    %c0_115 = arith.constant 0 : index
    %305 = vector.load %arg25[%c0_114, %c0_115] : memref<2048x128xbf16, #tpu.memory_space<vmem>>, vector<2048x128xbf16>
    %cst_116 = arith.constant dense<0.000000e+00> : vector<128x128xf32>
    %306 = tpu.matmul %304, %305, %cst_116 {dimension_numbers = #tpu.dot_dimension_numbers<[1], [0], [0], [1], [0, 0, 1, 1], [], []>} : vector<128x2048xbf16>, vector<2048x128xbf16>, vector<128x128xf32> -> vector<128x128xf32>
    %307 = arith.addf %303, %306 : vector<128x128xf32>
    %c0_117 = arith.constant 0 : index
    %c0_118 = arith.constant 0 : index
    %308 = vector.load %arg23[%c0_117, %c0_118] : memref<128x128xf32, #tpu.memory_space<vmem>>, vector<128x128xf32>
    tpu.vector_store %arg23[%c0_117, %c0_118], %307 {strides = array<i32>} : memref<128x128xf32, #tpu.memory_space<vmem>>, vector<128x128xf32>,
    %c0_i32_119 = arith.constant 0 : i32
    %309 = arith.cmpi eq, %arg1, %c0_i32_119 : i32
    %310 = arith.extui %309 : i1 to i32
    %c0_i32_120 = arith.constant 0 : i32
    %311 = arith.cmpi ne, %310, %c0_i32_120 : i32
    scf.if %311 {
      %c0_123 = arith.constant 0 : index
      %c0_124 = arith.constant 0 : index
      %317 = vector.load %arg23[%c0_123, %c0_124] : memref<128x128xf32, #tpu.memory_space<vmem>>, vector<128x128xf32>
      %318 = arith.truncf %317 : vector<128x128xf32> to vector<128x128xbf16>
      %c0_125 = arith.constant 0 : index
      %c0_126 = arith.constant 0 : index
      %c0_127 = arith.constant 0 : index
      %319 = vector.load %arg15[%c0_125, %c0_126, %c0_127] : memref<1x128x128xbf16, #tpu.memory_space<vmem>>, vector<1x128x128xbf16>
      %320 = vector.shape_cast %319 : vector<1x128x128xbf16> to vector<128x128xbf16>
      %cst_128 = arith.constant dense<0.000000e+00> : vector<128x128xf32>
      %321 = tpu.matmul %318, %320, %cst_128 {dimension_numbers = #tpu.dot_dimension_numbers<[1], [0], [0], [1], [0, 0, 1, 1], [], []>} : vector<128x128xbf16>, vector<128x128xbf16>, vector<128x128xf32> -> vector<128x128xf32>
      %c0_129 = arith.constant 0 : index
      %c0_130 = arith.constant 0 : index
      %c0_131 = arith.constant 0 : index
      %322 = vector.load %arg16[%c0_129, %c0_130, %c0_131] : memref<1x1x128xf32, #tpu.memory_space<vmem>>, vector<1x1x128xf32>
      %323 = vector.shape_cast %322 : vector<1x1x128xf32> to vector<1x128xf32>
      %324 = vector.broadcast %323 : vector<1x128xf32> to vector<128x128xf32>
      %325 = arith.addf %321, %324 : vector<128x128xf32>
      %c0_132 = arith.constant 0 : index
      %c0_133 = arith.constant 0 : index
      %326 = vector.load %arg21[%c0_132, %c0_133] : memref<128x128xf32, #tpu.memory_space<vmem>>, vector<128x128xf32>
      %327 = arith.negf %325 : vector<128x128xf32>
      %328 = math.exp %327 : vector<128x128xf32>
      %cst_134 = arith.constant 1.000000e+00 : f32
      %329 = vector.broadcast %cst_134 : f32 to vector<128x128xf32>
      %330 = arith.addf %329, %328 : vector<128x128xf32>
      %331 = arith.divf %329, %330 : vector<128x128xf32>
      %332 = arith.mulf %325, %331 : vector<128x128xf32>
      %333 = arith.addf %326, %332 : vector<128x128xf32>
      %c0_135 = arith.constant 0 : index
      %c0_136 = arith.constant 0 : index
      %334 = vector.load %arg21[%c0_135, %c0_136] : memref<128x128xf32, #tpu.memory_space<vmem>>, vector<128x128xf32>
      tpu.vector_store %arg21[%c0_135, %c0_136], %333 {strides = array<i32>} : memref<128x128xf32, #tpu.memory_space<vmem>>, vector<128x128xf32>,
    } else {
    }
    %c1_i32 = arith.constant 1 : i32
    %312 = arith.cmpi eq, %arg0, %c1_i32 : i32
    %c0_i32_121 = arith.constant 0 : i32
    %313 = arith.cmpi eq, %arg1, %c0_i32_121 : i32
    %314 = arith.andi %312, %313 : i1
    %315 = arith.extui %314 : i1 to i32
    %c0_i32_122 = arith.constant 0 : i32
    %316 = arith.cmpi ne, %315, %c0_i32_122 : i32
    scf.if %316 {
      %c0_123 = arith.constant 0 : index
      %c0_124 = arith.constant 0 : index
      %317 = vector.load %arg21[%c0_123, %c0_124] : memref<128x128xf32, #tpu.memory_space<vmem>>, vector<128x128xf32>
      %318 = arith.truncf %317 : vector<128x128xf32> to vector<128x128xbf16>
      %c0_125 = arith.constant 0 : index
      %c0_126 = arith.constant 0 : index
      %319 = vector.load %arg17[%c0_125, %c0_126] : memref<128x128xbf16, #tpu.memory_space<vmem>>, vector<128x128xbf16>
      %cst_127 = arith.constant dense<0.000000e+00> : vector<128x128xf32>
      %320 = tpu.matmul %318, %319, %cst_127 {dimension_numbers = #tpu.dot_dimension_numbers<[1], [0], [0], [1], [0, 0, 1, 1], [], []>} : vector<128x128xbf16>, vector<128x128xbf16>, vector<128x128xf32> -> vector<128x128xf32>
      %c0_128 = arith.constant 0 : index
      %c0_129 = arith.constant 0 : index
      %321 = vector.load %arg18[%c0_128, %c0_129] : memref<1x128xf32, #tpu.memory_space<vmem>>, vector<1x128xf32>
      %322 = vector.broadcast %321 : vector<1x128xf32> to vector<128x128xf32>
      %323 = arith.addf %320, %322 : vector<128x128xf32>
      %324 = arith.negf %323 : vector<128x128xf32>
      %325 = math.exp %324 : vector<128x128xf32>
      %cst_130 = arith.constant 1.000000e+00 : f32
      %326 = vector.broadcast %cst_130 : f32 to vector<128x128xf32>
      %327 = arith.addf %326, %325 : vector<128x128xf32>
      %328 = arith.divf %326, %327 : vector<128x128xf32>
      %329 = arith.mulf %323, %328 : vector<128x128xf32>
      %c0_131 = arith.constant 0 : index
      %c0_132 = arith.constant 0 : index
      %330 = vector.load %arg11[%c0_131, %c0_132] : memref<2x128xbf16, #tpu.memory_space<vmem>>, vector<2x128xbf16>
      %331 = arith.truncf %329 : vector<128x128xf32> to vector<128x128xbf16>
      %cst_133 = arith.constant dense<0.000000e+00> : vector<2x128xf32>
      %332 = tpu.matmul %330, %331, %cst_133 {dimension_numbers = #tpu.dot_dimension_numbers<[1], [0], [0], [1], [0, 0, 1, 1], [], []>} : vector<2x128xbf16>, vector<128x128xbf16>, vector<2x128xf32> -> vector<2x128xf32>
      %c0_134 = arith.constant 0 : index
      %c0_135 = arith.constant 0 : index
      %333 = vector.load %arg19[%c0_134, %c0_135] : memref<1x128xf32, #tpu.memory_space<vmem>>, vector<1x128xf32>
      %334 = vector.broadcast %333 : vector<1x128xf32> to vector<2x128xf32>
      %335 = arith.mulf %332, %334 : vector<2x128xf32>
      %cst_136 = arith.constant dense<0.000000e+00> : vector<2xf32>
      %336 = vector.multi_reduction <add>, %335, %cst_136 [1] : vector<2x128xf32> to vector<2xf32>
      %337 = vector.shape_cast %336 : vector<2xf32> to vector<2x1xf32>
      %c0_137 = arith.constant 0 : index
      %c0_138 = arith.constant 0 : index
      %338 = vector.load %arg20[%c0_137, %c0_138] : memref<2x1xf32, #tpu.memory_space<vmem>>, vector<2x1xf32>
      tpu.vector_store %arg20[%c0_137, %c0_138], %337 {strides = array<i32>} : memref<2x1xf32, #tpu.memory_space<vmem>>, vector<2x1xf32>,
    } else {
    }
    return
  }
  func.func @transform_0(%arg0: i32, %arg1: i32) -> (i32, i32) {
    %c0_i32 = arith.constant 0 : i32
    %c0_i32_0 = arith.constant 0 : i32
    %c0_i32_1 = arith.constant 0 : i32
    return %c0_i32, %c0_i32_0 : i32, i32
  }
  func.func @transform_1(%arg0: i32, %arg1: i32) -> (i32, i32) {
    %c0_i32 = arith.constant 0 : i32
    %c0_i32_0 = arith.constant 0 : i32
    %c0_i32_1 = arith.constant 0 : i32
    return %c0_i32, %c0_i32_0 : i32, i32
  }
  func.func @transform_2(%arg0: i32, %arg1: i32) -> (i32, i32) {
    %c0_i32 = arith.constant 0 : i32
    %c0_i32_0 = arith.constant 0 : i32
    %c0_i32_1 = arith.constant 0 : i32
    return %c0_i32, %c0_i32_0 : i32, i32
  }
  func.func @transform_3(%arg0: i32, %arg1: i32) -> (i32, i32) {
    %c0_i32 = arith.constant 0 : i32
    %c0_i32_0 = arith.constant 0 : i32
    return %c0_i32, %arg1 : i32, i32
  }
  func.func @transform_4(%arg0: i32, %arg1: i32) -> (i32, i32) {
    %c0_i32 = arith.constant 0 : i32
    %c0_i32_0 = arith.constant 0 : i32
    return %c0_i32, %arg1 : i32, i32
  }
  func.func @transform_5(%arg0: i32, %arg1: i32) -> (i32, i32) {
    %c0_i32 = arith.constant 0 : i32
    %c0_i32_0 = arith.constant 0 : i32
    return %c0_i32, %arg1 : i32, i32
  }
  func.func @transform_6(%arg0: i32, %arg1: i32) -> (i32, i32) {
    %c0_i32 = arith.constant 0 : i32
    %c0_i32_0 = arith.constant 0 : i32
    %c0_i32_1 = arith.constant 0 : i32
    return %c0_i32, %c0_i32_0 : i32, i32
  }
  func.func @transform_7(%arg0: i32, %arg1: i32) -> (i32, i32) {
    %c0_i32 = arith.constant 0 : i32
    %c0_i32_0 = arith.constant 0 : i32
    return %c0_i32, %arg1 : i32, i32
  }
  func.func @transform_8(%arg0: i32, %arg1: i32) -> (i32, i32) {
    %c0_i32 = arith.constant 0 : i32
    %c0_i32_0 = arith.constant 0 : i32
    %c0_i32_1 = arith.constant 0 : i32
    return %c0_i32, %c0_i32_0 : i32, i32
  }
  func.func @transform_9(%arg0: i32, %arg1: i32) -> (i32, i32) {
    %c0_i32 = arith.constant 0 : i32
    %c0_i32_0 = arith.constant 0 : i32
    %c0_i32_1 = arith.constant 0 : i32
    return %c0_i32, %c0_i32_0 : i32, i32
  }
  func.func @transform_10(%arg0: i32, %arg1: i32) -> (i32, i32) {
    %c0_i32 = arith.constant 0 : i32
    %c0_i32_0 = arith.constant 0 : i32
    %c0_i32_1 = arith.constant 0 : i32
    return %c0_i32, %c0_i32_0 : i32, i32
  }
  func.func @transform_11(%arg0: i32, %arg1: i32) -> (i32, i32, i32) {
    %c0_i32 = arith.constant 0 : i32
    %c0_i32_0 = arith.constant 0 : i32
    %c0_i32_1 = arith.constant 0 : i32
    return %arg0, %c0_i32, %c0_i32_0 : i32, i32, i32
  }
  func.func @transform_12(%arg0: i32, %arg1: i32) -> (i32, i32, i32) {
    %c0_i32 = arith.constant 0 : i32
    %c0_i32_0 = arith.constant 0 : i32
    %c0_i32_1 = arith.constant 0 : i32
    return %arg0, %c0_i32, %c0_i32_0 : i32, i32, i32
  }
  func.func @transform_13(%arg0: i32, %arg1: i32) -> (i32, i32, i32) {
    %c0_i32 = arith.constant 0 : i32
    %c0_i32_0 = arith.constant 0 : i32
    %c0_i32_1 = arith.constant 0 : i32
    return %arg0, %c0_i32, %c0_i32_0 : i32, i32, i32
  }
  func.func @transform_14(%arg0: i32, %arg1: i32) -> (i32, i32, i32) {
    %c0_i32 = arith.constant 0 : i32
    %c0_i32_0 = arith.constant 0 : i32
    %c0_i32_1 = arith.constant 0 : i32
    return %arg0, %c0_i32, %c0_i32_0 : i32, i32, i32
  }
  func.func @transform_15(%arg0: i32, %arg1: i32) -> (i32, i32) {
    %c0_i32 = arith.constant 0 : i32
    %c0_i32_0 = arith.constant 0 : i32
    %c0_i32_1 = arith.constant 0 : i32
    return %c0_i32, %c0_i32_0 : i32, i32
  }
  func.func @transform_16(%arg0: i32, %arg1: i32) -> (i32, i32) {
    %c0_i32 = arith.constant 0 : i32
    %c0_i32_0 = arith.constant 0 : i32
    %c0_i32_1 = arith.constant 0 : i32
    return %c0_i32, %c0_i32_0 : i32, i32
  }
  func.func @transform_17(%arg0: i32, %arg1: i32) -> (i32, i32) {
    %c0_i32 = arith.constant 0 : i32
    %c0_i32_0 = arith.constant 0 : i32
    %c0_i32_1 = arith.constant 0 : i32
    return %c0_i32, %c0_i32_0 : i32, i32
  }
  func.func @transform_18(%arg0: i32, %arg1: i32) -> (i32, i32) {
    %c0_i32 = arith.constant 0 : i32
    %c0_i32_0 = arith.constant 0 : i32
    %c0_i32_1 = arith.constant 0 : i32
    return %c0_i32, %c0_i32_0 : i32, i32
  }
}

</mosaic_0001>

<llo_original>
// kernel: tpu_custom_call.1
$region0: #{tpu_custom_call.1}
  #allocation0 [shape = 'u32[]', space=smem, size = 0x4, offset = 0x4, fixed_abs, tag = 'smem constant byte address 0x4 - core index']
  #allocation1 [shape = 'u32[72,128]{1,0:T(1,128)}', space=vmem, size = 0x9000, scoped, tag = 'internal scratch']
  #allocation2 [shape = 'f32[128,128]{1,0:T(8,128)}', space=vmem, size = 0x10000, scoped, tag = 'scratch operand']
  #allocation3 [shape = 'f32[128,128]{1,0:T(8,128)}', space=vmem, size = 0x10000, scoped, tag = 'scratch operand']
  #allocation4 [shape = 'f32[128,128]{1,0:T(8,128)}', space=vmem, size = 0x10000, scoped, tag = 'scratch operand']
  #allocation5 [shape = 'bf16[128,2048]{1,0:T(8,128)(2,1)}', space=vmem, size = 0x80000, scoped, tag = 'scratch operand']
  #allocation6 [shape = 'bf16[2048,128]{1,0:T(8,128)(2,1)}', space=vmem, size = 0x80000, scoped, tag = 'scratch operand']
  %s0 = inlined_call_operand.vmem [shape: f32[128,1], index: 0, kind: input, shape index: {}]
  %s1 = inlined_call_operand.vmem [shape: f32[128,1], index: 1, kind: input, shape index: {}]
  %s2 = inlined_call_operand.vmem [shape: f32[128,1], index: 2, kind: input, shape index: {}]
  %s3 = inlined_call_operand.vmem [shape: f32[1,128], index: 3, kind: input, shape index: {}]
  %s4 = inlined_call_operand.vmem [shape: f32[1,128], index: 4, kind: input, shape index: {}]
  %s5 = inlined_call_operand.vmem [shape: f32[1,128], index: 5, kind: input, shape index: {}]
  %s6 = inlined_call_operand.vmem [shape: f32[128,1], index: 6, kind: input, shape index: {}]
  %s7 = inlined_call_operand.vmem [shape: f32[1,128], index: 7, kind: input, shape index: {}]
  %s8 = inlined_call_operand.vmem [shape: bf16[128,10], index: 8, kind: input, shape index: {}]
  %s9 = inlined_call_operand.vmem [shape: bf16[2,128], index: 9, kind: input, shape index: {}]
  %s10 = inlined_call_operand.vmem [shape: bf16[10,128], index: 10, kind: input, shape index: {}]
  %s11 = inlined_call_operand.vmem [shape: bf16[2,128,128], index: 11, kind: input, shape index: {}]
  %s12 = inlined_call_operand.vmem [shape: bf16[2,16,128], index: 12, kind: input, shape index: {}]
  %s13 = inlined_call_operand.vmem [shape: bf16[2,128,128], index: 13, kind: input, shape index: {}]
  %s14 = inlined_call_operand.vmem [shape: f32[2,1,128], index: 14, kind: input, shape index: {}]
  %s15 = inlined_call_operand.vmem [shape: bf16[128,128], index: 15, kind: input, shape index: {}]
  %s16 = inlined_call_operand.vmem [shape: f32[1,128], index: 16, kind: input, shape index: {}]
  %s17 = inlined_call_operand.vmem [shape: f32[1,128], index: 17, kind: input, shape index: {}]
  %s18 = inlined_call_operand.vmem [shape: f32[2,1], index: 18, kind: output, shape index: {}]
  %s19 = sld [smem:[#allocation0]]
  $region121: #{tpu_custom_call.1} parent=0
    _
  %s21 = ssub.s32 1, %s19
  %s22 = scalar_select 0, %s21, %s19
  loop: start=0, step=1, limit=4
  $region2: #{tpu_custom_call.1} parent=0 // loop_pre_header
    _
  $region3: #{tpu_custom_call.1} parent=0 // loop_header
    %s24 = sphi 0, %s28
    %p25 = scmp.ge.s32.totalorder %s24, 4
    %s31 = sphi 0, %s43
    %s32 = sphi 0, %s39
    %s33 = sphi 0, %s31
    %s34 = sphi 0, %s32
    %s35 = sphi 0, %s33
    %s36 = sphi 0, %s34
    %s44 = sphi 0, %s44
    %s46 = sphi 0, %s44
    %s47 = sphi 0, %s46
    %s61 = sphi 0, %s47
    %s65 = sphi 0, %s65
    %s67 = sphi 0, %s65
    %s68 = sphi 0, %s67
    %s82 = sphi 0, %s68
    %s86 = sphi 0, %s86
    %s88 = sphi 0, %s86
    %s89 = sphi 0, %s88
    %s103 = sphi 0, %s89
    %s109 = sphi 0, %s111
    %s112 = sphi 0, %s109
    %s113 = sphi 0, %s112
    %s129 = sphi 0, %s113
    %s135 = sphi 0, %s137
    %s138 = sphi 0, %s135
    %s139 = sphi 0, %s138
    %s155 = sphi 0, %s139
    %s161 = sphi 0, %s163
    %s164 = sphi 0, %s161
    %s165 = sphi 0, %s164
    %s181 = sphi 0, %s165
    %s185 = sphi 0, %s185
    %s187 = sphi 0, %s185
    %s188 = sphi 0, %s187
    %s202 = sphi 0, %s188
    %s208 = sphi 0, %s210
    %s211 = sphi 0, %s208
    %s212 = sphi 0, %s211
    %s228 = sphi 0, %s212
    %s232 = sphi 0, %s232
    %s234 = sphi 0, %s232
    %s235 = sphi 0, %s234
    %s249 = sphi 0, %s235
    %s253 = sphi 0, %s253
    %s255 = sphi 0, %s253
    %s256 = sphi 0, %s255
    %s270 = sphi 0, %s256
    %s274 = sphi 0, %s274
    %s276 = sphi 0, %s274
    %s277 = sphi 0, %s276
    %s291 = sphi 0, %s277
    %s297 = sphi 0, %s299
    %s300 = sphi 0, %s297
    %s301 = sphi 0, %s300
    %s317 = sphi 0, %s301
    %s323 = sphi 0, %s325
    %s326 = sphi 0, %s323
    %s327 = sphi 0, %s326
    %s343 = sphi 0, %s327
    %s349 = sphi 0, %s351
    %s352 = sphi 0, %s349
    %s353 = sphi 0, %s352
    %s369 = sphi 0, %s353
    %s375 = sphi 0, %s377
    %s378 = sphi 0, %s375
    %s379 = sphi 0, %s378
    %s395 = sphi 0, %s379
    %s399 = sphi 0, %s399
    %s401 = sphi 0, %s399
    %s402 = sphi 0, %s401
    %s416 = sphi 0, %s402
    %s420 = sphi 0, %s420
    %s422 = sphi 0, %s420
    %s423 = sphi 0, %s422
    %s437 = sphi 0, %s423
    %s441 = sphi 0, %s441
    %s443 = sphi 0, %s441
    %s444 = sphi 0, %s443
    %s458 = sphi 0, %s444
    %s462 = sphi 0, %s462
    %s464 = sphi 0, %s462
    %s465 = sphi 0, %s464
    %s479 = sphi 0, %s465
  $region4: #{tpu_custom_call.1} parent=0 // loop_header_branch
    %27 = sbr.rel (%p25) target = $region8
  $region5: #{tpu_custom_call.1} parent=0 // loop_body
    %s29 = ssub.s32 %s24, 1
    %s30 = ssub.s32 %s24, 2
    %s37 = sadd.s32 1, %s32
    %p38 = scmp.ge.s32.totalorder %s37, 1
    %s39 = scalar_select %p38, 0, %s37
    %s40 = sadd.s32 1, %s31
    %s41 = scalar_select %p38, %s40, %s31
    %p42 = scmp.ge.s32.totalorder %s41, 2
    %s43 = scalar_select %p42, 0, %s41
    %s45 = sadd.s32 %s44, 1
    %p48 = scmp.eq.s32.totalorder %s24, 1
    %p49 = scmp.ne.s32.totalorder %s44, %s46
    %p50 = scmp.eq.s32.totalorder %s24, 0
    %p51 = por %p49, %p50
    %p52 = scmp.ne.s32.totalorder %s44, %s46
    %p53 = scmp.eq.s32.totalorder %s29, 1
    %p54 = por %p52, %p53
    %p55 = scmp.ne.s32.totalorder %s46, %s47
    %p56 = scmp.eq.s32.totalorder %s29, 0
    %p57 = por %p55, %p56
    %p58 = scmp.ne.s32.totalorder %s46, %s47
    %p59 = scmp.eq.s32.totalorder %s30, 1
    %p60 = por %p58, %p59
    %p62 = scmp.ne.s32.totalorder %s47, %s61
    %p63 = scmp.eq.s32.totalorder %s30, 0
    %p64 = por %p62, %p63
    %s66 = sadd.s32 %s65, 1
    %p69 = scmp.eq.s32.totalorder %s24, 1
    %p70 = scmp.ne.s32.totalorder %s65, %s67
    %p71 = scmp.eq.s32.totalorder %s24, 0
    %p72 = por %p70, %p71
    %p73 = scmp.ne.s32.totalorder %s65, %s67
    %p74 = scmp.eq.s32.totalorder %s29, 1
    %p75 = por %p73, %p74
    %p76 = scmp.ne.s32.totalorder %s67, %s68
    %p77 = scmp.eq.s32.totalorder %s29, 0
    %p78 = por %p76, %p77
    %p79 = scmp.ne.s32.totalorder %s67, %s68
    %p80 = scmp.eq.s32.totalorder %s30, 1
    %p81 = por %p79, %p80
    %p83 = scmp.ne.s32.totalorder %s68, %s82
    %p84 = scmp.eq.s32.totalorder %s30, 0
    %p85 = por %p83, %p84
    %s87 = sadd.s32 %s86, 1
    %p90 = scmp.eq.s32.totalorder %s24, 1
    %p91 = scmp.ne.s32.totalorder %s86, %s88
    %p92 = scmp.eq.s32.totalorder %s24, 0
    %p93 = por %p91, %p92
    %p94 = scmp.ne.s32.totalorder %s86, %s88
    %p95 = scmp.eq.s32.totalorder %s29, 1
    %p96 = por %p94, %p95
    %p97 = scmp.ne.s32.totalorder %s88, %s89
    %p98 = scmp.eq.s32.totalorder %s29, 0
    %p99 = por %p97, %p98
    %p100 = scmp.ne.s32.totalorder %s88, %s89
    %p101 = scmp.eq.s32.totalorder %s30, 1
    %p102 = por %p100, %p101
    %p104 = scmp.ne.s32.totalorder %s89, %s103
    %p105 = scmp.eq.s32.totalorder %s30, 0
    %p106 = por %p104, %p105
    %s107 = ssub.s32 %s32, %s39
    %p108 = scmp.eq.s32.totalorder %s107, 0
    %s110 = sadd.s32 %s109, 1
    %s111 = scalar_select %p108, %s109, %s110
    %p114 = pneg %p108
    %p115 = scmp.eq.s32.totalorder %s24, 1
    %p116 = por %p114, %p115
    %p117 = scmp.ne.s32.totalorder %s109, %s112
    %p118 = scmp.eq.s32.totalorder %s24, 0
    %p119 = por %p117, %p118
    %p120 = scmp.ne.s32.totalorder %s109, %s112
    %p121 = scmp.eq.s32.totalorder %s29, 1
    %p122 = por %p120, %p121
    %p123 = scmp.ne.s32.totalorder %s112, %s113
    %p124 = scmp.eq.s32.totalorder %s29, 0
    %p125 = por %p123, %p124
    %p126 = scmp.ne.s32.totalorder %s112, %s113
    %p127 = scmp.eq.s32.totalorder %s30, 1
    %p128 = por %p126, %p127
    %p130 = scmp.ne.s32.totalorder %s113, %s129
    %p131 = scmp.eq.s32.totalorder %s30, 0
    %p132 = por %p130, %p131
    %s133 = ssub.s32 %s32, %s39
    %p134 = scmp.eq.s32.totalorder %s133, 0
    %s136 = sadd.s32 %s135, 1
    %s137 = scalar_select %p134, %s135, %s136
    %p140 = pneg %p134
    %p141 = scmp.eq.s32.totalorder %s24, 1
    %p142 = por %p140, %p141
    %p143 = scmp.ne.s32.totalorder %s135, %s138
    %p144 = scmp.eq.s32.totalorder %s24, 0
    %p145 = por %p143, %p144
    %p146 = scmp.ne.s32.totalorder %s135, %s138
    %p147 = scmp.eq.s32.totalorder %s29, 1
    %p148 = por %p146, %p147
    %p149 = scmp.ne.s32.totalorder %s138, %s139
    %p150 = scmp.eq.s32.totalorder %s29, 0
    %p151 = por %p149, %p150
    %p152 = scmp.ne.s32.totalorder %s138, %s139
    %p153 = scmp.eq.s32.totalorder %s30, 1
    %p154 = por %p152, %p153
    %p156 = scmp.ne.s32.totalorder %s139, %s155
    %p157 = scmp.eq.s32.totalorder %s30, 0
    %p158 = por %p156, %p157
    %s159 = ssub.s32 %s32, %s39
    %p160 = scmp.eq.s32.totalorder %s159, 0
    %s162 = sadd.s32 %s161, 1
    %s163 = scalar_select %p160, %s161, %s162
    %p166 = pneg %p160
    %p167 = scmp.eq.s32.totalorder %s24, 1
    %p168 = por %p166, %p167
    %p169 = scmp.ne.s32.totalorder %s161, %s164
    %p170 = scmp.eq.s32.totalorder %s24, 0
    %p171 = por %p169, %p170
    %p172 = scmp.ne.s32.totalorder %s161, %s164
    %p173 = scmp.eq.s32.totalorder %s29, 1
    %p174 = por %p172, %p173
    %p175 = scmp.ne.s32.totalorder %s164, %s165
    %p176 = scmp.eq.s32.totalorder %s29, 0
    %p177 = por %p175, %p176
    %p178 = scmp.ne.s32.totalorder %s164, %s165
    %p179 = scmp.eq.s32.totalorder %s30, 1
    %p180 = por %p178, %p179
    %p182 = scmp.ne.s32.totalorder %s165, %s181
    %p183 = scmp.eq.s32.totalorder %s30, 0
    %p184 = por %p182, %p183
    %s186 = sadd.s32 %s185, 1
    %p189 = scmp.eq.s32.totalorder %s24, 1
    %p190 = scmp.ne.s32.totalorder %s185, %s187
    %p191 = scmp.eq.s32.totalorder %s24, 0
    %p192 = por %p190, %p191
    %p193 = scmp.ne.s32.totalorder %s185, %s187
    %p194 = scmp.eq.s32.totalorder %s29, 1
    %p195 = por %p193, %p194
    %p196 = scmp.ne.s32.totalorder %s187, %s188
    %p197 = scmp.eq.s32.totalorder %s29, 0
    %p198 = por %p196, %p197
    %p199 = scmp.ne.s32.totalorder %s187, %s188
    %p200 = scmp.eq.s32.totalorder %s30, 1
    %p201 = por %p199, %p200
    %p203 = scmp.ne.s32.totalorder %s188, %s202
    %p204 = scmp.eq.s32.totalorder %s30, 0
    %p205 = por %p203, %p204
    %s206 = ssub.s32 %s32, %s39
    %p207 = scmp.eq.s32.totalorder %s206, 0
    %s209 = sadd.s32 %s208, 1
    %s210 = scalar_select %p207, %s208, %s209
    %p213 = pneg %p207
    %p214 = scmp.eq.s32.totalorder %s24, 1
    %p215 = por %p213, %p214
    %p216 = scmp.ne.s32.totalorder %s208, %s211
    %p217 = scmp.eq.s32.totalorder %s24, 0
    %p218 = por %p216, %p217
    %p219 = scmp.ne.s32.totalorder %s208, %s211
    %p220 = scmp.eq.s32.totalorder %s29, 1
    %p221 = por %p219, %p220
    %p222 = scmp.ne.s32.totalorder %s211, %s212
    %p223 = scmp.eq.s32.totalorder %s29, 0
    %p224 = por %p222, %p223
    %p225 = scmp.ne.s32.totalorder %s211, %s212
    %p226 = scmp.eq.s32.totalorder %s30, 1
    %p227 = por %p225, %p226
    %p229 = scmp.ne.s32.totalorder %s212, %s228
    %p230 = scmp.eq.s32.totalorder %s30, 0
    %p231 = por %p229, %p230
    %s233 = sadd.s32 %s232, 1
    %p236 = scmp.eq.s32.totalorder %s24, 1
    %p237 = scmp.ne.s32.totalorder %s232, %s234
    %p238 = scmp.eq.s32.totalorder %s24, 0
    %p239 = por %p237, %p238
    %p240 = scmp.ne.s32.totalorder %s232, %s234
    %p241 = scmp.eq.s32.totalorder %s29, 1
    %p242 = por %p240, %p241
    %p243 = scmp.ne.s32.totalorder %s234, %s235
    %p244 = scmp.eq.s32.totalorder %s29, 0
    %p245 = por %p243, %p244
    %p246 = scmp.ne.s32.totalorder %s234, %s235
    %p247 = scmp.eq.s32.totalorder %s30, 1
    %p248 = por %p246, %p247
    %p250 = scmp.ne.s32.totalorder %s235, %s249
    %p251 = scmp.eq.s32.totalorder %s30, 0
    %p252 = por %p250, %p251
    %s254 = sadd.s32 %s253, 1
    %p257 = scmp.eq.s32.totalorder %s24, 1
    %p258 = scmp.ne.s32.totalorder %s253, %s255
    %p259 = scmp.eq.s32.totalorder %s24, 0
    %p260 = por %p258, %p259
    %p261 = scmp.ne.s32.totalorder %s253, %s255
    %p262 = scmp.eq.s32.totalorder %s29, 1
    %p263 = por %p261, %p262
    %p264 = scmp.ne.s32.totalorder %s255, %s256
    %p265 = scmp.eq.s32.totalorder %s29, 0
    %p266 = por %p264, %p265
    %p267 = scmp.ne.s32.totalorder %s255, %s256
    %p268 = scmp.eq.s32.totalorder %s30, 1
    %p269 = por %p267, %p268
    %p271 = scmp.ne.s32.totalorder %s256, %s270
    %p272 = scmp.eq.s32.totalorder %s30, 0
    %p273 = por %p271, %p272
    %s275 = sadd.s32 %s274, 1
    %p278 = scmp.eq.s32.totalorder %s24, 1
    %p279 = scmp.ne.s32.totalorder %s274, %s276
    %p280 = scmp.eq.s32.totalorder %s24, 0
    %p281 = por %p279, %p280
    %p282 = scmp.ne.s32.totalorder %s274, %s276
    %p283 = scmp.eq.s32.totalorder %s29, 1
    %p284 = por %p282, %p283
    %p285 = scmp.ne.s32.totalorder %s276, %s277
    %p286 = scmp.eq.s32.totalorder %s29, 0
    %p287 = por %p285, %p286
    %p288 = scmp.ne.s32.totalorder %s276, %s277
    %p289 = scmp.eq.s32.totalorder %s30, 1
    %p290 = por %p288, %p289
    %p292 = scmp.ne.s32.totalorder %s277, %s291
    %p293 = scmp.eq.s32.totalorder %s30, 0
    %p294 = por %p292, %p293
    %s295 = ssub.s32 %s31, %s43
    %p296 = scmp.eq.s32.totalorder %s295, 0
    %s298 = sadd.s32 %s297, 1
    %s299 = scalar_select %p296, %s297, %s298
    %p302 = pneg %p296
    %p303 = scmp.eq.s32.totalorder %s24, 1
    %p304 = por %p302, %p303
    %p305 = scmp.ne.s32.totalorder %s297, %s300
    %p306 = scmp.eq.s32.totalorder %s24, 0
    %p307 = por %p305, %p306
    %p308 = scmp.ne.s32.totalorder %s297, %s300
    %p309 = scmp.eq.s32.totalorder %s29, 1
    %p310 = por %p308, %p309
    %p311 = scmp.ne.s32.totalorder %s300, %s301
    %p312 = scmp.eq.s32.totalorder %s29, 0
    %p313 = por %p311, %p312
    %p314 = scmp.ne.s32.totalorder %s300, %s301
    %p315 = scmp.eq.s32.totalorder %s30, 1
    %p316 = por %p314, %p315
    %p318 = scmp.ne.s32.totalorder %s301, %s317
    %p319 = scmp.eq.s32.totalorder %s30, 0
    %p320 = por %p318, %p319
    %s321 = ssub.s32 %s31, %s43
    %p322 = scmp.eq.s32.totalorder %s321, 0
    %s324 = sadd.s32 %s323, 1
    %s325 = scalar_select %p322, %s323, %s324
    %p328 = pneg %p322
    %p329 = scmp.eq.s32.totalorder %s24, 1
    %p330 = por %p328, %p329
    %p331 = scmp.ne.s32.totalorder %s323, %s326
    %p332 = scmp.eq.s32.totalorder %s24, 0
    %p333 = por %p331, %p332
    %p334 = scmp.ne.s32.totalorder %s323, %s326
    %p335 = scmp.eq.s32.totalorder %s29, 1
    %p336 = por %p334, %p335
    %p337 = scmp.ne.s32.totalorder %s326, %s327
    %p338 = scmp.eq.s32.totalorder %s29, 0
    %p339 = por %p337, %p338
    %p340 = scmp.ne.s32.totalorder %s326, %s327
    %p341 = scmp.eq.s32.totalorder %s30, 1
    %p342 = por %p340, %p341
    %p344 = scmp.ne.s32.totalorder %s327, %s343
    %p345 = scmp.eq.s32.totalorder %s30, 0
    %p346 = por %p344, %p345
    %s347 = ssub.s32 %s31, %s43
    %p348 = scmp.eq.s32.totalorder %s347, 0
    %s350 = sadd.s32 %s349, 1
    %s351 = scalar_select %p348, %s349, %s350
    %p354 = pneg %p348
    %p355 = scmp.eq.s32.totalorder %s24, 1
    %p356 = por %p354, %p355
    %p357 = scmp.ne.s32.totalorder %s349, %s352
    %p358 = scmp.eq.s32.totalorder %s24, 0
    %p359 = por %p357, %p358
    %p360 = scmp.ne.s32.totalorder %s349, %s352
    %p361 = scmp.eq.s32.totalorder %s29, 1
    %p362 = por %p360, %p361
    %p363 = scmp.ne.s32.totalorder %s352, %s353
    %p364 = scmp.eq.s32.totalorder %s29, 0
    %p365 = por %p363, %p364
    %p366 = scmp.ne.s32.totalorder %s352, %s353
    %p367 = scmp.eq.s32.totalorder %s30, 1
    %p368 = por %p366, %p367
    %p370 = scmp.ne.s32.totalorder %s353, %s369
    %p371 = scmp.eq.s32.totalorder %s30, 0
    %p372 = por %p370, %p371
    %s373 = ssub.s32 %s31, %s43
    %p374 = scmp.eq.s32.totalorder %s373, 0
    %s376 = sadd.s32 %s375, 1
    %s377 = scalar_select %p374, %s375, %s376
    %p380 = pneg %p374
    %p381 = scmp.eq.s32.totalorder %s24, 1
    %p382 = por %p380, %p381
    %p383 = scmp.ne.s32.totalorder %s375, %s378
    %p384 = scmp.eq.s32.totalorder %s24, 0
    %p385 = por %p383, %p384
    %p386 = scmp.ne.s32.totalorder %s375, %s378
    %p387 = scmp.eq.s32.totalorder %s29, 1
    %p388 = por %p386, %p387
    %p389 = scmp.ne.s32.totalorder %s378, %s379
    %p390 = scmp.eq.s32.totalorder %s29, 0
    %p391 = por %p389, %p390
    %p392 = scmp.ne.s32.totalorder %s378, %s379
    %p393 = scmp.eq.s32.totalorder %s30, 1
    %p394 = por %p392, %p393
    %p396 = scmp.ne.s32.totalorder %s379, %s395
    %p397 = scmp.eq.s32.totalorder %s30, 0
    %p398 = por %p396, %p397
    %s400 = sadd.s32 %s399, 1
    %p403 = scmp.eq.s32.totalorder %s24, 1
    %p404 = scmp.ne.s32.totalorder %s399, %s401
    %p405 = scmp.eq.s32.totalorder %s24, 0
    %p406 = por %p404, %p405
    %p407 = scmp.ne.s32.totalorder %s399, %s401
    %p408 = scmp.eq.s32.totalorder %s29, 1
    %p409 = por %p407, %p408
    %p410 = scmp.ne.s32.totalorder %s401, %s402
    %p411 = scmp.eq.s32.totalorder %s29, 0
    %p412 = por %p410, %p411
    %p413 = scmp.ne.s32.totalorder %s401, %s402
    %p414 = scmp.eq.s32.totalorder %s30, 1
    %p415 = por %p413, %p414
    %p417 = scmp.ne.s32.totalorder %s402, %s416
    %p418 = scmp.eq.s32.totalorder %s30, 0
    %p419 = por %p417, %p418
    %s421 = sadd.s32 %s420, 1
    %p424 = scmp.eq.s32.totalorder %s24, 1
    %p425 = scmp.ne.s32.totalorder %s420, %s422
    %p426 = scmp.eq.s32.totalorder %s24, 0
    %p427 = por %p425, %p426
    %p428 = scmp.ne.s32.totalorder %s420, %s422
    %p429 = scmp.eq.s32.totalorder %s29, 1
    %p430 = por %p428, %p429
    %p431 = scmp.ne.s32.totalorder %s422, %s423
    %p432 = scmp.eq.s32.totalorder %s29, 0
    %p433 = por %p431, %p432
    %p434 = scmp.ne.s32.totalorder %s422, %s423
    %p435 = scmp.eq.s32.totalorder %s30, 1
    %p436 = por %p434, %p435
    %p438 = scmp.ne.s32.totalorder %s423, %s437
    %p439 = scmp.eq.s32.totalorder %s30, 0
    %p440 = por %p438, %p439
    %s442 = sadd.s32 %s441, 1
    %p445 = scmp.eq.s32.totalorder %s24, 1
    %p446 = scmp.ne.s32.totalorder %s441, %s443
    %p447 = scmp.eq.s32.totalorder %s24, 0
    %p448 = por %p446, %p447
    %p449 = scmp.ne.s32.totalorder %s441, %s443
    %p450 = scmp.eq.s32.totalorder %s29, 1
    %p451 = por %p449, %p450
    %p452 = scmp.ne.s32.totalorder %s443, %s444
    %p453 = scmp.eq.s32.totalorder %s29, 0
    %p454 = por %p452, %p453
    %p455 = scmp.ne.s32.totalorder %s443, %s444
    %p456 = scmp.eq.s32.totalorder %s30, 1
    %p457 = por %p455, %p456
    %p459 = scmp.ne.s32.totalorder %s444, %s458
    %p460 = scmp.eq.s32.totalorder %s30, 0
    %p461 = por %p459, %p460
    %s463 = sadd.s32 %s462, 1
    %p466 = scmp.eq.s32.totalorder %s24, 1
    %p467 = scmp.ne.s32.totalorder %s462, %s464
    %p468 = scmp.eq.s32.totalorder %s24, 0
    %p469 = por %p467, %p468
    %p470 = scmp.ne.s32.totalorder %s462, %s464
    %p471 = scmp.eq.s32.totalorder %s29, 1
    %p472 = por %p470, %p471
    %p473 = scmp.ne.s32.totalorder %s464, %s465
    %p474 = scmp.eq.s32.totalorder %s29, 0
    %p475 = por %p473, %p474
    %p476 = scmp.ne.s32.totalorder %s464, %s465
    %p477 = scmp.eq.s32.totalorder %s30, 1
    %p478 = por %p476, %p477
    %p480 = scmp.ne.s32.totalorder %s465, %s479
    %p481 = scmp.eq.s32.totalorder %s30, 0
    %p482 = por %p480, %p481
    %p483 = scmp.le.s32.totalorder 1, %s24
    %p484 = scmp.lt.s32.totalorder %s24, 3
    %p485 = pnand %p483, %p484
    %p486 = pneg %p485
    // Predicated region
    $region9: #{tpu_custom_call.1} parent=5 // pred_check
      _
    $region10: #{tpu_custom_call.1} parent=5 // pred_check_branch
      %488 = sbr.rel (%p485) target = $region12
    $region11: #{tpu_custom_call.1} parent=5 // pred_region
      %s489 = ssub.s32 %s24, 1
      // Predicated region
      $region13: #{tpu_custom_call.1} parent=11 // pred_check
        %p490 = pneg %p57
      $region14: #{tpu_custom_call.1} parent=11 // pred_check_branch
        %492 = sbr.rel (%p490) target = $region16
      $region15: #{tpu_custom_call.1} parent=11 // pred_region
        _
      $region16: #{tpu_custom_call.1} parent=11 // pred_fallthru
        _
      // Predicated region
      $region17: #{tpu_custom_call.1} parent=11 // pred_check
        %p493 = pneg %p78
      $region18: #{tpu_custom_call.1} parent=11 // pred_check_branch
        %495 = sbr.rel (%p493) target = $region20
      $region19: #{tpu_custom_call.1} parent=11 // pred_region
        _
      $region20: #{tpu_custom_call.1} parent=11 // pred_fallthru
        _
      // Predicated region
      $region21: #{tpu_custom_call.1} parent=11 // pred_check
        %p496 = pneg %p99
      $region22: #{tpu_custom_call.1} parent=11 // pred_check_branch
        %498 = sbr.rel (%p496) target = $region24
      $region23: #{tpu_custom_call.1} parent=11 // pred_region
        _
      $region24: #{tpu_custom_call.1} parent=11 // pred_fallthru
        _
      // Predicated region
      $region25: #{tpu_custom_call.1} parent=11 // pred_check
        %p499 = pneg %p125
      $region26: #{tpu_custom_call.1} parent=11 // pred_check_branch
        %501 = sbr.rel (%p499) target = $region28
      $region27: #{tpu_custom_call.1} parent=11 // pred_region
        %p502 = scmp.lt.s32.totalorder %s34, 0
        %s503 = scalar_select %p502, %s34, 0
        %s504 = scalar_lea.vmem %s3, %s503
      $region28: #{tpu_custom_call.1} parent=11 // pred_fallthru
        _
      // Predicated region
      $region29: #{tpu_custom_call.1} parent=11 // pred_check
        %p505 = pneg %p151
      $region30: #{tpu_custom_call.1} parent=11 // pred_check_branch
        %507 = sbr.rel (%p505) target = $region32
      $region31: #{tpu_custom_call.1} parent=11 // pred_region
        %p508 = scmp.lt.s32.totalorder %s34, 0
        %s509 = scalar_select %p508, %s34, 0
        %s510 = scalar_lea.vmem %s4, %s509
      $region32: #{tpu_custom_call.1} parent=11 // pred_fallthru
        _
      // Predicated region
      $region33: #{tpu_custom_call.1} parent=11 // pred_check
        %p511 = pneg %p177
      $region34: #{tpu_custom_call.1} parent=11 // pred_check_branch
        %513 = sbr.rel (%p511) target = $region36
      $region35: #{tpu_custom_call.1} parent=11 // pred_region
        %p514 = scmp.lt.s32.totalorder %s34, 0
        %s515 = scalar_select %p514, %s34, 0
        %s516 = scalar_lea.vmem %s5, %s515
      $region36: #{tpu_custom_call.1} parent=11 // pred_fallthru
        _
      // Predicated region
      $region37: #{tpu_custom_call.1} parent=11 // pred_check
        %p517 = pneg %p198
      $region38: #{tpu_custom_call.1} parent=11 // pred_check_branch
        %519 = sbr.rel (%p517) target = $region40
      $region39: #{tpu_custom_call.1} parent=11 // pred_region
        _
      $region40: #{tpu_custom_call.1} parent=11 // pred_fallthru
        _
      // Predicated region
      $region41: #{tpu_custom_call.1} parent=11 // pred_check
        %p520 = pneg %p224
      $region42: #{tpu_custom_call.1} parent=11 // pred_check_branch
        %522 = sbr.rel (%p520) target = $region44
      $region43: #{tpu_custom_call.1} parent=11 // pred_region
        %p523 = scmp.lt.s32.totalorder %s34, 0
        %s524 = scalar_select %p523, %s34, 0
        %s525 = scalar_lea.vmem %s7, %s524
      $region44: #{tpu_custom_call.1} parent=11 // pred_fallthru
        _
      // Predicated region
      $region45: #{tpu_custom_call.1} parent=11 // pred_check
        %p526 = pneg %p245
      $region46: #{tpu_custom_call.1} parent=11 // pred_check_branch
        %528 = sbr.rel (%p526) target = $region48
      $region47: #{tpu_custom_call.1} parent=11 // pred_region
        _
      $region48: #{tpu_custom_call.1} parent=11 // pred_fallthru
        _
      // Predicated region
      $region49: #{tpu_custom_call.1} parent=11 // pred_check
        %p529 = pneg %p266
      $region50: #{tpu_custom_call.1} parent=11 // pred_check_branch
        %531 = sbr.rel (%p529) target = $region52
      $region51: #{tpu_custom_call.1} parent=11 // pred_region
        _
      $region52: #{tpu_custom_call.1} parent=11 // pred_fallthru
        _
      // Predicated region
      $region53: #{tpu_custom_call.1} parent=11 // pred_check
        %p532 = pneg %p287
      $region54: #{tpu_custom_call.1} parent=11 // pred_check_branch
        %534 = sbr.rel (%p532) target = $region56
      $region55: #{tpu_custom_call.1} parent=11 // pred_region
        _
      $region56: #{tpu_custom_call.1} parent=11 // pred_fallthru
        _
      // Predicated region
      $region57: #{tpu_custom_call.1} parent=11 // pred_check
        %p535 = pneg %p412
      $region58: #{tpu_custom_call.1} parent=11 // pred_check_branch
        %537 = sbr.rel (%p535) target = $region60
      $region59: #{tpu_custom_call.1} parent=11 // pred_region
        _
      $region60: #{tpu_custom_call.1} parent=11 // pred_fallthru
        _
      // Predicated region
      $region61: #{tpu_custom_call.1} parent=11 // pred_check
        %p538 = pneg %p433
      $region62: #{tpu_custom_call.1} parent=11 // pred_check_branch
        %540 = sbr.rel (%p538) target = $region64
      $region63: #{tpu_custom_call.1} parent=11 // pred_region
        _
      $region64: #{tpu_custom_call.1} parent=11 // pred_fallthru
        _
      // Predicated region
      $region65: #{tpu_custom_call.1} parent=11 // pred_check
        %p541 = pneg %p454
      $region66: #{tpu_custom_call.1} parent=11 // pred_check_branch
        %543 = sbr.rel (%p541) target = $region68
      $region67: #{tpu_custom_call.1} parent=11 // pred_region
        _
      $region68: #{tpu_custom_call.1} parent=11 // pred_fallthru
        _
    $region12: #{tpu_custom_call.1} parent=5 // pred_fallthru
      _
    %p544 = scmp.lt.s32.totalorder %s24, 2
    // Predicated region
    $region69: #{tpu_custom_call.1} parent=5 // pred_check
      %p545 = pneg %p544
    $region70: #{tpu_custom_call.1} parent=5 // pred_check_branch
      %547 = sbr.rel (%p545) target = $region72
    $region71: #{tpu_custom_call.1} parent=5 // pred_region
      // Predicated region
      $region73: #{tpu_custom_call.1} parent=71 // pred_check
        %p548 = pneg %p307
      $region74: #{tpu_custom_call.1} parent=71 // pred_check_branch
        %550 = sbr.rel (%p548) target = $region76
      $region75: #{tpu_custom_call.1} parent=71 // pred_region
        %p551 = scmp.lt.s32.totalorder %s31, 1
        %s552 = scalar_select %p551, %s31, 1
        %s553 = smul.addr %s552, 16
        %s554 = smul.addr %s553, 4
        %s555 = scalar_lea.vmem %s11, %s554
      $region76: #{tpu_custom_call.1} parent=71 // pred_fallthru
        _
      // Predicated region
      $region77: #{tpu_custom_call.1} parent=71 // pred_check
        %p556 = pneg %p333
      $region78: #{tpu_custom_call.1} parent=71 // pred_check_branch
        %558 = sbr.rel (%p556) target = $region80
      $region79: #{tpu_custom_call.1} parent=71 // pred_region
        %p559 = scmp.lt.s32.totalorder %s31, 1
        %s560 = scalar_select %p559, %s31, 1
        %s561 = smul.addr %s560, 2
        %s562 = smul.addr %s561, 4
        %s563 = scalar_lea.vmem %s12, %s562
      $region80: #{tpu_custom_call.1} parent=71 // pred_fallthru
        _
      // Predicated region
      $region81: #{tpu_custom_call.1} parent=71 // pred_check
        %p564 = pneg %p359
      $region82: #{tpu_custom_call.1} parent=71 // pred_check_branch
        %566 = sbr.rel (%p564) target = $region84
      $region83: #{tpu_custom_call.1} parent=71 // pred_region
        %p567 = scmp.lt.s32.totalorder %s31, 1
        %s568 = scalar_select %p567, %s31, 1
        %s569 = smul.addr %s568, 16
        %s570 = smul.addr %s569, 4
        %s571 = scalar_lea.vmem %s13, %s570
      $region84: #{tpu_custom_call.1} parent=71 // pred_fallthru
        _
      // Predicated region
      $region85: #{tpu_custom_call.1} parent=71 // pred_check
        %p572 = pneg %p385
      $region86: #{tpu_custom_call.1} parent=71 // pred_check_branch
        %574 = sbr.rel (%p572) target = $region88
      $region87: #{tpu_custom_call.1} parent=71 // pred_region
        %p575 = scmp.lt.s32.totalorder %s31, 1
        %s576 = scalar_select %p575, %s31, 1
        %s577 = scalar_lea.vmem %s14, %s576
      $region88: #{tpu_custom_call.1} parent=71 // pred_fallthru
        _
    $region72: #{tpu_custom_call.1} parent=5 // pred_fallthru
      _
    %p578 = scmp.le.s32.totalorder 1, %s24
    %p579 = scmp.lt.s32.totalorder %s24, 3
    %p580 = pnand %p578, %p579
    %p581 = pneg %p580
    // Predicated region
    $region89: #{tpu_custom_call.1} parent=5 // pred_check
      _
    $region90: #{tpu_custom_call.1} parent=5 // pred_check_branch
      %583 = sbr.rel (%p580) target = $region92
    $region91: #{tpu_custom_call.1} parent=5 // pred_region
      %s584 = ssub.s32 %s24, 1
      %p585 = pneg %p57
      %p586 = pneg %p54
      %p587 = pneg %p78
      %p588 = pneg %p75
      %p589 = pneg %p99
      %p590 = pneg %p96
      %p591 = scmp.lt.s32.totalorder %s34, 0
      %s592 = scalar_select %p591, %s34, 0
      %s593 = scalar_lea.vmem %s3, %s592
      %p594 = pneg %p125
      %p595 = pneg %p122
      %p596 = scmp.lt.s32.totalorder %s34, 0
      %s597 = scalar_select %p596, %s34, 0
      %s598 = scalar_lea.vmem %s4, %s597
      %p599 = pneg %p151
      %p600 = pneg %p148
      %p601 = scmp.lt.s32.totalorder %s34, 0
      %s602 = scalar_select %p601, %s34, 0
      %s603 = scalar_lea.vmem %s5, %s602
      %p604 = pneg %p177
      %p605 = pneg %p174
      %p606 = pneg %p198
      %p607 = pneg %p195
      %p608 = scmp.lt.s32.totalorder %s34, 0
      %s609 = scalar_select %p608, %s34, 0
      %s610 = scalar_lea.vmem %s7, %s609
      %p611 = pneg %p224
      %p612 = pneg %p221
      %p613 = pneg %p245
      %p614 = pneg %p242
      %p615 = pneg %p266
      %p616 = pneg %p263
      %p617 = pneg %p287
      %p618 = pneg %p284
      %p619 = scmp.lt.s32.totalorder %s33, 1
      %s620 = scalar_select %p619, %s33, 1
      %s621 = smul.addr %s620, 16
      %s622 = smul.addr %s621, 4
      %s623 = scalar_lea.vmem %s11, %s622
      %p624 = pneg %p313
      %p625 = pneg %p310
      %p626 = scmp.lt.s32.totalorder %s33, 1
      %s627 = scalar_select %p626, %s33, 1
      %s628 = smul.addr %s627, 2
      %s629 = smul.addr %s628, 4
      %s630 = scalar_lea.vmem %s12, %s629
      %p631 = pneg %p339
      %p632 = pneg %p336
      %p633 = scmp.lt.s32.totalorder %s33, 1
      %s634 = scalar_select %p633, %s33, 1
      %s635 = smul.addr %s634, 16
      %s636 = smul.addr %s635, 4
      %s637 = scalar_lea.vmem %s13, %s636
      %p638 = pneg %p365
      %p639 = pneg %p362
      %p640 = scmp.lt.s32.totalorder %s33, 1
      %s641 = scalar_select %p640, %s33, 1
      %s642 = scalar_lea.vmem %s14, %s641
      %p643 = pneg %p391
      %p644 = pneg %p388
      %p645 = pneg %p412
      %p646 = pneg %p409
      %p647 = pneg %p433
      %p648 = pneg %p430
      %p649 = pneg %p454
      %p650 = pneg %p451
      %p651 = pneg %p475
      %p652 = pneg %p472
      %p653 = scmp.lt.s32.totalorder %s34, 0
      %s654 = scalar_select %p653, %s34, 0
      %s655 = scalar_lea.vmem %s3, %s654
      %p656 = scmp.lt.s32.totalorder %s34, 0
      %s657 = scalar_select %p656, %s34, 0
      %s658 = scalar_lea.vmem %s4, %s657
      %p659 = scmp.lt.s32.totalorder %s34, 0
      %s660 = scalar_select %p659, %s34, 0
      %s661 = scalar_lea.vmem %s5, %s660
      %p662 = scmp.lt.s32.totalorder %s34, 0
      %s663 = scalar_select %p662, %s34, 0
      %s664 = scalar_lea.vmem %s7, %s663
      %p665 = scmp.lt.s32.totalorder %s33, 1
      %s666 = scalar_select %p665, %s33, 1
      %s667 = smul.addr %s666, 16
      %s668 = smul.addr %s667, 4
      %s669 = scalar_lea.vmem %s11, %s668
      %p670 = scmp.lt.s32.totalorder %s33, 1
      %s671 = scalar_select %p670, %s33, 1
      %s672 = smul.addr %s671, 2
      %s673 = smul.addr %s672, 4
      %s674 = scalar_lea.vmem %s12, %s673
      %p675 = scmp.lt.s32.totalorder %s33, 1
      %s676 = scalar_select %p675, %s33, 1
      %s677 = smul.addr %s676, 16
      %s678 = smul.addr %s677, 4
      %s679 = scalar_lea.vmem %s13, %s678
      %p680 = scmp.lt.s32.totalorder %s33, 1
      %s681 = scalar_select %p680, %s33, 1
      %s682 = scalar_lea.vmem %s14, %s681
      %p684 = scmp.eq.s32.totalorder %s33, 0
      %p685 = scmp.eq.s32.totalorder %s34, 0
      %p686 = pnand %p684, %p685
      %p687 = pneg %p686
      // Predicated region
      $region93: #{tpu_custom_call.1} parent=91 // pred_check
        _
      $region94: #{tpu_custom_call.1} parent=91 // pred_check_branch
        %689 = sbr.rel (%p686) target = $region96
      $region95: #{tpu_custom_call.1} parent=91 // pred_region
        %v690 = vld [vmem:[%s8] sm:$0xf]
        %v691 = vld [vmem:[%s8 + $0x4] sm:$0xf]
        %v692 = vld [vmem:[%s8 + $0x8] sm:$0xf]
        %v693 = vld [vmem:[%s8 + $0xc] sm:$0xf]
        %v694 = vld [vmem:[%s8 + $0x10] sm:$0xf]
        %v695 = vld [vmem:[%s8 + $0x14] sm:$0xf]
        %v696 = vld [vmem:[%s8 + $0x18] sm:$0xf]
        %v697 = vld [vmem:[%s8 + $0x1c] sm:$0xf]
        %v698 = vld [vmem:[%s8 + $0x20] sm:$0xf]
        %v699 = vld [vmem:[%s8 + $0x24] sm:$0xf]
        %v700 = vld [vmem:[%s8 + $0x28] sm:$0xf]
        %v701 = vld [vmem:[%s8 + $0x2c] sm:$0xf]
        %v702 = vld [vmem:[%s8 + $0x30] sm:$0xf]
        %v703 = vld [vmem:[%s8 + $0x34] sm:$0xf]
        %v704 = vld [vmem:[%s8 + $0x38] sm:$0xf]
        %v705 = vld [vmem:[%s8 + $0x3c] sm:$0xf]
        %v706 = vld [vmem:[%s10] sm:$0xf]
        %v707 = vld [vmem:[%s10 + $0x4] sm:$0x1]
        %v724 = vunpack.c.l.b16 %v690
        %v725 = vunpack.c.l.b16 %v691
        %v726 = vunpack.c.l.b16 %v692
        %v727 = vunpack.c.l.b16 %v693
        %v728 = vunpack.c.l.b16 %v694
        %v729 = vunpack.c.l.b16 %v695
        %v730 = vunpack.c.l.b16 %v696
        %v731 = vunpack.c.l.b16 %v697
        %v732 = vunpack.c.l.b16 %v698
        %v733 = vunpack.c.l.b16 %v699
        %v734 = vunpack.c.l.b16 %v700
        %v735 = vunpack.c.l.b16 %v701
        %v736 = vunpack.c.l.b16 %v702
        %v737 = vunpack.c.l.b16 %v703
        %v738 = vunpack.c.l.b16 %v704
        %v739 = vunpack.c.l.b16 %v705
        %v740 = vpack.c.b16 %v725, %v724
        %v741 = vpack.c.b16 %v727, %v726
        %v742 = vpack.c.b16 %v729, %v728
        %v743 = vpack.c.b16 %v731, %v730
        %v744 = vpack.c.b16 %v733, %v732
        %v745 = vpack.c.b16 %v735, %v734
        %v746 = vpack.c.b16 %v737, %v736
        %v747 = vpack.c.b16 %v739, %v738
        %v750 = vunpack.c.l.b16 %v706
        %v751 = vunpack.c.l.b16 %v707
        %v752 = vpack.c.b16 %v751, %v750
        %vm753 = vcmask 80896
        %v755 = vsel %vm753, %v740, 0
        %v758 = vsel %vm753, %v741, 0
        %v761 = vsel %vm753, %v742, 0
        %v764 = vsel %vm753, %v743, 0
        %v767 = vsel %vm753, %v744, 0
        %v770 = vsel %vm753, %v745, 0
        %v773 = vsel %vm753, %v746, 0
        %v776 = vsel %vm753, %v747, 0
        %vm778 = vcmask 1044480
        %v780 = vsel %vm778, %v752, 0
        %782 = vmatpush.bf16.msra.mxu0 0
        %783 = vmatpush.bf16.msra.mxu0 0
        %784 = vmatpush.bf16.msra.mxu0 0
        %785 = vmatpush.bf16.msra.mxu0 0
        %786 = vmatpush.bf16.msra.mxu0 0
        %787 = vmatpush.bf16.msra.mxu0 0
        %788 = vmatpush.bf16.msra.mxu0 0
        %789 = vmatpush.bf16.msra.mxu0 %v780
        %790 = vmatmul.bf16.gmra.mxu0 %v755
        %v791 = vpop.f32.mrf.mxu0
        %v792 = vadd.f32 0.0, %v791
        %v793 = vpop.f32.mrf.mxu0
        %v794 = vadd.f32 0.0, %v793
        %795 = vmatmul.bf16.gmra.mxu0 %v758
        %v796 = vpop.f32.mrf.mxu0
        %v797 = vadd.f32 0.0, %v796
        %v798 = vpop.f32.mrf.mxu0
        %v799 = vadd.f32 0.0, %v798
        %800 = vmatmul.bf16.gmra.mxu0 %v761
        %v801 = vpop.f32.mrf.mxu0
        %v802 = vadd.f32 0.0, %v801
        %v803 = vpop.f32.mrf.mxu0
        %v804 = vadd.f32 0.0, %v803
        %805 = vmatmul.bf16.gmra.mxu0 %v764
        %v806 = vpop.f32.mrf.mxu0
        %v807 = vadd.f32 0.0, %v806
        %v808 = vpop.f32.mrf.mxu0
        %v809 = vadd.f32 0.0, %v808
        %810 = vmatmul.bf16.gmra.mxu0 %v767
        %v811 = vpop.f32.mrf.mxu0
        %v812 = vadd.f32 0.0, %v811
        %v813 = vpop.f32.mrf.mxu0
        %v814 = vadd.f32 0.0, %v813
        %815 = vmatmul.bf16.gmra.mxu0 %v770
        %v816 = vpop.f32.mrf.mxu0
        %v817 = vadd.f32 0.0, %v816
        %v818 = vpop.f32.mrf.mxu0
        %v819 = vadd.f32 0.0, %v818
        %820 = vmatmul.bf16.gmra.mxu0 %v773
        %v821 = vpop.f32.mrf.mxu0
        %v822 = vadd.f32 0.0, %v821
        %v823 = vpop.f32.mrf.mxu0
        %v824 = vadd.f32 0.0, %v823
        %825 = vmatmul.bf16.gmra.mxu0 %v776
        %v826 = vpop.f32.mrf.mxu0
        %v827 = vadd.f32 0.0, %v826
        %v828 = vpop.f32.mrf.mxu0
        %v829 = vadd.f32 0.0, %v828
        %830 = vdwg.mxu0
        %831 = vst [vmem:[#allocation2] sm:$0xff] %v792
        %832 = vst [vmem:[#allocation2 + $0x8] sm:$0xff] %v794
        %833 = vst [vmem:[#allocation2 + $0x10] sm:$0xff] %v797
        %834 = vst [vmem:[#allocation2 + $0x18] sm:$0xff] %v799
        %835 = vst [vmem:[#allocation2 + $0x20] sm:$0xff] %v802
        %836 = vst [vmem:[#allocation2 + $0x28] sm:$0xff] %v804
        %837 = vst [vmem:[#allocation2 + $0x30] sm:$0xff] %v807
        %838 = vst [vmem:[#allocation2 + $0x38] sm:$0xff] %v809
        %839 = vst [vmem:[#allocation2 + $0x40] sm:$0xff] %v812
        %840 = vst [vmem:[#allocation2 + $0x48] sm:$0xff] %v814
        %841 = vst [vmem:[#allocation2 + $0x50] sm:$0xff] %v817
        %842 = vst [vmem:[#allocation2 + $0x58] sm:$0xff] %v819
        %843 = vst [vmem:[#allocation2 + $0x60] sm:$0xff] %v822
        %844 = vst [vmem:[#allocation2 + $0x68] sm:$0xff] %v824
        %845 = vst [vmem:[#allocation2 + $0x70] sm:$0xff] %v827
        %846 = vst [vmem:[#allocation2 + $0x78] sm:$0xff] %v829
      $region96: #{tpu_custom_call.1} parent=91 // pred_fallthru
        _
      // Predicated region
      $region97: #{tpu_custom_call.1} parent=91 // pred_check
        %p847 = pneg %p685
      $region98: #{tpu_custom_call.1} parent=91 // pred_check_branch
        %849 = sbr.rel (%p847) target = $region100
      $region99: #{tpu_custom_call.1} parent=91 // pred_region
        %850 = vst [vmem:[#allocation4] sm:$0xff] 0.0
        %851 = vst [vmem:[#allocation4 + $0x8] sm:$0xff] 0.0
        %852 = vst [vmem:[#allocation4 + $0x10] sm:$0xff] 0.0
        %853 = vst [vmem:[#allocation4 + $0x18] sm:$0xff] 0.0
        %854 = vst [vmem:[#allocation4 + $0x20] sm:$0xff] 0.0
        %855 = vst [vmem:[#allocation4 + $0x28] sm:$0xff] 0.0
        %856 = vst [vmem:[#allocation4 + $0x30] sm:$0xff] 0.0
        %857 = vst [vmem:[#allocation4 + $0x38] sm:$0xff] 0.0
        %858 = vst [vmem:[#allocation4 + $0x40] sm:$0xff] 0.0
        %859 = vst [vmem:[#allocation4 + $0x48] sm:$0xff] 0.0
        %860 = vst [vmem:[#allocation4 + $0x50] sm:$0xff] 0.0
        %861 = vst [vmem:[#allocation4 + $0x58] sm:$0xff] 0.0
        %862 = vst [vmem:[#allocation4 + $0x60] sm:$0xff] 0.0
        %863 = vst [vmem:[#allocation4 + $0x68] sm:$0xff] 0.0
        %864 = vst [vmem:[#allocation4 + $0x70] sm:$0xff] 0.0
        %865 = vst [vmem:[#allocation4 + $0x78] sm:$0xff] 0.0
        %v866 = vld [vmem:[#allocation2] sm:$0xff]
        %v867 = vld [vmem:[#allocation2 + $0x8] sm:$0xff]
        %v868 = vld [vmem:[#allocation2 + $0x10] sm:$0xff]
        %v869 = vld [vmem:[#allocation2 + $0x18] sm:$0xff]
        %v870 = vld [vmem:[#allocation2 + $0x20] sm:$0xff]
        %v871 = vld [vmem:[#allocation2 + $0x28] sm:$0xff]
        %v872 = vld [vmem:[#allocation2 + $0x30] sm:$0xff]
        %v873 = vld [vmem:[#allocation2 + $0x38] sm:$0xff]
        %v874 = vld [vmem:[#allocation2 + $0x40] sm:$0xff]
        %v875 = vld [vmem:[#allocation2 + $0x48] sm:$0xff]
        %v876 = vld [vmem:[#allocation2 + $0x50] sm:$0xff]
        %v877 = vld [vmem:[#allocation2 + $0x58] sm:$0xff]
        %v878 = vld [vmem:[#allocation2 + $0x60] sm:$0xff]
        %v879 = vld [vmem:[#allocation2 + $0x68] sm:$0xff]
        %v880 = vld [vmem:[#allocation2 + $0x70] sm:$0xff]
        %v881 = vld [vmem:[#allocation2 + $0x78] sm:$0xff]
        %v882 = vpack.c.bf16 %v867, %v866
        %v883 = vpack.c.bf16 %v869, %v868
        %v884 = vpack.c.bf16 %v871, %v870
        %v885 = vpack.c.bf16 %v873, %v872
        %v886 = vpack.c.bf16 %v875, %v874
        %v887 = vpack.c.bf16 %v877, %v876
        %v888 = vpack.c.bf16 %v879, %v878
        %v889 = vpack.c.bf16 %v881, %v880
        %v890 = vld [vmem:[%s669] sm:$0xf]
        %v891 = vld [vmem:[%s669 + $0x4] sm:$0xf]
        %v892 = vld [vmem:[%s669 + $0x8] sm:$0xf]
        %v893 = vld [vmem:[%s669 + $0xc] sm:$0xf]
        %v894 = vld [vmem:[%s669 + $0x10] sm:$0xf]
        %v895 = vld [vmem:[%s669 + $0x14] sm:$0xf]
        %v896 = vld [vmem:[%s669 + $0x18] sm:$0xf]
        %v897 = vld [vmem:[%s669 + $0x1c] sm:$0xf]
        %v898 = vld [vmem:[%s669 + $0x20] sm:$0xf]
        %v899 = vld [vmem:[%s669 + $0x24] sm:$0xf]
        %v900 = vld [vmem:[%s669 + $0x28] sm:$0xf]
        %v901 = vld [vmem:[%s669 + $0x2c] sm:$0xf]
        %v902 = vld [vmem:[%s669 + $0x30] sm:$0xf]
        %v903 = vld [vmem:[%s669 + $0x34] sm:$0xf]
        %v904 = vld [vmem:[%s669 + $0x38] sm:$0xf]
        %v905 = vld [vmem:[%s669 + $0x3c] sm:$0xf]
        %v922 = vunpack.c.l.b16 %v890
        %v923 = vunpack.c.l.b16 %v891
        %v924 = vunpack.c.l.b16 %v892
        %v925 = vunpack.c.l.b16 %v893
        %v926 = vunpack.c.l.b16 %v894
        %v927 = vunpack.c.l.b16 %v895
        %v928 = vunpack.c.l.b16 %v896
        %v929 = vunpack.c.l.b16 %v897
        %v930 = vunpack.c.l.b16 %v898
        %v931 = vunpack.c.l.b16 %v899
        %v932 = vunpack.c.l.b16 %v900
        %v933 = vunpack.c.l.b16 %v901
        %v934 = vunpack.c.l.b16 %v902
        %v935 = vunpack.c.l.b16 %v903
        %v936 = vunpack.c.l.b16 %v904
        %v937 = vunpack.c.l.b16 %v905
        %v938 = vpack.c.b16 %v923, %v922
        %v939 = vpack.c.b16 %v925, %v924
        %v940 = vpack.c.b16 %v927, %v926
        %v941 = vpack.c.b16 %v929, %v928
        %v942 = vpack.c.b16 %v931, %v930
        %v943 = vpack.c.b16 %v933, %v932
        %v944 = vpack.c.b16 %v935, %v934
        %v945 = vpack.c.b16 %v937, %v936
        %954 = vmatpush.bf16.msra.mxu0 %v945
        %955 = vmatpush.bf16.msra.mxu0 %v944
        %956 = vmatpush.bf16.msra.mxu0 %v943
        %957 = vmatpush.bf16.msra.mxu0 %v942
        %958 = vmatpush.bf16.msra.mxu0 %v941
        %959 = vmatpush.bf16.msra.mxu0 %v940
        %960 = vmatpush.bf16.msra.mxu0 %v939
        %961 = vmatpush.bf16.msra.mxu0 %v938
        %962 = vmatmul.bf16.gmra.mxu0 %v882
        %v963 = vpop.f32.mrf.mxu0
        %v964 = vadd.f32 0.0, %v963
        %v965 = vpop.f32.mrf.mxu0
        %v966 = vadd.f32 0.0, %v965
        %967 = vmatmul.bf16.gmra.mxu0 %v883
        %v968 = vpop.f32.mrf.mxu0
        %v969 = vadd.f32 0.0, %v968
        %v970 = vpop.f32.mrf.mxu0
        %v971 = vadd.f32 0.0, %v970
        %972 = vmatmul.bf16.gmra.mxu0 %v884
        %v973 = vpop.f32.mrf.mxu0
        %v974 = vadd.f32 0.0, %v973
        %v975 = vpop.f32.mrf.mxu0
        %v976 = vadd.f32 0.0, %v975
        %977 = vmatmul.bf16.gmra.mxu0 %v885
        %v978 = vpop.f32.mrf.mxu0
        %v979 = vadd.f32 0.0, %v978
        %v980 = vpop.f32.mrf.mxu0
        %v981 = vadd.f32 0.0, %v980
        %982 = vmatmul.bf16.gmra.mxu0 %v886
        %v983 = vpop.f32.mrf.mxu0
        %v984 = vadd.f32 0.0, %v983
        %v985 = vpop.f32.mrf.mxu0
        %v986 = vadd.f32 0.0, %v985
        %987 = vmatmul.bf16.gmra.mxu0 %v887
        %v988 = vpop.f32.mrf.mxu0
        %v989 = vadd.f32 0.0, %v988
        %v990 = vpop.f32.mrf.mxu0
        %v991 = vadd.f32 0.0, %v990
        %992 = vmatmul.bf16.gmra.mxu0 %v888
        %v993 = vpop.f32.mrf.mxu0
        %v994 = vadd.f32 0.0, %v993
        %v995 = vpop.f32.mrf.mxu0
        %v996 = vadd.f32 0.0, %v995
        %997 = vmatmul.bf16.gmra.mxu0 %v889
        %v998 = vpop.f32.mrf.mxu0
        %v999 = vadd.f32 0.0, %v998
        %v1000 = vpop.f32.mrf.mxu0
        %v1001 = vadd.f32 0.0, %v1000
        %1002 = vdwg.mxu0
        %1003 = vst [vmem:[#allocation3] sm:$0xff] %v964
        %1004 = vst [vmem:[#allocation3 + $0x8] sm:$0xff] %v966
        %1005 = vst [vmem:[#allocation3 + $0x10] sm:$0xff] %v969
        %1006 = vst [vmem:[#allocation3 + $0x18] sm:$0xff] %v971
        %1007 = vst [vmem:[#allocation3 + $0x20] sm:$0xff] %v974
        %1008 = vst [vmem:[#allocation3 + $0x28] sm:$0xff] %v976
        %1009 = vst [vmem:[#allocation3 + $0x30] sm:$0xff] %v979
        %1010 = vst [vmem:[#allocation3 + $0x38] sm:$0xff] %v981
        %1011 = vst [vmem:[#allocation3 + $0x40] sm:$0xff] %v984
        %1012 = vst [vmem:[#allocation3 + $0x48] sm:$0xff] %v986
        %1013 = vst [vmem:[#allocation3 + $0x50] sm:$0xff] %v989
        %1014 = vst [vmem:[#allocation3 + $0x58] sm:$0xff] %v991
        %1015 = vst [vmem:[#allocation3 + $0x60] sm:$0xff] %v994
        %1016 = vst [vmem:[#allocation3 + $0x68] sm:$0xff] %v996
        %1017 = vst [vmem:[#allocation3 + $0x70] sm:$0xff] %v999
        %1018 = vst [vmem:[#allocation3 + $0x78] sm:$0xff] %v1001
      $region100: #{tpu_custom_call.1} parent=91 // pred_fallthru
        _
      %v1019 = vld [vmem:[%s0] sm:$0xff]
      %v1020 = vld [vmem:[%s0 + $0x8] sm:$0xff]
      %v1021 = vld [vmem:[%s0 + $0x10] sm:$0xff]
      %v1022 = vld [vmem:[%s0 + $0x18] sm:$0xff]
      %v1023 = vld [vmem:[%s0 + $0x20] sm:$0xff]
      %v1024 = vld [vmem:[%s0 + $0x28] sm:$0xff]
      %v1025 = vld [vmem:[%s0 + $0x30] sm:$0xff]
      %v1026 = vld [vmem:[%s0 + $0x38] sm:$0xff]
      %v1027 = vld [vmem:[%s0 + $0x40] sm:$0xff]
      %v1028 = vld [vmem:[%s0 + $0x48] sm:$0xff]
      %v1029 = vld [vmem:[%s0 + $0x50] sm:$0xff]
      %v1030 = vld [vmem:[%s0 + $0x58] sm:$0xff]
      %v1031 = vld [vmem:[%s0 + $0x60] sm:$0xff]
      %v1032 = vld [vmem:[%s0 + $0x68] sm:$0xff]
      %v1033 = vld [vmem:[%s0 + $0x70] sm:$0xff]
      %v1034 = vld [vmem:[%s0 + $0x78] sm:$0xff]
      %v1035 = vld [vmem:[%s655] sm:$0x1]
      %1037 = vset.pattern.permute.xlu0 0
      %1038 = vperm.xlu0 %1037, %v1019
      %v1039 = vpop.permute.xlu0 %1038
      %1042 = vset.pattern.permute.xlu0 0
      %1043 = vperm.xlu0 %1042, %v1020
      %v1044 = vpop.permute.xlu0 %1043
      %1047 = vset.pattern.permute.xlu0 0
      %1048 = vperm.xlu0 %1047, %v1021
      %v1049 = vpop.permute.xlu0 %1048
      %1052 = vset.pattern.permute.xlu0 0
      %1053 = vperm.xlu0 %1052, %v1022
      %v1054 = vpop.permute.xlu0 %1053
      %1057 = vset.pattern.permute.xlu0 0
      %1058 = vperm.xlu0 %1057, %v1023
      %v1059 = vpop.permute.xlu0 %1058
      %1062 = vset.pattern.permute.xlu0 0
      %1063 = vperm.xlu0 %1062, %v1024
      %v1064 = vpop.permute.xlu0 %1063
      %1067 = vset.pattern.permute.xlu0 0
      %1068 = vperm.xlu0 %1067, %v1025
      %v1069 = vpop.permute.xlu0 %1068
      %1072 = vset.pattern.permute.xlu0 0
      %1073 = vperm.xlu0 %1072, %v1026
      %v1074 = vpop.permute.xlu0 %1073
      %1077 = vset.pattern.permute.xlu0 0
      %1078 = vperm.xlu0 %1077, %v1027
      %v1079 = vpop.permute.xlu0 %1078
      %1082 = vset.pattern.permute.xlu0 0
      %1083 = vperm.xlu0 %1082, %v1028
      %v1084 = vpop.permute.xlu0 %1083
      %1087 = vset.pattern.permute.xlu0 0
      %1088 = vperm.xlu0 %1087, %v1029
      %v1089 = vpop.permute.xlu0 %1088
      %1092 = vset.pattern.permute.xlu0 0
      %1093 = vperm.xlu0 %1092, %v1030
      %v1094 = vpop.permute.xlu0 %1093
      %1097 = vset.pattern.permute.xlu0 0
      %1098 = vperm.xlu0 %1097, %v1031
      %v1099 = vpop.permute.xlu0 %1098
      %1102 = vset.pattern.permute.xlu0 0
      %1103 = vperm.xlu0 %1102, %v1032
      %v1104 = vpop.permute.xlu0 %1103
      %1107 = vset.pattern.permute.xlu0 0
      %1108 = vperm.xlu0 %1107, %v1033
      %v1109 = vpop.permute.xlu0 %1108
      %1112 = vset.pattern.permute.xlu0 0
      %1113 = vperm.xlu0 %1112, %v1034
      %v1114 = vpop.permute.xlu0 %1113
      %v1117 = vperm.slane %v1035, 0
      %v1119 = vsub.f32 %v1039, %v1117
      %v1120 = vsub.f32 %v1044, %v1117
      %v1121 = vsub.f32 %v1049, %v1117
      %v1122 = vsub.f32 %v1054, %v1117
      %v1123 = vsub.f32 %v1059, %v1117
      %v1124 = vsub.f32 %v1064, %v1117
      %v1125 = vsub.f32 %v1069, %v1117
      %v1126 = vsub.f32 %v1074, %v1117
      %v1127 = vsub.f32 %v1079, %v1117
      %v1128 = vsub.f32 %v1084, %v1117
      %v1129 = vsub.f32 %v1089, %v1117
      %v1130 = vsub.f32 %v1094, %v1117
      %v1131 = vsub.f32 %v1099, %v1117
      %v1132 = vsub.f32 %v1104, %v1117
      %v1133 = vsub.f32 %v1109, %v1117
      %v1134 = vsub.f32 %v1114, %v1117
      %v1135 = vld [vmem:[%s1] sm:$0xff]
      %v1136 = vld [vmem:[%s1 + $0x8] sm:$0xff]
      %v1137 = vld [vmem:[%s1 + $0x10] sm:$0xff]
      %v1138 = vld [vmem:[%s1 + $0x18] sm:$0xff]
      %v1139 = vld [vmem:[%s1 + $0x20] sm:$0xff]
      %v1140 = vld [vmem:[%s1 + $0x28] sm:$0xff]
      %v1141 = vld [vmem:[%s1 + $0x30] sm:$0xff]
      %v1142 = vld [vmem:[%s1 + $0x38] sm:$0xff]
      %v1143 = vld [vmem:[%s1 + $0x40] sm:$0xff]
      %v1144 = vld [vmem:[%s1 + $0x48] sm:$0xff]
      %v1145 = vld [vmem:[%s1 + $0x50] sm:$0xff]
      %v1146 = vld [vmem:[%s1 + $0x58] sm:$0xff]
      %v1147 = vld [vmem:[%s1 + $0x60] sm:$0xff]
      %v1148 = vld [vmem:[%s1 + $0x68] sm:$0xff]
      %v1149 = vld [vmem:[%s1 + $0x70] sm:$0xff]
      %v1150 = vld [vmem:[%s1 + $0x78] sm:$0xff]
      %v1151 = vld [vmem:[%s658] sm:$0x1]
      %1153 = vset.pattern.permute.xlu0 0
      %1154 = vperm.xlu0 %1153, %v1135
      %v1155 = vpop.permute.xlu0 %1154
      %1158 = vset.pattern.permute.xlu0 0
      %1159 = vperm.xlu0 %1158, %v1136
      %v1160 = vpop.permute.xlu0 %1159
      %1163 = vset.pattern.permute.xlu0 0
      %1164 = vperm.xlu0 %1163, %v1137
      %v1165 = vpop.permute.xlu0 %1164
      %1168 = vset.pattern.permute.xlu0 0
      %1169 = vperm.xlu0 %1168, %v1138
      %v1170 = vpop.permute.xlu0 %1169
      %1173 = vset.pattern.permute.xlu0 0
      %1174 = vperm.xlu0 %1173, %v1139
      %v1175 = vpop.permute.xlu0 %1174
      %1178 = vset.pattern.permute.xlu0 0
      %1179 = vperm.xlu0 %1178, %v1140
      %v1180 = vpop.permute.xlu0 %1179
      %1183 = vset.pattern.permute.xlu0 0
      %1184 = vperm.xlu0 %1183, %v1141
      %v1185 = vpop.permute.xlu0 %1184
      %1188 = vset.pattern.permute.xlu0 0
      %1189 = vperm.xlu0 %1188, %v1142
      %v1190 = vpop.permute.xlu0 %1189
      %1193 = vset.pattern.permute.xlu0 0
      %1194 = vperm.xlu0 %1193, %v1143
      %v1195 = vpop.permute.xlu0 %1194
      %1198 = vset.pattern.permute.xlu0 0
      %1199 = vperm.xlu0 %1198, %v1144
      %v1200 = vpop.permute.xlu0 %1199
      %1203 = vset.pattern.permute.xlu0 0
      %1204 = vperm.xlu0 %1203, %v1145
      %v1205 = vpop.permute.xlu0 %1204
      %1208 = vset.pattern.permute.xlu0 0
      %1209 = vperm.xlu0 %1208, %v1146
      %v1210 = vpop.permute.xlu0 %1209
      %1213 = vset.pattern.permute.xlu0 0
      %1214 = vperm.xlu0 %1213, %v1147
      %v1215 = vpop.permute.xlu0 %1214
      %1218 = vset.pattern.permute.xlu0 0
      %1219 = vperm.xlu0 %1218, %v1148
      %v1220 = vpop.permute.xlu0 %1219
      %1223 = vset.pattern.permute.xlu0 0
      %1224 = vperm.xlu0 %1223, %v1149
      %v1225 = vpop.permute.xlu0 %1224
      %1228 = vset.pattern.permute.xlu0 0
      %1229 = vperm.xlu0 %1228, %v1150
      %v1230 = vpop.permute.xlu0 %1229
      %v1233 = vperm.slane %v1151, 0
      %v1235 = vsub.f32 %v1155, %v1233
      %v1236 = vsub.f32 %v1160, %v1233
      %v1237 = vsub.f32 %v1165, %v1233
      %v1238 = vsub.f32 %v1170, %v1233
      %v1239 = vsub.f32 %v1175, %v1233
      %v1240 = vsub.f32 %v1180, %v1233
      %v1241 = vsub.f32 %v1185, %v1233
      %v1242 = vsub.f32 %v1190, %v1233
      %v1243 = vsub.f32 %v1195, %v1233
      %v1244 = vsub.f32 %v1200, %v1233
      %v1245 = vsub.f32 %v1205, %v1233
      %v1246 = vsub.f32 %v1210, %v1233
      %v1247 = vsub.f32 %v1215, %v1233
      %v1248 = vsub.f32 %v1220, %v1233
      %v1249 = vsub.f32 %v1225, %v1233
      %v1250 = vsub.f32 %v1230, %v1233
      %v1251 = vld [vmem:[%s2] sm:$0xff]
      %v1252 = vld [vmem:[%s2 + $0x8] sm:$0xff]
      %v1253 = vld [vmem:[%s2 + $0x10] sm:$0xff]
      %v1254 = vld [vmem:[%s2 + $0x18] sm:$0xff]
      %v1255 = vld [vmem:[%s2 + $0x20] sm:$0xff]
      %v1256 = vld [vmem:[%s2 + $0x28] sm:$0xff]
      %v1257 = vld [vmem:[%s2 + $0x30] sm:$0xff]
      %v1258 = vld [vmem:[%s2 + $0x38] sm:$0xff]
      %v1259 = vld [vmem:[%s2 + $0x40] sm:$0xff]
      %v1260 = vld [vmem:[%s2 + $0x48] sm:$0xff]
      %v1261 = vld [vmem:[%s2 + $0x50] sm:$0xff]
      %v1262 = vld [vmem:[%s2 + $0x58] sm:$0xff]
      %v1263 = vld [vmem:[%s2 + $0x60] sm:$0xff]
      %v1264 = vld [vmem:[%s2 + $0x68] sm:$0xff]
      %v1265 = vld [vmem:[%s2 + $0x70] sm:$0xff]
      %v1266 = vld [vmem:[%s2 + $0x78] sm:$0xff]
      %v1267 = vld [vmem:[%s661] sm:$0x1]
      %1269 = vset.pattern.permute.xlu0 0
      %1270 = vperm.xlu0 %1269, %v1251
      %v1271 = vpop.permute.xlu0 %1270
      %1274 = vset.pattern.permute.xlu0 0
      %1275 = vperm.xlu0 %1274, %v1252
      %v1276 = vpop.permute.xlu0 %1275
      %1279 = vset.pattern.permute.xlu0 0
      %1280 = vperm.xlu0 %1279, %v1253
      %v1281 = vpop.permute.xlu0 %1280
      %1284 = vset.pattern.permute.xlu0 0
      %1285 = vperm.xlu0 %1284, %v1254
      %v1286 = vpop.permute.xlu0 %1285
      %1289 = vset.pattern.permute.xlu0 0
      %1290 = vperm.xlu0 %1289, %v1255
      %v1291 = vpop.permute.xlu0 %1290
      %1294 = vset.pattern.permute.xlu0 0
      %1295 = vperm.xlu0 %1294, %v1256
      %v1296 = vpop.permute.xlu0 %1295
      %1299 = vset.pattern.permute.xlu0 0
      %1300 = vperm.xlu0 %1299, %v1257
      %v1301 = vpop.permute.xlu0 %1300
      %1304 = vset.pattern.permute.xlu0 0
      %1305 = vperm.xlu0 %1304, %v1258
      %v1306 = vpop.permute.xlu0 %1305
      %1309 = vset.pattern.permute.xlu0 0
      %1310 = vperm.xlu0 %1309, %v1259
      %v1311 = vpop.permute.xlu0 %1310
      %1314 = vset.pattern.permute.xlu0 0
      %1315 = vperm.xlu0 %1314, %v1260
      %v1316 = vpop.permute.xlu0 %1315
      %1319 = vset.pattern.permute.xlu0 0
      %1320 = vperm.xlu0 %1319, %v1261
      %v1321 = vpop.permute.xlu0 %1320
      %1324 = vset.pattern.permute.xlu0 0
      %1325 = vperm.xlu0 %1324, %v1262
      %v1326 = vpop.permute.xlu0 %1325
      %1329 = vset.pattern.permute.xlu0 0
      %1330 = vperm.xlu0 %1329, %v1263
      %v1331 = vpop.permute.xlu0 %1330
      %1334 = vset.pattern.permute.xlu0 0
      %1335 = vperm.xlu0 %1334, %v1264
      %v1336 = vpop.permute.xlu0 %1335
      %1339 = vset.pattern.permute.xlu0 0
      %1340 = vperm.xlu0 %1339, %v1265
      %v1341 = vpop.permute.xlu0 %1340
      %1344 = vset.pattern.permute.xlu0 0
      %1345 = vperm.xlu0 %1344, %v1266
      %v1346 = vpop.permute.xlu0 %1345
      %v1349 = vperm.slane %v1267, 0
      %v1351 = vsub.f32 %v1271, %v1349
      %v1352 = vsub.f32 %v1276, %v1349
      %v1353 = vsub.f32 %v1281, %v1349
      %v1354 = vsub.f32 %v1286, %v1349
      %v1355 = vsub.f32 %v1291, %v1349
      %v1356 = vsub.f32 %v1296, %v1349
      %v1357 = vsub.f32 %v1301, %v1349
      %v1358 = vsub.f32 %v1306, %v1349
      %v1359 = vsub.f32 %v1311, %v1349
      %v1360 = vsub.f32 %v1316, %v1349
      %v1361 = vsub.f32 %v1321, %v1349
      %v1362 = vsub.f32 %v1326, %v1349
      %v1363 = vsub.f32 %v1331, %v1349
      %v1364 = vsub.f32 %v1336, %v1349
      %v1365 = vsub.f32 %v1341, %v1349
      %v1366 = vsub.f32 %v1346, %v1349
      %v1367 = vmul.f32 %v1119, %v1119
      %v1368 = vmul.f32 %v1120, %v1120
      %v1369 = vmul.f32 %v1121, %v1121
      %v1370 = vmul.f32 %v1122, %v1122
      %v1371 = vmul.f32 %v1123, %v1123
      %v1372 = vmul.f32 %v1124, %v1124
      %v1373 = vmul.f32 %v1125, %v1125
      %v1374 = vmul.f32 %v1126, %v1126
      %v1375 = vmul.f32 %v1127, %v1127
      %v1376 = vmul.f32 %v1128, %v1128
      %v1377 = vmul.f32 %v1129, %v1129
      %v1378 = vmul.f32 %v1130, %v1130
      %v1379 = vmul.f32 %v1131, %v1131
      %v1380 = vmul.f32 %v1132, %v1132
      %v1381 = vmul.f32 %v1133, %v1133
      %v1382 = vmul.f32 %v1134, %v1134
      %v1383 = vmul.f32 %v1235, %v1235
      %v1384 = vmul.f32 %v1236, %v1236
      %v1385 = vmul.f32 %v1237, %v1237
      %v1386 = vmul.f32 %v1238, %v1238
      %v1387 = vmul.f32 %v1239, %v1239
      %v1388 = vmul.f32 %v1240, %v1240
      %v1389 = vmul.f32 %v1241, %v1241
      %v1390 = vmul.f32 %v1242, %v1242
      %v1391 = vmul.f32 %v1243, %v1243
      %v1392 = vmul.f32 %v1244, %v1244
      %v1393 = vmul.f32 %v1245, %v1245
      %v1394 = vmul.f32 %v1246, %v1246
      %v1395 = vmul.f32 %v1247, %v1247
      %v1396 = vmul.f32 %v1248, %v1248
      %v1397 = vmul.f32 %v1249, %v1249
      %v1398 = vmul.f32 %v1250, %v1250
      %v1399 = vadd.f32 %v1367, %v1383
      %v1400 = vadd.f32 %v1368, %v1384
      %v1401 = vadd.f32 %v1369, %v1385
      %v1402 = vadd.f32 %v1370, %v1386
      %v1403 = vadd.f32 %v1371, %v1387
      %v1404 = vadd.f32 %v1372, %v1388
      %v1405 = vadd.f32 %v1373, %v1389
      %v1406 = vadd.f32 %v1374, %v1390
      %v1407 = vadd.f32 %v1375, %v1391
      %v1408 = vadd.f32 %v1376, %v1392
      %v1409 = vadd.f32 %v1377, %v1393
      %v1410 = vadd.f32 %v1378, %v1394
      %v1411 = vadd.f32 %v1379, %v1395
      %v1412 = vadd.f32 %v1380, %v1396
      %v1413 = vadd.f32 %v1381, %v1397
      %v1414 = vadd.f32 %v1382, %v1398
      %v1415 = vmul.f32 %v1351, %v1351
      %v1416 = vmul.f32 %v1352, %v1352
      %v1417 = vmul.f32 %v1353, %v1353
      %v1418 = vmul.f32 %v1354, %v1354
      %v1419 = vmul.f32 %v1355, %v1355
      %v1420 = vmul.f32 %v1356, %v1356
      %v1421 = vmul.f32 %v1357, %v1357
      %v1422 = vmul.f32 %v1358, %v1358
      %v1423 = vmul.f32 %v1359, %v1359
      %v1424 = vmul.f32 %v1360, %v1360
      %v1425 = vmul.f32 %v1361, %v1361
      %v1426 = vmul.f32 %v1362, %v1362
      %v1427 = vmul.f32 %v1363, %v1363
      %v1428 = vmul.f32 %v1364, %v1364
      %v1429 = vmul.f32 %v1365, %v1365
      %v1430 = vmul.f32 %v1366, %v1366
      %v1431 = vadd.f32 %v1399, %v1415
      %v1432 = vadd.f32 %v1400, %v1416
      %v1433 = vadd.f32 %v1401, %v1417
      %v1434 = vadd.f32 %v1402, %v1418
      %v1435 = vadd.f32 %v1403, %v1419
      %v1436 = vadd.f32 %v1404, %v1420
      %v1437 = vadd.f32 %v1405, %v1421
      %v1438 = vadd.f32 %v1406, %v1422
      %v1439 = vadd.f32 %v1407, %v1423
      %v1440 = vadd.f32 %v1408, %v1424
      %v1441 = vadd.f32 %v1409, %v1425
      %v1442 = vadd.f32 %v1410, %v1426
      %v1443 = vadd.f32 %v1411, %v1427
      %v1444 = vadd.f32 %v1412, %v1428
      %v1445 = vadd.f32 %v1413, %v1429
      %v1446 = vadd.f32 %v1414, %v1430
      %v1447 = vmax.f32 %v1431, 1e-12
      %v1448 = vmax.f32 %v1432, 1e-12
      %v1449 = vmax.f32 %v1433, 1e-12
      %v1450 = vmax.f32 %v1434, 1e-12
      %v1451 = vmax.f32 %v1435, 1e-12
      %v1452 = vmax.f32 %v1436, 1e-12
      %v1453 = vmax.f32 %v1437, 1e-12
      %v1454 = vmax.f32 %v1438, 1e-12
      %v1455 = vmax.f32 %v1439, 1e-12
      %v1456 = vmax.f32 %v1440, 1e-12
      %v1457 = vmax.f32 %v1441, 1e-12
      %v1458 = vmax.f32 %v1442, 1e-12
      %v1459 = vmax.f32 %v1443, 1e-12
      %v1460 = vmax.f32 %v1444, 1e-12
      %v1461 = vmax.f32 %v1445, 1e-12
      %v1462 = vmax.f32 %v1446, 1e-12
      %v1463 = vrsqrt.pop %v1447
      %v1464 = vmul.f32 %v1463, %v1447
      %v1465 = vmul.f32 %v1464, %v1463
      %v1466 = vmul.f32 0.5, %v1465
      %v1467 = vsub.f32 1.5, %v1466
      %v1468 = vmul.f32 %v1463, %v1467
      %v1469 = vmul.f32 %v1447, %v1468
      %vm1470 = vcmp.eq.f32.partialorder %v1447, inf
      %v1471 = vsel %vm1470, %v1447, %v1469
      %vm1472 = vcmp.eq.f32.partialorder %v1447, 0.0
      %v1473 = vand.u32 %v1447, 2147483648
      %v1474 = vsel %vm1472, %v1473, %v1471
      %v1475 = vrsqrt.pop %v1448
      %v1476 = vmul.f32 %v1475, %v1448
      %v1477 = vmul.f32 %v1476, %v1475
      %v1478 = vmul.f32 0.5, %v1477
      %v1479 = vsub.f32 1.5, %v1478
      %v1480 = vmul.f32 %v1475, %v1479
      %v1481 = vmul.f32 %v1448, %v1480
      %vm1482 = vcmp.eq.f32.partialorder %v1448, inf
      %v1483 = vsel %vm1482, %v1448, %v1481
      %vm1484 = vcmp.eq.f32.partialorder %v1448, 0.0
      %v1485 = vand.u32 %v1448, 2147483648
      %v1486 = vsel %vm1484, %v1485, %v1483
      %v1487 = vrsqrt.pop %v1449
      %v1488 = vmul.f32 %v1487, %v1449
      %v1489 = vmul.f32 %v1488, %v1487
      %v1490 = vmul.f32 0.5, %v1489
      %v1491 = vsub.f32 1.5, %v1490
      %v1492 = vmul.f32 %v1487, %v1491
      %v1493 = vmul.f32 %v1449, %v1492
      %vm1494 = vcmp.eq.f32.partialorder %v1449, inf
      %v1495 = vsel %vm1494, %v1449, %v1493
      %vm1496 = vcmp.eq.f32.partialorder %v1449, 0.0
      %v1497 = vand.u32 %v1449, 2147483648
      %v1498 = vsel %vm1496, %v1497, %v1495
      %v1499 = vrsqrt.pop %v1450
      %v1500 = vmul.f32 %v1499, %v1450
      %v1501 = vmul.f32 %v1500, %v1499
      %v1502 = vmul.f32 0.5, %v1501
      %v1503 = vsub.f32 1.5, %v1502
      %v1504 = vmul.f32 %v1499, %v1503
      %v1505 = vmul.f32 %v1450, %v1504
      %vm1506 = vcmp.eq.f32.partialorder %v1450, inf
      %v1507 = vsel %vm1506, %v1450, %v1505
      %vm1508 = vcmp.eq.f32.partialorder %v1450, 0.0
      %v1509 = vand.u32 %v1450, 2147483648
      %v1510 = vsel %vm1508, %v1509, %v1507
      %v1511 = vrsqrt.pop %v1451
      %v1512 = vmul.f32 %v1511, %v1451
      %v1513 = vmul.f32 %v1512, %v1511
      %v1514 = vmul.f32 0.5, %v1513
      %v1515 = vsub.f32 1.5, %v1514
      %v1516 = vmul.f32 %v1511, %v1515
      %v1517 = vmul.f32 %v1451, %v1516
      %vm1518 = vcmp.eq.f32.partialorder %v1451, inf
      %v1519 = vsel %vm1518, %v1451, %v1517
      %vm1520 = vcmp.eq.f32.partialorder %v1451, 0.0
      %v1521 = vand.u32 %v1451, 2147483648
      %v1522 = vsel %vm1520, %v1521, %v1519
      %v1523 = vrsqrt.pop %v1452
      %v1524 = vmul.f32 %v1523, %v1452
      %v1525 = vmul.f32 %v1524, %v1523
      %v1526 = vmul.f32 0.5, %v1525
      %v1527 = vsub.f32 1.5, %v1526
      %v1528 = vmul.f32 %v1523, %v1527
      %v1529 = vmul.f32 %v1452, %v1528
      %vm1530 = vcmp.eq.f32.partialorder %v1452, inf
      %v1531 = vsel %vm1530, %v1452, %v1529
      %vm1532 = vcmp.eq.f32.partialorder %v1452, 0.0
      %v1533 = vand.u32 %v1452, 2147483648
      %v1534 = vsel %vm1532, %v1533, %v1531
      %v1535 = vrsqrt.pop %v1453
      %v1536 = vmul.f32 %v1535, %v1453
      %v1537 = vmul.f32 %v1536, %v1535
      %v1538 = vmul.f32 0.5, %v1537
      %v1539 = vsub.f32 1.5, %v1538
      %v1540 = vmul.f32 %v1535, %v1539
      %v1541 = vmul.f32 %v1453, %v1540
      %vm1542 = vcmp.eq.f32.partialorder %v1453, inf
      %v1543 = vsel %vm1542, %v1453, %v1541
      %vm1544 = vcmp.eq.f32.partialorder %v1453, 0.0
      %v1545 = vand.u32 %v1453, 2147483648
      %v1546 = vsel %vm1544, %v1545, %v1543
      %v1547 = vrsqrt.pop %v1454
      %v1548 = vmul.f32 %v1547, %v1454
      %v1549 = vmul.f32 %v1548, %v1547
      %v1550 = vmul.f32 0.5, %v1549
      %v1551 = vsub.f32 1.5, %v1550
      %v1552 = vmul.f32 %v1547, %v1551
      %v1553 = vmul.f32 %v1454, %v1552
      %vm1554 = vcmp.eq.f32.partialorder %v1454, inf
      %v1555 = vsel %vm1554, %v1454, %v1553
      %vm1556 = vcmp.eq.f32.partialorder %v1454, 0.0
      %v1557 = vand.u32 %v1454, 2147483648
      %v1558 = vsel %vm1556, %v1557, %v1555
      %v1559 = vrsqrt.pop %v1455
      %v1560 = vmul.f32 %v1559, %v1455
      %v1561 = vmul.f32 %v1560, %v1559
      %v1562 = vmul.f32 0.5, %v1561
      %v1563 = vsub.f32 1.5, %v1562
      %v1564 = vmul.f32 %v1559, %v1563
      %v1565 = vmul.f32 %v1455, %v1564
      %vm1566 = vcmp.eq.f32.partialorder %v1455, inf
      %v1567 = vsel %vm1566, %v1455, %v1565
      %vm1568 = vcmp.eq.f32.partialorder %v1455, 0.0
      %v1569 = vand.u32 %v1455, 2147483648
      %v1570 = vsel %vm1568, %v1569, %v1567
      %v1571 = vrsqrt.pop %v1456
      %v1572 = vmul.f32 %v1571, %v1456
      %v1573 = vmul.f32 %v1572, %v1571
      %v1574 = vmul.f32 0.5, %v1573
      %v1575 = vsub.f32 1.5, %v1574
      %v1576 = vmul.f32 %v1571, %v1575
      %v1577 = vmul.f32 %v1456, %v1576
      %vm1578 = vcmp.eq.f32.partialorder %v1456, inf
      %v1579 = vsel %vm1578, %v1456, %v1577
      %vm1580 = vcmp.eq.f32.partialorder %v1456, 0.0
      %v1581 = vand.u32 %v1456, 2147483648
      %v1582 = vsel %vm1580, %v1581, %v1579
      %v1583 = vrsqrt.pop %v1457
      %v1584 = vmul.f32 %v1583, %v1457
      %v1585 = vmul.f32 %v1584, %v1583
      %v1586 = vmul.f32 0.5, %v1585
      %v1587 = vsub.f32 1.5, %v1586
      %v1588 = vmul.f32 %v1583, %v1587
      %v1589 = vmul.f32 %v1457, %v1588
      %vm1590 = vcmp.eq.f32.partialorder %v1457, inf
      %v1591 = vsel %vm1590, %v1457, %v1589
      %vm1592 = vcmp.eq.f32.partialorder %v1457, 0.0
      %v1593 = vand.u32 %v1457, 2147483648
      %v1594 = vsel %vm1592, %v1593, %v1591
      %v1595 = vrsqrt.pop %v1458
      %v1596 = vmul.f32 %v1595, %v1458
      %v1597 = vmul.f32 %v1596, %v1595
      %v1598 = vmul.f32 0.5, %v1597
      %v1599 = vsub.f32 1.5, %v1598
      %v1600 = vmul.f32 %v1595, %v1599
      %v1601 = vmul.f32 %v1458, %v1600
      %vm1602 = vcmp.eq.f32.partialorder %v1458, inf
      %v1603 = vsel %vm1602, %v1458, %v1601
      %vm1604 = vcmp.eq.f32.partialorder %v1458, 0.0
      %v1605 = vand.u32 %v1458, 2147483648
      %v1606 = vsel %vm1604, %v1605, %v1603
      %v1607 = vrsqrt.pop %v1459
      %v1608 = vmul.f32 %v1607, %v1459
      %v1609 = vmul.f32 %v1608, %v1607
      %v1610 = vmul.f32 0.5, %v1609
      %v1611 = vsub.f32 1.5, %v1610
      %v1612 = vmul.f32 %v1607, %v1611
      %v1613 = vmul.f32 %v1459, %v1612
      %vm1614 = vcmp.eq.f32.partialorder %v1459, inf
      %v1615 = vsel %vm1614, %v1459, %v1613
      %vm1616 = vcmp.eq.f32.partialorder %v1459, 0.0
      %v1617 = vand.u32 %v1459, 2147483648
      %v1618 = vsel %vm1616, %v1617, %v1615
      %v1619 = vrsqrt.pop %v1460
      %v1620 = vmul.f32 %v1619, %v1460
      %v1621 = vmul.f32 %v1620, %v1619
      %v1622 = vmul.f32 0.5, %v1621
      %v1623 = vsub.f32 1.5, %v1622
      %v1624 = vmul.f32 %v1619, %v1623
      %v1625 = vmul.f32 %v1460, %v1624
      %vm1626 = vcmp.eq.f32.partialorder %v1460, inf
      %v1627 = vsel %vm1626, %v1460, %v1625
      %vm1628 = vcmp.eq.f32.partialorder %v1460, 0.0
      %v1629 = vand.u32 %v1460, 2147483648
      %v1630 = vsel %vm1628, %v1629, %v1627
      %v1631 = vrsqrt.pop %v1461
      %v1632 = vmul.f32 %v1631, %v1461
      %v1633 = vmul.f32 %v1632, %v1631
      %v1634 = vmul.f32 0.5, %v1633
      %v1635 = vsub.f32 1.5, %v1634
      %v1636 = vmul.f32 %v1631, %v1635
      %v1637 = vmul.f32 %v1461, %v1636
      %vm1638 = vcmp.eq.f32.partialorder %v1461, inf
      %v1639 = vsel %vm1638, %v1461, %v1637
      %vm1640 = vcmp.eq.f32.partialorder %v1461, 0.0
      %v1641 = vand.u32 %v1461, 2147483648
      %v1642 = vsel %vm1640, %v1641, %v1639
      %v1643 = vrsqrt.pop %v1462
      %v1644 = vmul.f32 %v1643, %v1462
      %v1645 = vmul.f32 %v1644, %v1643
      %v1646 = vmul.f32 0.5, %v1645
      %v1647 = vsub.f32 1.5, %v1646
      %v1648 = vmul.f32 %v1643, %v1647
      %v1649 = vmul.f32 %v1462, %v1648
      %vm1650 = vcmp.eq.f32.partialorder %v1462, inf
      %v1651 = vsel %vm1650, %v1462, %v1649
      %vm1652 = vcmp.eq.f32.partialorder %v1462, 0.0
      %v1653 = vand.u32 %v1462, 2147483648
      %v1654 = vsel %vm1652, %v1653, %v1651
      %v1655 = vlaneseq
      %v1656 = vshrl.u32 %v1655, 7
      %v1657 = vadd.s32 %v1656, 8
      %v1658 = vadd.s32 %v1656, 16
      %v1659 = vadd.s32 %v1656, 24
      %v1660 = vadd.s32 %v1656, 32
      %v1661 = vadd.s32 %v1656, 40
      %v1662 = vadd.s32 %v1656, 48
      %v1663 = vadd.s32 %v1656, 56
      %v1664 = vadd.s32 %v1656, 64
      %v1665 = vadd.s32 %v1656, 72
      %v1666 = vadd.s32 %v1656, 80
      %v1667 = vadd.s32 %v1656, 88
      %v1668 = vadd.s32 %v1656, 96
      %v1669 = vadd.s32 %v1656, 104
      %v1670 = vadd.s32 %v1656, 112
      %v1671 = vadd.s32 %v1656, 120
      %v1672 = vlaneseq
      %v1673 = vand.u32 %v1672, 127
      %s1674 = smul.u32 %s34, 128
      %v1675 = vstv %s1674
      %v1676 = vadd.s32 %v1673, %v1675
      %v1677 = vld [vmem:[%s6] sm:$0xff]
      %v1678 = vld [vmem:[%s6 + $0x8] sm:$0xff]
      %v1679 = vld [vmem:[%s6 + $0x10] sm:$0xff]
      %v1680 = vld [vmem:[%s6 + $0x18] sm:$0xff]
      %v1681 = vld [vmem:[%s6 + $0x20] sm:$0xff]
      %v1682 = vld [vmem:[%s6 + $0x28] sm:$0xff]
      %v1683 = vld [vmem:[%s6 + $0x30] sm:$0xff]
      %v1684 = vld [vmem:[%s6 + $0x38] sm:$0xff]
      %v1685 = vld [vmem:[%s6 + $0x40] sm:$0xff]
      %v1686 = vld [vmem:[%s6 + $0x48] sm:$0xff]
      %v1687 = vld [vmem:[%s6 + $0x50] sm:$0xff]
      %v1688 = vld [vmem:[%s6 + $0x58] sm:$0xff]
      %v1689 = vld [vmem:[%s6 + $0x60] sm:$0xff]
      %v1690 = vld [vmem:[%s6 + $0x68] sm:$0xff]
      %v1691 = vld [vmem:[%s6 + $0x70] sm:$0xff]
      %v1692 = vld [vmem:[%s6 + $0x78] sm:$0xff]
      %v1693 = vld [vmem:[%s664] sm:$0x1]
      %1695 = vset.pattern.permute.xlu0 0
      %1696 = vperm.xlu0 %1695, %v1677
      %v1697 = vpop.permute.xlu0 %1696
      %1700 = vset.pattern.permute.xlu0 0
      %1701 = vperm.xlu0 %1700, %v1678
      %v1702 = vpop.permute.xlu0 %1701
      %1705 = vset.pattern.permute.xlu0 0
      %1706 = vperm.xlu0 %1705, %v1679
      %v1707 = vpop.permute.xlu0 %1706
      %1710 = vset.pattern.permute.xlu0 0
      %1711 = vperm.xlu0 %1710, %v1680
      %v1712 = vpop.permute.xlu0 %1711
      %1715 = vset.pattern.permute.xlu0 0
      %1716 = vperm.xlu0 %1715, %v1681
      %v1717 = vpop.permute.xlu0 %1716
      %1720 = vset.pattern.permute.xlu0 0
      %1721 = vperm.xlu0 %1720, %v1682
      %v1722 = vpop.permute.xlu0 %1721
      %1725 = vset.pattern.permute.xlu0 0
      %1726 = vperm.xlu0 %1725, %v1683
      %v1727 = vpop.permute.xlu0 %1726
      %1730 = vset.pattern.permute.xlu0 0
      %1731 = vperm.xlu0 %1730, %v1684
      %v1732 = vpop.permute.xlu0 %1731
      %1735 = vset.pattern.permute.xlu0 0
      %1736 = vperm.xlu0 %1735, %v1685
      %v1737 = vpop.permute.xlu0 %1736
      %1740 = vset.pattern.permute.xlu0 0
      %1741 = vperm.xlu0 %1740, %v1686
      %v1742 = vpop.permute.xlu0 %1741
      %1745 = vset.pattern.permute.xlu0 0
      %1746 = vperm.xlu0 %1745, %v1687
      %v1747 = vpop.permute.xlu0 %1746
      %1750 = vset.pattern.permute.xlu0 0
      %1751 = vperm.xlu0 %1750, %v1688
      %v1752 = vpop.permute.xlu0 %1751
      %1755 = vset.pattern.permute.xlu0 0
      %1756 = vperm.xlu0 %1755, %v1689
      %v1757 = vpop.permute.xlu0 %1756
      %1760 = vset.pattern.permute.xlu0 0
      %1761 = vperm.xlu0 %1760, %v1690
      %v1762 = vpop.permute.xlu0 %1761
      %1765 = vset.pattern.permute.xlu0 0
      %1766 = vperm.xlu0 %1765, %v1691
      %v1767 = vpop.permute.xlu0 %1766
      %1770 = vset.pattern.permute.xlu0 0
      %1771 = vperm.xlu0 %1770, %v1692
      %v1772 = vpop.permute.xlu0 %1771
      %v1775 = vperm.slane %v1693, 0
      %vm1777 = vcmp.eq.f32.partialorder %v1697, %v1775
      %vm1778 = vcmp.eq.f32.partialorder %v1702, %v1775
      %vm1779 = vcmp.eq.f32.partialorder %v1707, %v1775
      %vm1780 = vcmp.eq.f32.partialorder %v1712, %v1775
      %vm1781 = vcmp.eq.f32.partialorder %v1717, %v1775
      %vm1782 = vcmp.eq.f32.partialorder %v1722, %v1775
      %vm1783 = vcmp.eq.f32.partialorder %v1727, %v1775
      %vm1784 = vcmp.eq.f32.partialorder %v1732, %v1775
      %vm1785 = vcmp.eq.f32.partialorder %v1737, %v1775
      %vm1786 = vcmp.eq.f32.partialorder %v1742, %v1775
      %vm1787 = vcmp.eq.f32.partialorder %v1747, %v1775
      %vm1788 = vcmp.eq.f32.partialorder %v1752, %v1775
      %vm1789 = vcmp.eq.f32.partialorder %v1757, %v1775
      %vm1790 = vcmp.eq.f32.partialorder %v1762, %v1775
      %vm1791 = vcmp.eq.f32.partialorder %v1767, %v1775
      %vm1792 = vcmp.eq.f32.partialorder %v1772, %v1775
      %vm1793 = vcmp.lt.f32.partialorder %v1474, 5.0
      %vm1794 = vcmp.lt.f32.partialorder %v1486, 5.0
      %vm1795 = vcmp.lt.f32.partialorder %v1498, 5.0
      %vm1796 = vcmp.lt.f32.partialorder %v1510, 5.0
      %vm1797 = vcmp.lt.f32.partialorder %v1522, 5.0
      %vm1798 = vcmp.lt.f32.partialorder %v1534, 5.0
      %vm1799 = vcmp.lt.f32.partialorder %v1546, 5.0
      %vm1800 = vcmp.lt.f32.partialorder %v1558, 5.0
      %vm1801 = vcmp.lt.f32.partialorder %v1570, 5.0
      %vm1802 = vcmp.lt.f32.partialorder %v1582, 5.0
      %vm1803 = vcmp.lt.f32.partialorder %v1594, 5.0
      %vm1804 = vcmp.lt.f32.partialorder %v1606, 5.0
      %vm1805 = vcmp.lt.f32.partialorder %v1618, 5.0
      %vm1806 = vcmp.lt.f32.partialorder %v1630, 5.0
      %vm1807 = vcmp.lt.f32.partialorder %v1642, 5.0
      %vm1808 = vcmp.lt.f32.partialorder %v1654, 5.0
      %vm1809 = vmand %vm1793, %vm1777
      %vm1810 = vmand %vm1794, %vm1778
      %vm1811 = vmand %vm1795, %vm1779
      %vm1812 = vmand %vm1796, %vm1780
      %vm1813 = vmand %vm1797, %vm1781
      %vm1814 = vmand %vm1798, %vm1782
      %vm1815 = vmand %vm1799, %vm1783
      %vm1816 = vmand %vm1800, %vm1784
      %vm1817 = vmand %vm1801, %vm1785
      %vm1818 = vmand %vm1802, %vm1786
      %vm1819 = vmand %vm1803, %vm1787
      %vm1820 = vmand %vm1804, %vm1788
      %vm1821 = vmand %vm1805, %vm1789
      %vm1822 = vmand %vm1806, %vm1790
      %vm1823 = vmand %vm1807, %vm1791
      %vm1824 = vmand %vm1808, %vm1792
      %vm1825 = vcmp.ne.s32.totalorder %v1656, %v1676
      %vm1826 = vcmp.ne.s32.totalorder %v1657, %v1676
      %vm1827 = vcmp.ne.s32.totalorder %v1658, %v1676
      %vm1828 = vcmp.ne.s32.totalorder %v1659, %v1676
      %vm1829 = vcmp.ne.s32.totalorder %v1660, %v1676
      %vm1830 = vcmp.ne.s32.totalorder %v1661, %v1676
      %vm1831 = vcmp.ne.s32.totalorder %v1662, %v1676
      %vm1832 = vcmp.ne.s32.totalorder %v1663, %v1676
      %vm1833 = vcmp.ne.s32.totalorder %v1664, %v1676
      %vm1834 = vcmp.ne.s32.totalorder %v1665, %v1676
      %vm1835 = vcmp.ne.s32.totalorder %v1666, %v1676
      %vm1836 = vcmp.ne.s32.totalorder %v1667, %v1676
      %vm1837 = vcmp.ne.s32.totalorder %v1668, %v1676
      %vm1838 = vcmp.ne.s32.totalorder %v1669, %v1676
      %vm1839 = vcmp.ne.s32.totalorder %v1670, %v1676
      %vm1840 = vcmp.ne.s32.totalorder %v1671, %v1676
      %vm1841 = vmand %vm1809, %vm1825
      %vm1842 = vmand %vm1810, %vm1826
      %vm1843 = vmand %vm1811, %vm1827
      %vm1844 = vmand %vm1812, %vm1828
      %vm1845 = vmand %vm1813, %vm1829
      %vm1846 = vmand %vm1814, %vm1830
      %vm1847 = vmand %vm1815, %vm1831
      %vm1848 = vmand %vm1816, %vm1832
      %vm1849 = vmand %vm1817, %vm1833
      %vm1850 = vmand %vm1818, %vm1834
      %vm1851 = vmand %vm1819, %vm1835
      %vm1852 = vmand %vm1820, %vm1836
      %vm1853 = vmand %vm1821, %vm1837
      %vm1854 = vmand %vm1822, %vm1838
      %vm1855 = vmand %vm1823, %vm1839
      %vm1856 = vmand %vm1824, %vm1840
      %v1857 = vmul.f32 %v1474, 0.62831855
      %v1858 = vmul.f32 %v1486, 0.62831855
      %v1859 = vmul.f32 %v1498, 0.62831855
      %v1860 = vmul.f32 %v1510, 0.62831855
      %v1861 = vmul.f32 %v1522, 0.62831855
      %v1862 = vmul.f32 %v1534, 0.62831855
      %v1863 = vmul.f32 %v1546, 0.62831855
      %v1864 = vmul.f32 %v1558, 0.62831855
      %v1865 = vmul.f32 %v1570, 0.62831855
      %v1866 = vmul.f32 %v1582, 0.62831855
      %v1867 = vmul.f32 %v1594, 0.62831855
      %v1868 = vmul.f32 %v1606, 0.62831855
      %v1869 = vmul.f32 %v1618, 0.62831855
      %v1870 = vmul.f32 %v1630, 0.62831855
      %v1871 = vmul.f32 %v1642, 0.62831855
      %v1872 = vmul.f32 %v1654, 0.62831855
      %v1873 = vand.u32 2147483647, %v1857
      %vm1874 = vcmp.le.f32.partialorder %v1873, 0.7853982
      %vm1875 = vcmp.lt.s32.totalorder %v1857, 0
      %v1876 = vand.u32 %v1857, 2139095040
      %v1877 = vshrl.u32 %v1876, 23
      %v1878 = vsub.s32 %v1877, 127
      %v1879 = vand.u32 2147483647, %v1857
      %v1880 = vand.u32 %v1879, 8388607
      %v1881 = vor.u32 %v1880, 8388608
      %v1882 = vsub.s32 0, %v1881
      %v1883 = vadd.s32 %v1878, 1
      %vm1884 = vcmp.gt.s32.totalorder %v1883, 0
      %v1885 = vsel %vm1884, %v1883, 0
      %v1886 = vshrl.u32 %v1885, 5
      %v1887 = vand.u32 %v1885, 31
      %v1888 = vsub.s32 32, %v1887
      %v1889 = vshrl.u32 683565275, %v1888
      %v1890 = vshll.u32 683565275, %v1887
      %v1891 = vshrl.u32 2475754826, %v1888
      %v1892 = vor.u32 %v1890, %v1891
      %v1893 = vshll.u32 2475754826, %v1887
      %v1894 = vshrl.u32 2131351028, %v1888
      %v1895 = vor.u32 %v1893, %v1894
      %v1896 = vshll.u32 2131351028, %v1887
      %v1897 = vshrl.u32 2102212464, %v1888
      %v1898 = vor.u32 %v1896, %v1897
      %v1899 = vshll.u32 2102212464, %v1887
      %v1900 = vshrl.u32 920167782, %v1888
      %v1901 = vor.u32 %v1899, %v1900
      %v1902 = vshll.u32 920167782, %v1887
      %v1903 = vshrl.u32 1326507024, %v1888
      %v1904 = vor.u32 %v1902, %v1903
      %vm1905 = vcmp.lt.s32.totalorder %v1886, 1
      %vm1906 = vcmp.lt.s32.totalorder %v1886, 2
      %vm1907 = vcmp.lt.s32.totalorder %v1886, 3
      %vm1908 = vcmp.lt.s32.totalorder %v1886, 4
      %v1909 = vsel %vm1905, %v1889, %v1892
      %v1910 = vsel %vm1908, %v1898, 2102212464
      %v1911 = vsel %vm1907, %v1895, %v1910
      %v1912 = vsel %vm1906, %v1909, %v1911
      %v1913 = vsel %vm1905, %v1892, %v1895
      %v1914 = vsel %vm1908, %v1901, 920167782
      %v1915 = vsel %vm1907, %v1898, %v1914
      %v1916 = vsel %vm1906, %v1913, %v1915
      %v1917 = vsel %vm1905, %v1895, %v1898
      %v1918 = vsel %vm1908, %v1904, 1326507024
      %v1919 = vsel %vm1907, %v1901, %v1918
      %v1920 = vsel %vm1906, %v1917, %v1919
      %v1921 = vshll.u32 %v1881, 8
      %v1922 = vand.u32 %v1921, 65535
      %v1923 = vshrl.u32 %v1921, 16
      %v1924 = vand.u32 %v1920, 65535
      %v1925 = vshrl.u32 %v1920, 16
      %v1926 = vmul.u32 %v1922, %v1924
      %v1927 = vmul.u32 %v1922, %v1925
      %v1928 = vmul.u32 %v1923, %v1924
      %v1929 = vmul.u32 %v1923, %v1925
      %v1930 = vshll.u32 %v1927, 16
      %v1931 = vshrl.u32 %v1927, 16
      %v1932 = vshll.u32 %v1928, 16
      %v1933 = vshrl.u32 %v1928, 16
      %vm1934 = vc.u32 %v1926, %v1930
      %v1935 = vsel %vm1934, 1, 0
      %v1936 = vadd.s32 %v1926, %v1930
      %v1937 = vadd.s32 %v1929, %v1935
      %vm1938 = vc.u32 %v1936, %v1932
      %v1939 = vsel %vm1938, 1, 0
      %v1940 = vadd.s32 %v1936, %v1932
      %v1941 = vadd.s32 %v1937, %v1939
      %v1942 = vadd.s32 %v1941, %v1931
      %v1943 = vadd.s32 %v1942, %v1933
      %v1944 = vand.u32 %v1921, 65535
      %v1945 = vshrl.u32 %v1921, 16
      %v1946 = vand.u32 %v1916, 65535
      %v1947 = vshrl.u32 %v1916, 16
      %v1948 = vmul.u32 %v1944, %v1946
      %v1949 = vmul.u32 %v1944, %v1947
      %v1950 = vmul.u32 %v1945, %v1946
      %v1951 = vmul.u32 %v1945, %v1947
      %v1952 = vshll.u32 %v1949, 16
      %v1953 = vshrl.u32 %v1949, 16
      %v1954 = vshll.u32 %v1950, 16
      %v1955 = vshrl.u32 %v1950, 16
      %vm1956 = vc.u32 %v1948, %v1952
      %v1957 = vsel %vm1956, 1, 0
      %v1958 = vadd.s32 %v1948, %v1952
      %v1959 = vadd.s32 %v1951, %v1957
      %vm1960 = vc.u32 %v1958, %v1954
      %v1961 = vsel %vm1960, 1, 0
      %v1962 = vadd.s32 %v1958, %v1954
      %v1963 = vadd.s32 %v1959, %v1961
      %v1964 = vadd.s32 %v1963, %v1953
      %v1965 = vadd.s32 %v1964, %v1955
      %v1966 = vmul.u32 %v1921, %v1912
      %v1967 = vadd.s32 %v1943, %v1962
      %vm1968 = vc.u32 %v1943, %v1962
      %v1969 = vadd.s32 %v1965, 1
      %v1970 = vsel %vm1968, %v1969, %v1965
      %v1971 = vadd.s32 %v1966, %v1970
      %v1972 = vadd.s32 %v1971, 536870912
      %v1973 = vshrl.u32 %v1972, 30
      %v1974 = vshll.u32 %v1973, 30
      %v1975 = vsub.s32 %v1971, %v1974
      %vm1976 = vcmp.lt.s32.totalorder %v1975, 0
      %v1977 = vsub.s32 0, %v1975
      %v1978 = vsel %vm1976, %v1977, %v1975
      %v1979 = vclz %v1978
      %v1980 = vsub.s32 %v1979, 2
      %vm1981 = vcmp.gt.s32.totalorder 0, %v1980
      %v1982 = vsel %vm1981, 0, %v1980
      %v1983 = vsub.s32 32, %v1982
      %v1984 = vshll.u32 %v1975, %v1982
      %v1985 = vshrl.u32 %v1967, %v1983
      %v1986 = vor.u32 %v1984, %v1985
      %v1987 = vsub.s32 4294967266, %v1982
      %v1988 = vadd.s32 %v1987, 127
      %v1989 = vshll.u32 %v1988, 23
      %v1990 = vor.u32 4788187, %v1989
      %v1991 = vand.u32 2147483647, %v1990
      %v1993 = vcvt.s32.f32 %v1986
      %v1994 = vmul.f32 %v1993, %v1991
      %v1995 = vxor.u32 %v1994, 2147483648
      %v1996 = vsel %vm1875, %v1995, %v1994
      %v1997 = vsub.s32 4, %v1973
      %v1998 = vsel %vm1875, %v1997, %v1973
      %v1999 = vsel %vm1874, %v1857, %v1996
      %v2000 = vsel %vm1874, 0, %v1998
      %v2001 = vmul.f32 %v1999, %v1999
      %v2002 = vmul.f32 %v2001, -0.001358992
      %v2003 = vadd.f32 %v2002, 0.041655596
      %v2004 = vmul.f32 %v2001, %v2003
      %v2005 = vadd.f32 %v2004, -0.4999988
      %v2006 = vmul.f32 %v2001, %v2005
      %v2007 = vadd.f32 1.0, %v2006
      %v2008 = vmul.f32 %v1999, %v1999
      %v2009 = vmul.f32 %v2008, -0.00019511016
      %v2010 = vadd.f32 %v2009, 0.008332121
      %v2011 = vmul.f32 %v2008, %v2010
      %v2012 = vadd.f32 %v2011, -0.16666654
      %v2013 = vmul.f32 %v2008, %v2012
      %v2014 = vadd.f32 %v2013, 1.0
      %v2015 = vmul.f32 %v2014, %v1999
      %vm2016 = vweird.f32 %v1857
      %v2017 = vand.u32 %v2000, 3
      %vm2018 = vcmp.lt.s32.totalorder %v2017, 2
      %vm2019 = vcmp.eq.s32.totalorder %v2017, 0
      %v2020 = vxor.u32 %v2015, 2147483648
      %v2021 = vsel %vm2019, %v2007, %v2020
      %vm2022 = vcmp.eq.s32.totalorder %v2017, 2
      %v2023 = vxor.u32 %v2007, 2147483648
      %v2024 = vsel %vm2022, %v2023, %v2015
      %v2025 = vsel %vm2018, %v2021, %v2024
      %v2026 = vsel %vm2016, nan, %v2025
      %v2027 = vand.u32 2147483647, %v1858
      %vm2028 = vcmp.le.f32.partialorder %v2027, 0.7853982
      %vm2029 = vcmp.lt.s32.totalorder %v1858, 0
      %v2030 = vand.u32 %v1858, 2139095040
      %v2031 = vshrl.u32 %v2030, 23
      %v2032 = vsub.s32 %v2031, 127
      %v2033 = vand.u32 2147483647, %v1858
      %v2034 = vand.u32 %v2033, 8388607
      %v2035 = vor.u32 %v2034, 8388608
      %v2036 = vsub.s32 0, %v2035
      %v2037 = vadd.s32 %v2032, 1
      %vm2038 = vcmp.gt.s32.totalorder %v2037, 0
      %v2039 = vsel %vm2038, %v2037, 0
      %v2040 = vshrl.u32 %v2039, 5
      %v2041 = vand.u32 %v2039, 31
      %v2042 = vsub.s32 32, %v2041
      %v2043 = vshrl.u32 683565275, %v2042
      %v2044 = vshll.u32 683565275, %v2041
      %v2045 = vshrl.u32 2475754826, %v2042
      %v2046 = vor.u32 %v2044, %v2045
      %v2047 = vshll.u32 2475754826, %v2041
      %v2048 = vshrl.u32 2131351028, %v2042
      %v2049 = vor.u32 %v2047, %v2048
      %v2050 = vshll.u32 2131351028, %v2041
      %v2051 = vshrl.u32 2102212464, %v2042
      %v2052 = vor.u32 %v2050, %v2051
      %v2053 = vshll.u32 2102212464, %v2041
      %v2054 = vshrl.u32 920167782, %v2042
      %v2055 = vor.u32 %v2053, %v2054
      %v2056 = vshll.u32 920167782, %v2041
      %v2057 = vshrl.u32 1326507024, %v2042
      %v2058 = vor.u32 %v2056, %v2057
      %vm2059 = vcmp.lt.s32.totalorder %v2040, 1
      %vm2060 = vcmp.lt.s32.totalorder %v2040, 2
      %vm2061 = vcmp.lt.s32.totalorder %v2040, 3
      %vm2062 = vcmp.lt.s32.totalorder %v2040, 4
      %v2063 = vsel %vm2059, %v2043, %v2046
      %v2064 = vsel %vm2062, %v2052, 2102212464
      %v2065 = vsel %vm2061, %v2049, %v2064
      %v2066 = vsel %vm2060, %v2063, %v2065
      %v2067 = vsel %vm2059, %v2046, %v2049
      %v2068 = vsel %vm2062, %v2055, 920167782
      %v2069 = vsel %vm2061, %v2052, %v2068
      %v2070 = vsel %vm2060, %v2067, %v2069
      %v2071 = vsel %vm2059, %v2049, %v2052
      %v2072 = vsel %vm2062, %v2058, 1326507024
      %v2073 = vsel %vm2061, %v2055, %v2072
      %v2074 = vsel %vm2060, %v2071, %v2073
      %v2075 = vshll.u32 %v2035, 8
      %v2076 = vand.u32 %v2075, 65535
      %v2077 = vshrl.u32 %v2075, 16
      %v2078 = vand.u32 %v2074, 65535
      %v2079 = vshrl.u32 %v2074, 16
      %v2080 = vmul.u32 %v2076, %v2078
      %v2081 = vmul.u32 %v2076, %v2079
      %v2082 = vmul.u32 %v2077, %v2078
      %v2083 = vmul.u32 %v2077, %v2079
      %v2084 = vshll.u32 %v2081, 16
      %v2085 = vshrl.u32 %v2081, 16
      %v2086 = vshll.u32 %v2082, 16
      %v2087 = vshrl.u32 %v2082, 16
      %vm2088 = vc.u32 %v2080, %v2084
      %v2089 = vsel %vm2088, 1, 0
      %v2090 = vadd.s32 %v2080, %v2084
      %v2091 = vadd.s32 %v2083, %v2089
      %vm2092 = vc.u32 %v2090, %v2086
      %v2093 = vsel %vm2092, 1, 0
      %v2094 = vadd.s32 %v2090, %v2086
      %v2095 = vadd.s32 %v2091, %v2093
      %v2096 = vadd.s32 %v2095, %v2085
      %v2097 = vadd.s32 %v2096, %v2087
      %v2098 = vand.u32 %v2075, 65535
      %v2099 = vshrl.u32 %v2075, 16
      %v2100 = vand.u32 %v2070, 65535
      %v2101 = vshrl.u32 %v2070, 16
      %v2102 = vmul.u32 %v2098, %v2100
      %v2103 = vmul.u32 %v2098, %v2101
      %v2104 = vmul.u32 %v2099, %v2100
      %v2105 = vmul.u32 %v2099, %v2101
      %v2106 = vshll.u32 %v2103, 16
      %v2107 = vshrl.u32 %v2103, 16
      %v2108 = vshll.u32 %v2104, 16
      %v2109 = vshrl.u32 %v2104, 16
      %vm2110 = vc.u32 %v2102, %v2106
      %v2111 = vsel %vm2110, 1, 0
      %v2112 = vadd.s32 %v2102, %v2106
      %v2113 = vadd.s32 %v2105, %v2111
      %vm2114 = vc.u32 %v2112, %v2108
      %v2115 = vsel %vm2114, 1, 0
      %v2116 = vadd.s32 %v2112, %v2108
      %v2117 = vadd.s32 %v2113, %v2115
      %v2118 = vadd.s32 %v2117, %v2107
      %v2119 = vadd.s32 %v2118, %v2109
      %v2120 = vmul.u32 %v2075, %v2066
      %v2121 = vadd.s32 %v2097, %v2116
      %vm2122 = vc.u32 %v2097, %v2116
      %v2123 = vadd.s32 %v2119, 1
      %v2124 = vsel %vm2122, %v2123, %v2119
      %v2125 = vadd.s32 %v2120, %v2124
      %v2126 = vadd.s32 %v2125, 536870912
      %v2127 = vshrl.u32 %v2126, 30
      %v2128 = vshll.u32 %v2127, 30
      %v2129 = vsub.s32 %v2125, %v2128
      %vm2130 = vcmp.lt.s32.totalorder %v2129, 0
      %v2131 = vsub.s32 0, %v2129
      %v2132 = vsel %vm2130, %v2131, %v2129
      %v2133 = vclz %v2132
      %v2134 = vsub.s32 %v2133, 2
      %vm2135 = vcmp.gt.s32.totalorder 0, %v2134
      %v2136 = vsel %vm2135, 0, %v2134
      %v2137 = vsub.s32 32, %v2136
      %v2138 = vshll.u32 %v2129, %v2136
      %v2139 = vshrl.u32 %v2121, %v2137
      %v2140 = vor.u32 %v2138, %v2139
      %v2141 = vsub.s32 4294967266, %v2136
      %v2142 = vadd.s32 %v2141, 127
      %v2143 = vshll.u32 %v2142, 23
      %v2144 = vor.u32 4788187, %v2143
      %v2145 = vand.u32 2147483647, %v2144
      %v2147 = vcvt.s32.f32 %v2140
      %v2148 = vmul.f32 %v2147, %v2145
      %v2149 = vxor.u32 %v2148, 2147483648
      %v2150 = vsel %vm2029, %v2149, %v2148
      %v2151 = vsub.s32 4, %v2127
      %v2152 = vsel %vm2029, %v2151, %v2127
      %v2153 = vsel %vm2028, %v1858, %v2150
      %v2154 = vsel %vm2028, 0, %v2152
      %v2155 = vmul.f32 %v2153, %v2153
      %v2156 = vmul.f32 %v2155, -0.001358992
      %v2157 = vadd.f32 %v2156, 0.041655596
      %v2158 = vmul.f32 %v2155, %v2157
      %v2159 = vadd.f32 %v2158, -0.4999988
      %v2160 = vmul.f32 %v2155, %v2159
      %v2161 = vadd.f32 1.0, %v2160
      %v2162 = vmul.f32 %v2153, %v2153
      %v2163 = vmul.f32 %v2162, -0.00019511016
      %v2164 = vadd.f32 %v2163, 0.008332121
      %v2165 = vmul.f32 %v2162, %v2164
      %v2166 = vadd.f32 %v2165, -0.16666654
      %v2167 = vmul.f32 %v2162, %v2166
      %v2168 = vadd.f32 %v2167, 1.0
      %v2169 = vmul.f32 %v2168, %v2153
      %vm2170 = vweird.f32 %v1858
      %v2171 = vand.u32 %v2154, 3
      %vm2172 = vcmp.lt.s32.totalorder %v2171, 2
      %vm2173 = vcmp.eq.s32.totalorder %v2171, 0
      %v2174 = vxor.u32 %v2169, 2147483648
      %v2175 = vsel %vm2173, %v2161, %v2174
      %vm2176 = vcmp.eq.s32.totalorder %v2171, 2
      %v2177 = vxor.u32 %v2161, 2147483648
      %v2178 = vsel %vm2176, %v2177, %v2169
      %v2179 = vsel %vm2172, %v2175, %v2178
      %v2180 = vsel %vm2170, nan, %v2179
      %v2181 = vand.u32 2147483647, %v1859
      %vm2182 = vcmp.le.f32.partialorder %v2181, 0.7853982
      %vm2183 = vcmp.lt.s32.totalorder %v1859, 0
      %v2184 = vand.u32 %v1859, 2139095040
      %v2185 = vshrl.u32 %v2184, 23
      %v2186 = vsub.s32 %v2185, 127
      %v2187 = vand.u32 2147483647, %v1859
      %v2188 = vand.u32 %v2187, 8388607
      %v2189 = vor.u32 %v2188, 8388608
      %v2190 = vsub.s32 0, %v2189
      %v2191 = vadd.s32 %v2186, 1
      %vm2192 = vcmp.gt.s32.totalorder %v2191, 0
      %v2193 = vsel %vm2192, %v2191, 0
      %v2194 = vshrl.u32 %v2193, 5
      %v2195 = vand.u32 %v2193, 31
      %v2196 = vsub.s32 32, %v2195
      %v2197 = vshrl.u32 683565275, %v2196
      %v2198 = vshll.u32 683565275, %v2195
      %v2199 = vshrl.u32 2475754826, %v2196
      %v2200 = vor.u32 %v2198, %v2199
      %v2201 = vshll.u32 2475754826, %v2195
      %v2202 = vshrl.u32 2131351028, %v2196
      %v2203 = vor.u32 %v2201, %v2202
      %v2204 = vshll.u32 2131351028, %v2195
      %v2205 = vshrl.u32 2102212464, %v2196
      %v2206 = vor.u32 %v2204, %v2205
      %v2207 = vshll.u32 2102212464, %v2195
      %v2208 = vshrl.u32 920167782, %v2196
      %v2209 = vor.u32 %v2207, %v2208
      %v2210 = vshll.u32 920167782, %v2195
      %v2211 = vshrl.u32 1326507024, %v2196
      %v2212 = vor.u32 %v2210, %v2211
      %vm2213 = vcmp.lt.s32.totalorder %v2194, 1
      %vm2214 = vcmp.lt.s32.totalorder %v2194, 2
      %vm2215 = vcmp.lt.s32.totalorder %v2194, 3
      %vm2216 = vcmp.lt.s32.totalorder %v2194, 4
      %v2217 = vsel %vm2213, %v2197, %v2200
      %v2218 = vsel %vm2216, %v2206, 2102212464
      %v2219 = vsel %vm2215, %v2203, %v2218
      %v2220 = vsel %vm2214, %v2217, %v2219
      %v2221 = vsel %vm2213, %v2200, %v2203
      %v2222 = vsel %vm2216, %v2209, 920167782
      %v2223 = vsel %vm2215, %v2206, %v2222
      %v2224 = vsel %vm2214, %v2221, %v2223
      %v2225 = vsel %vm2213, %v2203, %v2206
      %v2226 = vsel %vm2216, %v2212, 1326507024
      %v2227 = vsel %vm2215, %v2209, %v2226
      %v2228 = vsel %vm2214, %v2225, %v2227
      %v2229 = vshll.u32 %v2189, 8
      %v2230 = vand.u32 %v2229, 65535
      %v2231 = vshrl.u32 %v2229, 16
      %v2232 = vand.u32 %v2228, 65535
      %v2233 = vshrl.u32 %v2228, 16
      %v2234 = vmul.u32 %v2230, %v2232
      %v2235 = vmul.u32 %v2230, %v2233
      %v2236 = vmul.u32 %v2231, %v2232
      %v2237 = vmul.u32 %v2231, %v2233
      %v2238 = vshll.u32 %v2235, 16
      %v2239 = vshrl.u32 %v2235, 16
      %v2240 = vshll.u32 %v2236, 16
      %v2241 = vshrl.u32 %v2236, 16
      %vm2242 = vc.u32 %v2234, %v2238
      %v2243 = vsel %vm2242, 1, 0
      %v2244 = vadd.s32 %v2234, %v2238
      %v2245 = vadd.s32 %v2237, %v2243
      %vm2246 = vc.u32 %v2244, %v2240
      %v2247 = vsel %vm2246, 1, 0
      %v2248 = vadd.s32 %v2244, %v2240
      %v2249 = vadd.s32 %v2245, %v2247
      %v2250 = vadd.s32 %v2249, %v2239
      %v2251 = vadd.s32 %v2250, %v2241
      %v2252 = vand.u32 %v2229, 65535
      %v2253 = vshrl.u32 %v2229, 16
      %v2254 = vand.u32 %v2224, 65535
      %v2255 = vshrl.u32 %v2224, 16
      %v2256 = vmul.u32 %v2252, %v2254
      %v2257 = vmul.u32 %v2252, %v2255
      %v2258 = vmul.u32 %v2253, %v2254
      %v2259 = vmul.u32 %v2253, %v2255
      %v2260 = vshll.u32 %v2257, 16
      %v2261 = vshrl.u32 %v2257, 16
      %v2262 = vshll.u32 %v2258, 16
      %v2263 = vshrl.u32 %v2258, 16
      %vm2264 = vc.u32 %v2256, %v2260
      %v2265 = vsel %vm2264, 1, 0
      %v2266 = vadd.s32 %v2256, %v2260
      %v2267 = vadd.s32 %v2259, %v2265
      %vm2268 = vc.u32 %v2266, %v2262
      %v2269 = vsel %vm2268, 1, 0
      %v2270 = vadd.s32 %v2266, %v2262
      %v2271 = vadd.s32 %v2267, %v2269
      %v2272 = vadd.s32 %v2271, %v2261
      %v2273 = vadd.s32 %v2272, %v2263
      %v2274 = vmul.u32 %v2229, %v2220
      %v2275 = vadd.s32 %v2251, %v2270
      %vm2276 = vc.u32 %v2251, %v2270
      %v2277 = vadd.s32 %v2273, 1
      %v2278 = vsel %vm2276, %v2277, %v2273
      %v2279 = vadd.s32 %v2274, %v2278
      %v2280 = vadd.s32 %v2279, 536870912
      %v2281 = vshrl.u32 %v2280, 30
      %v2282 = vshll.u32 %v2281, 30
      %v2283 = vsub.s32 %v2279, %v2282
      %vm2284 = vcmp.lt.s32.totalorder %v2283, 0
      %v2285 = vsub.s32 0, %v2283
      %v2286 = vsel %vm2284, %v2285, %v2283
      %v2287 = vclz %v2286
      %v2288 = vsub.s32 %v2287, 2
      %vm2289 = vcmp.gt.s32.totalorder 0, %v2288
      %v2290 = vsel %vm2289, 0, %v2288
      %v2291 = vsub.s32 32, %v2290
      %v2292 = vshll.u32 %v2283, %v2290
      %v2293 = vshrl.u32 %v2275, %v2291
      %v2294 = vor.u32 %v2292, %v2293
      %v2295 = vsub.s32 4294967266, %v2290
      %v2296 = vadd.s32 %v2295, 127
      %v2297 = vshll.u32 %v2296, 23
      %v2298 = vor.u32 4788187, %v2297
      %v2299 = vand.u32 2147483647, %v2298
      %v2301 = vcvt.s32.f32 %v2294
      %v2302 = vmul.f32 %v2301, %v2299
      %v2303 = vxor.u32 %v2302, 2147483648
      %v2304 = vsel %vm2183, %v2303, %v2302
      %v2305 = vsub.s32 4, %v2281
      %v2306 = vsel %vm2183, %v2305, %v2281
      %v2307 = vsel %vm2182, %v1859, %v2304
      %v2308 = vsel %vm2182, 0, %v2306
      %v2309 = vmul.f32 %v2307, %v2307
      %v2310 = vmul.f32 %v2309, -0.001358992
      %v2311 = vadd.f32 %v2310, 0.041655596
      %v2312 = vmul.f32 %v2309, %v2311
      %v2313 = vadd.f32 %v2312, -0.4999988
      %v2314 = vmul.f32 %v2309, %v2313
      %v2315 = vadd.f32 1.0, %v2314
      %v2316 = vmul.f32 %v2307, %v2307
      %v2317 = vmul.f32 %v2316, -0.00019511016
      %v2318 = vadd.f32 %v2317, 0.008332121
      %v2319 = vmul.f32 %v2316, %v2318
      %v2320 = vadd.f32 %v2319, -0.16666654
      %v2321 = vmul.f32 %v2316, %v2320
      %v2322 = vadd.f32 %v2321, 1.0
      %v2323 = vmul.f32 %v2322, %v2307
      %vm2324 = vweird.f32 %v1859
      %v2325 = vand.u32 %v2308, 3
      %vm2326 = vcmp.lt.s32.totalorder %v2325, 2
      %vm2327 = vcmp.eq.s32.totalorder %v2325, 0
      %v2328 = vxor.u32 %v2323, 2147483648
      %v2329 = vsel %vm2327, %v2315, %v2328
      %vm2330 = vcmp.eq.s32.totalorder %v2325, 2
      %v2331 = vxor.u32 %v2315, 2147483648
      %v2332 = vsel %vm2330, %v2331, %v2323
      %v2333 = vsel %vm2326, %v2329, %v2332
      %v2334 = vsel %vm2324, nan, %v2333
      %v2335 = vand.u32 2147483647, %v1860
      %vm2336 = vcmp.le.f32.partialorder %v2335, 0.7853982
      %vm2337 = vcmp.lt.s32.totalorder %v1860, 0
      %v2338 = vand.u32 %v1860, 2139095040
      %v2339 = vshrl.u32 %v2338, 23
      %v2340 = vsub.s32 %v2339, 127
      %v2341 = vand.u32 2147483647, %v1860
      %v2342 = vand.u32 %v2341, 8388607
      %v2343 = vor.u32 %v2342, 8388608
      %v2344 = vsub.s32 0, %v2343
      %v2345 = vadd.s32 %v2340, 1
      %vm2346 = vcmp.gt.s32.totalorder %v2345, 0
      %v2347 = vsel %vm2346, %v2345, 0
      %v2348 = vshrl.u32 %v2347, 5
      %v2349 = vand.u32 %v2347, 31
      %v2350 = vsub.s32 32, %v2349
      %v2351 = vshrl.u32 683565275, %v2350
      %v2352 = vshll.u32 683565275, %v2349
      %v2353 = vshrl.u32 2475754826, %v2350
      %v2354 = vor.u32 %v2352, %v2353
      %v2355 = vshll.u32 2475754826, %v2349
      %v2356 = vshrl.u32 2131351028, %v2350
      %v2357 = vor.u32 %v2355, %v2356
      %v2358 = vshll.u32 2131351028, %v2349
      %v2359 = vshrl.u32 2102212464, %v2350
      %v2360 = vor.u32 %v2358, %v2359
      %v2361 = vshll.u32 2102212464, %v2349
      %v2362 = vshrl.u32 920167782, %v2350
      %v2363 = vor.u32 %v2361, %v2362
      %v2364 = vshll.u32 920167782, %v2349
      %v2365 = vshrl.u32 1326507024, %v2350
      %v2366 = vor.u32 %v2364, %v2365
      %vm2367 = vcmp.lt.s32.totalorder %v2348, 1
      %vm2368 = vcmp.lt.s32.totalorder %v2348, 2
      %vm2369 = vcmp.lt.s32.totalorder %v2348, 3
      %vm2370 = vcmp.lt.s32.totalorder %v2348, 4
      %v2371 = vsel %vm2367, %v2351, %v2354
      %v2372 = vsel %vm2370, %v2360, 2102212464
      %v2373 = vsel %vm2369, %v2357, %v2372
      %v2374 = vsel %vm2368, %v2371, %v2373
      %v2375 = vsel %vm2367, %v2354, %v2357
      %v2376 = vsel %vm2370, %v2363, 920167782
      %v2377 = vsel %vm2369, %v2360, %v2376
      %v2378 = vsel %vm2368, %v2375, %v2377
      %v2379 = vsel %vm2367, %v2357, %v2360
      %v2380 = vsel %vm2370, %v2366, 1326507024
      %v2381 = vsel %vm2369, %v2363, %v2380
      %v2382 = vsel %vm2368, %v2379, %v2381
      %v2383 = vshll.u32 %v2343, 8
      %v2384 = vand.u32 %v2383, 65535
      %v2385 = vshrl.u32 %v2383, 16
      %v2386 = vand.u32 %v2382, 65535
      %v2387 = vshrl.u32 %v2382, 16
      %v2388 = vmul.u32 %v2384, %v2386
      %v2389 = vmul.u32 %v2384, %v2387
      %v2390 = vmul.u32 %v2385, %v2386
      %v2391 = vmul.u32 %v2385, %v2387
      %v2392 = vshll.u32 %v2389, 16
      %v2393 = vshrl.u32 %v2389, 16
      %v2394 = vshll.u32 %v2390, 16
      %v2395 = vshrl.u32 %v2390, 16
      %vm2396 = vc.u32 %v2388, %v2392
      %v2397 = vsel %vm2396, 1, 0
      %v2398 = vadd.s32 %v2388, %v2392
      %v2399 = vadd.s32 %v2391, %v2397
      %vm2400 = vc.u32 %v2398, %v2394
      %v2401 = vsel %vm2400, 1, 0
      %v2402 = vadd.s32 %v2398, %v2394
      %v2403 = vadd.s32 %v2399, %v2401
      %v2404 = vadd.s32 %v2403, %v2393
      %v2405 = vadd.s32 %v2404, %v2395
      %v2406 = vand.u32 %v2383, 65535
      %v2407 = vshrl.u32 %v2383, 16
      %v2408 = vand.u32 %v2378, 65535
      %v2409 = vshrl.u32 %v2378, 16
      %v2410 = vmul.u32 %v2406, %v2408
      %v2411 = vmul.u32 %v2406, %v2409
      %v2412 = vmul.u32 %v2407, %v2408
      %v2413 = vmul.u32 %v2407, %v2409
      %v2414 = vshll.u32 %v2411, 16
      %v2415 = vshrl.u32 %v2411, 16
      %v2416 = vshll.u32 %v2412, 16
      %v2417 = vshrl.u32 %v2412, 16
      %vm2418 = vc.u32 %v2410, %v2414
      %v2419 = vsel %vm2418, 1, 0
      %v2420 = vadd.s32 %v2410, %v2414
      %v2421 = vadd.s32 %v2413, %v2419
      %vm2422 = vc.u32 %v2420, %v2416
      %v2423 = vsel %vm2422, 1, 0
      %v2424 = vadd.s32 %v2420, %v2416
      %v2425 = vadd.s32 %v2421, %v2423
      %v2426 = vadd.s32 %v2425, %v2415
      %v2427 = vadd.s32 %v2426, %v2417
      %v2428 = vmul.u32 %v2383, %v2374
      %v2429 = vadd.s32 %v2405, %v2424
      %vm2430 = vc.u32 %v2405, %v2424
      %v2431 = vadd.s32 %v2427, 1
      %v2432 = vsel %vm2430, %v2431, %v2427
      %v2433 = vadd.s32 %v2428, %v2432
      %v2434 = vadd.s32 %v2433, 536870912
      %v2435 = vshrl.u32 %v2434, 30
      %v2436 = vshll.u32 %v2435, 30
      %v2437 = vsub.s32 %v2433, %v2436
      %vm2438 = vcmp.lt.s32.totalorder %v2437, 0
      %v2439 = vsub.s32 0, %v2437
      %v2440 = vsel %vm2438, %v2439, %v2437
      %v2441 = vclz %v2440
      %v2442 = vsub.s32 %v2441, 2
      %vm2443 = vcmp.gt.s32.totalorder 0, %v2442
      %v2444 = vsel %vm2443, 0, %v2442
      %v2445 = vsub.s32 32, %v2444
      %v2446 = vshll.u32 %v2437, %v2444
      %v2447 = vshrl.u32 %v2429, %v2445
      %v2448 = vor.u32 %v2446, %v2447
      %v2449 = vsub.s32 4294967266, %v2444
      %v2450 = vadd.s32 %v2449, 127
      %v2451 = vshll.u32 %v2450, 23
      %v2452 = vor.u32 4788187, %v2451
      %v2453 = vand.u32 2147483647, %v2452
      %v2455 = vcvt.s32.f32 %v2448
      %v2456 = vmul.f32 %v2455, %v2453
      %v2457 = vxor.u32 %v2456, 2147483648
      %v2458 = vsel %vm2337, %v2457, %v2456
      %v2459 = vsub.s32 4, %v2435
      %v2460 = vsel %vm2337, %v2459, %v2435
      %v2461 = vsel %vm2336, %v1860, %v2458
      %v2462 = vsel %vm2336, 0, %v2460
      %v2463 = vmul.f32 %v2461, %v2461
      %v2464 = vmul.f32 %v2463, -0.001358992
      %v2465 = vadd.f32 %v2464, 0.041655596
      %v2466 = vmul.f32 %v2463, %v2465
      %v2467 = vadd.f32 %v2466, -0.4999988
      %v2468 = vmul.f32 %v2463, %v2467
      %v2469 = vadd.f32 1.0, %v2468
      %v2470 = vmul.f32 %v2461, %v2461
      %v2471 = vmul.f32 %v2470, -0.00019511016
      %v2472 = vadd.f32 %v2471, 0.008332121
      %v2473 = vmul.f32 %v2470, %v2472
      %v2474 = vadd.f32 %v2473, -0.16666654
      %v2475 = vmul.f32 %v2470, %v2474
      %v2476 = vadd.f32 %v2475, 1.0
      %v2477 = vmul.f32 %v2476, %v2461
      %vm2478 = vweird.f32 %v1860
      %v2479 = vand.u32 %v2462, 3
      %vm2480 = vcmp.lt.s32.totalorder %v2479, 2
      %vm2481 = vcmp.eq.s32.totalorder %v2479, 0
      %v2482 = vxor.u32 %v2477, 2147483648
      %v2483 = vsel %vm2481, %v2469, %v2482
      %vm2484 = vcmp.eq.s32.totalorder %v2479, 2
      %v2485 = vxor.u32 %v2469, 2147483648
      %v2486 = vsel %vm2484, %v2485, %v2477
      %v2487 = vsel %vm2480, %v2483, %v2486
      %v2488 = vsel %vm2478, nan, %v2487
      %v2489 = vand.u32 2147483647, %v1861
      %vm2490 = vcmp.le.f32.partialorder %v2489, 0.7853982
      %vm2491 = vcmp.lt.s32.totalorder %v1861, 0
      %v2492 = vand.u32 %v1861, 2139095040
      %v2493 = vshrl.u32 %v2492, 23
      %v2494 = vsub.s32 %v2493, 127
      %v2495 = vand.u32 2147483647, %v1861
      %v2496 = vand.u32 %v2495, 8388607
      %v2497 = vor.u32 %v2496, 8388608
      %v2498 = vsub.s32 0, %v2497
      %v2499 = vadd.s32 %v2494, 1
      %vm2500 = vcmp.gt.s32.totalorder %v2499, 0
      %v2501 = vsel %vm2500, %v2499, 0
      %v2502 = vshrl.u32 %v2501, 5
      %v2503 = vand.u32 %v2501, 31
      %v2504 = vsub.s32 32, %v2503
      %v2505 = vshrl.u32 683565275, %v2504
      %v2506 = vshll.u32 683565275, %v2503
      %v2507 = vshrl.u32 2475754826, %v2504
      %v2508 = vor.u32 %v2506, %v2507
      %v2509 = vshll.u32 2475754826, %v2503
      %v2510 = vshrl.u32 2131351028, %v2504
      %v2511 = vor.u32 %v2509, %v2510
      %v2512 = vshll.u32 2131351028, %v2503
      %v2513 = vshrl.u32 2102212464, %v2504
      %v2514 = vor.u32 %v2512, %v2513
      %v2515 = vshll.u32 2102212464, %v2503
      %v2516 = vshrl.u32 920167782, %v2504
      %v2517 = vor.u32 %v2515, %v2516
      %v2518 = vshll.u32 920167782, %v2503
      %v2519 = vshrl.u32 1326507024, %v2504
      %v2520 = vor.u32 %v2518, %v2519
      %vm2521 = vcmp.lt.s32.totalorder %v2502, 1
      %vm2522 = vcmp.lt.s32.totalorder %v2502, 2
      %vm2523 = vcmp.lt.s32.totalorder %v2502, 3
      %vm2524 = vcmp.lt.s32.totalorder %v2502, 4
      %v2525 = vsel %vm2521, %v2505, %v2508
      %v2526 = vsel %vm2524, %v2514, 2102212464
      %v2527 = vsel %vm2523, %v2511, %v2526
      %v2528 = vsel %vm2522, %v2525, %v2527
      %v2529 = vsel %vm2521, %v2508, %v2511
      %v2530 = vsel %vm2524, %v2517, 920167782
      %v2531 = vsel %vm2523, %v2514, %v2530
      %v2532 = vsel %vm2522, %v2529, %v2531
      %v2533 = vsel %vm2521, %v2511, %v2514
      %v2534 = vsel %vm2524, %v2520, 1326507024
      %v2535 = vsel %vm2523, %v2517, %v2534
      %v2536 = vsel %vm2522, %v2533, %v2535
      %v2537 = vshll.u32 %v2497, 8
      %v2538 = vand.u32 %v2537, 65535
      %v2539 = vshrl.u32 %v2537, 16
      %v2540 = vand.u32 %v2536, 65535
      %v2541 = vshrl.u32 %v2536, 16
      %v2542 = vmul.u32 %v2538, %v2540
      %v2543 = vmul.u32 %v2538, %v2541
      %v2544 = vmul.u32 %v2539, %v2540
      %v2545 = vmul.u32 %v2539, %v2541
      %v2546 = vshll.u32 %v2543, 16
      %v2547 = vshrl.u32 %v2543, 16
      %v2548 = vshll.u32 %v2544, 16
      %v2549 = vshrl.u32 %v2544, 16
      %vm2550 = vc.u32 %v2542, %v2546
      %v2551 = vsel %vm2550, 1, 0
      %v2552 = vadd.s32 %v2542, %v2546
      %v2553 = vadd.s32 %v2545, %v2551
      %vm2554 = vc.u32 %v2552, %v2548
      %v2555 = vsel %vm2554, 1, 0
      %v2556 = vadd.s32 %v2552, %v2548
      %v2557 = vadd.s32 %v2553, %v2555
      %v2558 = vadd.s32 %v2557, %v2547
      %v2559 = vadd.s32 %v2558, %v2549
      %v2560 = vand.u32 %v2537, 65535
      %v2561 = vshrl.u32 %v2537, 16
      %v2562 = vand.u32 %v2532, 65535
      %v2563 = vshrl.u32 %v2532, 16
      %v2564 = vmul.u32 %v2560, %v2562
      %v2565 = vmul.u32 %v2560, %v2563
      %v2566 = vmul.u32 %v2561, %v2562
      %v2567 = vmul.u32 %v2561, %v2563
      %v2568 = vshll.u32 %v2565, 16
      %v2569 = vshrl.u32 %v2565, 16
      %v2570 = vshll.u32 %v2566, 16
      %v2571 = vshrl.u32 %v2566, 16
      %vm2572 = vc.u32 %v2564, %v2568
      %v2573 = vsel %vm2572, 1, 0
      %v2574 = vadd.s32 %v2564, %v2568
      %v2575 = vadd.s32 %v2567, %v2573
      %vm2576 = vc.u32 %v2574, %v2570
      %v2577 = vsel %vm2576, 1, 0
      %v2578 = vadd.s32 %v2574, %v2570
      %v2579 = vadd.s32 %v2575, %v2577
      %v2580 = vadd.s32 %v2579, %v2569
      %v2581 = vadd.s32 %v2580, %v2571
      %v2582 = vmul.u32 %v2537, %v2528
      %v2583 = vadd.s32 %v2559, %v2578
      %vm2584 = vc.u32 %v2559, %v2578
      %v2585 = vadd.s32 %v2581, 1
      %v2586 = vsel %vm2584, %v2585, %v2581
      %v2587 = vadd.s32 %v2582, %v2586
      %v2588 = vadd.s32 %v2587, 536870912
      %v2589 = vshrl.u32 %v2588, 30
      %v2590 = vshll.u32 %v2589, 30
      %v2591 = vsub.s32 %v2587, %v2590
      %vm2592 = vcmp.lt.s32.totalorder %v2591, 0
      %v2593 = vsub.s32 0, %v2591
      %v2594 = vsel %vm2592, %v2593, %v2591
      %v2595 = vclz %v2594
      %v2596 = vsub.s32 %v2595, 2
      %vm2597 = vcmp.gt.s32.totalorder 0, %v2596
      %v2598 = vsel %vm2597, 0, %v2596
      %v2599 = vsub.s32 32, %v2598
      %v2600 = vshll.u32 %v2591, %v2598
      %v2601 = vshrl.u32 %v2583, %v2599
      %v2602 = vor.u32 %v2600, %v2601
      %v2603 = vsub.s32 4294967266, %v2598
      %v2604 = vadd.s32 %v2603, 127
      %v2605 = vshll.u32 %v2604, 23
      %v2606 = vor.u32 4788187, %v2605
      %v2607 = vand.u32 2147483647, %v2606
      %v2609 = vcvt.s32.f32 %v2602
      %v2610 = vmul.f32 %v2609, %v2607
      %v2611 = vxor.u32 %v2610, 2147483648
      %v2612 = vsel %vm2491, %v2611, %v2610
      %v2613 = vsub.s32 4, %v2589
      %v2614 = vsel %vm2491, %v2613, %v2589
      %v2615 = vsel %vm2490, %v1861, %v2612
      %v2616 = vsel %vm2490, 0, %v2614
      %v2617 = vmul.f32 %v2615, %v2615
      %v2618 = vmul.f32 %v2617, -0.001358992
      %v2619 = vadd.f32 %v2618, 0.041655596
      %v2620 = vmul.f32 %v2617, %v2619
      %v2621 = vadd.f32 %v2620, -0.4999988
      %v2622 = vmul.f32 %v2617, %v2621
      %v2623 = vadd.f32 1.0, %v2622
      %v2624 = vmul.f32 %v2615, %v2615
      %v2625 = vmul.f32 %v2624, -0.00019511016
      %v2626 = vadd.f32 %v2625, 0.008332121
      %v2627 = vmul.f32 %v2624, %v2626
      %v2628 = vadd.f32 %v2627, -0.16666654
      %v2629 = vmul.f32 %v2624, %v2628
      %v2630 = vadd.f32 %v2629, 1.0
      %v2631 = vmul.f32 %v2630, %v2615
      %vm2632 = vweird.f32 %v1861
      %v2633 = vand.u32 %v2616, 3
      %vm2634 = vcmp.lt.s32.totalorder %v2633, 2
      %vm2635 = vcmp.eq.s32.totalorder %v2633, 0
      %v2636 = vxor.u32 %v2631, 2147483648
      %v2637 = vsel %vm2635, %v2623, %v2636
      %vm2638 = vcmp.eq.s32.totalorder %v2633, 2
      %v2639 = vxor.u32 %v2623, 2147483648
      %v2640 = vsel %vm2638, %v2639, %v2631
      %v2641 = vsel %vm2634, %v2637, %v2640
      %v2642 = vsel %vm2632, nan, %v2641
      %v2643 = vand.u32 2147483647, %v1862
      %vm2644 = vcmp.le.f32.partialorder %v2643, 0.7853982
      %vm2645 = vcmp.lt.s32.totalorder %v1862, 0
      %v2646 = vand.u32 %v1862, 2139095040
      %v2647 = vshrl.u32 %v2646, 23
      %v2648 = vsub.s32 %v2647, 127
      %v2649 = vand.u32 2147483647, %v1862
      %v2650 = vand.u32 %v2649, 8388607
      %v2651 = vor.u32 %v2650, 8388608
      %v2652 = vsub.s32 0, %v2651
      %v2653 = vadd.s32 %v2648, 1
      %vm2654 = vcmp.gt.s32.totalorder %v2653, 0
      %v2655 = vsel %vm2654, %v2653, 0
      %v2656 = vshrl.u32 %v2655, 5
      %v2657 = vand.u32 %v2655, 31
      %v2658 = vsub.s32 32, %v2657
      %v2659 = vshrl.u32 683565275, %v2658
      %v2660 = vshll.u32 683565275, %v2657
      %v2661 = vshrl.u32 2475754826, %v2658
      %v2662 = vor.u32 %v2660, %v2661
      %v2663 = vshll.u32 2475754826, %v2657
      %v2664 = vshrl.u32 2131351028, %v2658
      %v2665 = vor.u32 %v2663, %v2664
      %v2666 = vshll.u32 2131351028, %v2657
      %v2667 = vshrl.u32 2102212464, %v2658
      %v2668 = vor.u32 %v2666, %v2667
      %v2669 = vshll.u32 2102212464, %v2657
      %v2670 = vshrl.u32 920167782, %v2658
      %v2671 = vor.u32 %v2669, %v2670
      %v2672 = vshll.u32 920167782, %v2657
      %v2673 = vshrl.u32 1326507024, %v2658
      %v2674 = vor.u32 %v2672, %v2673
      %vm2675 = vcmp.lt.s32.totalorder %v2656, 1
      %vm2676 = vcmp.lt.s32.totalorder %v2656, 2
      %vm2677 = vcmp.lt.s32.totalorder %v2656, 3
      %vm2678 = vcmp.lt.s32.totalorder %v2656, 4
      %v2679 = vsel %vm2675, %v2659, %v2662
      %v2680 = vsel %vm2678, %v2668, 2102212464
      %v2681 = vsel %vm2677, %v2665, %v2680
      %v2682 = vsel %vm2676, %v2679, %v2681
      %v2683 = vsel %vm2675, %v2662, %v2665
      %v2684 = vsel %vm2678, %v2671, 920167782
      %v2685 = vsel %vm2677, %v2668, %v2684
      %v2686 = vsel %vm2676, %v2683, %v2685
      %v2687 = vsel %vm2675, %v2665, %v2668
      %v2688 = vsel %vm2678, %v2674, 1326507024
      %v2689 = vsel %vm2677, %v2671, %v2688
      %v2690 = vsel %vm2676, %v2687, %v2689
      %v2691 = vshll.u32 %v2651, 8
      %v2692 = vand.u32 %v2691, 65535
      %v2693 = vshrl.u32 %v2691, 16
      %v2694 = vand.u32 %v2690, 65535
      %v2695 = vshrl.u32 %v2690, 16
      %v2696 = vmul.u32 %v2692, %v2694
      %v2697 = vmul.u32 %v2692, %v2695
      %v2698 = vmul.u32 %v2693, %v2694
      %v2699 = vmul.u32 %v2693, %v2695
      %v2700 = vshll.u32 %v2697, 16
      %v2701 = vshrl.u32 %v2697, 16
      %v2702 = vshll.u32 %v2698, 16
      %v2703 = vshrl.u32 %v2698, 16
      %vm2704 = vc.u32 %v2696, %v2700
      %v2705 = vsel %vm2704, 1, 0
      %v2706 = vadd.s32 %v2696, %v2700
      %v2707 = vadd.s32 %v2699, %v2705
      %vm2708 = vc.u32 %v2706, %v2702
      %v2709 = vsel %vm2708, 1, 0
      %v2710 = vadd.s32 %v2706, %v2702
      %v2711 = vadd.s32 %v2707, %v2709
      %v2712 = vadd.s32 %v2711, %v2701
      %v2713 = vadd.s32 %v2712, %v2703
      %v2714 = vand.u32 %v2691, 65535
      %v2715 = vshrl.u32 %v2691, 16
      %v2716 = vand.u32 %v2686, 65535
      %v2717 = vshrl.u32 %v2686, 16
      %v2718 = vmul.u32 %v2714, %v2716
      %v2719 = vmul.u32 %v2714, %v2717
      %v2720 = vmul.u32 %v2715, %v2716
      %v2721 = vmul.u32 %v2715, %v2717
      %v2722 = vshll.u32 %v2719, 16
      %v2723 = vshrl.u32 %v2719, 16
      %v2724 = vshll.u32 %v2720, 16
      %v2725 = vshrl.u32 %v2720, 16
      %vm2726 = vc.u32 %v2718, %v2722
      %v2727 = vsel %vm2726, 1, 0
      %v2728 = vadd.s32 %v2718, %v2722
      %v2729 = vadd.s32 %v2721, %v2727
      %vm2730 = vc.u32 %v2728, %v2724
      %v2731 = vsel %vm2730, 1, 0
      %v2732 = vadd.s32 %v2728, %v2724
      %v2733 = vadd.s32 %v2729, %v2731
      %v2734 = vadd.s32 %v2733, %v2723
      %v2735 = vadd.s32 %v2734, %v2725
      %v2736 = vmul.u32 %v2691, %v2682
      %v2737 = vadd.s32 %v2713, %v2732
      %vm2738 = vc.u32 %v2713, %v2732
      %v2739 = vadd.s32 %v2735, 1
      %v2740 = vsel %vm2738, %v2739, %v2735
      %v2741 = vadd.s32 %v2736, %v2740
      %v2742 = vadd.s32 %v2741, 536870912
      %v2743 = vshrl.u32 %v2742, 30
      %v2744 = vshll.u32 %v2743, 30
      %v2745 = vsub.s32 %v2741, %v2744
      %vm2746 = vcmp.lt.s32.totalorder %v2745, 0
      %v2747 = vsub.s32 0, %v2745
      %v2748 = vsel %vm2746, %v2747, %v2745
      %v2749 = vclz %v2748
      %v2750 = vsub.s32 %v2749, 2
      %vm2751 = vcmp.gt.s32.totalorder 0, %v2750
      %v2752 = vsel %vm2751, 0, %v2750
      %v2753 = vsub.s32 32, %v2752
      %v2754 = vshll.u32 %v2745, %v2752
      %v2755 = vshrl.u32 %v2737, %v2753
      %v2756 = vor.u32 %v2754, %v2755
      %v2757 = vsub.s32 4294967266, %v2752
      %v2758 = vadd.s32 %v2757, 127
      %v2759 = vshll.u32 %v2758, 23
      %v2760 = vor.u32 4788187, %v2759
      %v2761 = vand.u32 2147483647, %v2760
      %v2763 = vcvt.s32.f32 %v2756
      %v2764 = vmul.f32 %v2763, %v2761
      %v2765 = vxor.u32 %v2764, 2147483648
      %v2766 = vsel %vm2645, %v2765, %v2764
      %v2767 = vsub.s32 4, %v2743
      %v2768 = vsel %vm2645, %v2767, %v2743
      %v2769 = vsel %vm2644, %v1862, %v2766
      %v2770 = vsel %vm2644, 0, %v2768
      %v2771 = vmul.f32 %v2769, %v2769
      %v2772 = vmul.f32 %v2771, -0.001358992
      %v2773 = vadd.f32 %v2772, 0.041655596
      %v2774 = vmul.f32 %v2771, %v2773
      %v2775 = vadd.f32 %v2774, -0.4999988
      %v2776 = vmul.f32 %v2771, %v2775
      %v2777 = vadd.f32 1.0, %v2776
      %v2778 = vmul.f32 %v2769, %v2769
      %v2779 = vmul.f32 %v2778, -0.00019511016
      %v2780 = vadd.f32 %v2779, 0.008332121
      %v2781 = vmul.f32 %v2778, %v2780
      %v2782 = vadd.f32 %v2781, -0.16666654
      %v2783 = vmul.f32 %v2778, %v2782
      %v2784 = vadd.f32 %v2783, 1.0
      %v2785 = vmul.f32 %v2784, %v2769
      %vm2786 = vweird.f32 %v1862
      %v2787 = vand.u32 %v2770, 3
      %vm2788 = vcmp.lt.s32.totalorder %v2787, 2
      %vm2789 = vcmp.eq.s32.totalorder %v2787, 0
      %v2790 = vxor.u32 %v2785, 2147483648
      %v2791 = vsel %vm2789, %v2777, %v2790
      %vm2792 = vcmp.eq.s32.totalorder %v2787, 2
      %v2793 = vxor.u32 %v2777, 2147483648
      %v2794 = vsel %vm2792, %v2793, %v2785
      %v2795 = vsel %vm2788, %v2791, %v2794
      %v2796 = vsel %vm2786, nan, %v2795
      %v2797 = vand.u32 2147483647, %v1863
      %vm2798 = vcmp.le.f32.partialorder %v2797, 0.7853982
      %vm2799 = vcmp.lt.s32.totalorder %v1863, 0
      %v2800 = vand.u32 %v1863, 2139095040
      %v2801 = vshrl.u32 %v2800, 23
      %v2802 = vsub.s32 %v2801, 127
      %v2803 = vand.u32 2147483647, %v1863
      %v2804 = vand.u32 %v2803, 8388607
      %v2805 = vor.u32 %v2804, 8388608
      %v2806 = vsub.s32 0, %v2805
      %v2807 = vadd.s32 %v2802, 1
      %vm2808 = vcmp.gt.s32.totalorder %v2807, 0
      %v2809 = vsel %vm2808, %v2807, 0
      %v2810 = vshrl.u32 %v2809, 5
      %v2811 = vand.u32 %v2809, 31
      %v2812 = vsub.s32 32, %v2811
      %v2813 = vshrl.u32 683565275, %v2812
      %v2814 = vshll.u32 683565275, %v2811
      %v2815 = vshrl.u32 2475754826, %v2812
      %v2816 = vor.u32 %v2814, %v2815
      %v2817 = vshll.u32 2475754826, %v2811
      %v2818 = vshrl.u32 2131351028, %v2812
      %v2819 = vor.u32 %v2817, %v2818
      %v2820 = vshll.u32 2131351028, %v2811
      %v2821 = vshrl.u32 2102212464, %v2812
      %v2822 = vor.u32 %v2820, %v2821
      %v2823 = vshll.u32 2102212464, %v2811
      %v2824 = vshrl.u32 920167782, %v2812
      %v2825 = vor.u32 %v2823, %v2824
      %v2826 = vshll.u32 920167782, %v2811
      %v2827 = vshrl.u32 1326507024, %v2812
      %v2828 = vor.u32 %v2826, %v2827
      %vm2829 = vcmp.lt.s32.totalorder %v2810, 1
      %vm2830 = vcmp.lt.s32.totalorder %v2810, 2
      %vm2831 = vcmp.lt.s32.totalorder %v2810, 3
      %vm2832 = vcmp.lt.s32.totalorder %v2810, 4
      %v2833 = vsel %vm2829, %v2813, %v2816
      %v2834 = vsel %vm2832, %v2822, 2102212464
      %v2835 = vsel %vm2831, %v2819, %v2834
      %v2836 = vsel %vm2830, %v2833, %v2835
      %v2837 = vsel %vm2829, %v2816, %v2819
      %v2838 = vsel %vm2832, %v2825, 920167782
      %v2839 = vsel %vm2831, %v2822, %v2838
      %v2840 = vsel %vm2830, %v2837, %v2839
      %v2841 = vsel %vm2829, %v2819, %v2822
      %v2842 = vsel %vm2832, %v2828, 1326507024
      %v2843 = vsel %vm2831, %v2825, %v2842
      %v2844 = vsel %vm2830, %v2841, %v2843
      %v2845 = vshll.u32 %v2805, 8
      %v2846 = vand.u32 %v2845, 65535
      %v2847 = vshrl.u32 %v2845, 16
      %v2848 = vand.u32 %v2844, 65535
      %v2849 = vshrl.u32 %v2844, 16
      %v2850 = vmul.u32 %v2846, %v2848
      %v2851 = vmul.u32 %v2846, %v2849
      %v2852 = vmul.u32 %v2847, %v2848
      %v2853 = vmul.u32 %v2847, %v2849
      %v2854 = vshll.u32 %v2851, 16
      %v2855 = vshrl.u32 %v2851, 16
      %v2856 = vshll.u32 %v2852, 16
      %v2857 = vshrl.u32 %v2852, 16
      %vm2858 = vc.u32 %v2850, %v2854
      %v2859 = vsel %vm2858, 1, 0
      %v2860 = vadd.s32 %v2850, %v2854
      %v2861 = vadd.s32 %v2853, %v2859
      %vm2862 = vc.u32 %v2860, %v2856
      %v2863 = vsel %vm2862, 1, 0
      %v2864 = vadd.s32 %v2860, %v2856
      %v2865 = vadd.s32 %v2861, %v2863
      %v2866 = vadd.s32 %v2865, %v2855
      %v2867 = vadd.s32 %v2866, %v2857
      %v2868 = vand.u32 %v2845, 65535
      %v2869 = vshrl.u32 %v2845, 16
      %v2870 = vand.u32 %v2840, 65535
      %v2871 = vshrl.u32 %v2840, 16
      %v2872 = vmul.u32 %v2868, %v2870
      %v2873 = vmul.u32 %v2868, %v2871
      %v2874 = vmul.u32 %v2869, %v2870
      %v2875 = vmul.u32 %v2869, %v2871
      %v2876 = vshll.u32 %v2873, 16
      %v2877 = vshrl.u32 %v2873, 16
      %v2878 = vshll.u32 %v2874, 16
      %v2879 = vshrl.u32 %v2874, 16
      %vm2880 = vc.u32 %v2872, %v2876
      %v2881 = vsel %vm2880, 1, 0
      %v2882 = vadd.s32 %v2872, %v2876
      %v2883 = vadd.s32 %v2875, %v2881
      %vm2884 = vc.u32 %v2882, %v2878
      %v2885 = vsel %vm2884, 1, 0
      %v2886 = vadd.s32 %v2882, %v2878
      %v2887 = vadd.s32 %v2883, %v2885
      %v2888 = vadd.s32 %v2887, %v2877
      %v2889 = vadd.s32 %v2888, %v2879
      %v2890 = vmul.u32 %v2845, %v2836
      %v2891 = vadd.s32 %v2867, %v2886
      %vm2892 = vc.u32 %v2867, %v2886
      %v2893 = vadd.s32 %v2889, 1
      %v2894 = vsel %vm2892, %v2893, %v2889
      %v2895 = vadd.s32 %v2890, %v2894
      %v2896 = vadd.s32 %v2895, 536870912
      %v2897 = vshrl.u32 %v2896, 30
      %v2898 = vshll.u32 %v2897, 30
      %v2899 = vsub.s32 %v2895, %v2898
      %vm2900 = vcmp.lt.s32.totalorder %v2899, 0
      %v2901 = vsub.s32 0, %v2899
      %v2902 = vsel %vm2900, %v2901, %v2899
      %v2903 = vclz %v2902
      %v2904 = vsub.s32 %v2903, 2
      %vm2905 = vcmp.gt.s32.totalorder 0, %v2904
      %v2906 = vsel %vm2905, 0, %v2904
      %v2907 = vsub.s32 32, %v2906
      %v2908 = vshll.u32 %v2899, %v2906
      %v2909 = vshrl.u32 %v2891, %v2907
      %v2910 = vor.u32 %v2908, %v2909
      %v2911 = vsub.s32 4294967266, %v2906
      %v2912 = vadd.s32 %v2911, 127
      %v2913 = vshll.u32 %v2912, 23
      %v2914 = vor.u32 4788187, %v2913
      %v2915 = vand.u32 2147483647, %v2914
      %v2917 = vcvt.s32.f32 %v2910
      %v2918 = vmul.f32 %v2917, %v2915
      %v2919 = vxor.u32 %v2918, 2147483648
      %v2920 = vsel %vm2799, %v2919, %v2918
      %v2921 = vsub.s32 4, %v2897
      %v2922 = vsel %vm2799, %v2921, %v2897
      %v2923 = vsel %vm2798, %v1863, %v2920
      %v2924 = vsel %vm2798, 0, %v2922
      %v2925 = vmul.f32 %v2923, %v2923
      %v2926 = vmul.f32 %v2925, -0.001358992
      %v2927 = vadd.f32 %v2926, 0.041655596
      %v2928 = vmul.f32 %v2925, %v2927
      %v2929 = vadd.f32 %v2928, -0.4999988
      %v2930 = vmul.f32 %v2925, %v2929
      %v2931 = vadd.f32 1.0, %v2930
      %v2932 = vmul.f32 %v2923, %v2923
      %v2933 = vmul.f32 %v2932, -0.00019511016
      %v2934 = vadd.f32 %v2933, 0.008332121
      %v2935 = vmul.f32 %v2932, %v2934
      %v2936 = vadd.f32 %v2935, -0.16666654
      %v2937 = vmul.f32 %v2932, %v2936
      %v2938 = vadd.f32 %v2937, 1.0
      %v2939 = vmul.f32 %v2938, %v2923
      %vm2940 = vweird.f32 %v1863
      %v2941 = vand.u32 %v2924, 3
      %vm2942 = vcmp.lt.s32.totalorder %v2941, 2
      %vm2943 = vcmp.eq.s32.totalorder %v2941, 0
      %v2944 = vxor.u32 %v2939, 2147483648
      %v2945 = vsel %vm2943, %v2931, %v2944
      %vm2946 = vcmp.eq.s32.totalorder %v2941, 2
      %v2947 = vxor.u32 %v2931, 2147483648
      %v2948 = vsel %vm2946, %v2947, %v2939
      %v2949 = vsel %vm2942, %v2945, %v2948
      %v2950 = vsel %vm2940, nan, %v2949
      %v2951 = vand.u32 2147483647, %v1864
      %vm2952 = vcmp.le.f32.partialorder %v2951, 0.7853982
      %vm2953 = vcmp.lt.s32.totalorder %v1864, 0
      %v2954 = vand.u32 %v1864, 2139095040
      %v2955 = vshrl.u32 %v2954, 23
      %v2956 = vsub.s32 %v2955, 127
      %v2957 = vand.u32 2147483647, %v1864
      %v2958 = vand.u32 %v2957, 8388607
      %v2959 = vor.u32 %v2958, 8388608
      %v2960 = vsub.s32 0, %v2959
      %v2961 = vadd.s32 %v2956, 1
      %vm2962 = vcmp.gt.s32.totalorder %v2961, 0
      %v2963 = vsel %vm2962, %v2961, 0
      %v2964 = vshrl.u32 %v2963, 5
      %v2965 = vand.u32 %v2963, 31
      %v2966 = vsub.s32 32, %v2965
      %v2967 = vshrl.u32 683565275, %v2966
      %v2968 = vshll.u32 683565275, %v2965
      %v2969 = vshrl.u32 2475754826, %v2966
      %v2970 = vor.u32 %v2968, %v2969
      %v2971 = vshll.u32 2475754826, %v2965
      %v2972 = vshrl.u32 2131351028, %v2966
      %v2973 = vor.u32 %v2971, %v2972
      %v2974 = vshll.u32 2131351028, %v2965
      %v2975 = vshrl.u32 2102212464, %v2966
      %v2976 = vor.u32 %v2974, %v2975
      %v2977 = vshll.u32 2102212464, %v2965
      %v2978 = vshrl.u32 920167782, %v2966
      %v2979 = vor.u32 %v2977, %v2978
      %v2980 = vshll.u32 920167782, %v2965
      %v2981 = vshrl.u32 1326507024, %v2966
      %v2982 = vor.u32 %v2980, %v2981
      %vm2983 = vcmp.lt.s32.totalorder %v2964, 1
      %vm2984 = vcmp.lt.s32.totalorder %v2964, 2
      %vm2985 = vcmp.lt.s32.totalorder %v2964, 3
      %vm2986 = vcmp.lt.s32.totalorder %v2964, 4
      %v2987 = vsel %vm2983, %v2967, %v2970
      %v2988 = vsel %vm2986, %v2976, 2102212464
      %v2989 = vsel %vm2985, %v2973, %v2988
      %v2990 = vsel %vm2984, %v2987, %v2989
      %v2991 = vsel %vm2983, %v2970, %v2973
      %v2992 = vsel %vm2986, %v2979, 920167782
      %v2993 = vsel %vm2985, %v2976, %v2992
      %v2994 = vsel %vm2984, %v2991, %v2993
      %v2995 = vsel %vm2983, %v2973, %v2976
      %v2996 = vsel %vm2986, %v2982, 1326507024
      %v2997 = vsel %vm2985, %v2979, %v2996
      %v2998 = vsel %vm2984, %v2995, %v2997
      %v2999 = vshll.u32 %v2959, 8
      %v3000 = vand.u32 %v2999, 65535
      %v3001 = vshrl.u32 %v2999, 16
      %v3002 = vand.u32 %v2998, 65535
      %v3003 = vshrl.u32 %v2998, 16
      %v3004 = vmul.u32 %v3000, %v3002
      %v3005 = vmul.u32 %v3000, %v3003
      %v3006 = vmul.u32 %v3001, %v3002
      %v3007 = vmul.u32 %v3001, %v3003
      %v3008 = vshll.u32 %v3005, 16
      %v3009 = vshrl.u32 %v3005, 16
      %v3010 = vshll.u32 %v3006, 16
      %v3011 = vshrl.u32 %v3006, 16
      %vm3012 = vc.u32 %v3004, %v3008
      %v3013 = vsel %vm3012, 1, 0
      %v3014 = vadd.s32 %v3004, %v3008
      %v3015 = vadd.s32 %v3007, %v3013
      %vm3016 = vc.u32 %v3014, %v3010
      %v3017 = vsel %vm3016, 1, 0
      %v3018 = vadd.s32 %v3014, %v3010
      %v3019 = vadd.s32 %v3015, %v3017
      %v3020 = vadd.s32 %v3019, %v3009
      %v3021 = vadd.s32 %v3020, %v3011
      %v3022 = vand.u32 %v2999, 65535
      %v3023 = vshrl.u32 %v2999, 16
      %v3024 = vand.u32 %v2994, 65535
      %v3025 = vshrl.u32 %v2994, 16
      %v3026 = vmul.u32 %v3022, %v3024
      %v3027 = vmul.u32 %v3022, %v3025
      %v3028 = vmul.u32 %v3023, %v3024
      %v3029 = vmul.u32 %v3023, %v3025
      %v3030 = vshll.u32 %v3027, 16
      %v3031 = vshrl.u32 %v3027, 16
      %v3032 = vshll.u32 %v3028, 16
      %v3033 = vshrl.u32 %v3028, 16
      %vm3034 = vc.u32 %v3026, %v3030
      %v3035 = vsel %vm3034, 1, 0
      %v3036 = vadd.s32 %v3026, %v3030
      %v3037 = vadd.s32 %v3029, %v3035
      %vm3038 = vc.u32 %v3036, %v3032
      %v3039 = vsel %vm3038, 1, 0
      %v3040 = vadd.s32 %v3036, %v3032
      %v3041 = vadd.s32 %v3037, %v3039
      %v3042 = vadd.s32 %v3041, %v3031
      %v3043 = vadd.s32 %v3042, %v3033
      %v3044 = vmul.u32 %v2999, %v2990
      %v3045 = vadd.s32 %v3021, %v3040
      %vm3046 = vc.u32 %v3021, %v3040
      %v3047 = vadd.s32 %v3043, 1
      %v3048 = vsel %vm3046, %v3047, %v3043
      %v3049 = vadd.s32 %v3044, %v3048
      %v3050 = vadd.s32 %v3049, 536870912
      %v3051 = vshrl.u32 %v3050, 30
      %v3052 = vshll.u32 %v3051, 30
      %v3053 = vsub.s32 %v3049, %v3052
      %vm3054 = vcmp.lt.s32.totalorder %v3053, 0
      %v3055 = vsub.s32 0, %v3053
      %v3056 = vsel %vm3054, %v3055, %v3053
      %v3057 = vclz %v3056
      %v3058 = vsub.s32 %v3057, 2
      %vm3059 = vcmp.gt.s32.totalorder 0, %v3058
      %v3060 = vsel %vm3059, 0, %v3058
      %v3061 = vsub.s32 32, %v3060
      %v3062 = vshll.u32 %v3053, %v3060
      %v3063 = vshrl.u32 %v3045, %v3061
      %v3064 = vor.u32 %v3062, %v3063
      %v3065 = vsub.s32 4294967266, %v3060
      %v3066 = vadd.s32 %v3065, 127
      %v3067 = vshll.u32 %v3066, 23
      %v3068 = vor.u32 4788187, %v3067
      %v3069 = vand.u32 2147483647, %v3068
      %v3071 = vcvt.s32.f32 %v3064
      %v3072 = vmul.f32 %v3071, %v3069
      %v3073 = vxor.u32 %v3072, 2147483648
      %v3074 = vsel %vm2953, %v3073, %v3072
      %v3075 = vsub.s32 4, %v3051
      %v3076 = vsel %vm2953, %v3075, %v3051
      %v3077 = vsel %vm2952, %v1864, %v3074
      %v3078 = vsel %vm2952, 0, %v3076
      %v3079 = vmul.f32 %v3077, %v3077
      %v3080 = vmul.f32 %v3079, -0.001358992
      %v3081 = vadd.f32 %v3080, 0.041655596
      %v3082 = vmul.f32 %v3079, %v3081
      %v3083 = vadd.f32 %v3082, -0.4999988
      %v3084 = vmul.f32 %v3079, %v3083
      %v3085 = vadd.f32 1.0, %v3084
      %v3086 = vmul.f32 %v3077, %v3077
      %v3087 = vmul.f32 %v3086, -0.00019511016
      %v3088 = vadd.f32 %v3087, 0.008332121
      %v3089 = vmul.f32 %v3086, %v3088
      %v3090 = vadd.f32 %v3089, -0.16666654
      %v3091 = vmul.f32 %v3086, %v3090
      %v3092 = vadd.f32 %v3091, 1.0
      %v3093 = vmul.f32 %v3092, %v3077
      %vm3094 = vweird.f32 %v1864
      %v3095 = vand.u32 %v3078, 3
      %vm3096 = vcmp.lt.s32.totalorder %v3095, 2
      %vm3097 = vcmp.eq.s32.totalorder %v3095, 0
      %v3098 = vxor.u32 %v3093, 2147483648
      %v3099 = vsel %vm3097, %v3085, %v3098
      %vm3100 = vcmp.eq.s32.totalorder %v3095, 2
      %v3101 = vxor.u32 %v3085, 2147483648
      %v3102 = vsel %vm3100, %v3101, %v3093
      %v3103 = vsel %vm3096, %v3099, %v3102
      %v3104 = vsel %vm3094, nan, %v3103
      %v3105 = vand.u32 2147483647, %v1865
      %vm3106 = vcmp.le.f32.partialorder %v3105, 0.7853982
      %vm3107 = vcmp.lt.s32.totalorder %v1865, 0
      %v3108 = vand.u32 %v1865, 2139095040
      %v3109 = vshrl.u32 %v3108, 23
      %v3110 = vsub.s32 %v3109, 127
      %v3111 = vand.u32 2147483647, %v1865
      %v3112 = vand.u32 %v3111, 8388607
      %v3113 = vor.u32 %v3112, 8388608
      %v3114 = vsub.s32 0, %v3113
      %v3115 = vadd.s32 %v3110, 1
      %vm3116 = vcmp.gt.s32.totalorder %v3115, 0
      %v3117 = vsel %vm3116, %v3115, 0
      %v3118 = vshrl.u32 %v3117, 5
      %v3119 = vand.u32 %v3117, 31
      %v3120 = vsub.s32 32, %v3119
      %v3121 = vshrl.u32 683565275, %v3120
      %v3122 = vshll.u32 683565275, %v3119
      %v3123 = vshrl.u32 2475754826, %v3120
      %v3124 = vor.u32 %v3122, %v3123
      %v3125 = vshll.u32 2475754826, %v3119
      %v3126 = vshrl.u32 2131351028, %v3120
      %v3127 = vor.u32 %v3125, %v3126
      %v3128 = vshll.u32 2131351028, %v3119
      %v3129 = vshrl.u32 2102212464, %v3120
      %v3130 = vor.u32 %v3128, %v3129
      %v3131 = vshll.u32 2102212464, %v3119
      %v3132 = vshrl.u32 920167782, %v3120
      %v3133 = vor.u32 %v3131, %v3132
      %v3134 = vshll.u32 920167782, %v3119
      %v3135 = vshrl.u32 1326507024, %v3120
      %v3136 = vor.u32 %v3134, %v3135
      %vm3137 = vcmp.lt.s32.totalorder %v3118, 1
      %vm3138 = vcmp.lt.s32.totalorder %v3118, 2
      %vm3139 = vcmp.lt.s32.totalorder %v3118, 3
      %vm3140 = vcmp.lt.s32.totalorder %v3118, 4
      %v3141 = vsel %vm3137, %v3121, %v3124
      %v3142 = vsel %vm3140, %v3130, 2102212464
      %v3143 = vsel %vm3139, %v3127, %v3142
      %v3144 = vsel %vm3138, %v3141, %v3143
      %v3145 = vsel %vm3137, %v3124, %v3127
      %v3146 = vsel %vm3140, %v3133, 920167782
      %v3147 = vsel %vm3139, %v3130, %v3146
      %v3148 = vsel %vm3138, %v3145, %v3147
      %v3149 = vsel %vm3137, %v3127, %v3130
      %v3150 = vsel %vm3140, %v3136, 1326507024
      %v3151 = vsel %vm3139, %v3133, %v3150
      %v3152 = vsel %vm3138, %v3149, %v3151
      %v3153 = vshll.u32 %v3113, 8
      %v3154 = vand.u32 %v3153, 65535
      %v3155 = vshrl.u32 %v3153, 16
      %v3156 = vand.u32 %v3152, 65535
      %v3157 = vshrl.u32 %v3152, 16
      %v3158 = vmul.u32 %v3154, %v3156
      %v3159 = vmul.u32 %v3154, %v3157
      %v3160 = vmul.u32 %v3155, %v3156
      %v3161 = vmul.u32 %v3155, %v3157
      %v3162 = vshll.u32 %v3159, 16
      %v3163 = vshrl.u32 %v3159, 16
      %v3164 = vshll.u32 %v3160, 16
      %v3165 = vshrl.u32 %v3160, 16
      %vm3166 = vc.u32 %v3158, %v3162
      %v3167 = vsel %vm3166, 1, 0
      %v3168 = vadd.s32 %v3158, %v3162
      %v3169 = vadd.s32 %v3161, %v3167
      %vm3170 = vc.u32 %v3168, %v3164
      %v3171 = vsel %vm3170, 1, 0
      %v3172 = vadd.s32 %v3168, %v3164
      %v3173 = vadd.s32 %v3169, %v3171
      %v3174 = vadd.s32 %v3173, %v3163
      %v3175 = vadd.s32 %v3174, %v3165
      %v3176 = vand.u32 %v3153, 65535
      %v3177 = vshrl.u32 %v3153, 16
      %v3178 = vand.u32 %v3148, 65535
      %v3179 = vshrl.u32 %v3148, 16
      %v3180 = vmul.u32 %v3176, %v3178
      %v3181 = vmul.u32 %v3176, %v3179
      %v3182 = vmul.u32 %v3177, %v3178
      %v3183 = vmul.u32 %v3177, %v3179
      %v3184 = vshll.u32 %v3181, 16
      %v3185 = vshrl.u32 %v3181, 16
      %v3186 = vshll.u32 %v3182, 16
      %v3187 = vshrl.u32 %v3182, 16
      %vm3188 = vc.u32 %v3180, %v3184
      %v3189 = vsel %vm3188, 1, 0
      %v3190 = vadd.s32 %v3180, %v3184
      %v3191 = vadd.s32 %v3183, %v3189
      %vm3192 = vc.u32 %v3190, %v3186
      %v3193 = vsel %vm3192, 1, 0
      %v3194 = vadd.s32 %v3190, %v3186
      %v3195 = vadd.s32 %v3191, %v3193
      %v3196 = vadd.s32 %v3195, %v3185
      %v3197 = vadd.s32 %v3196, %v3187
      %v3198 = vmul.u32 %v3153, %v3144
      %v3199 = vadd.s32 %v3175, %v3194
      %vm3200 = vc.u32 %v3175, %v3194
      %v3201 = vadd.s32 %v3197, 1
      %v3202 = vsel %vm3200, %v3201, %v3197
      %v3203 = vadd.s32 %v3198, %v3202
      %v3204 = vadd.s32 %v3203, 536870912
      %v3205 = vshrl.u32 %v3204, 30
      %v3206 = vshll.u32 %v3205, 30
      %v3207 = vsub.s32 %v3203, %v3206
      %vm3208 = vcmp.lt.s32.totalorder %v3207, 0
      %v3209 = vsub.s32 0, %v3207
      %v3210 = vsel %vm3208, %v3209, %v3207
      %v3211 = vclz %v3210
      %v3212 = vsub.s32 %v3211, 2
      %vm3213 = vcmp.gt.s32.totalorder 0, %v3212
      %v3214 = vsel %vm3213, 0, %v3212
      %v3215 = vsub.s32 32, %v3214
      %v3216 = vshll.u32 %v3207, %v3214
      %v3217 = vshrl.u32 %v3199, %v3215
      %v3218 = vor.u32 %v3216, %v3217
      %v3219 = vsub.s32 4294967266, %v3214
      %v3220 = vadd.s32 %v3219, 127
      %v3221 = vshll.u32 %v3220, 23
      %v3222 = vor.u32 4788187, %v3221
      %v3223 = vand.u32 2147483647, %v3222
      %v3225 = vcvt.s32.f32 %v3218
      %v3226 = vmul.f32 %v3225, %v3223
      %v3227 = vxor.u32 %v3226, 2147483648
      %v3228 = vsel %vm3107, %v3227, %v3226
      %v3229 = vsub.s32 4, %v3205
      %v3230 = vsel %vm3107, %v3229, %v3205
      %v3231 = vsel %vm3106, %v1865, %v3228
      %v3232 = vsel %vm3106, 0, %v3230
      %v3233 = vmul.f32 %v3231, %v3231
      %v3234 = vmul.f32 %v3233, -0.001358992
      %v3235 = vadd.f32 %v3234, 0.041655596
      %v3236 = vmul.f32 %v3233, %v3235
      %v3237 = vadd.f32 %v3236, -0.4999988
      %v3238 = vmul.f32 %v3233, %v3237
      %v3239 = vadd.f32 1.0, %v3238
      %v3240 = vmul.f32 %v3231, %v3231
      %v3241 = vmul.f32 %v3240, -0.00019511016
      %v3242 = vadd.f32 %v3241, 0.008332121
      %v3243 = vmul.f32 %v3240, %v3242
      %v3244 = vadd.f32 %v3243, -0.16666654
      %v3245 = vmul.f32 %v3240, %v3244
      %v3246 = vadd.f32 %v3245, 1.0
      %v3247 = vmul.f32 %v3246, %v3231
      %vm3248 = vweird.f32 %v1865
      %v3249 = vand.u32 %v3232, 3
      %vm3250 = vcmp.lt.s32.totalorder %v3249, 2
      %vm3251 = vcmp.eq.s32.totalorder %v3249, 0
      %v3252 = vxor.u32 %v3247, 2147483648
      %v3253 = vsel %vm3251, %v3239, %v3252
      %vm3254 = vcmp.eq.s32.totalorder %v3249, 2
      %v3255 = vxor.u32 %v3239, 2147483648
      %v3256 = vsel %vm3254, %v3255, %v3247
      %v3257 = vsel %vm3250, %v3253, %v3256
      %v3258 = vsel %vm3248, nan, %v3257
      %v3259 = vand.u32 2147483647, %v1866
      %vm3260 = vcmp.le.f32.partialorder %v3259, 0.7853982
      %vm3261 = vcmp.lt.s32.totalorder %v1866, 0
      %v3262 = vand.u32 %v1866, 2139095040
      %v3263 = vshrl.u32 %v3262, 23
      %v3264 = vsub.s32 %v3263, 127
      %v3265 = vand.u32 2147483647, %v1866
      %v3266 = vand.u32 %v3265, 8388607
      %v3267 = vor.u32 %v3266, 8388608
      %v3268 = vsub.s32 0, %v3267
      %v3269 = vadd.s32 %v3264, 1
      %vm3270 = vcmp.gt.s32.totalorder %v3269, 0
      %v3271 = vsel %vm3270, %v3269, 0
      %v3272 = vshrl.u32 %v3271, 5
      %v3273 = vand.u32 %v3271, 31
      %v3274 = vsub.s32 32, %v3273
      %v3275 = vshrl.u32 683565275, %v3274
      %v3276 = vshll.u32 683565275, %v3273
      %v3277 = vshrl.u32 2475754826, %v3274
      %v3278 = vor.u32 %v3276, %v3277
      %v3279 = vshll.u32 2475754826, %v3273
      %v3280 = vshrl.u32 2131351028, %v3274
      %v3281 = vor.u32 %v3279, %v3280
      %v3282 = vshll.u32 2131351028, %v3273
      %v3283 = vshrl.u32 2102212464, %v3274
      %v3284 = vor.u32 %v3282, %v3283
      %v3285 = vshll.u32 2102212464, %v3273
      %v3286 = vshrl.u32 920167782, %v3274
      %v3287 = vor.u32 %v3285, %v3286
      %v3288 = vshll.u32 920167782, %v3273
      %v3289 = vshrl.u32 1326507024, %v3274
      %v3290 = vor.u32 %v3288, %v3289
      %vm3291 = vcmp.lt.s32.totalorder %v3272, 1
      %vm3292 = vcmp.lt.s32.totalorder %v3272, 2
      %vm3293 = vcmp.lt.s32.totalorder %v3272, 3
      %vm3294 = vcmp.lt.s32.totalorder %v3272, 4
      %v3295 = vsel %vm3291, %v3275, %v3278
      %v3296 = vsel %vm3294, %v3284, 2102212464
      %v3297 = vsel %vm3293, %v3281, %v3296
      %v3298 = vsel %vm3292, %v3295, %v3297
      %v3299 = vsel %vm3291, %v3278, %v3281
      %v3300 = vsel %vm3294, %v3287, 920167782
      %v3301 = vsel %vm3293, %v3284, %v3300
      %v3302 = vsel %vm3292, %v3299, %v3301
      %v3303 = vsel %vm3291, %v3281, %v3284
      %v3304 = vsel %vm3294, %v3290, 1326507024
      %v3305 = vsel %vm3293, %v3287, %v3304
      %v3306 = vsel %vm3292, %v3303, %v3305
      %v3307 = vshll.u32 %v3267, 8
      %v3308 = vand.u32 %v3307, 65535
      %v3309 = vshrl.u32 %v3307, 16
      %v3310 = vand.u32 %v3306, 65535
      %v3311 = vshrl.u32 %v3306, 16
      %v3312 = vmul.u32 %v3308, %v3310
      %v3313 = vmul.u32 %v3308, %v3311
      %v3314 = vmul.u32 %v3309, %v3310
      %v3315 = vmul.u32 %v3309, %v3311
      %v3316 = vshll.u32 %v3313, 16
      %v3317 = vshrl.u32 %v3313, 16
      %v3318 = vshll.u32 %v3314, 16
      %v3319 = vshrl.u32 %v3314, 16
      %vm3320 = vc.u32 %v3312, %v3316
      %v3321 = vsel %vm3320, 1, 0
      %v3322 = vadd.s32 %v3312, %v3316
      %v3323 = vadd.s32 %v3315, %v3321
      %vm3324 = vc.u32 %v3322, %v3318
      %v3325 = vsel %vm3324, 1, 0
      %v3326 = vadd.s32 %v3322, %v3318
      %v3327 = vadd.s32 %v3323, %v3325
      %v3328 = vadd.s32 %v3327, %v3317
      %v3329 = vadd.s32 %v3328, %v3319
      %v3330 = vand.u32 %v3307, 65535
      %v3331 = vshrl.u32 %v3307, 16
      %v3332 = vand.u32 %v3302, 65535
      %v3333 = vshrl.u32 %v3302, 16
      %v3334 = vmul.u32 %v3330, %v3332
      %v3335 = vmul.u32 %v3330, %v3333
      %v3336 = vmul.u32 %v3331, %v3332
      %v3337 = vmul.u32 %v3331, %v3333
      %v3338 = vshll.u32 %v3335, 16
      %v3339 = vshrl.u32 %v3335, 16
      %v3340 = vshll.u32 %v3336, 16
      %v3341 = vshrl.u32 %v3336, 16
      %vm3342 = vc.u32 %v3334, %v3338
      %v3343 = vsel %vm3342, 1, 0
      %v3344 = vadd.s32 %v3334, %v3338
      %v3345 = vadd.s32 %v3337, %v3343
      %vm3346 = vc.u32 %v3344, %v3340
      %v3347 = vsel %vm3346, 1, 0
      %v3348 = vadd.s32 %v3344, %v3340
      %v3349 = vadd.s32 %v3345, %v3347
      %v3350 = vadd.s32 %v3349, %v3339
      %v3351 = vadd.s32 %v3350, %v3341
      %v3352 = vmul.u32 %v3307, %v3298
      %v3353 = vadd.s32 %v3329, %v3348
      %vm3354 = vc.u32 %v3329, %v3348
      %v3355 = vadd.s32 %v3351, 1
      %v3356 = vsel %vm3354, %v3355, %v3351
      %v3357 = vadd.s32 %v3352, %v3356
      %v3358 = vadd.s32 %v3357, 536870912
      %v3359 = vshrl.u32 %v3358, 30
      %v3360 = vshll.u32 %v3359, 30
      %v3361 = vsub.s32 %v3357, %v3360
      %vm3362 = vcmp.lt.s32.totalorder %v3361, 0
      %v3363 = vsub.s32 0, %v3361
      %v3364 = vsel %vm3362, %v3363, %v3361
      %v3365 = vclz %v3364
      %v3366 = vsub.s32 %v3365, 2
      %vm3367 = vcmp.gt.s32.totalorder 0, %v3366
      %v3368 = vsel %vm3367, 0, %v3366
      %v3369 = vsub.s32 32, %v3368
      %v3370 = vshll.u32 %v3361, %v3368
      %v3371 = vshrl.u32 %v3353, %v3369
      %v3372 = vor.u32 %v3370, %v3371
      %v3373 = vsub.s32 4294967266, %v3368
      %v3374 = vadd.s32 %v3373, 127
      %v3375 = vshll.u32 %v3374, 23
      %v3376 = vor.u32 4788187, %v3375
      %v3377 = vand.u32 2147483647, %v3376
      %v3379 = vcvt.s32.f32 %v3372
      %v3380 = vmul.f32 %v3379, %v3377
      %v3381 = vxor.u32 %v3380, 2147483648
      %v3382 = vsel %vm3261, %v3381, %v3380
      %v3383 = vsub.s32 4, %v3359
      %v3384 = vsel %vm3261, %v3383, %v3359
      %v3385 = vsel %vm3260, %v1866, %v3382
      %v3386 = vsel %vm3260, 0, %v3384
      %v3387 = vmul.f32 %v3385, %v3385
      %v3388 = vmul.f32 %v3387, -0.001358992
      %v3389 = vadd.f32 %v3388, 0.041655596
      %v3390 = vmul.f32 %v3387, %v3389
      %v3391 = vadd.f32 %v3390, -0.4999988
      %v3392 = vmul.f32 %v3387, %v3391
      %v3393 = vadd.f32 1.0, %v3392
      %v3394 = vmul.f32 %v3385, %v3385
      %v3395 = vmul.f32 %v3394, -0.00019511016
      %v3396 = vadd.f32 %v3395, 0.008332121
      %v3397 = vmul.f32 %v3394, %v3396
      %v3398 = vadd.f32 %v3397, -0.16666654
      %v3399 = vmul.f32 %v3394, %v3398
      %v3400 = vadd.f32 %v3399, 1.0
      %v3401 = vmul.f32 %v3400, %v3385
      %vm3402 = vweird.f32 %v1866
      %v3403 = vand.u32 %v3386, 3
      %vm3404 = vcmp.lt.s32.totalorder %v3403, 2
      %vm3405 = vcmp.eq.s32.totalorder %v3403, 0
      %v3406 = vxor.u32 %v3401, 2147483648
      %v3407 = vsel %vm3405, %v3393, %v3406
      %vm3408 = vcmp.eq.s32.totalorder %v3403, 2
      %v3409 = vxor.u32 %v3393, 2147483648
      %v3410 = vsel %vm3408, %v3409, %v3401
      %v3411 = vsel %vm3404, %v3407, %v3410
      %v3412 = vsel %vm3402, nan, %v3411
      %v3413 = vand.u32 2147483647, %v1867
      %vm3414 = vcmp.le.f32.partialorder %v3413, 0.7853982
      %vm3415 = vcmp.lt.s32.totalorder %v1867, 0
      %v3416 = vand.u32 %v1867, 2139095040
      %v3417 = vshrl.u32 %v3416, 23
      %v3418 = vsub.s32 %v3417, 127
      %v3419 = vand.u32 2147483647, %v1867
      %v3420 = vand.u32 %v3419, 8388607
      %v3421 = vor.u32 %v3420, 8388608
      %v3422 = vsub.s32 0, %v3421
      %v3423 = vadd.s32 %v3418, 1
      %vm3424 = vcmp.gt.s32.totalorder %v3423, 0
      %v3425 = vsel %vm3424, %v3423, 0
      %v3426 = vshrl.u32 %v3425, 5
      %v3427 = vand.u32 %v3425, 31
      %v3428 = vsub.s32 32, %v3427
      %v3429 = vshrl.u32 683565275, %v3428
      %v3430 = vshll.u32 683565275, %v3427
      %v3431 = vshrl.u32 2475754826, %v3428
      %v3432 = vor.u32 %v3430, %v3431
      %v3433 = vshll.u32 2475754826, %v3427
      %v3434 = vshrl.u32 2131351028, %v3428
      %v3435 = vor.u32 %v3433, %v3434
      %v3436 = vshll.u32 2131351028, %v3427
      %v3437 = vshrl.u32 2102212464, %v3428
      %v3438 = vor.u32 %v3436, %v3437
      %v3439 = vshll.u32 2102212464, %v3427
      %v3440 = vshrl.u32 920167782, %v3428
      %v3441 = vor.u32 %v3439, %v3440
      %v3442 = vshll.u32 920167782, %v3427
      %v3443 = vshrl.u32 1326507024, %v3428
      %v3444 = vor.u32 %v3442, %v3443
      %vm3445 = vcmp.lt.s32.totalorder %v3426, 1
      %vm3446 = vcmp.lt.s32.totalorder %v3426, 2
      %vm3447 = vcmp.lt.s32.totalorder %v3426, 3
      %vm3448 = vcmp.lt.s32.totalorder %v3426, 4
      %v3449 = vsel %vm3445, %v3429, %v3432
      %v3450 = vsel %vm3448, %v3438, 2102212464
      %v3451 = vsel %vm3447, %v3435, %v3450
      %v3452 = vsel %vm3446, %v3449, %v3451
      %v3453 = vsel %vm3445, %v3432, %v3435
      %v3454 = vsel %vm3448, %v3441, 920167782
      %v3455 = vsel %vm3447, %v3438, %v3454
      %v3456 = vsel %vm3446, %v3453, %v3455
      %v3457 = vsel %vm3445, %v3435, %v3438
      %v3458 = vsel %vm3448, %v3444, 1326507024
      %v3459 = vsel %vm3447, %v3441, %v3458
      %v3460 = vsel %vm3446, %v3457, %v3459
      %v3461 = vshll.u32 %v3421, 8
      %v3462 = vand.u32 %v3461, 65535
      %v3463 = vshrl.u32 %v3461, 16
      %v3464 = vand.u32 %v3460, 65535
      %v3465 = vshrl.u32 %v3460, 16
      %v3466 = vmul.u32 %v3462, %v3464
      %v3467 = vmul.u32 %v3462, %v3465
      %v3468 = vmul.u32 %v3463, %v3464
      %v3469 = vmul.u32 %v3463, %v3465
      %v3470 = vshll.u32 %v3467, 16
      %v3471 = vshrl.u32 %v3467, 16
      %v3472 = vshll.u32 %v3468, 16
      %v3473 = vshrl.u32 %v3468, 16
      %vm3474 = vc.u32 %v3466, %v3470
      %v3475 = vsel %vm3474, 1, 0
      %v3476 = vadd.s32 %v3466, %v3470
      %v3477 = vadd.s32 %v3469, %v3475
      %vm3478 = vc.u32 %v3476, %v3472
      %v3479 = vsel %vm3478, 1, 0
      %v3480 = vadd.s32 %v3476, %v3472
      %v3481 = vadd.s32 %v3477, %v3479
      %v3482 = vadd.s32 %v3481, %v3471
      %v3483 = vadd.s32 %v3482, %v3473
      %v3484 = vand.u32 %v3461, 65535
      %v3485 = vshrl.u32 %v3461, 16
      %v3486 = vand.u32 %v3456, 65535
      %v3487 = vshrl.u32 %v3456, 16
      %v3488 = vmul.u32 %v3484, %v3486
      %v3489 = vmul.u32 %v3484, %v3487
      %v3490 = vmul.u32 %v3485, %v3486
      %v3491 = vmul.u32 %v3485, %v3487
      %v3492 = vshll.u32 %v3489, 16
      %v3493 = vshrl.u32 %v3489, 16
      %v3494 = vshll.u32 %v3490, 16
      %v3495 = vshrl.u32 %v3490, 16
      %vm3496 = vc.u32 %v3488, %v3492
      %v3497 = vsel %vm3496, 1, 0
      %v3498 = vadd.s32 %v3488, %v3492
      %v3499 = vadd.s32 %v3491, %v3497
      %vm3500 = vc.u32 %v3498, %v3494
      %v3501 = vsel %vm3500, 1, 0
      %v3502 = vadd.s32 %v3498, %v3494
      %v3503 = vadd.s32 %v3499, %v3501
      %v3504 = vadd.s32 %v3503, %v3493
      %v3505 = vadd.s32 %v3504, %v3495
      %v3506 = vmul.u32 %v3461, %v3452
      %v3507 = vadd.s32 %v3483, %v3502
      %vm3508 = vc.u32 %v3483, %v3502
      %v3509 = vadd.s32 %v3505, 1
      %v3510 = vsel %vm3508, %v3509, %v3505
      %v3511 = vadd.s32 %v3506, %v3510
      %v3512 = vadd.s32 %v3511, 536870912
      %v3513 = vshrl.u32 %v3512, 30
      %v3514 = vshll.u32 %v3513, 30
      %v3515 = vsub.s32 %v3511, %v3514
      %vm3516 = vcmp.lt.s32.totalorder %v3515, 0
      %v3517 = vsub.s32 0, %v3515
      %v3518 = vsel %vm3516, %v3517, %v3515
      %v3519 = vclz %v3518
      %v3520 = vsub.s32 %v3519, 2
      %vm3521 = vcmp.gt.s32.totalorder 0, %v3520
      %v3522 = vsel %vm3521, 0, %v3520
      %v3523 = vsub.s32 32, %v3522
      %v3524 = vshll.u32 %v3515, %v3522
      %v3525 = vshrl.u32 %v3507, %v3523
      %v3526 = vor.u32 %v3524, %v3525
      %v3527 = vsub.s32 4294967266, %v3522
      %v3528 = vadd.s32 %v3527, 127
      %v3529 = vshll.u32 %v3528, 23
      %v3530 = vor.u32 4788187, %v3529
      %v3531 = vand.u32 2147483647, %v3530
      %v3533 = vcvt.s32.f32 %v3526
      %v3534 = vmul.f32 %v3533, %v3531
      %v3535 = vxor.u32 %v3534, 2147483648
      %v3536 = vsel %vm3415, %v3535, %v3534
      %v3537 = vsub.s32 4, %v3513
      %v3538 = vsel %vm3415, %v3537, %v3513
      %v3539 = vsel %vm3414, %v1867, %v3536
      %v3540 = vsel %vm3414, 0, %v3538
      %v3541 = vmul.f32 %v3539, %v3539
      %v3542 = vmul.f32 %v3541, -0.001358992
      %v3543 = vadd.f32 %v3542, 0.041655596
      %v3544 = vmul.f32 %v3541, %v3543
      %v3545 = vadd.f32 %v3544, -0.4999988
      %v3546 = vmul.f32 %v3541, %v3545
      %v3547 = vadd.f32 1.0, %v3546
      %v3548 = vmul.f32 %v3539, %v3539
      %v3549 = vmul.f32 %v3548, -0.00019511016
      %v3550 = vadd.f32 %v3549, 0.008332121
      %v3551 = vmul.f32 %v3548, %v3550
      %v3552 = vadd.f32 %v3551, -0.16666654
      %v3553 = vmul.f32 %v3548, %v3552
      %v3554 = vadd.f32 %v3553, 1.0
      %v3555 = vmul.f32 %v3554, %v3539
      %vm3556 = vweird.f32 %v1867
      %v3557 = vand.u32 %v3540, 3
      %vm3558 = vcmp.lt.s32.totalorder %v3557, 2
      %vm3559 = vcmp.eq.s32.totalorder %v3557, 0
      %v3560 = vxor.u32 %v3555, 2147483648
      %v3561 = vsel %vm3559, %v3547, %v3560
      %vm3562 = vcmp.eq.s32.totalorder %v3557, 2
      %v3563 = vxor.u32 %v3547, 2147483648
      %v3564 = vsel %vm3562, %v3563, %v3555
      %v3565 = vsel %vm3558, %v3561, %v3564
      %v3566 = vsel %vm3556, nan, %v3565
      %v3567 = vand.u32 2147483647, %v1868
      %vm3568 = vcmp.le.f32.partialorder %v3567, 0.7853982
      %vm3569 = vcmp.lt.s32.totalorder %v1868, 0
      %v3570 = vand.u32 %v1868, 2139095040
      %v3571 = vshrl.u32 %v3570, 23
      %v3572 = vsub.s32 %v3571, 127
      %v3573 = vand.u32 2147483647, %v1868
      %v3574 = vand.u32 %v3573, 8388607
      %v3575 = vor.u32 %v3574, 8388608
      %v3576 = vsub.s32 0, %v3575
      %v3577 = vadd.s32 %v3572, 1
      %vm3578 = vcmp.gt.s32.totalorder %v3577, 0
      %v3579 = vsel %vm3578, %v3577, 0
      %v3580 = vshrl.u32 %v3579, 5
      %v3581 = vand.u32 %v3579, 31
      %v3582 = vsub.s32 32, %v3581
      %v3583 = vshrl.u32 683565275, %v3582
      %v3584 = vshll.u32 683565275, %v3581
      %v3585 = vshrl.u32 2475754826, %v3582
      %v3586 = vor.u32 %v3584, %v3585
      %v3587 = vshll.u32 2475754826, %v3581
      %v3588 = vshrl.u32 2131351028, %v3582
      %v3589 = vor.u32 %v3587, %v3588
      %v3590 = vshll.u32 2131351028, %v3581
      %v3591 = vshrl.u32 2102212464, %v3582
      %v3592 = vor.u32 %v3590, %v3591
      %v3593 = vshll.u32 2102212464, %v3581
      %v3594 = vshrl.u32 920167782, %v3582
      %v3595 = vor.u32 %v3593, %v3594
      %v3596 = vshll.u32 920167782, %v3581
      %v3597 = vshrl.u32 1326507024, %v3582
      %v3598 = vor.u32 %v3596, %v3597
      %vm3599 = vcmp.lt.s32.totalorder %v3580, 1
      %vm3600 = vcmp.lt.s32.totalorder %v3580, 2
      %vm3601 = vcmp.lt.s32.totalorder %v3580, 3
      %vm3602 = vcmp.lt.s32.totalorder %v3580, 4
      %v3603 = vsel %vm3599, %v3583, %v3586
      %v3604 = vsel %vm3602, %v3592, 2102212464
      %v3605 = vsel %vm3601, %v3589, %v3604
      %v3606 = vsel %vm3600, %v3603, %v3605
      %v3607 = vsel %vm3599, %v3586, %v3589
      %v3608 = vsel %vm3602, %v3595, 920167782
      %v3609 = vsel %vm3601, %v3592, %v3608
      %v3610 = vsel %vm3600, %v3607, %v3609
      %v3611 = vsel %vm3599, %v3589, %v3592
      %v3612 = vsel %vm3602, %v3598, 1326507024
      %v3613 = vsel %vm3601, %v3595, %v3612
      %v3614 = vsel %vm3600, %v3611, %v3613
      %v3615 = vshll.u32 %v3575, 8
      %v3616 = vand.u32 %v3615, 65535
      %v3617 = vshrl.u32 %v3615, 16
      %v3618 = vand.u32 %v3614, 65535
      %v3619 = vshrl.u32 %v3614, 16
      %v3620 = vmul.u32 %v3616, %v3618
      %v3621 = vmul.u32 %v3616, %v3619
      %v3622 = vmul.u32 %v3617, %v3618
      %v3623 = vmul.u32 %v3617, %v3619
      %v3624 = vshll.u32 %v3621, 16
      %v3625 = vshrl.u32 %v3621, 16
      %v3626 = vshll.u32 %v3622, 16
      %v3627 = vshrl.u32 %v3622, 16
      %vm3628 = vc.u32 %v3620, %v3624
      %v3629 = vsel %vm3628, 1, 0
      %v3630 = vadd.s32 %v3620, %v3624
      %v3631 = vadd.s32 %v3623, %v3629
      %vm3632 = vc.u32 %v3630, %v3626
      %v3633 = vsel %vm3632, 1, 0
      %v3634 = vadd.s32 %v3630, %v3626
      %v3635 = vadd.s32 %v3631, %v3633
      %v3636 = vadd.s32 %v3635, %v3625
      %v3637 = vadd.s32 %v3636, %v3627
      %v3638 = vand.u32 %v3615, 65535
      %v3639 = vshrl.u32 %v3615, 16
      %v3640 = vand.u32 %v3610, 65535
      %v3641 = vshrl.u32 %v3610, 16
      %v3642 = vmul.u32 %v3638, %v3640
      %v3643 = vmul.u32 %v3638, %v3641
      %v3644 = vmul.u32 %v3639, %v3640
      %v3645 = vmul.u32 %v3639, %v3641
      %v3646 = vshll.u32 %v3643, 16
      %v3647 = vshrl.u32 %v3643, 16
      %v3648 = vshll.u32 %v3644, 16
      %v3649 = vshrl.u32 %v3644, 16
      %vm3650 = vc.u32 %v3642, %v3646
      %v3651 = vsel %vm3650, 1, 0
      %v3652 = vadd.s32 %v3642, %v3646
      %v3653 = vadd.s32 %v3645, %v3651
      %vm3654 = vc.u32 %v3652, %v3648
      %v3655 = vsel %vm3654, 1, 0
      %v3656 = vadd.s32 %v3652, %v3648
      %v3657 = vadd.s32 %v3653, %v3655
      %v3658 = vadd.s32 %v3657, %v3647
      %v3659 = vadd.s32 %v3658, %v3649
      %v3660 = vmul.u32 %v3615, %v3606
      %v3661 = vadd.s32 %v3637, %v3656
      %vm3662 = vc.u32 %v3637, %v3656
      %v3663 = vadd.s32 %v3659, 1
      %v3664 = vsel %vm3662, %v3663, %v3659
      %v3665 = vadd.s32 %v3660, %v3664
      %v3666 = vadd.s32 %v3665, 536870912
      %v3667 = vshrl.u32 %v3666, 30
      %v3668 = vshll.u32 %v3667, 30
      %v3669 = vsub.s32 %v3665, %v3668
      %vm3670 = vcmp.lt.s32.totalorder %v3669, 0
      %v3671 = vsub.s32 0, %v3669
      %v3672 = vsel %vm3670, %v3671, %v3669
      %v3673 = vclz %v3672
      %v3674 = vsub.s32 %v3673, 2
      %vm3675 = vcmp.gt.s32.totalorder 0, %v3674
      %v3676 = vsel %vm3675, 0, %v3674
      %v3677 = vsub.s32 32, %v3676
      %v3678 = vshll.u32 %v3669, %v3676
      %v3679 = vshrl.u32 %v3661, %v3677
      %v3680 = vor.u32 %v3678, %v3679
      %v3681 = vsub.s32 4294967266, %v3676
      %v3682 = vadd.s32 %v3681, 127
      %v3683 = vshll.u32 %v3682, 23
      %v3684 = vor.u32 4788187, %v3683
      %v3685 = vand.u32 2147483647, %v3684
      %v3687 = vcvt.s32.f32 %v3680
      %v3688 = vmul.f32 %v3687, %v3685
      %v3689 = vxor.u32 %v3688, 2147483648
      %v3690 = vsel %vm3569, %v3689, %v3688
      %v3691 = vsub.s32 4, %v3667
      %v3692 = vsel %vm3569, %v3691, %v3667
      %v3693 = vsel %vm3568, %v1868, %v3690
      %v3694 = vsel %vm3568, 0, %v3692
      %v3695 = vmul.f32 %v3693, %v3693
      %v3696 = vmul.f32 %v3695, -0.001358992
      %v3697 = vadd.f32 %v3696, 0.041655596
      %v3698 = vmul.f32 %v3695, %v3697
      %v3699 = vadd.f32 %v3698, -0.4999988
      %v3700 = vmul.f32 %v3695, %v3699
      %v3701 = vadd.f32 1.0, %v3700
      %v3702 = vmul.f32 %v3693, %v3693
      %v3703 = vmul.f32 %v3702, -0.00019511016
      %v3704 = vadd.f32 %v3703, 0.008332121
      %v3705 = vmul.f32 %v3702, %v3704
      %v3706 = vadd.f32 %v3705, -0.16666654
      %v3707 = vmul.f32 %v3702, %v3706
      %v3708 = vadd.f32 %v3707, 1.0
      %v3709 = vmul.f32 %v3708, %v3693
      %vm3710 = vweird.f32 %v1868
      %v3711 = vand.u32 %v3694, 3
      %vm3712 = vcmp.lt.s32.totalorder %v3711, 2
      %vm3713 = vcmp.eq.s32.totalorder %v3711, 0
      %v3714 = vxor.u32 %v3709, 2147483648
      %v3715 = vsel %vm3713, %v3701, %v3714
      %vm3716 = vcmp.eq.s32.totalorder %v3711, 2
      %v3717 = vxor.u32 %v3701, 2147483648
      %v3718 = vsel %vm3716, %v3717, %v3709
      %v3719 = vsel %vm3712, %v3715, %v3718
      %v3720 = vsel %vm3710, nan, %v3719
      %v3721 = vand.u32 2147483647, %v1869
      %vm3722 = vcmp.le.f32.partialorder %v3721, 0.7853982
      %vm3723 = vcmp.lt.s32.totalorder %v1869, 0
      %v3724 = vand.u32 %v1869, 2139095040
      %v3725 = vshrl.u32 %v3724, 23
      %v3726 = vsub.s32 %v3725, 127
      %v3727 = vand.u32 2147483647, %v1869
      %v3728 = vand.u32 %v3727, 8388607
      %v3729 = vor.u32 %v3728, 8388608
      %v3730 = vsub.s32 0, %v3729
      %v3731 = vadd.s32 %v3726, 1
      %vm3732 = vcmp.gt.s32.totalorder %v3731, 0
      %v3733 = vsel %vm3732, %v3731, 0
      %v3734 = vshrl.u32 %v3733, 5
      %v3735 = vand.u32 %v3733, 31
      %v3736 = vsub.s32 32, %v3735
      %v3737 = vshrl.u32 683565275, %v3736
      %v3738 = vshll.u32 683565275, %v3735
      %v3739 = vshrl.u32 2475754826, %v3736
      %v3740 = vor.u32 %v3738, %v3739
      %v3741 = vshll.u32 2475754826, %v3735
      %v3742 = vshrl.u32 2131351028, %v3736
      %v3743 = vor.u32 %v3741, %v3742
      %v3744 = vshll.u32 2131351028, %v3735
      %v3745 = vshrl.u32 2102212464, %v3736
      %v3746 = vor.u32 %v3744, %v3745
      %v3747 = vshll.u32 2102212464, %v3735
      %v3748 = vshrl.u32 920167782, %v3736
      %v3749 = vor.u32 %v3747, %v3748
      %v3750 = vshll.u32 920167782, %v3735
      %v3751 = vshrl.u32 1326507024, %v3736
      %v3752 = vor.u32 %v3750, %v3751
      %vm3753 = vcmp.lt.s32.totalorder %v3734, 1
      %vm3754 = vcmp.lt.s32.totalorder %v3734, 2
      %vm3755 = vcmp.lt.s32.totalorder %v3734, 3
      %vm3756 = vcmp.lt.s32.totalorder %v3734, 4
      %v3757 = vsel %vm3753, %v3737, %v3740
      %v3758 = vsel %vm3756, %v3746, 2102212464
      %v3759 = vsel %vm3755, %v3743, %v3758
      %v3760 = vsel %vm3754, %v3757, %v3759
      %v3761 = vsel %vm3753, %v3740, %v3743
      %v3762 = vsel %vm3756, %v3749, 920167782
      %v3763 = vsel %vm3755, %v3746, %v3762
      %v3764 = vsel %vm3754, %v3761, %v3763
      %v3765 = vsel %vm3753, %v3743, %v3746
      %v3766 = vsel %vm3756, %v3752, 1326507024
      %v3767 = vsel %vm3755, %v3749, %v3766
      %v3768 = vsel %vm3754, %v3765, %v3767
      %v3769 = vshll.u32 %v3729, 8
      %v3770 = vand.u32 %v3769, 65535
      %v3771 = vshrl.u32 %v3769, 16
      %v3772 = vand.u32 %v3768, 65535
      %v3773 = vshrl.u32 %v3768, 16
      %v3774 = vmul.u32 %v3770, %v3772
      %v3775 = vmul.u32 %v3770, %v3773
      %v3776 = vmul.u32 %v3771, %v3772
      %v3777 = vmul.u32 %v3771, %v3773
      %v3778 = vshll.u32 %v3775, 16
      %v3779 = vshrl.u32 %v3775, 16
      %v3780 = vshll.u32 %v3776, 16
      %v3781 = vshrl.u32 %v3776, 16
      %vm3782 = vc.u32 %v3774, %v3778
      %v3783 = vsel %vm3782, 1, 0
      %v3784 = vadd.s32 %v3774, %v3778
      %v3785 = vadd.s32 %v3777, %v3783
      %vm3786 = vc.u32 %v3784, %v3780
      %v3787 = vsel %vm3786, 1, 0
      %v3788 = vadd.s32 %v3784, %v3780
      %v3789 = vadd.s32 %v3785, %v3787
      %v3790 = vadd.s32 %v3789, %v3779
      %v3791 = vadd.s32 %v3790, %v3781
      %v3792 = vand.u32 %v3769, 65535
      %v3793 = vshrl.u32 %v3769, 16
      %v3794 = vand.u32 %v3764, 65535
      %v3795 = vshrl.u32 %v3764, 16
      %v3796 = vmul.u32 %v3792, %v3794
      %v3797 = vmul.u32 %v3792, %v3795
      %v3798 = vmul.u32 %v3793, %v3794
      %v3799 = vmul.u32 %v3793, %v3795
      %v3800 = vshll.u32 %v3797, 16
      %v3801 = vshrl.u32 %v3797, 16
      %v3802 = vshll.u32 %v3798, 16
      %v3803 = vshrl.u32 %v3798, 16
      %vm3804 = vc.u32 %v3796, %v3800
      %v3805 = vsel %vm3804, 1, 0
      %v3806 = vadd.s32 %v3796, %v3800
      %v3807 = vadd.s32 %v3799, %v3805
      %vm3808 = vc.u32 %v3806, %v3802
      %v3809 = vsel %vm3808, 1, 0
      %v3810 = vadd.s32 %v3806, %v3802
      %v3811 = vadd.s32 %v3807, %v3809
      %v3812 = vadd.s32 %v3811, %v3801
      %v3813 = vadd.s32 %v3812, %v3803
      %v3814 = vmul.u32 %v3769, %v3760
      %v3815 = vadd.s32 %v3791, %v3810
      %vm3816 = vc.u32 %v3791, %v3810
      %v3817 = vadd.s32 %v3813, 1
      %v3818 = vsel %vm3816, %v3817, %v3813
      %v3819 = vadd.s32 %v3814, %v3818
      %v3820 = vadd.s32 %v3819, 536870912
      %v3821 = vshrl.u32 %v3820, 30
      %v3822 = vshll.u32 %v3821, 30
      %v3823 = vsub.s32 %v3819, %v3822
      %vm3824 = vcmp.lt.s32.totalorder %v3823, 0
      %v3825 = vsub.s32 0, %v3823
      %v3826 = vsel %vm3824, %v3825, %v3823
      %v3827 = vclz %v3826
      %v3828 = vsub.s32 %v3827, 2
      %vm3829 = vcmp.gt.s32.totalorder 0, %v3828
      %v3830 = vsel %vm3829, 0, %v3828
      %v3831 = vsub.s32 32, %v3830
      %v3832 = vshll.u32 %v3823, %v3830
      %v3833 = vshrl.u32 %v3815, %v3831
      %v3834 = vor.u32 %v3832, %v3833
      %v3835 = vsub.s32 4294967266, %v3830
      %v3836 = vadd.s32 %v3835, 127
      %v3837 = vshll.u32 %v3836, 23
      %v3838 = vor.u32 4788187, %v3837
      %v3839 = vand.u32 2147483647, %v3838
      %v3841 = vcvt.s32.f32 %v3834
      %v3842 = vmul.f32 %v3841, %v3839
      %v3843 = vxor.u32 %v3842, 2147483648
      %v3844 = vsel %vm3723, %v3843, %v3842
      %v3845 = vsub.s32 4, %v3821
      %v3846 = vsel %vm3723, %v3845, %v3821
      %v3847 = vsel %vm3722, %v1869, %v3844
      %v3848 = vsel %vm3722, 0, %v3846
      %v3849 = vmul.f32 %v3847, %v3847
      %v3850 = vmul.f32 %v3849, -0.001358992
      %v3851 = vadd.f32 %v3850, 0.041655596
      %v3852 = vmul.f32 %v3849, %v3851
      %v3853 = vadd.f32 %v3852, -0.4999988
      %v3854 = vmul.f32 %v3849, %v3853
      %v3855 = vadd.f32 1.0, %v3854
      %v3856 = vmul.f32 %v3847, %v3847
      %v3857 = vmul.f32 %v3856, -0.00019511016
      %v3858 = vadd.f32 %v3857, 0.008332121
      %v3859 = vmul.f32 %v3856, %v3858
      %v3860 = vadd.f32 %v3859, -0.16666654
      %v3861 = vmul.f32 %v3856, %v3860
      %v3862 = vadd.f32 %v3861, 1.0
      %v3863 = vmul.f32 %v3862, %v3847
      %vm3864 = vweird.f32 %v1869
      %v3865 = vand.u32 %v3848, 3
      %vm3866 = vcmp.lt.s32.totalorder %v3865, 2
      %vm3867 = vcmp.eq.s32.totalorder %v3865, 0
      %v3868 = vxor.u32 %v3863, 2147483648
      %v3869 = vsel %vm3867, %v3855, %v3868
      %vm3870 = vcmp.eq.s32.totalorder %v3865, 2
      %v3871 = vxor.u32 %v3855, 2147483648
      %v3872 = vsel %vm3870, %v3871, %v3863
      %v3873 = vsel %vm3866, %v3869, %v3872
      %v3874 = vsel %vm3864, nan, %v3873
      %v3875 = vand.u32 2147483647, %v1870
      %vm3876 = vcmp.le.f32.partialorder %v3875, 0.7853982
      %vm3877 = vcmp.lt.s32.totalorder %v1870, 0
      %v3878 = vand.u32 %v1870, 2139095040
      %v3879 = vshrl.u32 %v3878, 23
      %v3880 = vsub.s32 %v3879, 127
      %v3881 = vand.u32 2147483647, %v1870
      %v3882 = vand.u32 %v3881, 8388607
      %v3883 = vor.u32 %v3882, 8388608
      %v3884 = vsub.s32 0, %v3883
      %v3885 = vadd.s32 %v3880, 1
      %vm3886 = vcmp.gt.s32.totalorder %v3885, 0
      %v3887 = vsel %vm3886, %v3885, 0
      %v3888 = vshrl.u32 %v3887, 5
      %v3889 = vand.u32 %v3887, 31
      %v3890 = vsub.s32 32, %v3889
      %v3891 = vshrl.u32 683565275, %v3890
      %v3892 = vshll.u32 683565275, %v3889
      %v3893 = vshrl.u32 2475754826, %v3890
      %v3894 = vor.u32 %v3892, %v3893
      %v3895 = vshll.u32 2475754826, %v3889
      %v3896 = vshrl.u32 2131351028, %v3890
      %v3897 = vor.u32 %v3895, %v3896
      %v3898 = vshll.u32 2131351028, %v3889
      %v3899 = vshrl.u32 2102212464, %v3890
      %v3900 = vor.u32 %v3898, %v3899
      %v3901 = vshll.u32 2102212464, %v3889
      %v3902 = vshrl.u32 920167782, %v3890
      %v3903 = vor.u32 %v3901, %v3902
      %v3904 = vshll.u32 920167782, %v3889
      %v3905 = vshrl.u32 1326507024, %v3890
      %v3906 = vor.u32 %v3904, %v3905
      %vm3907 = vcmp.lt.s32.totalorder %v3888, 1
      %vm3908 = vcmp.lt.s32.totalorder %v3888, 2
      %vm3909 = vcmp.lt.s32.totalorder %v3888, 3
      %vm3910 = vcmp.lt.s32.totalorder %v3888, 4
      %v3911 = vsel %vm3907, %v3891, %v3894
      %v3912 = vsel %vm3910, %v3900, 2102212464
      %v3913 = vsel %vm3909, %v3897, %v3912
      %v3914 = vsel %vm3908, %v3911, %v3913
      %v3915 = vsel %vm3907, %v3894, %v3897
      %v3916 = vsel %vm3910, %v3903, 920167782
      %v3917 = vsel %vm3909, %v3900, %v3916
      %v3918 = vsel %vm3908, %v3915, %v3917
      %v3919 = vsel %vm3907, %v3897, %v3900
      %v3920 = vsel %vm3910, %v3906, 1326507024
      %v3921 = vsel %vm3909, %v3903, %v3920
      %v3922 = vsel %vm3908, %v3919, %v3921
      %v3923 = vshll.u32 %v3883, 8
      %v3924 = vand.u32 %v3923, 65535
      %v3925 = vshrl.u32 %v3923, 16
      %v3926 = vand.u32 %v3922, 65535
      %v3927 = vshrl.u32 %v3922, 16
      %v3928 = vmul.u32 %v3924, %v3926
      %v3929 = vmul.u32 %v3924, %v3927
      %v3930 = vmul.u32 %v3925, %v3926
      %v3931 = vmul.u32 %v3925, %v3927
      %v3932 = vshll.u32 %v3929, 16
      %v3933 = vshrl.u32 %v3929, 16
      %v3934 = vshll.u32 %v3930, 16
      %v3935 = vshrl.u32 %v3930, 16
      %vm3936 = vc.u32 %v3928, %v3932
      %v3937 = vsel %vm3936, 1, 0
      %v3938 = vadd.s32 %v3928, %v3932
      %v3939 = vadd.s32 %v3931, %v3937
      %vm3940 = vc.u32 %v3938, %v3934
      %v3941 = vsel %vm3940, 1, 0
      %v3942 = vadd.s32 %v3938, %v3934
      %v3943 = vadd.s32 %v3939, %v3941
      %v3944 = vadd.s32 %v3943, %v3933
      %v3945 = vadd.s32 %v3944, %v3935
      %v3946 = vand.u32 %v3923, 65535
      %v3947 = vshrl.u32 %v3923, 16
      %v3948 = vand.u32 %v3918, 65535
      %v3949 = vshrl.u32 %v3918, 16
      %v3950 = vmul.u32 %v3946, %v3948
      %v3951 = vmul.u32 %v3946, %v3949
      %v3952 = vmul.u32 %v3947, %v3948
      %v3953 = vmul.u32 %v3947, %v3949
      %v3954 = vshll.u32 %v3951, 16
      %v3955 = vshrl.u32 %v3951, 16
      %v3956 = vshll.u32 %v3952, 16
      %v3957 = vshrl.u32 %v3952, 16
      %vm3958 = vc.u32 %v3950, %v3954
      %v3959 = vsel %vm3958, 1, 0
      %v3960 = vadd.s32 %v3950, %v3954
      %v3961 = vadd.s32 %v3953, %v3959
      %vm3962 = vc.u32 %v3960, %v3956
      %v3963 = vsel %vm3962, 1, 0
      %v3964 = vadd.s32 %v3960, %v3956
      %v3965 = vadd.s32 %v3961, %v3963
      %v3966 = vadd.s32 %v3965, %v3955
      %v3967 = vadd.s32 %v3966, %v3957
      %v3968 = vmul.u32 %v3923, %v3914
      %v3969 = vadd.s32 %v3945, %v3964
      %vm3970 = vc.u32 %v3945, %v3964
      %v3971 = vadd.s32 %v3967, 1
      %v3972 = vsel %vm3970, %v3971, %v3967
      %v3973 = vadd.s32 %v3968, %v3972
      %v3974 = vadd.s32 %v3973, 536870912
      %v3975 = vshrl.u32 %v3974, 30
      %v3976 = vshll.u32 %v3975, 30
      %v3977 = vsub.s32 %v3973, %v3976
      %vm3978 = vcmp.lt.s32.totalorder %v3977, 0
      %v3979 = vsub.s32 0, %v3977
      %v3980 = vsel %vm3978, %v3979, %v3977
      %v3981 = vclz %v3980
      %v3982 = vsub.s32 %v3981, 2
      %vm3983 = vcmp.gt.s32.totalorder 0, %v3982
      %v3984 = vsel %vm3983, 0, %v3982
      %v3985 = vsub.s32 32, %v3984
      %v3986 = vshll.u32 %v3977, %v3984
      %v3987 = vshrl.u32 %v3969, %v3985
      %v3988 = vor.u32 %v3986, %v3987
      %v3989 = vsub.s32 4294967266, %v3984
      %v3990 = vadd.s32 %v3989, 127
      %v3991 = vshll.u32 %v3990, 23
      %v3992 = vor.u32 4788187, %v3991
      %v3993 = vand.u32 2147483647, %v3992
      %v3995 = vcvt.s32.f32 %v3988
      %v3996 = vmul.f32 %v3995, %v3993
      %v3997 = vxor.u32 %v3996, 2147483648
      %v3998 = vsel %vm3877, %v3997, %v3996
      %v3999 = vsub.s32 4, %v3975
      %v4000 = vsel %vm3877, %v3999, %v3975
      %v4001 = vsel %vm3876, %v1870, %v3998
      %v4002 = vsel %vm3876, 0, %v4000
      %v4003 = vmul.f32 %v4001, %v4001
      %v4004 = vmul.f32 %v4003, -0.001358992
      %v4005 = vadd.f32 %v4004, 0.041655596
      %v4006 = vmul.f32 %v4003, %v4005
      %v4007 = vadd.f32 %v4006, -0.4999988
      %v4008 = vmul.f32 %v4003, %v4007
      %v4009 = vadd.f32 1.0, %v4008
      %v4010 = vmul.f32 %v4001, %v4001
      %v4011 = vmul.f32 %v4010, -0.00019511016
      %v4012 = vadd.f32 %v4011, 0.008332121
      %v4013 = vmul.f32 %v4010, %v4012
      %v4014 = vadd.f32 %v4013, -0.16666654
      %v4015 = vmul.f32 %v4010, %v4014
      %v4016 = vadd.f32 %v4015, 1.0
      %v4017 = vmul.f32 %v4016, %v4001
      %vm4018 = vweird.f32 %v1870
      %v4019 = vand.u32 %v4002, 3
      %vm4020 = vcmp.lt.s32.totalorder %v4019, 2
      %vm4021 = vcmp.eq.s32.totalorder %v4019, 0
      %v4022 = vxor.u32 %v4017, 2147483648
      %v4023 = vsel %vm4021, %v4009, %v4022
      %vm4024 = vcmp.eq.s32.totalorder %v4019, 2
      %v4025 = vxor.u32 %v4009, 2147483648
      %v4026 = vsel %vm4024, %v4025, %v4017
      %v4027 = vsel %vm4020, %v4023, %v4026
      %v4028 = vsel %vm4018, nan, %v4027
      %v4029 = vand.u32 2147483647, %v1871
      %vm4030 = vcmp.le.f32.partialorder %v4029, 0.7853982
      %vm4031 = vcmp.lt.s32.totalorder %v1871, 0
      %v4032 = vand.u32 %v1871, 2139095040
      %v4033 = vshrl.u32 %v4032, 23
      %v4034 = vsub.s32 %v4033, 127
      %v4035 = vand.u32 2147483647, %v1871
      %v4036 = vand.u32 %v4035, 8388607
      %v4037 = vor.u32 %v4036, 8388608
      %v4038 = vsub.s32 0, %v4037
      %v4039 = vadd.s32 %v4034, 1
      %vm4040 = vcmp.gt.s32.totalorder %v4039, 0
      %v4041 = vsel %vm4040, %v4039, 0
      %v4042 = vshrl.u32 %v4041, 5
      %v4043 = vand.u32 %v4041, 31
      %v4044 = vsub.s32 32, %v4043
      %v4045 = vshrl.u32 683565275, %v4044
      %v4046 = vshll.u32 683565275, %v4043
      %v4047 = vshrl.u32 2475754826, %v4044
      %v4048 = vor.u32 %v4046, %v4047
      %v4049 = vshll.u32 2475754826, %v4043
      %v4050 = vshrl.u32 2131351028, %v4044
      %v4051 = vor.u32 %v4049, %v4050
      %v4052 = vshll.u32 2131351028, %v4043
      %v4053 = vshrl.u32 2102212464, %v4044
      %v4054 = vor.u32 %v4052, %v4053
      %v4055 = vshll.u32 2102212464, %v4043
      %v4056 = vshrl.u32 920167782, %v4044
      %v4057 = vor.u32 %v4055, %v4056
      %v4058 = vshll.u32 920167782, %v4043
      %v4059 = vshrl.u32 1326507024, %v4044
      %v4060 = vor.u32 %v4058, %v4059
      %vm4061 = vcmp.lt.s32.totalorder %v4042, 1
      %vm4062 = vcmp.lt.s32.totalorder %v4042, 2
      %vm4063 = vcmp.lt.s32.totalorder %v4042, 3
      %vm4064 = vcmp.lt.s32.totalorder %v4042, 4
      %v4065 = vsel %vm4061, %v4045, %v4048
      %v4066 = vsel %vm4064, %v4054, 2102212464
      %v4067 = vsel %vm4063, %v4051, %v4066
      %v4068 = vsel %vm4062, %v4065, %v4067
      %v4069 = vsel %vm4061, %v4048, %v4051
      %v4070 = vsel %vm4064, %v4057, 920167782
      %v4071 = vsel %vm4063, %v4054, %v4070
      %v4072 = vsel %vm4062, %v4069, %v4071
      %v4073 = vsel %vm4061, %v4051, %v4054
      %v4074 = vsel %vm4064, %v4060, 1326507024
      %v4075 = vsel %vm4063, %v4057, %v4074
      %v4076 = vsel %vm4062, %v4073, %v4075
      %v4077 = vshll.u32 %v4037, 8
      %v4078 = vand.u32 %v4077, 65535
      %v4079 = vshrl.u32 %v4077, 16
      %v4080 = vand.u32 %v4076, 65535
      %v4081 = vshrl.u32 %v4076, 16
      %v4082 = vmul.u32 %v4078, %v4080
      %v4083 = vmul.u32 %v4078, %v4081
      %v4084 = vmul.u32 %v4079, %v4080
      %v4085 = vmul.u32 %v4079, %v4081
      %v4086 = vshll.u32 %v4083, 16
      %v4087 = vshrl.u32 %v4083, 16
      %v4088 = vshll.u32 %v4084, 16
      %v4089 = vshrl.u32 %v4084, 16
      %vm4090 = vc.u32 %v4082, %v4086
      %v4091 = vsel %vm4090, 1, 0
      %v4092 = vadd.s32 %v4082, %v4086
      %v4093 = vadd.s32 %v4085, %v4091
      %vm4094 = vc.u32 %v4092, %v4088
      %v4095 = vsel %vm4094, 1, 0
      %v4096 = vadd.s32 %v4092, %v4088
      %v4097 = vadd.s32 %v4093, %v4095
      %v4098 = vadd.s32 %v4097, %v4087
      %v4099 = vadd.s32 %v4098, %v4089
      %v4100 = vand.u32 %v4077, 65535
      %v4101 = vshrl.u32 %v4077, 16
      %v4102 = vand.u32 %v4072, 65535
      %v4103 = vshrl.u32 %v4072, 16
      %v4104 = vmul.u32 %v4100, %v4102
      %v4105 = vmul.u32 %v4100, %v4103
      %v4106 = vmul.u32 %v4101, %v4102
      %v4107 = vmul.u32 %v4101, %v4103
      %v4108 = vshll.u32 %v4105, 16
      %v4109 = vshrl.u32 %v4105, 16
      %v4110 = vshll.u32 %v4106, 16
      %v4111 = vshrl.u32 %v4106, 16
      %vm4112 = vc.u32 %v4104, %v4108
      %v4113 = vsel %vm4112, 1, 0
      %v4114 = vadd.s32 %v4104, %v4108
      %v4115 = vadd.s32 %v4107, %v4113
      %vm4116 = vc.u32 %v4114, %v4110
      %v4117 = vsel %vm4116, 1, 0
      %v4118 = vadd.s32 %v4114, %v4110
      %v4119 = vadd.s32 %v4115, %v4117
      %v4120 = vadd.s32 %v4119, %v4109
      %v4121 = vadd.s32 %v4120, %v4111
      %v4122 = vmul.u32 %v4077, %v4068
      %v4123 = vadd.s32 %v4099, %v4118
      %vm4124 = vc.u32 %v4099, %v4118
      %v4125 = vadd.s32 %v4121, 1
      %v4126 = vsel %vm4124, %v4125, %v4121
      %v4127 = vadd.s32 %v4122, %v4126
      %v4128 = vadd.s32 %v4127, 536870912
      %v4129 = vshrl.u32 %v4128, 30
      %v4130 = vshll.u32 %v4129, 30
      %v4131 = vsub.s32 %v4127, %v4130
      %vm4132 = vcmp.lt.s32.totalorder %v4131, 0
      %v4133 = vsub.s32 0, %v4131
      %v4134 = vsel %vm4132, %v4133, %v4131
      %v4135 = vclz %v4134
      %v4136 = vsub.s32 %v4135, 2
      %vm4137 = vcmp.gt.s32.totalorder 0, %v4136
      %v4138 = vsel %vm4137, 0, %v4136
      %v4139 = vsub.s32 32, %v4138
      %v4140 = vshll.u32 %v4131, %v4138
      %v4141 = vshrl.u32 %v4123, %v4139
      %v4142 = vor.u32 %v4140, %v4141
      %v4143 = vsub.s32 4294967266, %v4138
      %v4144 = vadd.s32 %v4143, 127
      %v4145 = vshll.u32 %v4144, 23
      %v4146 = vor.u32 4788187, %v4145
      %v4147 = vand.u32 2147483647, %v4146
      %v4149 = vcvt.s32.f32 %v4142
      %v4150 = vmul.f32 %v4149, %v4147
      %v4151 = vxor.u32 %v4150, 2147483648
      %v4152 = vsel %vm4031, %v4151, %v4150
      %v4153 = vsub.s32 4, %v4129
      %v4154 = vsel %vm4031, %v4153, %v4129
      %v4155 = vsel %vm4030, %v1871, %v4152
      %v4156 = vsel %vm4030, 0, %v4154
      %v4157 = vmul.f32 %v4155, %v4155
      %v4158 = vmul.f32 %v4157, -0.001358992
      %v4159 = vadd.f32 %v4158, 0.041655596
      %v4160 = vmul.f32 %v4157, %v4159
      %v4161 = vadd.f32 %v4160, -0.4999988
      %v4162 = vmul.f32 %v4157, %v4161
      %v4163 = vadd.f32 1.0, %v4162
      %v4164 = vmul.f32 %v4155, %v4155
      %v4165 = vmul.f32 %v4164, -0.00019511016
      %v4166 = vadd.f32 %v4165, 0.008332121
      %v4167 = vmul.f32 %v4164, %v4166
      %v4168 = vadd.f32 %v4167, -0.16666654
      %v4169 = vmul.f32 %v4164, %v4168
      %v4170 = vadd.f32 %v4169, 1.0
      %v4171 = vmul.f32 %v4170, %v4155
      %vm4172 = vweird.f32 %v1871
      %v4173 = vand.u32 %v4156, 3
      %vm4174 = vcmp.lt.s32.totalorder %v4173, 2
      %vm4175 = vcmp.eq.s32.totalorder %v4173, 0
      %v4176 = vxor.u32 %v4171, 2147483648
      %v4177 = vsel %vm4175, %v4163, %v4176
      %vm4178 = vcmp.eq.s32.totalorder %v4173, 2
      %v4179 = vxor.u32 %v4163, 2147483648
      %v4180 = vsel %vm4178, %v4179, %v4171
      %v4181 = vsel %vm4174, %v4177, %v4180
      %v4182 = vsel %vm4172, nan, %v4181
      %v4183 = vand.u32 2147483647, %v1872
      %vm4184 = vcmp.le.f32.partialorder %v4183, 0.7853982
      %vm4185 = vcmp.lt.s32.totalorder %v1872, 0
      %v4186 = vand.u32 %v1872, 2139095040
      %v4187 = vshrl.u32 %v4186, 23
      %v4188 = vsub.s32 %v4187, 127
      %v4189 = vand.u32 2147483647, %v1872
      %v4190 = vand.u32 %v4189, 8388607
      %v4191 = vor.u32 %v4190, 8388608
      %v4192 = vsub.s32 0, %v4191
      %v4193 = vadd.s32 %v4188, 1
      %vm4194 = vcmp.gt.s32.totalorder %v4193, 0
      %v4195 = vsel %vm4194, %v4193, 0
      %v4196 = vshrl.u32 %v4195, 5
      %v4197 = vand.u32 %v4195, 31
      %v4198 = vsub.s32 32, %v4197
      %v4199 = vshrl.u32 683565275, %v4198
      %v4200 = vshll.u32 683565275, %v4197
      %v4201 = vshrl.u32 2475754826, %v4198
      %v4202 = vor.u32 %v4200, %v4201
      %v4203 = vshll.u32 2475754826, %v4197
      %v4204 = vshrl.u32 2131351028, %v4198
      %v4205 = vor.u32 %v4203, %v4204
      %v4206 = vshll.u32 2131351028, %v4197
      %v4207 = vshrl.u32 2102212464, %v4198
      %v4208 = vor.u32 %v4206, %v4207
      %v4209 = vshll.u32 2102212464, %v4197
      %v4210 = vshrl.u32 920167782, %v4198
      %v4211 = vor.u32 %v4209, %v4210
      %v4212 = vshll.u32 920167782, %v4197
      %v4213 = vshrl.u32 1326507024, %v4198
      %v4214 = vor.u32 %v4212, %v4213
      %vm4215 = vcmp.lt.s32.totalorder %v4196, 1
      %vm4216 = vcmp.lt.s32.totalorder %v4196, 2
      %vm4217 = vcmp.lt.s32.totalorder %v4196, 3
      %vm4218 = vcmp.lt.s32.totalorder %v4196, 4
      %v4219 = vsel %vm4215, %v4199, %v4202
      %v4220 = vsel %vm4218, %v4208, 2102212464
      %v4221 = vsel %vm4217, %v4205, %v4220
      %v4222 = vsel %vm4216, %v4219, %v4221
      %v4223 = vsel %vm4215, %v4202, %v4205
      %v4224 = vsel %vm4218, %v4211, 920167782
      %v4225 = vsel %vm4217, %v4208, %v4224
      %v4226 = vsel %vm4216, %v4223, %v4225
      %v4227 = vsel %vm4215, %v4205, %v4208
      %v4228 = vsel %vm4218, %v4214, 1326507024
      %v4229 = vsel %vm4217, %v4211, %v4228
      %v4230 = vsel %vm4216, %v4227, %v4229
      %v4231 = vshll.u32 %v4191, 8
      %v4232 = vand.u32 %v4231, 65535
      %v4233 = vshrl.u32 %v4231, 16
      %v4234 = vand.u32 %v4230, 65535
      %v4235 = vshrl.u32 %v4230, 16
      %v4236 = vmul.u32 %v4232, %v4234
      %v4237 = vmul.u32 %v4232, %v4235
      %v4238 = vmul.u32 %v4233, %v4234
      %v4239 = vmul.u32 %v4233, %v4235
      %v4240 = vshll.u32 %v4237, 16
      %v4241 = vshrl.u32 %v4237, 16
      %v4242 = vshll.u32 %v4238, 16
      %v4243 = vshrl.u32 %v4238, 16
      %vm4244 = vc.u32 %v4236, %v4240
      %v4245 = vsel %vm4244, 1, 0
      %v4246 = vadd.s32 %v4236, %v4240
      %v4247 = vadd.s32 %v4239, %v4245
      %vm4248 = vc.u32 %v4246, %v4242
      %v4249 = vsel %vm4248, 1, 0
      %v4250 = vadd.s32 %v4246, %v4242
      %v4251 = vadd.s32 %v4247, %v4249
      %v4252 = vadd.s32 %v4251, %v4241
      %v4253 = vadd.s32 %v4252, %v4243
      %v4254 = vand.u32 %v4231, 65535
      %v4255 = vshrl.u32 %v4231, 16
      %v4256 = vand.u32 %v4226, 65535
      %v4257 = vshrl.u32 %v4226, 16
      %v4258 = vmul.u32 %v4254, %v4256
      %v4259 = vmul.u32 %v4254, %v4257
      %v4260 = vmul.u32 %v4255, %v4256
      %v4261 = vmul.u32 %v4255, %v4257
      %v4262 = vshll.u32 %v4259, 16
      %v4263 = vshrl.u32 %v4259, 16
      %v4264 = vshll.u32 %v4260, 16
      %v4265 = vshrl.u32 %v4260, 16
      %vm4266 = vc.u32 %v4258, %v4262
      %v4267 = vsel %vm4266, 1, 0
      %v4268 = vadd.s32 %v4258, %v4262
      %v4269 = vadd.s32 %v4261, %v4267
      %vm4270 = vc.u32 %v4268, %v4264
      %v4271 = vsel %vm4270, 1, 0
      %v4272 = vadd.s32 %v4268, %v4264
      %v4273 = vadd.s32 %v4269, %v4271
      %v4274 = vadd.s32 %v4273, %v4263
      %v4275 = vadd.s32 %v4274, %v4265
      %v4276 = vmul.u32 %v4231, %v4222
      %v4277 = vadd.s32 %v4253, %v4272
      %vm4278 = vc.u32 %v4253, %v4272
      %v4279 = vadd.s32 %v4275, 1
      %v4280 = vsel %vm4278, %v4279, %v4275
      %v4281 = vadd.s32 %v4276, %v4280
      %v4282 = vadd.s32 %v4281, 536870912
      %v4283 = vshrl.u32 %v4282, 30
      %v4284 = vshll.u32 %v4283, 30
      %v4285 = vsub.s32 %v4281, %v4284
      %vm4286 = vcmp.lt.s32.totalorder %v4285, 0
      %v4287 = vsub.s32 0, %v4285
      %v4288 = vsel %vm4286, %v4287, %v4285
      %v4289 = vclz %v4288
      %v4290 = vsub.s32 %v4289, 2
      %vm4291 = vcmp.gt.s32.totalorder 0, %v4290
      %v4292 = vsel %vm4291, 0, %v4290
      %v4293 = vsub.s32 32, %v4292
      %v4294 = vshll.u32 %v4285, %v4292
      %v4295 = vshrl.u32 %v4277, %v4293
      %v4296 = vor.u32 %v4294, %v4295
      %v4297 = vsub.s32 4294967266, %v4292
      %v4298 = vadd.s32 %v4297, 127
      %v4299 = vshll.u32 %v4298, 23
      %v4300 = vor.u32 4788187, %v4299
      %v4301 = vand.u32 2147483647, %v4300
      %v4303 = vcvt.s32.f32 %v4296
      %v4304 = vmul.f32 %v4303, %v4301
      %v4305 = vxor.u32 %v4304, 2147483648
      %v4306 = vsel %vm4185, %v4305, %v4304
      %v4307 = vsub.s32 4, %v4283
      %v4308 = vsel %vm4185, %v4307, %v4283
      %v4309 = vsel %vm4184, %v1872, %v4306
      %v4310 = vsel %vm4184, 0, %v4308
      %v4311 = vmul.f32 %v4309, %v4309
      %v4312 = vmul.f32 %v4311, -0.001358992
      %v4313 = vadd.f32 %v4312, 0.041655596
      %v4314 = vmul.f32 %v4311, %v4313
      %v4315 = vadd.f32 %v4314, -0.4999988
      %v4316 = vmul.f32 %v4311, %v4315
      %v4317 = vadd.f32 1.0, %v4316
      %v4318 = vmul.f32 %v4309, %v4309
      %v4319 = vmul.f32 %v4318, -0.00019511016
      %v4320 = vadd.f32 %v4319, 0.008332121
      %v4321 = vmul.f32 %v4318, %v4320
      %v4322 = vadd.f32 %v4321, -0.16666654
      %v4323 = vmul.f32 %v4318, %v4322
      %v4324 = vadd.f32 %v4323, 1.0
      %v4325 = vmul.f32 %v4324, %v4309
      %vm4326 = vweird.f32 %v1872
      %v4327 = vand.u32 %v4310, 3
      %vm4328 = vcmp.lt.s32.totalorder %v4327, 2
      %vm4329 = vcmp.eq.s32.totalorder %v4327, 0
      %v4330 = vxor.u32 %v4325, 2147483648
      %v4331 = vsel %vm4329, %v4317, %v4330
      %vm4332 = vcmp.eq.s32.totalorder %v4327, 2
      %v4333 = vxor.u32 %v4317, 2147483648
      %v4334 = vsel %vm4332, %v4333, %v4325
      %v4335 = vsel %vm4328, %v4331, %v4334
      %v4336 = vsel %vm4326, nan, %v4335
      %v4337 = vadd.f32 %v2026, 1.0
      %v4338 = vadd.f32 %v2180, 1.0
      %v4339 = vadd.f32 %v2334, 1.0
      %v4340 = vadd.f32 %v2488, 1.0
      %v4341 = vadd.f32 %v2642, 1.0
      %v4342 = vadd.f32 %v2796, 1.0
      %v4343 = vadd.f32 %v2950, 1.0
      %v4344 = vadd.f32 %v3104, 1.0
      %v4345 = vadd.f32 %v3258, 1.0
      %v4346 = vadd.f32 %v3412, 1.0
      %v4347 = vadd.f32 %v3566, 1.0
      %v4348 = vadd.f32 %v3720, 1.0
      %v4349 = vadd.f32 %v3874, 1.0
      %v4350 = vadd.f32 %v4028, 1.0
      %v4351 = vadd.f32 %v4182, 1.0
      %v4352 = vadd.f32 %v4336, 1.0
      %v4353 = vmul.f32 %v4337, 0.5
      %v4354 = vmul.f32 %v4338, 0.5
      %v4355 = vmul.f32 %v4339, 0.5
      %v4356 = vmul.f32 %v4340, 0.5
      %v4357 = vmul.f32 %v4341, 0.5
      %v4358 = vmul.f32 %v4342, 0.5
      %v4359 = vmul.f32 %v4343, 0.5
      %v4360 = vmul.f32 %v4344, 0.5
      %v4361 = vmul.f32 %v4345, 0.5
      %v4362 = vmul.f32 %v4346, 0.5
      %v4363 = vmul.f32 %v4347, 0.5
      %v4364 = vmul.f32 %v4348, 0.5
      %v4365 = vmul.f32 %v4349, 0.5
      %v4366 = vmul.f32 %v4350, 0.5
      %v4367 = vmul.f32 %v4351, 0.5
      %v4368 = vmul.f32 %v4352, 0.5
      %v4369 = vsel %vm1841, %v4353, 0.0
      %v4370 = vsel %vm1842, %v4354, 0.0
      %v4371 = vsel %vm1843, %v4355, 0.0
      %v4372 = vsel %vm1844, %v4356, 0.0
      %v4373 = vsel %vm1845, %v4357, 0.0
      %v4374 = vsel %vm1846, %v4358, 0.0
      %v4375 = vsel %vm1847, %v4359, 0.0
      %v4376 = vsel %vm1848, %v4360, 0.0
      %v4377 = vsel %vm1849, %v4361, 0.0
      %v4378 = vsel %vm1850, %v4362, 0.0
      %v4379 = vsel %vm1851, %v4363, 0.0
      %v4380 = vsel %vm1852, %v4364, 0.0
      %v4381 = vsel %vm1853, %v4365, 0.0
      %v4382 = vsel %vm1854, %v4366, 0.0
      %v4383 = vsel %vm1855, %v4367, 0.0
      %v4384 = vsel %vm1856, %v4368, 0.0
      %s4385 = scalar_lea.vmem [#allocation3], %s1674
      %v4386 = vld [vmem:[%s4385] sm:$0xff]
      %v4387 = vld [vmem:[%s4385 + $0x8] sm:$0xff]
      %v4388 = vld [vmem:[%s4385 + $0x10] sm:$0xff]
      %v4389 = vld [vmem:[%s4385 + $0x18] sm:$0xff]
      %v4390 = vld [vmem:[%s4385 + $0x20] sm:$0xff]
      %v4391 = vld [vmem:[%s4385 + $0x28] sm:$0xff]
      %v4392 = vld [vmem:[%s4385 + $0x30] sm:$0xff]
      %v4393 = vld [vmem:[%s4385 + $0x38] sm:$0xff]
      %v4394 = vld [vmem:[%s4385 + $0x40] sm:$0xff]
      %v4395 = vld [vmem:[%s4385 + $0x48] sm:$0xff]
      %v4396 = vld [vmem:[%s4385 + $0x50] sm:$0xff]
      %v4397 = vld [vmem:[%s4385 + $0x58] sm:$0xff]
      %v4398 = vld [vmem:[%s4385 + $0x60] sm:$0xff]
      %v4399 = vld [vmem:[%s4385 + $0x68] sm:$0xff]
      %v4400 = vld [vmem:[%s4385 + $0x70] sm:$0xff]
      %v4401 = vld [vmem:[%s4385 + $0x78] sm:$0xff]
      %v4402 = vld [vmem:[%s674] sm:$0xf]
      %v4403 = vld [vmem:[%s674 + $0x4] sm:$0xf]
      %v4404 = vmul.f32 %v1474, -4.5
      %v4405 = vmul.f32 %v1486, -4.5
      %v4406 = vmul.f32 %v1498, -4.5
      %v4407 = vmul.f32 %v1510, -4.5
      %v4408 = vmul.f32 %v1522, -4.5
      %v4409 = vmul.f32 %v1534, -4.5
      %v4410 = vmul.f32 %v1546, -4.5
      %v4411 = vmul.f32 %v1558, -4.5
      %v4412 = vmul.f32 %v1570, -4.5
      %v4413 = vmul.f32 %v1582, -4.5
      %v4414 = vmul.f32 %v1594, -4.5
      %v4415 = vmul.f32 %v1606, -4.5
      %v4416 = vmul.f32 %v1618, -4.5
      %v4417 = vmul.f32 %v1630, -4.5
      %v4418 = vmul.f32 %v1642, -4.5
      %v4419 = vmul.f32 %v1654, -4.5
      %v4420 = vmul.f32 %v4404, %v1474
      %v4421 = vmul.f32 %v4405, %v1486
      %v4422 = vmul.f32 %v4406, %v1498
      %v4423 = vmul.f32 %v4407, %v1510
      %v4424 = vmul.f32 %v4408, %v1522
      %v4425 = vmul.f32 %v4409, %v1534
      %v4426 = vmul.f32 %v4410, %v1546
      %v4427 = vmul.f32 %v4411, %v1558
      %v4428 = vmul.f32 %v4412, %v1570
      %v4429 = vmul.f32 %v4413, %v1582
      %v4430 = vmul.f32 %v4414, %v1594
      %v4431 = vmul.f32 %v4415, %v1606
      %v4432 = vmul.f32 %v4416, %v1618
      %v4433 = vmul.f32 %v4417, %v1630
      %v4434 = vmul.f32 %v4418, %v1642
      %v4435 = vmul.f32 %v4419, %v1654
      %v4436 = vmul.f32 %v4420, 1.442695
      %v4437 = vpow.pop %v4436
      %v4438 = vmul.f32 %v4421, 1.442695
      %v4439 = vpow.pop %v4438
      %v4440 = vmul.f32 %v4422, 1.442695
      %v4441 = vpow.pop %v4440
      %v4442 = vmul.f32 %v4423, 1.442695
      %v4443 = vpow.pop %v4442
      %v4444 = vmul.f32 %v4424, 1.442695
      %v4445 = vpow.pop %v4444
      %v4446 = vmul.f32 %v4425, 1.442695
      %v4447 = vpow.pop %v4446
      %v4448 = vmul.f32 %v4426, 1.442695
      %v4449 = vpow.pop %v4448
      %v4450 = vmul.f32 %v4427, 1.442695
      %v4451 = vpow.pop %v4450
      %v4452 = vmul.f32 %v4428, 1.442695
      %v4453 = vpow.pop %v4452
      %v4454 = vmul.f32 %v4429, 1.442695
      %v4455 = vpow.pop %v4454
      %v4456 = vmul.f32 %v4430, 1.442695
      %v4457 = vpow.pop %v4456
      %v4458 = vmul.f32 %v4431, 1.442695
      %v4459 = vpow.pop %v4458
      %v4460 = vmul.f32 %v4432, 1.442695
      %v4461 = vpow.pop %v4460
      %v4462 = vmul.f32 %v4433, 1.442695
      %v4463 = vpow.pop %v4462
      %v4464 = vmul.f32 %v4434, 1.442695
      %v4465 = vpow.pop %v4464
      %v4466 = vmul.f32 %v4435, 1.442695
      %v4467 = vpow.pop %v4466
      %v4468 = vmul.f32 %v4369, %v4437
      %v4469 = vmul.f32 %v4370, %v4439
      %v4470 = vmul.f32 %v4371, %v4441
      %v4471 = vmul.f32 %v4372, %v4443
      %v4472 = vmul.f32 %v4373, %v4445
      %v4473 = vmul.f32 %v4374, %v4447
      %v4474 = vmul.f32 %v4375, %v4449
      %v4475 = vmul.f32 %v4376, %v4451
      %v4476 = vmul.f32 %v4377, %v4453
      %v4477 = vmul.f32 %v4378, %v4455
      %v4478 = vmul.f32 %v4379, %v4457
      %v4479 = vmul.f32 %v4380, %v4459
      %v4480 = vmul.f32 %v4381, %v4461
      %v4481 = vmul.f32 %v4382, %v4463
      %v4482 = vmul.f32 %v4383, %v4465
      %v4483 = vmul.f32 %v4384, %v4467
      %v4484 = vpack.c.bf16 %v4468, %v4468
      %v4485 = vpack.c.bf16 %v4469, %v4469
      %v4486 = vpack.c.bf16 %v4470, %v4470
      %v4487 = vpack.c.bf16 %v4471, %v4471
      %v4488 = vpack.c.bf16 %v4472, %v4472
      %v4489 = vpack.c.bf16 %v4473, %v4473
      %v4490 = vpack.c.bf16 %v4474, %v4474
      %v4491 = vpack.c.bf16 %v4475, %v4475
      %v4492 = vpack.c.bf16 %v4476, %v4476
      %v4493 = vpack.c.bf16 %v4477, %v4477
      %v4494 = vpack.c.bf16 %v4478, %v4478
      %v4495 = vpack.c.bf16 %v4479, %v4479
      %v4496 = vpack.c.bf16 %v4480, %v4480
      %v4497 = vpack.c.bf16 %v4481, %v4481
      %v4498 = vpack.c.bf16 %v4482, %v4482
      %v4499 = vpack.c.bf16 %v4483, %v4483
      %4500 = vst [vmem:[#allocation5] sm:$0xf] %v4484
      %4501 = vst [vmem:[#allocation5 + $0x40] sm:$0xf] %v4485
      %4502 = vst [vmem:[#allocation5 + $0x80] sm:$0xf] %v4486
      %4503 = vst [vmem:[#allocation5 + $0xc0] sm:$0xf] %v4487
      %4504 = vst [vmem:[#allocation5 + $0x100] sm:$0xf] %v4488
      %4505 = vst [vmem:[#allocation5 + $0x140] sm:$0xf] %v4489
      %4506 = vst [vmem:[#allocation5 + $0x180] sm:$0xf] %v4490
      %4507 = vst [vmem:[#allocation5 + $0x1c0] sm:$0xf] %v4491
      %4508 = vst [vmem:[#allocation5 + $0x200] sm:$0xf] %v4492
      %4509 = vst [vmem:[#allocation5 + $0x240] sm:$0xf] %v4493
      %4510 = vst [vmem:[#allocation5 + $0x280] sm:$0xf] %v4494
      %4511 = vst [vmem:[#allocation5 + $0x2c0] sm:$0xf] %v4495
      %4512 = vst [vmem:[#allocation5 + $0x300] sm:$0xf] %v4496
      %4513 = vst [vmem:[#allocation5 + $0x340] sm:$0xf] %v4497
      %4514 = vst [vmem:[#allocation5 + $0x380] sm:$0xf] %v4498
      %4515 = vst [vmem:[#allocation5 + $0x3c0] sm:$0xf] %v4499
      %v4516 = vunpack.c.l.bf16 %v4402
      %v4517 = vperm.slane %v4516, 0
      %v4518 = vmul.f32 %v4386, %v4517
      %v4519 = vmul.f32 %v4387, %v4517
      %v4520 = vmul.f32 %v4388, %v4517
      %v4521 = vmul.f32 %v4389, %v4517
      %v4522 = vmul.f32 %v4390, %v4517
      %v4523 = vmul.f32 %v4391, %v4517
      %v4524 = vmul.f32 %v4392, %v4517
      %v4525 = vmul.f32 %v4393, %v4517
      %v4526 = vmul.f32 %v4394, %v4517
      %v4527 = vmul.f32 %v4395, %v4517
      %v4528 = vmul.f32 %v4396, %v4517
      %v4529 = vmul.f32 %v4397, %v4517
      %v4530 = vmul.f32 %v4398, %v4517
      %v4531 = vmul.f32 %v4399, %v4517
      %v4532 = vmul.f32 %v4400, %v4517
      %v4533 = vmul.f32 %v4401, %v4517
      %v4534 = vpack.c.bf16 %v4518, %v4518
      %v4535 = vpack.c.bf16 %v4519, %v4519
      %v4536 = vpack.c.bf16 %v4520, %v4520
      %v4537 = vpack.c.bf16 %v4521, %v4521
      %v4538 = vpack.c.bf16 %v4522, %v4522
      %v4539 = vpack.c.bf16 %v4523, %v4523
      %v4540 = vpack.c.bf16 %v4524, %v4524
      %v4541 = vpack.c.bf16 %v4525, %v4525
      %v4542 = vpack.c.bf16 %v4526, %v4526
      %v4543 = vpack.c.bf16 %v4527, %v4527
      %v4544 = vpack.c.bf16 %v4528, %v4528
      %v4545 = vpack.c.bf16 %v4529, %v4529
      %v4546 = vpack.c.bf16 %v4530, %v4530
      %v4547 = vpack.c.bf16 %v4531, %v4531
      %v4548 = vpack.c.bf16 %v4532, %v4532
      %v4549 = vpack.c.bf16 %v4533, %v4533
      %4550 = vst [vmem:[#allocation6] sm:$0xf] %v4534
      %4551 = vst [vmem:[#allocation6 + $0x4] sm:$0xf] %v4535
      %4552 = vst [vmem:[#allocation6 + $0x8] sm:$0xf] %v4536
      %4553 = vst [vmem:[#allocation6 + $0xc] sm:$0xf] %v4537
      %4554 = vst [vmem:[#allocation6 + $0x10] sm:$0xf] %v4538
      %4555 = vst [vmem:[#allocation6 + $0x14] sm:$0xf] %v4539
      %4556 = vst [vmem:[#allocation6 + $0x18] sm:$0xf] %v4540
      %4557 = vst [vmem:[#allocation6 + $0x1c] sm:$0xf] %v4541
      %4558 = vst [vmem:[#allocation6 + $0x20] sm:$0xf] %v4542
      %4559 = vst [vmem:[#allocation6 + $0x24] sm:$0xf] %v4543
      %4560 = vst [vmem:[#allocation6 + $0x28] sm:$0xf] %v4544
      %4561 = vst [vmem:[#allocation6 + $0x2c] sm:$0xf] %v4545
      %4562 = vst [vmem:[#allocation6 + $0x30] sm:$0xf] %v4546
      %4563 = vst [vmem:[#allocation6 + $0x34] sm:$0xf] %v4547
      %4564 = vst [vmem:[#allocation6 + $0x38] sm:$0xf] %v4548
      %4565 = vst [vmem:[#allocation6 + $0x3c] sm:$0xf] %v4549
      %v4566 = vsub.f32 %v1474, 0.33333334
      %v4567 = vsub.f32 %v1486, 0.33333334
      %v4568 = vsub.f32 %v1498, 0.33333334
      %v4569 = vsub.f32 %v1510, 0.33333334
      %v4570 = vsub.f32 %v1522, 0.33333334
      %v4571 = vsub.f32 %v1534, 0.33333334
      %v4572 = vsub.f32 %v1546, 0.33333334
      %v4573 = vsub.f32 %v1558, 0.33333334
      %v4574 = vsub.f32 %v1570, 0.33333334
      %v4575 = vsub.f32 %v1582, 0.33333334
      %v4576 = vsub.f32 %v1594, 0.33333334
      %v4577 = vsub.f32 %v1606, 0.33333334
      %v4578 = vsub.f32 %v1618, 0.33333334
      %v4579 = vsub.f32 %v1630, 0.33333334
      %v4580 = vsub.f32 %v1642, 0.33333334
      %v4581 = vsub.f32 %v1654, 0.33333334
      %v4582 = vmul.f32 %v4566, -4.5
      %v4583 = vmul.f32 %v4567, -4.5
      %v4584 = vmul.f32 %v4568, -4.5
      %v4585 = vmul.f32 %v4569, -4.5
      %v4586 = vmul.f32 %v4570, -4.5
      %v4587 = vmul.f32 %v4571, -4.5
      %v4588 = vmul.f32 %v4572, -4.5
      %v4589 = vmul.f32 %v4573, -4.5
      %v4590 = vmul.f32 %v4574, -4.5
      %v4591 = vmul.f32 %v4575, -4.5
      %v4592 = vmul.f32 %v4576, -4.5
      %v4593 = vmul.f32 %v4577, -4.5
      %v4594 = vmul.f32 %v4578, -4.5
      %v4595 = vmul.f32 %v4579, -4.5
      %v4596 = vmul.f32 %v4580, -4.5
      %v4597 = vmul.f32 %v4581, -4.5
      %v4598 = vmul.f32 %v4582, %v4566
      %v4599 = vmul.f32 %v4583, %v4567
      %v4600 = vmul.f32 %v4584, %v4568
      %v4601 = vmul.f32 %v4585, %v4569
      %v4602 = vmul.f32 %v4586, %v4570
      %v4603 = vmul.f32 %v4587, %v4571
      %v4604 = vmul.f32 %v4588, %v4572
      %v4605 = vmul.f32 %v4589, %v4573
      %v4606 = vmul.f32 %v4590, %v4574
      %v4607 = vmul.f32 %v4591, %v4575
      %v4608 = vmul.f32 %v4592, %v4576
      %v4609 = vmul.f32 %v4593, %v4577
      %v4610 = vmul.f32 %v4594, %v4578
      %v4611 = vmul.f32 %v4595, %v4579
      %v4612 = vmul.f32 %v4596, %v4580
      %v4613 = vmul.f32 %v4597, %v4581
      %v4614 = vmul.f32 %v4598, 1.442695
      %v4615 = vpow.pop %v4614
      %v4616 = vmul.f32 %v4599, 1.442695
      %v4617 = vpow.pop %v4616
      %v4618 = vmul.f32 %v4600, 1.442695
      %v4619 = vpow.pop %v4618
      %v4620 = vmul.f32 %v4601, 1.442695
      %v4621 = vpow.pop %v4620
      %v4622 = vmul.f32 %v4602, 1.442695
      %v4623 = vpow.pop %v4622
      %v4624 = vmul.f32 %v4603, 1.442695
      %v4625 = vpow.pop %v4624
      %v4626 = vmul.f32 %v4604, 1.442695
      %v4627 = vpow.pop %v4626
      %v4628 = vmul.f32 %v4605, 1.442695
      %v4629 = vpow.pop %v4628
      %v4630 = vmul.f32 %v4606, 1.442695
      %v4631 = vpow.pop %v4630
      %v4632 = vmul.f32 %v4607, 1.442695
      %v4633 = vpow.pop %v4632
      %v4634 = vmul.f32 %v4608, 1.442695
      %v4635 = vpow.pop %v4634
      %v4636 = vmul.f32 %v4609, 1.442695
      %v4637 = vpow.pop %v4636
      %v4638 = vmul.f32 %v4610, 1.442695
      %v4639 = vpow.pop %v4638
      %v4640 = vmul.f32 %v4611, 1.442695
      %v4641 = vpow.pop %v4640
      %v4642 = vmul.f32 %v4612, 1.442695
      %v4643 = vpow.pop %v4642
      %v4644 = vmul.f32 %v4613, 1.442695
      %v4645 = vpow.pop %v4644
      %v4646 = vmul.f32 %v4369, %v4615
      %v4647 = vmul.f32 %v4370, %v4617
      %v4648 = vmul.f32 %v4371, %v4619
      %v4649 = vmul.f32 %v4372, %v4621
      %v4650 = vmul.f32 %v4373, %v4623
      %v4651 = vmul.f32 %v4374, %v4625
      %v4652 = vmul.f32 %v4375, %v4627
      %v4653 = vmul.f32 %v4376, %v4629
      %v4654 = vmul.f32 %v4377, %v4631
      %v4655 = vmul.f32 %v4378, %v4633
      %v4656 = vmul.f32 %v4379, %v4635
      %v4657 = vmul.f32 %v4380, %v4637
      %v4658 = vmul.f32 %v4381, %v4639
      %v4659 = vmul.f32 %v4382, %v4641
      %v4660 = vmul.f32 %v4383, %v4643
      %v4661 = vmul.f32 %v4384, %v4645
      %v4662 = vpack.c.bf16 %v4646, %v4646
      %v4663 = vpack.c.bf16 %v4647, %v4647
      %v4664 = vpack.c.bf16 %v4648, %v4648
      %v4665 = vpack.c.bf16 %v4649, %v4649
      %v4666 = vpack.c.bf16 %v4650, %v4650
      %v4667 = vpack.c.bf16 %v4651, %v4651
      %v4668 = vpack.c.bf16 %v4652, %v4652
      %v4669 = vpack.c.bf16 %v4653, %v4653
      %v4670 = vpack.c.bf16 %v4654, %v4654
      %v4671 = vpack.c.bf16 %v4655, %v4655
      %v4672 = vpack.c.bf16 %v4656, %v4656
      %v4673 = vpack.c.bf16 %v4657, %v4657
      %v4674 = vpack.c.bf16 %v4658, %v4658
      %v4675 = vpack.c.bf16 %v4659, %v4659
      %v4676 = vpack.c.bf16 %v4660, %v4660
      %v4677 = vpack.c.bf16 %v4661, %v4661
      %4678 = vst [vmem:[#allocation5 + $0x4] sm:$0xf] %v4662
      %4679 = vst [vmem:[#allocation5 + $0x44] sm:$0xf] %v4663
      %4680 = vst [vmem:[#allocation5 + $0x84] sm:$0xf] %v4664
      %4681 = vst [vmem:[#allocation5 + $0xc4] sm:$0xf] %v4665
      %4682 = vst [vmem:[#allocation5 + $0x104] sm:$0xf] %v4666
      %4683 = vst [vmem:[#allocation5 + $0x144] sm:$0xf] %v4667
      %4684 = vst [vmem:[#allocation5 + $0x184] sm:$0xf] %v4668
      %4685 = vst [vmem:[#allocation5 + $0x1c4] sm:$0xf] %v4669
      %4686 = vst [vmem:[#allocation5 + $0x204] sm:$0xf] %v4670
      %4687 = vst [vmem:[#allocation5 + $0x244] sm:$0xf] %v4671
      %4688 = vst [vmem:[#allocation5 + $0x284] sm:$0xf] %v4672
      %4689 = vst [vmem:[#allocation5 + $0x2c4] sm:$0xf] %v4673
      %4690 = vst [vmem:[#allocation5 + $0x304] sm:$0xf] %v4674
      %4691 = vst [vmem:[#allocation5 + $0x344] sm:$0xf] %v4675
      %4692 = vst [vmem:[#allocation5 + $0x384] sm:$0xf] %v4676
      %4693 = vst [vmem:[#allocation5 + $0x3c4] sm:$0xf] %v4677
      %v4694 = vperm.slane %v4516, 1
      %v4695 = vmul.f32 %v4386, %v4694
      %v4696 = vmul.f32 %v4387, %v4694
      %v4697 = vmul.f32 %v4388, %v4694
      %v4698 = vmul.f32 %v4389, %v4694
      %v4699 = vmul.f32 %v4390, %v4694
      %v4700 = vmul.f32 %v4391, %v4694
      %v4701 = vmul.f32 %v4392, %v4694
      %v4702 = vmul.f32 %v4393, %v4694
      %v4703 = vmul.f32 %v4394, %v4694
      %v4704 = vmul.f32 %v4395, %v4694
      %v4705 = vmul.f32 %v4396, %v4694
      %v4706 = vmul.f32 %v4397, %v4694
      %v4707 = vmul.f32 %v4398, %v4694
      %v4708 = vmul.f32 %v4399, %v4694
      %v4709 = vmul.f32 %v4400, %v4694
      %v4710 = vmul.f32 %v4401, %v4694
      %v4711 = vpack.c.bf16 %v4695, %v4695
      %v4712 = vpack.c.bf16 %v4696, %v4696
      %v4713 = vpack.c.bf16 %v4697, %v4697
      %v4714 = vpack.c.bf16 %v4698, %v4698
      %v4715 = vpack.c.bf16 %v4699, %v4699
      %v4716 = vpack.c.bf16 %v4700, %v4700
      %v4717 = vpack.c.bf16 %v4701, %v4701
      %v4718 = vpack.c.bf16 %v4702, %v4702
      %v4719 = vpack.c.bf16 %v4703, %v4703
      %v4720 = vpack.c.bf16 %v4704, %v4704
      %v4721 = vpack.c.bf16 %v4705, %v4705
      %v4722 = vpack.c.bf16 %v4706, %v4706
      %v4723 = vpack.c.bf16 %v4707, %v4707
      %v4724 = vpack.c.bf16 %v4708, %v4708
      %v4725 = vpack.c.bf16 %v4709, %v4709
      %v4726 = vpack.c.bf16 %v4710, %v4710
      %4727 = vst [vmem:[#allocation6 + $0x40] sm:$0xf] %v4711
      %4728 = vst [vmem:[#allocation6 + $0x44] sm:$0xf] %v4712
      %4729 = vst [vmem:[#allocation6 + $0x48] sm:$0xf] %v4713
      %4730 = vst [vmem:[#allocation6 + $0x4c] sm:$0xf] %v4714
      %4731 = vst [vmem:[#allocation6 + $0x50] sm:$0xf] %v4715
      %4732 = vst [vmem:[#allocation6 + $0x54] sm:$0xf] %v4716
      %4733 = vst [vmem:[#allocation6 + $0x58] sm:$0xf] %v4717
      %4734 = vst [vmem:[#allocation6 + $0x5c] sm:$0xf] %v4718
      %4735 = vst [vmem:[#allocation6 + $0x60] sm:$0xf] %v4719
      %4736 = vst [vmem:[#allocation6 + $0x64] sm:$0xf] %v4720
      %4737 = vst [vmem:[#allocation6 + $0x68] sm:$0xf] %v4721
      %4738 = vst [vmem:[#allocation6 + $0x6c] sm:$0xf] %v4722
      %4739 = vst [vmem:[#allocation6 + $0x70] sm:$0xf] %v4723
      %4740 = vst [vmem:[#allocation6 + $0x74] sm:$0xf] %v4724
      %4741 = vst [vmem:[#allocation6 + $0x78] sm:$0xf] %v4725
      %4742 = vst [vmem:[#allocation6 + $0x7c] sm:$0xf] %v4726
      %v4743 = vsub.f32 %v1474, 0.6666667
      %v4744 = vsub.f32 %v1486, 0.6666667
      %v4745 = vsub.f32 %v1498, 0.6666667
      %v4746 = vsub.f32 %v1510, 0.6666667
      %v4747 = vsub.f32 %v1522, 0.6666667
      %v4748 = vsub.f32 %v1534, 0.6666667
      %v4749 = vsub.f32 %v1546, 0.6666667
      %v4750 = vsub.f32 %v1558, 0.6666667
      %v4751 = vsub.f32 %v1570, 0.6666667
      %v4752 = vsub.f32 %v1582, 0.6666667
      %v4753 = vsub.f32 %v1594, 0.6666667
      %v4754 = vsub.f32 %v1606, 0.6666667
      %v4755 = vsub.f32 %v1618, 0.6666667
      %v4756 = vsub.f32 %v1630, 0.6666667
      %v4757 = vsub.f32 %v1642, 0.6666667
      %v4758 = vsub.f32 %v1654, 0.6666667
      %v4759 = vmul.f32 %v4743, -4.5
      %v4760 = vmul.f32 %v4744, -4.5
      %v4761 = vmul.f32 %v4745, -4.5
      %v4762 = vmul.f32 %v4746, -4.5
      %v4763 = vmul.f32 %v4747, -4.5
      %v4764 = vmul.f32 %v4748, -4.5
      %v4765 = vmul.f32 %v4749, -4.5
      %v4766 = vmul.f32 %v4750, -4.5
      %v4767 = vmul.f32 %v4751, -4.5
      %v4768 = vmul.f32 %v4752, -4.5
      %v4769 = vmul.f32 %v4753, -4.5
      %v4770 = vmul.f32 %v4754, -4.5
      %v4771 = vmul.f32 %v4755, -4.5
      %v4772 = vmul.f32 %v4756, -4.5
      %v4773 = vmul.f32 %v4757, -4.5
      %v4774 = vmul.f32 %v4758, -4.5
      %v4775 = vmul.f32 %v4759, %v4743
      %v4776 = vmul.f32 %v4760, %v4744
      %v4777 = vmul.f32 %v4761, %v4745
      %v4778 = vmul.f32 %v4762, %v4746
      %v4779 = vmul.f32 %v4763, %v4747
      %v4780 = vmul.f32 %v4764, %v4748
      %v4781 = vmul.f32 %v4765, %v4749
      %v4782 = vmul.f32 %v4766, %v4750
      %v4783 = vmul.f32 %v4767, %v4751
      %v4784 = vmul.f32 %v4768, %v4752
      %v4785 = vmul.f32 %v4769, %v4753
      %v4786 = vmul.f32 %v4770, %v4754
      %v4787 = vmul.f32 %v4771, %v4755
      %v4788 = vmul.f32 %v4772, %v4756
      %v4789 = vmul.f32 %v4773, %v4757
      %v4790 = vmul.f32 %v4774, %v4758
      %v4791 = vmul.f32 %v4775, 1.442695
      %v4792 = vpow.pop %v4791
      %v4793 = vmul.f32 %v4776, 1.442695
      %v4794 = vpow.pop %v4793
      %v4795 = vmul.f32 %v4777, 1.442695
      %v4796 = vpow.pop %v4795
      %v4797 = vmul.f32 %v4778, 1.442695
      %v4798 = vpow.pop %v4797
      %v4799 = vmul.f32 %v4779, 1.442695
      %v4800 = vpow.pop %v4799
      %v4801 = vmul.f32 %v4780, 1.442695
      %v4802 = vpow.pop %v4801
      %v4803 = vmul.f32 %v4781, 1.442695
      %v4804 = vpow.pop %v4803
      %v4805 = vmul.f32 %v4782, 1.442695
      %v4806 = vpow.pop %v4805
      %v4807 = vmul.f32 %v4783, 1.442695
      %v4808 = vpow.pop %v4807
      %v4809 = vmul.f32 %v4784, 1.442695
      %v4810 = vpow.pop %v4809
      %v4811 = vmul.f32 %v4785, 1.442695
      %v4812 = vpow.pop %v4811
      %v4813 = vmul.f32 %v4786, 1.442695
      %v4814 = vpow.pop %v4813
      %v4815 = vmul.f32 %v4787, 1.442695
      %v4816 = vpow.pop %v4815
      %v4817 = vmul.f32 %v4788, 1.442695
      %v4818 = vpow.pop %v4817
      %v4819 = vmul.f32 %v4789, 1.442695
      %v4820 = vpow.pop %v4819
      %v4821 = vmul.f32 %v4790, 1.442695
      %v4822 = vpow.pop %v4821
      %v4823 = vmul.f32 %v4369, %v4792
      %v4824 = vmul.f32 %v4370, %v4794
      %v4825 = vmul.f32 %v4371, %v4796
      %v4826 = vmul.f32 %v4372, %v4798
      %v4827 = vmul.f32 %v4373, %v4800
      %v4828 = vmul.f32 %v4374, %v4802
      %v4829 = vmul.f32 %v4375, %v4804
      %v4830 = vmul.f32 %v4376, %v4806
      %v4831 = vmul.f32 %v4377, %v4808
      %v4832 = vmul.f32 %v4378, %v4810
      %v4833 = vmul.f32 %v4379, %v4812
      %v4834 = vmul.f32 %v4380, %v4814
      %v4835 = vmul.f32 %v4381, %v4816
      %v4836 = vmul.f32 %v4382, %v4818
      %v4837 = vmul.f32 %v4383, %v4820
      %v4838 = vmul.f32 %v4384, %v4822
      %v4839 = vpack.c.bf16 %v4823, %v4823
      %v4840 = vpack.c.bf16 %v4824, %v4824
      %v4841 = vpack.c.bf16 %v4825, %v4825
      %v4842 = vpack.c.bf16 %v4826, %v4826
      %v4843 = vpack.c.bf16 %v4827, %v4827
      %v4844 = vpack.c.bf16 %v4828, %v4828
      %v4845 = vpack.c.bf16 %v4829, %v4829
      %v4846 = vpack.c.bf16 %v4830, %v4830
      %v4847 = vpack.c.bf16 %v4831, %v4831
      %v4848 = vpack.c.bf16 %v4832, %v4832
      %v4849 = vpack.c.bf16 %v4833, %v4833
      %v4850 = vpack.c.bf16 %v4834, %v4834
      %v4851 = vpack.c.bf16 %v4835, %v4835
      %v4852 = vpack.c.bf16 %v4836, %v4836
      %v4853 = vpack.c.bf16 %v4837, %v4837
      %v4854 = vpack.c.bf16 %v4838, %v4838
      %4855 = vst [vmem:[#allocation5 + $0x8] sm:$0xf] %v4839
      %4856 = vst [vmem:[#allocation5 + $0x48] sm:$0xf] %v4840
      %4857 = vst [vmem:[#allocation5 + $0x88] sm:$0xf] %v4841
      %4858 = vst [vmem:[#allocation5 + $0xc8] sm:$0xf] %v4842
      %4859 = vst [vmem:[#allocation5 + $0x108] sm:$0xf] %v4843
      %4860 = vst [vmem:[#allocation5 + $0x148] sm:$0xf] %v4844
      %4861 = vst [vmem:[#allocation5 + $0x188] sm:$0xf] %v4845
      %4862 = vst [vmem:[#allocation5 + $0x1c8] sm:$0xf] %v4846
      %4863 = vst [vmem:[#allocation5 + $0x208] sm:$0xf] %v4847
      %4864 = vst [vmem:[#allocation5 + $0x248] sm:$0xf] %v4848
      %4865 = vst [vmem:[#allocation5 + $0x288] sm:$0xf] %v4849
      %4866 = vst [vmem:[#allocation5 + $0x2c8] sm:$0xf] %v4850
      %4867 = vst [vmem:[#allocation5 + $0x308] sm:$0xf] %v4851
      %4868 = vst [vmem:[#allocation5 + $0x348] sm:$0xf] %v4852
      %4869 = vst [vmem:[#allocation5 + $0x388] sm:$0xf] %v4853
      %4870 = vst [vmem:[#allocation5 + $0x3c8] sm:$0xf] %v4854
      %v4871 = vperm.slane %v4516, 2
      %v4872 = vmul.f32 %v4386, %v4871
      %v4873 = vmul.f32 %v4387, %v4871
      %v4874 = vmul.f32 %v4388, %v4871
      %v4875 = vmul.f32 %v4389, %v4871
      %v4876 = vmul.f32 %v4390, %v4871
      %v4877 = vmul.f32 %v4391, %v4871
      %v4878 = vmul.f32 %v4392, %v4871
      %v4879 = vmul.f32 %v4393, %v4871
      %v4880 = vmul.f32 %v4394, %v4871
      %v4881 = vmul.f32 %v4395, %v4871
      %v4882 = vmul.f32 %v4396, %v4871
      %v4883 = vmul.f32 %v4397, %v4871
      %v4884 = vmul.f32 %v4398, %v4871
      %v4885 = vmul.f32 %v4399, %v4871
      %v4886 = vmul.f32 %v4400, %v4871
      %v4887 = vmul.f32 %v4401, %v4871
      %v4888 = vpack.c.bf16 %v4872, %v4872
      %v4889 = vpack.c.bf16 %v4873, %v4873
      %v4890 = vpack.c.bf16 %v4874, %v4874
      %v4891 = vpack.c.bf16 %v4875, %v4875
      %v4892 = vpack.c.bf16 %v4876, %v4876
      %v4893 = vpack.c.bf16 %v4877, %v4877
      %v4894 = vpack.c.bf16 %v4878, %v4878
      %v4895 = vpack.c.bf16 %v4879, %v4879
      %v4896 = vpack.c.bf16 %v4880, %v4880
      %v4897 = vpack.c.bf16 %v4881, %v4881
      %v4898 = vpack.c.bf16 %v4882, %v4882
      %v4899 = vpack.c.bf16 %v4883, %v4883
      %v4900 = vpack.c.bf16 %v4884, %v4884
      %v4901 = vpack.c.bf16 %v4885, %v4885
      %v4902 = vpack.c.bf16 %v4886, %v4886
      %v4903 = vpack.c.bf16 %v4887, %v4887
      %4904 = vst [vmem:[#allocation6 + $0x80] sm:$0xf] %v4888
      %4905 = vst [vmem:[#allocation6 + $0x84] sm:$0xf] %v4889
      %4906 = vst [vmem:[#allocation6 + $0x88] sm:$0xf] %v4890
      %4907 = vst [vmem:[#allocation6 + $0x8c] sm:$0xf] %v4891
      %4908 = vst [vmem:[#allocation6 + $0x90] sm:$0xf] %v4892
      %4909 = vst [vmem:[#allocation6 + $0x94] sm:$0xf] %v4893
      %4910 = vst [vmem:[#allocation6 + $0x98] sm:$0xf] %v4894
      %4911 = vst [vmem:[#allocation6 + $0x9c] sm:$0xf] %v4895
      %4912 = vst [vmem:[#allocation6 + $0xa0] sm:$0xf] %v4896
      %4913 = vst [vmem:[#allocation6 + $0xa4] sm:$0xf] %v4897
      %4914 = vst [vmem:[#allocation6 + $0xa8] sm:$0xf] %v4898
      %4915 = vst [vmem:[#allocation6 + $0xac] sm:$0xf] %v4899
      %4916 = vst [vmem:[#allocation6 + $0xb0] sm:$0xf] %v4900
      %4917 = vst [vmem:[#allocation6 + $0xb4] sm:$0xf] %v4901
      %4918 = vst [vmem:[#allocation6 + $0xb8] sm:$0xf] %v4902
      %4919 = vst [vmem:[#allocation6 + $0xbc] sm:$0xf] %v4903
      %v4920 = vsub.f32 %v1474, 1.0
      %v4921 = vsub.f32 %v1486, 1.0
      %v4922 = vsub.f32 %v1498, 1.0
      %v4923 = vsub.f32 %v1510, 1.0
      %v4924 = vsub.f32 %v1522, 1.0
      %v4925 = vsub.f32 %v1534, 1.0
      %v4926 = vsub.f32 %v1546, 1.0
      %v4927 = vsub.f32 %v1558, 1.0
      %v4928 = vsub.f32 %v1570, 1.0
      %v4929 = vsub.f32 %v1582, 1.0
      %v4930 = vsub.f32 %v1594, 1.0
      %v4931 = vsub.f32 %v1606, 1.0
      %v4932 = vsub.f32 %v1618, 1.0
      %v4933 = vsub.f32 %v1630, 1.0
      %v4934 = vsub.f32 %v1642, 1.0
      %v4935 = vsub.f32 %v1654, 1.0
      %v4936 = vmul.f32 %v4920, -4.5
      %v4937 = vmul.f32 %v4921, -4.5
      %v4938 = vmul.f32 %v4922, -4.5
      %v4939 = vmul.f32 %v4923, -4.5
      %v4940 = vmul.f32 %v4924, -4.5
      %v4941 = vmul.f32 %v4925, -4.5
      %v4942 = vmul.f32 %v4926, -4.5
      %v4943 = vmul.f32 %v4927, -4.5
      %v4944 = vmul.f32 %v4928, -4.5
      %v4945 = vmul.f32 %v4929, -4.5
      %v4946 = vmul.f32 %v4930, -4.5
      %v4947 = vmul.f32 %v4931, -4.5
      %v4948 = vmul.f32 %v4932, -4.5
      %v4949 = vmul.f32 %v4933, -4.5
      %v4950 = vmul.f32 %v4934, -4.5
      %v4951 = vmul.f32 %v4935, -4.5
      %v4952 = vmul.f32 %v4936, %v4920
      %v4953 = vmul.f32 %v4937, %v4921
      %v4954 = vmul.f32 %v4938, %v4922
      %v4955 = vmul.f32 %v4939, %v4923
      %v4956 = vmul.f32 %v4940, %v4924
      %v4957 = vmul.f32 %v4941, %v4925
      %v4958 = vmul.f32 %v4942, %v4926
      %v4959 = vmul.f32 %v4943, %v4927
      %v4960 = vmul.f32 %v4944, %v4928
      %v4961 = vmul.f32 %v4945, %v4929
      %v4962 = vmul.f32 %v4946, %v4930
      %v4963 = vmul.f32 %v4947, %v4931
      %v4964 = vmul.f32 %v4948, %v4932
      %v4965 = vmul.f32 %v4949, %v4933
      %v4966 = vmul.f32 %v4950, %v4934
      %v4967 = vmul.f32 %v4951, %v4935
      %v4968 = vmul.f32 %v4952, 1.442695
      %v4969 = vpow.pop %v4968
      %v4970 = vmul.f32 %v4953, 1.442695
      %v4971 = vpow.pop %v4970
      %v4972 = vmul.f32 %v4954, 1.442695
      %v4973 = vpow.pop %v4972
      %v4974 = vmul.f32 %v4955, 1.442695
      %v4975 = vpow.pop %v4974
      %v4976 = vmul.f32 %v4956, 1.442695
      %v4977 = vpow.pop %v4976
      %v4978 = vmul.f32 %v4957, 1.442695
      %v4979 = vpow.pop %v4978
      %v4980 = vmul.f32 %v4958, 1.442695
      %v4981 = vpow.pop %v4980
      %v4982 = vmul.f32 %v4959, 1.442695
      %v4983 = vpow.pop %v4982
      %v4984 = vmul.f32 %v4960, 1.442695
      %v4985 = vpow.pop %v4984
      %v4986 = vmul.f32 %v4961, 1.442695
      %v4987 = vpow.pop %v4986
      %v4988 = vmul.f32 %v4962, 1.442695
      %v4989 = vpow.pop %v4988
      %v4990 = vmul.f32 %v4963, 1.442695
      %v4991 = vpow.pop %v4990
      %v4992 = vmul.f32 %v4964, 1.442695
      %v4993 = vpow.pop %v4992
      %v4994 = vmul.f32 %v4965, 1.442695
      %v4995 = vpow.pop %v4994
      %v4996 = vmul.f32 %v4966, 1.442695
      %v4997 = vpow.pop %v4996
      %v4998 = vmul.f32 %v4967, 1.442695
      %v4999 = vpow.pop %v4998
      %v5000 = vmul.f32 %v4369, %v4969
      %v5001 = vmul.f32 %v4370, %v4971
      %v5002 = vmul.f32 %v4371, %v4973
      %v5003 = vmul.f32 %v4372, %v4975
      %v5004 = vmul.f32 %v4373, %v4977
      %v5005 = vmul.f32 %v4374, %v4979
      %v5006 = vmul.f32 %v4375, %v4981
      %v5007 = vmul.f32 %v4376, %v4983
      %v5008 = vmul.f32 %v4377, %v4985
      %v5009 = vmul.f32 %v4378, %v4987
      %v5010 = vmul.f32 %v4379, %v4989
      %v5011 = vmul.f32 %v4380, %v4991
      %v5012 = vmul.f32 %v4381, %v4993
      %v5013 = vmul.f32 %v4382, %v4995
      %v5014 = vmul.f32 %v4383, %v4997
      %v5015 = vmul.f32 %v4384, %v4999
      %v5016 = vpack.c.bf16 %v5000, %v5000
      %v5017 = vpack.c.bf16 %v5001, %v5001
      %v5018 = vpack.c.bf16 %v5002, %v5002
      %v5019 = vpack.c.bf16 %v5003, %v5003
      %v5020 = vpack.c.bf16 %v5004, %v5004
      %v5021 = vpack.c.bf16 %v5005, %v5005
      %v5022 = vpack.c.bf16 %v5006, %v5006
      %v5023 = vpack.c.bf16 %v5007, %v5007
      %v5024 = vpack.c.bf16 %v5008, %v5008
      %v5025 = vpack.c.bf16 %v5009, %v5009
      %v5026 = vpack.c.bf16 %v5010, %v5010
      %v5027 = vpack.c.bf16 %v5011, %v5011
      %v5028 = vpack.c.bf16 %v5012, %v5012
      %v5029 = vpack.c.bf16 %v5013, %v5013
      %v5030 = vpack.c.bf16 %v5014, %v5014
      %v5031 = vpack.c.bf16 %v5015, %v5015
      %5032 = vst [vmem:[#allocation5 + $0xc] sm:$0xf] %v5016
      %5033 = vst [vmem:[#allocation5 + $0x4c] sm:$0xf] %v5017
      %5034 = vst [vmem:[#allocation5 + $0x8c] sm:$0xf] %v5018
      %5035 = vst [vmem:[#allocation5 + $0xcc] sm:$0xf] %v5019
      %5036 = vst [vmem:[#allocation5 + $0x10c] sm:$0xf] %v5020
      %5037 = vst [vmem:[#allocation5 + $0x14c] sm:$0xf] %v5021
      %5038 = vst [vmem:[#allocation5 + $0x18c] sm:$0xf] %v5022
      %5039 = vst [vmem:[#allocation5 + $0x1cc] sm:$0xf] %v5023
      %5040 = vst [vmem:[#allocation5 + $0x20c] sm:$0xf] %v5024
      %5041 = vst [vmem:[#allocation5 + $0x24c] sm:$0xf] %v5025
      %5042 = vst [vmem:[#allocation5 + $0x28c] sm:$0xf] %v5026
      %5043 = vst [vmem:[#allocation5 + $0x2cc] sm:$0xf] %v5027
      %5044 = vst [vmem:[#allocation5 + $0x30c] sm:$0xf] %v5028
      %5045 = vst [vmem:[#allocation5 + $0x34c] sm:$0xf] %v5029
      %5046 = vst [vmem:[#allocation5 + $0x38c] sm:$0xf] %v5030
      %5047 = vst [vmem:[#allocation5 + $0x3cc] sm:$0xf] %v5031
      %v5048 = vperm.slane %v4516, 3
      %v5049 = vmul.f32 %v4386, %v5048
      %v5050 = vmul.f32 %v4387, %v5048
      %v5051 = vmul.f32 %v4388, %v5048
      %v5052 = vmul.f32 %v4389, %v5048
      %v5053 = vmul.f32 %v4390, %v5048
      %v5054 = vmul.f32 %v4391, %v5048
      %v5055 = vmul.f32 %v4392, %v5048
      %v5056 = vmul.f32 %v4393, %v5048
      %v5057 = vmul.f32 %v4394, %v5048
      %v5058 = vmul.f32 %v4395, %v5048
      %v5059 = vmul.f32 %v4396, %v5048
      %v5060 = vmul.f32 %v4397, %v5048
      %v5061 = vmul.f32 %v4398, %v5048
      %v5062 = vmul.f32 %v4399, %v5048
      %v5063 = vmul.f32 %v4400, %v5048
      %v5064 = vmul.f32 %v4401, %v5048
      %v5065 = vpack.c.bf16 %v5049, %v5049
      %v5066 = vpack.c.bf16 %v5050, %v5050
      %v5067 = vpack.c.bf16 %v5051, %v5051
      %v5068 = vpack.c.bf16 %v5052, %v5052
      %v5069 = vpack.c.bf16 %v5053, %v5053
      %v5070 = vpack.c.bf16 %v5054, %v5054
      %v5071 = vpack.c.bf16 %v5055, %v5055
      %v5072 = vpack.c.bf16 %v5056, %v5056
      %v5073 = vpack.c.bf16 %v5057, %v5057
      %v5074 = vpack.c.bf16 %v5058, %v5058
      %v5075 = vpack.c.bf16 %v5059, %v5059
      %v5076 = vpack.c.bf16 %v5060, %v5060
      %v5077 = vpack.c.bf16 %v5061, %v5061
      %v5078 = vpack.c.bf16 %v5062, %v5062
      %v5079 = vpack.c.bf16 %v5063, %v5063
      %v5080 = vpack.c.bf16 %v5064, %v5064
      %5081 = vst [vmem:[#allocation6 + $0xc0] sm:$0xf] %v5065
      %5082 = vst [vmem:[#allocation6 + $0xc4] sm:$0xf] %v5066
      %5083 = vst [vmem:[#allocation6 + $0xc8] sm:$0xf] %v5067
      %5084 = vst [vmem:[#allocation6 + $0xcc] sm:$0xf] %v5068
      %5085 = vst [vmem:[#allocation6 + $0xd0] sm:$0xf] %v5069
      %5086 = vst [vmem:[#allocation6 + $0xd4] sm:$0xf] %v5070
      %5087 = vst [vmem:[#allocation6 + $0xd8] sm:$0xf] %v5071
      %5088 = vst [vmem:[#allocation6 + $0xdc] sm:$0xf] %v5072
      %5089 = vst [vmem:[#allocation6 + $0xe0] sm:$0xf] %v5073
      %5090 = vst [vmem:[#allocation6 + $0xe4] sm:$0xf] %v5074
      %5091 = vst [vmem:[#allocation6 + $0xe8] sm:$0xf] %v5075
      %5092 = vst [vmem:[#allocation6 + $0xec] sm:$0xf] %v5076
      %5093 = vst [vmem:[#allocation6 + $0xf0] sm:$0xf] %v5077
      %5094 = vst [vmem:[#allocation6 + $0xf4] sm:$0xf] %v5078
      %5095 = vst [vmem:[#allocation6 + $0xf8] sm:$0xf] %v5079
      %5096 = vst [vmem:[#allocation6 + $0xfc] sm:$0xf] %v5080
      %v5097 = vsub.f32 %v1474, 1.3333334
      %v5098 = vsub.f32 %v1486, 1.3333334
      %v5099 = vsub.f32 %v1498, 1.3333334
      %v5100 = vsub.f32 %v1510, 1.3333334
      %v5101 = vsub.f32 %v1522, 1.3333334
      %v5102 = vsub.f32 %v1534, 1.3333334
      %v5103 = vsub.f32 %v1546, 1.3333334
      %v5104 = vsub.f32 %v1558, 1.3333334
      %v5105 = vsub.f32 %v1570, 1.3333334
      %v5106 = vsub.f32 %v1582, 1.3333334
      %v5107 = vsub.f32 %v1594, 1.3333334
      %v5108 = vsub.f32 %v1606, 1.3333334
      %v5109 = vsub.f32 %v1618, 1.3333334
      %v5110 = vsub.f32 %v1630, 1.3333334
      %v5111 = vsub.f32 %v1642, 1.3333334
      %v5112 = vsub.f32 %v1654, 1.3333334
      %v5113 = vmul.f32 %v5097, -4.5
      %v5114 = vmul.f32 %v5098, -4.5
      %v5115 = vmul.f32 %v5099, -4.5
      %v5116 = vmul.f32 %v5100, -4.5
      %v5117 = vmul.f32 %v5101, -4.5
      %v5118 = vmul.f32 %v5102, -4.5
      %v5119 = vmul.f32 %v5103, -4.5
      %v5120 = vmul.f32 %v5104, -4.5
      %v5121 = vmul.f32 %v5105, -4.5
      %v5122 = vmul.f32 %v5106, -4.5
      %v5123 = vmul.f32 %v5107, -4.5
      %v5124 = vmul.f32 %v5108, -4.5
      %v5125 = vmul.f32 %v5109, -4.5
      %v5126 = vmul.f32 %v5110, -4.5
      %v5127 = vmul.f32 %v5111, -4.5
      %v5128 = vmul.f32 %v5112, -4.5
      %v5129 = vmul.f32 %v5113, %v5097
      %v5130 = vmul.f32 %v5114, %v5098
      %v5131 = vmul.f32 %v5115, %v5099
      %v5132 = vmul.f32 %v5116, %v5100
      %v5133 = vmul.f32 %v5117, %v5101
      %v5134 = vmul.f32 %v5118, %v5102
      %v5135 = vmul.f32 %v5119, %v5103
      %v5136 = vmul.f32 %v5120, %v5104
      %v5137 = vmul.f32 %v5121, %v5105
      %v5138 = vmul.f32 %v5122, %v5106
      %v5139 = vmul.f32 %v5123, %v5107
      %v5140 = vmul.f32 %v5124, %v5108
      %v5141 = vmul.f32 %v5125, %v5109
      %v5142 = vmul.f32 %v5126, %v5110
      %v5143 = vmul.f32 %v5127, %v5111
      %v5144 = vmul.f32 %v5128, %v5112
      %v5145 = vmul.f32 %v5129, 1.442695
      %v5146 = vpow.pop %v5145
      %v5147 = vmul.f32 %v5130, 1.442695
      %v5148 = vpow.pop %v5147
      %v5149 = vmul.f32 %v5131, 1.442695
      %v5150 = vpow.pop %v5149
      %v5151 = vmul.f32 %v5132, 1.442695
      %v5152 = vpow.pop %v5151
      %v5153 = vmul.f32 %v5133, 1.442695
      %v5154 = vpow.pop %v5153
      %v5155 = vmul.f32 %v5134, 1.442695
      %v5156 = vpow.pop %v5155
      %v5157 = vmul.f32 %v5135, 1.442695
      %v5158 = vpow.pop %v5157
      %v5159 = vmul.f32 %v5136, 1.442695
      %v5160 = vpow.pop %v5159
      %v5161 = vmul.f32 %v5137, 1.442695
      %v5162 = vpow.pop %v5161
      %v5163 = vmul.f32 %v5138, 1.442695
      %v5164 = vpow.pop %v5163
      %v5165 = vmul.f32 %v5139, 1.442695
      %v5166 = vpow.pop %v5165
      %v5167 = vmul.f32 %v5140, 1.442695
      %v5168 = vpow.pop %v5167
      %v5169 = vmul.f32 %v5141, 1.442695
      %v5170 = vpow.pop %v5169
      %v5171 = vmul.f32 %v5142, 1.442695
      %v5172 = vpow.pop %v5171
      %v5173 = vmul.f32 %v5143, 1.442695
      %v5174 = vpow.pop %v5173
      %v5175 = vmul.f32 %v5144, 1.442695
      %v5176 = vpow.pop %v5175
      %v5177 = vmul.f32 %v4369, %v5146
      %v5178 = vmul.f32 %v4370, %v5148
      %v5179 = vmul.f32 %v4371, %v5150
      %v5180 = vmul.f32 %v4372, %v5152
      %v5181 = vmul.f32 %v4373, %v5154
      %v5182 = vmul.f32 %v4374, %v5156
      %v5183 = vmul.f32 %v4375, %v5158
      %v5184 = vmul.f32 %v4376, %v5160
      %v5185 = vmul.f32 %v4377, %v5162
      %v5186 = vmul.f32 %v4378, %v5164
      %v5187 = vmul.f32 %v4379, %v5166
      %v5188 = vmul.f32 %v4380, %v5168
      %v5189 = vmul.f32 %v4381, %v5170
      %v5190 = vmul.f32 %v4382, %v5172
      %v5191 = vmul.f32 %v4383, %v5174
      %v5192 = vmul.f32 %v4384, %v5176
      %v5193 = vpack.c.bf16 %v5177, %v5177
      %v5194 = vpack.c.bf16 %v5178, %v5178
      %v5195 = vpack.c.bf16 %v5179, %v5179
      %v5196 = vpack.c.bf16 %v5180, %v5180
      %v5197 = vpack.c.bf16 %v5181, %v5181
      %v5198 = vpack.c.bf16 %v5182, %v5182
      %v5199 = vpack.c.bf16 %v5183, %v5183
      %v5200 = vpack.c.bf16 %v5184, %v5184
      %v5201 = vpack.c.bf16 %v5185, %v5185
      %v5202 = vpack.c.bf16 %v5186, %v5186
      %v5203 = vpack.c.bf16 %v5187, %v5187
      %v5204 = vpack.c.bf16 %v5188, %v5188
      %v5205 = vpack.c.bf16 %v5189, %v5189
      %v5206 = vpack.c.bf16 %v5190, %v5190
      %v5207 = vpack.c.bf16 %v5191, %v5191
      %v5208 = vpack.c.bf16 %v5192, %v5192
      %5209 = vst [vmem:[#allocation5 + $0x10] sm:$0xf] %v5193
      %5210 = vst [vmem:[#allocation5 + $0x50] sm:$0xf] %v5194
      %5211 = vst [vmem:[#allocation5 + $0x90] sm:$0xf] %v5195
      %5212 = vst [vmem:[#allocation5 + $0xd0] sm:$0xf] %v5196
      %5213 = vst [vmem:[#allocation5 + $0x110] sm:$0xf] %v5197
      %5214 = vst [vmem:[#allocation5 + $0x150] sm:$0xf] %v5198
      %5215 = vst [vmem:[#allocation5 + $0x190] sm:$0xf] %v5199
      %5216 = vst [vmem:[#allocation5 + $0x1d0] sm:$0xf] %v5200
      %5217 = vst [vmem:[#allocation5 + $0x210] sm:$0xf] %v5201
      %5218 = vst [vmem:[#allocation5 + $0x250] sm:$0xf] %v5202
      %5219 = vst [vmem:[#allocation5 + $0x290] sm:$0xf] %v5203
      %5220 = vst [vmem:[#allocation5 + $0x2d0] sm:$0xf] %v5204
      %5221 = vst [vmem:[#allocation5 + $0x310] sm:$0xf] %v5205
      %5222 = vst [vmem:[#allocation5 + $0x350] sm:$0xf] %v5206
      %5223 = vst [vmem:[#allocation5 + $0x390] sm:$0xf] %v5207
      %5224 = vst [vmem:[#allocation5 + $0x3d0] sm:$0xf] %v5208
      %v5225 = vperm.slane %v4516, 4
      %v5226 = vmul.f32 %v4386, %v5225
      %v5227 = vmul.f32 %v4387, %v5225
      %v5228 = vmul.f32 %v4388, %v5225
      %v5229 = vmul.f32 %v4389, %v5225
      %v5230 = vmul.f32 %v4390, %v5225
      %v5231 = vmul.f32 %v4391, %v5225
      %v5232 = vmul.f32 %v4392, %v5225
      %v5233 = vmul.f32 %v4393, %v5225
      %v5234 = vmul.f32 %v4394, %v5225
      %v5235 = vmul.f32 %v4395, %v5225
      %v5236 = vmul.f32 %v4396, %v5225
      %v5237 = vmul.f32 %v4397, %v5225
      %v5238 = vmul.f32 %v4398, %v5225
      %v5239 = vmul.f32 %v4399, %v5225
      %v5240 = vmul.f32 %v4400, %v5225
      %v5241 = vmul.f32 %v4401, %v5225
      %v5242 = vpack.c.bf16 %v5226, %v5226
      %v5243 = vpack.c.bf16 %v5227, %v5227
      %v5244 = vpack.c.bf16 %v5228, %v5228
      %v5245 = vpack.c.bf16 %v5229, %v5229
      %v5246 = vpack.c.bf16 %v5230, %v5230
      %v5247 = vpack.c.bf16 %v5231, %v5231
      %v5248 = vpack.c.bf16 %v5232, %v5232
      %v5249 = vpack.c.bf16 %v5233, %v5233
      %v5250 = vpack.c.bf16 %v5234, %v5234
      %v5251 = vpack.c.bf16 %v5235, %v5235
      %v5252 = vpack.c.bf16 %v5236, %v5236
      %v5253 = vpack.c.bf16 %v5237, %v5237
      %v5254 = vpack.c.bf16 %v5238, %v5238
      %v5255 = vpack.c.bf16 %v5239, %v5239
      %v5256 = vpack.c.bf16 %v5240, %v5240
      %v5257 = vpack.c.bf16 %v5241, %v5241
      %5258 = vst [vmem:[#allocation6 + $0x100] sm:$0xf] %v5242
      %5259 = vst [vmem:[#allocation6 + $0x104] sm:$0xf] %v5243
      %5260 = vst [vmem:[#allocation6 + $0x108] sm:$0xf] %v5244
      %5261 = vst [vmem:[#allocation6 + $0x10c] sm:$0xf] %v5245
      %5262 = vst [vmem:[#allocation6 + $0x110] sm:$0xf] %v5246
      %5263 = vst [vmem:[#allocation6 + $0x114] sm:$0xf] %v5247
      %5264 = vst [vmem:[#allocation6 + $0x118] sm:$0xf] %v5248
      %5265 = vst [vmem:[#allocation6 + $0x11c] sm:$0xf] %v5249
      %5266 = vst [vmem:[#allocation6 + $0x120] sm:$0xf] %v5250
      %5267 = vst [vmem:[#allocation6 + $0x124] sm:$0xf] %v5251
      %5268 = vst [vmem:[#allocation6 + $0x128] sm:$0xf] %v5252
      %5269 = vst [vmem:[#allocation6 + $0x12c] sm:$0xf] %v5253
      %5270 = vst [vmem:[#allocation6 + $0x130] sm:$0xf] %v5254
      %5271 = vst [vmem:[#allocation6 + $0x134] sm:$0xf] %v5255
      %5272 = vst [vmem:[#allocation6 + $0x138] sm:$0xf] %v5256
      %5273 = vst [vmem:[#allocation6 + $0x13c] sm:$0xf] %v5257
      %v5274 = vsub.f32 %v1474, 1.6666666
      %v5275 = vsub.f32 %v1486, 1.6666666
      %v5276 = vsub.f32 %v1498, 1.6666666
      %v5277 = vsub.f32 %v1510, 1.6666666
      %v5278 = vsub.f32 %v1522, 1.6666666
      %v5279 = vsub.f32 %v1534, 1.6666666
      %v5280 = vsub.f32 %v1546, 1.6666666
      %v5281 = vsub.f32 %v1558, 1.6666666
      %v5282 = vsub.f32 %v1570, 1.6666666
      %v5283 = vsub.f32 %v1582, 1.6666666
      %v5284 = vsub.f32 %v1594, 1.6666666
      %v5285 = vsub.f32 %v1606, 1.6666666
      %v5286 = vsub.f32 %v1618, 1.6666666
      %v5287 = vsub.f32 %v1630, 1.6666666
      %v5288 = vsub.f32 %v1642, 1.6666666
      %v5289 = vsub.f32 %v1654, 1.6666666
      %v5290 = vmul.f32 %v5274, -4.5
      %v5291 = vmul.f32 %v5275, -4.5
      %v5292 = vmul.f32 %v5276, -4.5
      %v5293 = vmul.f32 %v5277, -4.5
      %v5294 = vmul.f32 %v5278, -4.5
      %v5295 = vmul.f32 %v5279, -4.5
      %v5296 = vmul.f32 %v5280, -4.5
      %v5297 = vmul.f32 %v5281, -4.5
      %v5298 = vmul.f32 %v5282, -4.5
      %v5299 = vmul.f32 %v5283, -4.5
      %v5300 = vmul.f32 %v5284, -4.5
      %v5301 = vmul.f32 %v5285, -4.5
      %v5302 = vmul.f32 %v5286, -4.5
      %v5303 = vmul.f32 %v5287, -4.5
      %v5304 = vmul.f32 %v5288, -4.5
      %v5305 = vmul.f32 %v5289, -4.5
      %v5306 = vmul.f32 %v5290, %v5274
      %v5307 = vmul.f32 %v5291, %v5275
      %v5308 = vmul.f32 %v5292, %v5276
      %v5309 = vmul.f32 %v5293, %v5277
      %v5310 = vmul.f32 %v5294, %v5278
      %v5311 = vmul.f32 %v5295, %v5279
      %v5312 = vmul.f32 %v5296, %v5280
      %v5313 = vmul.f32 %v5297, %v5281
      %v5314 = vmul.f32 %v5298, %v5282
      %v5315 = vmul.f32 %v5299, %v5283
      %v5316 = vmul.f32 %v5300, %v5284
      %v5317 = vmul.f32 %v5301, %v5285
      %v5318 = vmul.f32 %v5302, %v5286
      %v5319 = vmul.f32 %v5303, %v5287
      %v5320 = vmul.f32 %v5304, %v5288
      %v5321 = vmul.f32 %v5305, %v5289
      %v5322 = vmul.f32 %v5306, 1.442695
      %v5323 = vpow.pop %v5322
      %v5324 = vmul.f32 %v5307, 1.442695
      %v5325 = vpow.pop %v5324
      %v5326 = vmul.f32 %v5308, 1.442695
      %v5327 = vpow.pop %v5326
      %v5328 = vmul.f32 %v5309, 1.442695
      %v5329 = vpow.pop %v5328
      %v5330 = vmul.f32 %v5310, 1.442695
      %v5331 = vpow.pop %v5330
      %v5332 = vmul.f32 %v5311, 1.442695
      %v5333 = vpow.pop %v5332
      %v5334 = vmul.f32 %v5312, 1.442695
      %v5335 = vpow.pop %v5334
      %v5336 = vmul.f32 %v5313, 1.442695
      %v5337 = vpow.pop %v5336
      %v5338 = vmul.f32 %v5314, 1.442695
      %v5339 = vpow.pop %v5338
      %v5340 = vmul.f32 %v5315, 1.442695
      %v5341 = vpow.pop %v5340
      %v5342 = vmul.f32 %v5316, 1.442695
      %v5343 = vpow.pop %v5342
      %v5344 = vmul.f32 %v5317, 1.442695
      %v5345 = vpow.pop %v5344
      %v5346 = vmul.f32 %v5318, 1.442695
      %v5347 = vpow.pop %v5346
      %v5348 = vmul.f32 %v5319, 1.442695
      %v5349 = vpow.pop %v5348
      %v5350 = vmul.f32 %v5320, 1.442695
      %v5351 = vpow.pop %v5350
      %v5352 = vmul.f32 %v5321, 1.442695
      %v5353 = vpow.pop %v5352
      %v5354 = vmul.f32 %v4369, %v5323
      %v5355 = vmul.f32 %v4370, %v5325
      %v5356 = vmul.f32 %v4371, %v5327
      %v5357 = vmul.f32 %v4372, %v5329
      %v5358 = vmul.f32 %v4373, %v5331
      %v5359 = vmul.f32 %v4374, %v5333
      %v5360 = vmul.f32 %v4375, %v5335
      %v5361 = vmul.f32 %v4376, %v5337
      %v5362 = vmul.f32 %v4377, %v5339
      %v5363 = vmul.f32 %v4378, %v5341
      %v5364 = vmul.f32 %v4379, %v5343
      %v5365 = vmul.f32 %v4380, %v5345
      %v5366 = vmul.f32 %v4381, %v5347
      %v5367 = vmul.f32 %v4382, %v5349
      %v5368 = vmul.f32 %v4383, %v5351
      %v5369 = vmul.f32 %v4384, %v5353
      %v5370 = vpack.c.bf16 %v5354, %v5354
      %v5371 = vpack.c.bf16 %v5355, %v5355
      %v5372 = vpack.c.bf16 %v5356, %v5356
      %v5373 = vpack.c.bf16 %v5357, %v5357
      %v5374 = vpack.c.bf16 %v5358, %v5358
      %v5375 = vpack.c.bf16 %v5359, %v5359
      %v5376 = vpack.c.bf16 %v5360, %v5360
      %v5377 = vpack.c.bf16 %v5361, %v5361
      %v5378 = vpack.c.bf16 %v5362, %v5362
      %v5379 = vpack.c.bf16 %v5363, %v5363
      %v5380 = vpack.c.bf16 %v5364, %v5364
      %v5381 = vpack.c.bf16 %v5365, %v5365
      %v5382 = vpack.c.bf16 %v5366, %v5366
      %v5383 = vpack.c.bf16 %v5367, %v5367
      %v5384 = vpack.c.bf16 %v5368, %v5368
      %v5385 = vpack.c.bf16 %v5369, %v5369
      %5386 = vst [vmem:[#allocation5 + $0x14] sm:$0xf] %v5370
      %5387 = vst [vmem:[#allocation5 + $0x54] sm:$0xf] %v5371
      %5388 = vst [vmem:[#allocation5 + $0x94] sm:$0xf] %v5372
      %5389 = vst [vmem:[#allocation5 + $0xd4] sm:$0xf] %v5373
      %5390 = vst [vmem:[#allocation5 + $0x114] sm:$0xf] %v5374
      %5391 = vst [vmem:[#allocation5 + $0x154] sm:$0xf] %v5375
      %5392 = vst [vmem:[#allocation5 + $0x194] sm:$0xf] %v5376
      %5393 = vst [vmem:[#allocation5 + $0x1d4] sm:$0xf] %v5377
      %5394 = vst [vmem:[#allocation5 + $0x214] sm:$0xf] %v5378
      %5395 = vst [vmem:[#allocation5 + $0x254] sm:$0xf] %v5379
      %5396 = vst [vmem:[#allocation5 + $0x294] sm:$0xf] %v5380
      %5397 = vst [vmem:[#allocation5 + $0x2d4] sm:$0xf] %v5381
      %5398 = vst [vmem:[#allocation5 + $0x314] sm:$0xf] %v5382
      %5399 = vst [vmem:[#allocation5 + $0x354] sm:$0xf] %v5383
      %5400 = vst [vmem:[#allocation5 + $0x394] sm:$0xf] %v5384
      %5401 = vst [vmem:[#allocation5 + $0x3d4] sm:$0xf] %v5385
      %v5402 = vperm.slane %v4516, 5
      %v5403 = vmul.f32 %v4386, %v5402
      %v5404 = vmul.f32 %v4387, %v5402
      %v5405 = vmul.f32 %v4388, %v5402
      %v5406 = vmul.f32 %v4389, %v5402
      %v5407 = vmul.f32 %v4390, %v5402
      %v5408 = vmul.f32 %v4391, %v5402
      %v5409 = vmul.f32 %v4392, %v5402
      %v5410 = vmul.f32 %v4393, %v5402
      %v5411 = vmul.f32 %v4394, %v5402
      %v5412 = vmul.f32 %v4395, %v5402
      %v5413 = vmul.f32 %v4396, %v5402
      %v5414 = vmul.f32 %v4397, %v5402
      %v5415 = vmul.f32 %v4398, %v5402
      %v5416 = vmul.f32 %v4399, %v5402
      %v5417 = vmul.f32 %v4400, %v5402
      %v5418 = vmul.f32 %v4401, %v5402
      %v5419 = vpack.c.bf16 %v5403, %v5403
      %v5420 = vpack.c.bf16 %v5404, %v5404
      %v5421 = vpack.c.bf16 %v5405, %v5405
      %v5422 = vpack.c.bf16 %v5406, %v5406
      %v5423 = vpack.c.bf16 %v5407, %v5407
      %v5424 = vpack.c.bf16 %v5408, %v5408
      %v5425 = vpack.c.bf16 %v5409, %v5409
      %v5426 = vpack.c.bf16 %v5410, %v5410
      %v5427 = vpack.c.bf16 %v5411, %v5411
      %v5428 = vpack.c.bf16 %v5412, %v5412
      %v5429 = vpack.c.bf16 %v5413, %v5413
      %v5430 = vpack.c.bf16 %v5414, %v5414
      %v5431 = vpack.c.bf16 %v5415, %v5415
      %v5432 = vpack.c.bf16 %v5416, %v5416
      %v5433 = vpack.c.bf16 %v5417, %v5417
      %v5434 = vpack.c.bf16 %v5418, %v5418
      %5435 = vst [vmem:[#allocation6 + $0x140] sm:$0xf] %v5419
      %5436 = vst [vmem:[#allocation6 + $0x144] sm:$0xf] %v5420
      %5437 = vst [vmem:[#allocation6 + $0x148] sm:$0xf] %v5421
      %5438 = vst [vmem:[#allocation6 + $0x14c] sm:$0xf] %v5422
      %5439 = vst [vmem:[#allocation6 + $0x150] sm:$0xf] %v5423
      %5440 = vst [vmem:[#allocation6 + $0x154] sm:$0xf] %v5424
      %5441 = vst [vmem:[#allocation6 + $0x158] sm:$0xf] %v5425
      %5442 = vst [vmem:[#allocation6 + $0x15c] sm:$0xf] %v5426
      %5443 = vst [vmem:[#allocation6 + $0x160] sm:$0xf] %v5427
      %5444 = vst [vmem:[#allocation6 + $0x164] sm:$0xf] %v5428
      %5445 = vst [vmem:[#allocation6 + $0x168] sm:$0xf] %v5429
      %5446 = vst [vmem:[#allocation6 + $0x16c] sm:$0xf] %v5430
      %5447 = vst [vmem:[#allocation6 + $0x170] sm:$0xf] %v5431
      %5448 = vst [vmem:[#allocation6 + $0x174] sm:$0xf] %v5432
      %5449 = vst [vmem:[#allocation6 + $0x178] sm:$0xf] %v5433
      %5450 = vst [vmem:[#allocation6 + $0x17c] sm:$0xf] %v5434
      %v5451 = vsub.f32 %v1474, 2.0
      %v5452 = vsub.f32 %v1486, 2.0
      %v5453 = vsub.f32 %v1498, 2.0
      %v5454 = vsub.f32 %v1510, 2.0
      %v5455 = vsub.f32 %v1522, 2.0
      %v5456 = vsub.f32 %v1534, 2.0
      %v5457 = vsub.f32 %v1546, 2.0
      %v5458 = vsub.f32 %v1558, 2.0
      %v5459 = vsub.f32 %v1570, 2.0
      %v5460 = vsub.f32 %v1582, 2.0
      %v5461 = vsub.f32 %v1594, 2.0
      %v5462 = vsub.f32 %v1606, 2.0
      %v5463 = vsub.f32 %v1618, 2.0
      %v5464 = vsub.f32 %v1630, 2.0
      %v5465 = vsub.f32 %v1642, 2.0
      %v5466 = vsub.f32 %v1654, 2.0
      %v5467 = vmul.f32 %v5451, -4.5
      %v5468 = vmul.f32 %v5452, -4.5
      %v5469 = vmul.f32 %v5453, -4.5
      %v5470 = vmul.f32 %v5454, -4.5
      %v5471 = vmul.f32 %v5455, -4.5
      %v5472 = vmul.f32 %v5456, -4.5
      %v5473 = vmul.f32 %v5457, -4.5
      %v5474 = vmul.f32 %v5458, -4.5
      %v5475 = vmul.f32 %v5459, -4.5
      %v5476 = vmul.f32 %v5460, -4.5
      %v5477 = vmul.f32 %v5461, -4.5
      %v5478 = vmul.f32 %v5462, -4.5
      %v5479 = vmul.f32 %v5463, -4.5
      %v5480 = vmul.f32 %v5464, -4.5
      %v5481 = vmul.f32 %v5465, -4.5
      %v5482 = vmul.f32 %v5466, -4.5
      %v5483 = vmul.f32 %v5467, %v5451
      %v5484 = vmul.f32 %v5468, %v5452
      %v5485 = vmul.f32 %v5469, %v5453
      %v5486 = vmul.f32 %v5470, %v5454
      %v5487 = vmul.f32 %v5471, %v5455
      %v5488 = vmul.f32 %v5472, %v5456
      %v5489 = vmul.f32 %v5473, %v5457
      %v5490 = vmul.f32 %v5474, %v5458
      %v5491 = vmul.f32 %v5475, %v5459
      %v5492 = vmul.f32 %v5476, %v5460
      %v5493 = vmul.f32 %v5477, %v5461
      %v5494 = vmul.f32 %v5478, %v5462
      %v5495 = vmul.f32 %v5479, %v5463
      %v5496 = vmul.f32 %v5480, %v5464
      %v5497 = vmul.f32 %v5481, %v5465
      %v5498 = vmul.f32 %v5482, %v5466
      %v5499 = vmul.f32 %v5483, 1.442695
      %v5500 = vpow.pop %v5499
      %v5501 = vmul.f32 %v5484, 1.442695
      %v5502 = vpow.pop %v5501
      %v5503 = vmul.f32 %v5485, 1.442695
      %v5504 = vpow.pop %v5503
      %v5505 = vmul.f32 %v5486, 1.442695
      %v5506 = vpow.pop %v5505
      %v5507 = vmul.f32 %v5487, 1.442695
      %v5508 = vpow.pop %v5507
      %v5509 = vmul.f32 %v5488, 1.442695
      %v5510 = vpow.pop %v5509
      %v5511 = vmul.f32 %v5489, 1.442695
      %v5512 = vpow.pop %v5511
      %v5513 = vmul.f32 %v5490, 1.442695
      %v5514 = vpow.pop %v5513
      %v5515 = vmul.f32 %v5491, 1.442695
      %v5516 = vpow.pop %v5515
      %v5517 = vmul.f32 %v5492, 1.442695
      %v5518 = vpow.pop %v5517
      %v5519 = vmul.f32 %v5493, 1.442695
      %v5520 = vpow.pop %v5519
      %v5521 = vmul.f32 %v5494, 1.442695
      %v5522 = vpow.pop %v5521
      %v5523 = vmul.f32 %v5495, 1.442695
      %v5524 = vpow.pop %v5523
      %v5525 = vmul.f32 %v5496, 1.442695
      %v5526 = vpow.pop %v5525
      %v5527 = vmul.f32 %v5497, 1.442695
      %v5528 = vpow.pop %v5527
      %v5529 = vmul.f32 %v5498, 1.442695
      %v5530 = vpow.pop %v5529
      %v5531 = vmul.f32 %v4369, %v5500
      %v5532 = vmul.f32 %v4370, %v5502
      %v5533 = vmul.f32 %v4371, %v5504
      %v5534 = vmul.f32 %v4372, %v5506
      %v5535 = vmul.f32 %v4373, %v5508
      %v5536 = vmul.f32 %v4374, %v5510
      %v5537 = vmul.f32 %v4375, %v5512
      %v5538 = vmul.f32 %v4376, %v5514
      %v5539 = vmul.f32 %v4377, %v5516
      %v5540 = vmul.f32 %v4378, %v5518
      %v5541 = vmul.f32 %v4379, %v5520
      %v5542 = vmul.f32 %v4380, %v5522
      %v5543 = vmul.f32 %v4381, %v5524
      %v5544 = vmul.f32 %v4382, %v5526
      %v5545 = vmul.f32 %v4383, %v5528
      %v5546 = vmul.f32 %v4384, %v5530
      %v5547 = vpack.c.bf16 %v5531, %v5531
      %v5548 = vpack.c.bf16 %v5532, %v5532
      %v5549 = vpack.c.bf16 %v5533, %v5533
      %v5550 = vpack.c.bf16 %v5534, %v5534
      %v5551 = vpack.c.bf16 %v5535, %v5535
      %v5552 = vpack.c.bf16 %v5536, %v5536
      %v5553 = vpack.c.bf16 %v5537, %v5537
      %v5554 = vpack.c.bf16 %v5538, %v5538
      %v5555 = vpack.c.bf16 %v5539, %v5539
      %v5556 = vpack.c.bf16 %v5540, %v5540
      %v5557 = vpack.c.bf16 %v5541, %v5541
      %v5558 = vpack.c.bf16 %v5542, %v5542
      %v5559 = vpack.c.bf16 %v5543, %v5543
      %v5560 = vpack.c.bf16 %v5544, %v5544
      %v5561 = vpack.c.bf16 %v5545, %v5545
      %v5562 = vpack.c.bf16 %v5546, %v5546
      %5563 = vst [vmem:[#allocation5 + $0x18] sm:$0xf] %v5547
      %5564 = vst [vmem:[#allocation5 + $0x58] sm:$0xf] %v5548
      %5565 = vst [vmem:[#allocation5 + $0x98] sm:$0xf] %v5549
      %5566 = vst [vmem:[#allocation5 + $0xd8] sm:$0xf] %v5550
      %5567 = vst [vmem:[#allocation5 + $0x118] sm:$0xf] %v5551
      %5568 = vst [vmem:[#allocation5 + $0x158] sm:$0xf] %v5552
      %5569 = vst [vmem:[#allocation5 + $0x198] sm:$0xf] %v5553
      %5570 = vst [vmem:[#allocation5 + $0x1d8] sm:$0xf] %v5554
      %5571 = vst [vmem:[#allocation5 + $0x218] sm:$0xf] %v5555
      %5572 = vst [vmem:[#allocation5 + $0x258] sm:$0xf] %v5556
      %5573 = vst [vmem:[#allocation5 + $0x298] sm:$0xf] %v5557
      %5574 = vst [vmem:[#allocation5 + $0x2d8] sm:$0xf] %v5558
      %5575 = vst [vmem:[#allocation5 + $0x318] sm:$0xf] %v5559
      %5576 = vst [vmem:[#allocation5 + $0x358] sm:$0xf] %v5560
      %5577 = vst [vmem:[#allocation5 + $0x398] sm:$0xf] %v5561
      %5578 = vst [vmem:[#allocation5 + $0x3d8] sm:$0xf] %v5562
      %v5579 = vperm.slane %v4516, 6
      %v5580 = vmul.f32 %v4386, %v5579
      %v5581 = vmul.f32 %v4387, %v5579
      %v5582 = vmul.f32 %v4388, %v5579
      %v5583 = vmul.f32 %v4389, %v5579
      %v5584 = vmul.f32 %v4390, %v5579
      %v5585 = vmul.f32 %v4391, %v5579
      %v5586 = vmul.f32 %v4392, %v5579
      %v5587 = vmul.f32 %v4393, %v5579
      %v5588 = vmul.f32 %v4394, %v5579
      %v5589 = vmul.f32 %v4395, %v5579
      %v5590 = vmul.f32 %v4396, %v5579
      %v5591 = vmul.f32 %v4397, %v5579
      %v5592 = vmul.f32 %v4398, %v5579
      %v5593 = vmul.f32 %v4399, %v5579
      %v5594 = vmul.f32 %v4400, %v5579
      %v5595 = vmul.f32 %v4401, %v5579
      %v5596 = vpack.c.bf16 %v5580, %v5580
      %v5597 = vpack.c.bf16 %v5581, %v5581
      %v5598 = vpack.c.bf16 %v5582, %v5582
      %v5599 = vpack.c.bf16 %v5583, %v5583
      %v5600 = vpack.c.bf16 %v5584, %v5584
      %v5601 = vpack.c.bf16 %v5585, %v5585
      %v5602 = vpack.c.bf16 %v5586, %v5586
      %v5603 = vpack.c.bf16 %v5587, %v5587
      %v5604 = vpack.c.bf16 %v5588, %v5588
      %v5605 = vpack.c.bf16 %v5589, %v5589
      %v5606 = vpack.c.bf16 %v5590, %v5590
      %v5607 = vpack.c.bf16 %v5591, %v5591
      %v5608 = vpack.c.bf16 %v5592, %v5592
      %v5609 = vpack.c.bf16 %v5593, %v5593
      %v5610 = vpack.c.bf16 %v5594, %v5594
      %v5611 = vpack.c.bf16 %v5595, %v5595
      %5612 = vst [vmem:[#allocation6 + $0x180] sm:$0xf] %v5596
      %5613 = vst [vmem:[#allocation6 + $0x184] sm:$0xf] %v5597
      %5614 = vst [vmem:[#allocation6 + $0x188] sm:$0xf] %v5598
      %5615 = vst [vmem:[#allocation6 + $0x18c] sm:$0xf] %v5599
      %5616 = vst [vmem:[#allocation6 + $0x190] sm:$0xf] %v5600
      %5617 = vst [vmem:[#allocation6 + $0x194] sm:$0xf] %v5601
      %5618 = vst [vmem:[#allocation6 + $0x198] sm:$0xf] %v5602
      %5619 = vst [vmem:[#allocation6 + $0x19c] sm:$0xf] %v5603
      %5620 = vst [vmem:[#allocation6 + $0x1a0] sm:$0xf] %v5604
      %5621 = vst [vmem:[#allocation6 + $0x1a4] sm:$0xf] %v5605
      %5622 = vst [vmem:[#allocation6 + $0x1a8] sm:$0xf] %v5606
      %5623 = vst [vmem:[#allocation6 + $0x1ac] sm:$0xf] %v5607
      %5624 = vst [vmem:[#allocation6 + $0x1b0] sm:$0xf] %v5608
      %5625 = vst [vmem:[#allocation6 + $0x1b4] sm:$0xf] %v5609
      %5626 = vst [vmem:[#allocation6 + $0x1b8] sm:$0xf] %v5610
      %5627 = vst [vmem:[#allocation6 + $0x1bc] sm:$0xf] %v5611
      %v5628 = vsub.f32 %v1474, 2.3333333
      %v5629 = vsub.f32 %v1486, 2.3333333
      %v5630 = vsub.f32 %v1498, 2.3333333
      %v5631 = vsub.f32 %v1510, 2.3333333
      %v5632 = vsub.f32 %v1522, 2.3333333
      %v5633 = vsub.f32 %v1534, 2.3333333
      %v5634 = vsub.f32 %v1546, 2.3333333
      %v5635 = vsub.f32 %v1558, 2.3333333
      %v5636 = vsub.f32 %v1570, 2.3333333
      %v5637 = vsub.f32 %v1582, 2.3333333
      %v5638 = vsub.f32 %v1594, 2.3333333
      %v5639 = vsub.f32 %v1606, 2.3333333
      %v5640 = vsub.f32 %v1618, 2.3333333
      %v5641 = vsub.f32 %v1630, 2.3333333
      %v5642 = vsub.f32 %v1642, 2.3333333
      %v5643 = vsub.f32 %v1654, 2.3333333
      %v5644 = vmul.f32 %v5628, -4.5
      %v5645 = vmul.f32 %v5629, -4.5
      %v5646 = vmul.f32 %v5630, -4.5
      %v5647 = vmul.f32 %v5631, -4.5
      %v5648 = vmul.f32 %v5632, -4.5
      %v5649 = vmul.f32 %v5633, -4.5
      %v5650 = vmul.f32 %v5634, -4.5
      %v5651 = vmul.f32 %v5635, -4.5
      %v5652 = vmul.f32 %v5636, -4.5
      %v5653 = vmul.f32 %v5637, -4.5
      %v5654 = vmul.f32 %v5638, -4.5
      %v5655 = vmul.f32 %v5639, -4.5
      %v5656 = vmul.f32 %v5640, -4.5
      %v5657 = vmul.f32 %v5641, -4.5
      %v5658 = vmul.f32 %v5642, -4.5
      %v5659 = vmul.f32 %v5643, -4.5
      %v5660 = vmul.f32 %v5644, %v5628
      %v5661 = vmul.f32 %v5645, %v5629
      %v5662 = vmul.f32 %v5646, %v5630
      %v5663 = vmul.f32 %v5647, %v5631
      %v5664 = vmul.f32 %v5648, %v5632
      %v5665 = vmul.f32 %v5649, %v5633
      %v5666 = vmul.f32 %v5650, %v5634
      %v5667 = vmul.f32 %v5651, %v5635
      %v5668 = vmul.f32 %v5652, %v5636
      %v5669 = vmul.f32 %v5653, %v5637
      %v5670 = vmul.f32 %v5654, %v5638
      %v5671 = vmul.f32 %v5655, %v5639
      %v5672 = vmul.f32 %v5656, %v5640
      %v5673 = vmul.f32 %v5657, %v5641
      %v5674 = vmul.f32 %v5658, %v5642
      %v5675 = vmul.f32 %v5659, %v5643
      %v5676 = vmul.f32 %v5660, 1.442695
      %v5677 = vpow.pop %v5676
      %v5678 = vmul.f32 %v5661, 1.442695
      %v5679 = vpow.pop %v5678
      %v5680 = vmul.f32 %v5662, 1.442695
      %v5681 = vpow.pop %v5680
      %v5682 = vmul.f32 %v5663, 1.442695
      %v5683 = vpow.pop %v5682
      %v5684 = vmul.f32 %v5664, 1.442695
      %v5685 = vpow.pop %v5684
      %v5686 = vmul.f32 %v5665, 1.442695
      %v5687 = vpow.pop %v5686
      %v5688 = vmul.f32 %v5666, 1.442695
      %v5689 = vpow.pop %v5688
      %v5690 = vmul.f32 %v5667, 1.442695
      %v5691 = vpow.pop %v5690
      %v5692 = vmul.f32 %v5668, 1.442695
      %v5693 = vpow.pop %v5692
      %v5694 = vmul.f32 %v5669, 1.442695
      %v5695 = vpow.pop %v5694
      %v5696 = vmul.f32 %v5670, 1.442695
      %v5697 = vpow.pop %v5696
      %v5698 = vmul.f32 %v5671, 1.442695
      %v5699 = vpow.pop %v5698
      %v5700 = vmul.f32 %v5672, 1.442695
      %v5701 = vpow.pop %v5700
      %v5702 = vmul.f32 %v5673, 1.442695
      %v5703 = vpow.pop %v5702
      %v5704 = vmul.f32 %v5674, 1.442695
      %v5705 = vpow.pop %v5704
      %v5706 = vmul.f32 %v5675, 1.442695
      %v5707 = vpow.pop %v5706
      %v5708 = vmul.f32 %v4369, %v5677
      %v5709 = vmul.f32 %v4370, %v5679
      %v5710 = vmul.f32 %v4371, %v5681
      %v5711 = vmul.f32 %v4372, %v5683
      %v5712 = vmul.f32 %v4373, %v5685
      %v5713 = vmul.f32 %v4374, %v5687
      %v5714 = vmul.f32 %v4375, %v5689
      %v5715 = vmul.f32 %v4376, %v5691
      %v5716 = vmul.f32 %v4377, %v5693
      %v5717 = vmul.f32 %v4378, %v5695
      %v5718 = vmul.f32 %v4379, %v5697
      %v5719 = vmul.f32 %v4380, %v5699
      %v5720 = vmul.f32 %v4381, %v5701
      %v5721 = vmul.f32 %v4382, %v5703
      %v5722 = vmul.f32 %v4383, %v5705
      %v5723 = vmul.f32 %v4384, %v5707
      %v5724 = vpack.c.bf16 %v5708, %v5708
      %v5725 = vpack.c.bf16 %v5709, %v5709
      %v5726 = vpack.c.bf16 %v5710, %v5710
      %v5727 = vpack.c.bf16 %v5711, %v5711
      %v5728 = vpack.c.bf16 %v5712, %v5712
      %v5729 = vpack.c.bf16 %v5713, %v5713
      %v5730 = vpack.c.bf16 %v5714, %v5714
      %v5731 = vpack.c.bf16 %v5715, %v5715
      %v5732 = vpack.c.bf16 %v5716, %v5716
      %v5733 = vpack.c.bf16 %v5717, %v5717
      %v5734 = vpack.c.bf16 %v5718, %v5718
      %v5735 = vpack.c.bf16 %v5719, %v5719
      %v5736 = vpack.c.bf16 %v5720, %v5720
      %v5737 = vpack.c.bf16 %v5721, %v5721
      %v5738 = vpack.c.bf16 %v5722, %v5722
      %v5739 = vpack.c.bf16 %v5723, %v5723
      %5740 = vst [vmem:[#allocation5 + $0x1c] sm:$0xf] %v5724
      %5741 = vst [vmem:[#allocation5 + $0x5c] sm:$0xf] %v5725
      %5742 = vst [vmem:[#allocation5 + $0x9c] sm:$0xf] %v5726
      %5743 = vst [vmem:[#allocation5 + $0xdc] sm:$0xf] %v5727
      %5744 = vst [vmem:[#allocation5 + $0x11c] sm:$0xf] %v5728
      %5745 = vst [vmem:[#allocation5 + $0x15c] sm:$0xf] %v5729
      %5746 = vst [vmem:[#allocation5 + $0x19c] sm:$0xf] %v5730
      %5747 = vst [vmem:[#allocation5 + $0x1dc] sm:$0xf] %v5731
      %5748 = vst [vmem:[#allocation5 + $0x21c] sm:$0xf] %v5732
      %5749 = vst [vmem:[#allocation5 + $0x25c] sm:$0xf] %v5733
      %5750 = vst [vmem:[#allocation5 + $0x29c] sm:$0xf] %v5734
      %5751 = vst [vmem:[#allocation5 + $0x2dc] sm:$0xf] %v5735
      %5752 = vst [vmem:[#allocation5 + $0x31c] sm:$0xf] %v5736
      %5753 = vst [vmem:[#allocation5 + $0x35c] sm:$0xf] %v5737
      %5754 = vst [vmem:[#allocation5 + $0x39c] sm:$0xf] %v5738
      %5755 = vst [vmem:[#allocation5 + $0x3dc] sm:$0xf] %v5739
      %v5756 = vperm.slane %v4516, 7
      %v5757 = vmul.f32 %v4386, %v5756
      %v5758 = vmul.f32 %v4387, %v5756
      %v5759 = vmul.f32 %v4388, %v5756
      %v5760 = vmul.f32 %v4389, %v5756
      %v5761 = vmul.f32 %v4390, %v5756
      %v5762 = vmul.f32 %v4391, %v5756
      %v5763 = vmul.f32 %v4392, %v5756
      %v5764 = vmul.f32 %v4393, %v5756
      %v5765 = vmul.f32 %v4394, %v5756
      %v5766 = vmul.f32 %v4395, %v5756
      %v5767 = vmul.f32 %v4396, %v5756
      %v5768 = vmul.f32 %v4397, %v5756
      %v5769 = vmul.f32 %v4398, %v5756
      %v5770 = vmul.f32 %v4399, %v5756
      %v5771 = vmul.f32 %v4400, %v5756
      %v5772 = vmul.f32 %v4401, %v5756
      %v5773 = vpack.c.bf16 %v5757, %v5757
      %v5774 = vpack.c.bf16 %v5758, %v5758
      %v5775 = vpack.c.bf16 %v5759, %v5759
      %v5776 = vpack.c.bf16 %v5760, %v5760
      %v5777 = vpack.c.bf16 %v5761, %v5761
      %v5778 = vpack.c.bf16 %v5762, %v5762
      %v5779 = vpack.c.bf16 %v5763, %v5763
      %v5780 = vpack.c.bf16 %v5764, %v5764
      %v5781 = vpack.c.bf16 %v5765, %v5765
      %v5782 = vpack.c.bf16 %v5766, %v5766
      %v5783 = vpack.c.bf16 %v5767, %v5767
      %v5784 = vpack.c.bf16 %v5768, %v5768
      %v5785 = vpack.c.bf16 %v5769, %v5769
      %v5786 = vpack.c.bf16 %v5770, %v5770
      %v5787 = vpack.c.bf16 %v5771, %v5771
      %v5788 = vpack.c.bf16 %v5772, %v5772
      %5789 = vst [vmem:[#allocation6 + $0x1c0] sm:$0xf] %v5773
      %5790 = vst [vmem:[#allocation6 + $0x1c4] sm:$0xf] %v5774
      %5791 = vst [vmem:[#allocation6 + $0x1c8] sm:$0xf] %v5775
      %5792 = vst [vmem:[#allocation6 + $0x1cc] sm:$0xf] %v5776
      %5793 = vst [vmem:[#allocation6 + $0x1d0] sm:$0xf] %v5777
      %5794 = vst [vmem:[#allocation6 + $0x1d4] sm:$0xf] %v5778
      %5795 = vst [vmem:[#allocation6 + $0x1d8] sm:$0xf] %v5779
      %5796 = vst [vmem:[#allocation6 + $0x1dc] sm:$0xf] %v5780
      %5797 = vst [vmem:[#allocation6 + $0x1e0] sm:$0xf] %v5781
      %5798 = vst [vmem:[#allocation6 + $0x1e4] sm:$0xf] %v5782
      %5799 = vst [vmem:[#allocation6 + $0x1e8] sm:$0xf] %v5783
      %5800 = vst [vmem:[#allocation6 + $0x1ec] sm:$0xf] %v5784
      %5801 = vst [vmem:[#allocation6 + $0x1f0] sm:$0xf] %v5785
      %5802 = vst [vmem:[#allocation6 + $0x1f4] sm:$0xf] %v5786
      %5803 = vst [vmem:[#allocation6 + $0x1f8] sm:$0xf] %v5787
      %5804 = vst [vmem:[#allocation6 + $0x1fc] sm:$0xf] %v5788
      %v5805 = vsub.f32 %v1474, 2.6666667
      %v5806 = vsub.f32 %v1486, 2.6666667
      %v5807 = vsub.f32 %v1498, 2.6666667
      %v5808 = vsub.f32 %v1510, 2.6666667
      %v5809 = vsub.f32 %v1522, 2.6666667
      %v5810 = vsub.f32 %v1534, 2.6666667
      %v5811 = vsub.f32 %v1546, 2.6666667
      %v5812 = vsub.f32 %v1558, 2.6666667
      %v5813 = vsub.f32 %v1570, 2.6666667
      %v5814 = vsub.f32 %v1582, 2.6666667
      %v5815 = vsub.f32 %v1594, 2.6666667
      %v5816 = vsub.f32 %v1606, 2.6666667
      %v5817 = vsub.f32 %v1618, 2.6666667
      %v5818 = vsub.f32 %v1630, 2.6666667
      %v5819 = vsub.f32 %v1642, 2.6666667
      %v5820 = vsub.f32 %v1654, 2.6666667
      %v5821 = vmul.f32 %v5805, -4.5
      %v5822 = vmul.f32 %v5806, -4.5
      %v5823 = vmul.f32 %v5807, -4.5
      %v5824 = vmul.f32 %v5808, -4.5
      %v5825 = vmul.f32 %v5809, -4.5
      %v5826 = vmul.f32 %v5810, -4.5
      %v5827 = vmul.f32 %v5811, -4.5
      %v5828 = vmul.f32 %v5812, -4.5
      %v5829 = vmul.f32 %v5813, -4.5
      %v5830 = vmul.f32 %v5814, -4.5
      %v5831 = vmul.f32 %v5815, -4.5
      %v5832 = vmul.f32 %v5816, -4.5
      %v5833 = vmul.f32 %v5817, -4.5
      %v5834 = vmul.f32 %v5818, -4.5
      %v5835 = vmul.f32 %v5819, -4.5
      %v5836 = vmul.f32 %v5820, -4.5
      %v5837 = vmul.f32 %v5821, %v5805
      %v5838 = vmul.f32 %v5822, %v5806
      %v5839 = vmul.f32 %v5823, %v5807
      %v5840 = vmul.f32 %v5824, %v5808
      %v5841 = vmul.f32 %v5825, %v5809
      %v5842 = vmul.f32 %v5826, %v5810
      %v5843 = vmul.f32 %v5827, %v5811
      %v5844 = vmul.f32 %v5828, %v5812
      %v5845 = vmul.f32 %v5829, %v5813
      %v5846 = vmul.f32 %v5830, %v5814
      %v5847 = vmul.f32 %v5831, %v5815
      %v5848 = vmul.f32 %v5832, %v5816
      %v5849 = vmul.f32 %v5833, %v5817
      %v5850 = vmul.f32 %v5834, %v5818
      %v5851 = vmul.f32 %v5835, %v5819
      %v5852 = vmul.f32 %v5836, %v5820
      %v5853 = vmul.f32 %v5837, 1.442695
      %v5854 = vpow.pop %v5853
      %v5855 = vmul.f32 %v5838, 1.442695
      %v5856 = vpow.pop %v5855
      %v5857 = vmul.f32 %v5839, 1.442695
      %v5858 = vpow.pop %v5857
      %v5859 = vmul.f32 %v5840, 1.442695
      %v5860 = vpow.pop %v5859
      %v5861 = vmul.f32 %v5841, 1.442695
      %v5862 = vpow.pop %v5861
      %v5863 = vmul.f32 %v5842, 1.442695
      %v5864 = vpow.pop %v5863
      %v5865 = vmul.f32 %v5843, 1.442695
      %v5866 = vpow.pop %v5865
      %v5867 = vmul.f32 %v5844, 1.442695
      %v5868 = vpow.pop %v5867
      %v5869 = vmul.f32 %v5845, 1.442695
      %v5870 = vpow.pop %v5869
      %v5871 = vmul.f32 %v5846, 1.442695
      %v5872 = vpow.pop %v5871
      %v5873 = vmul.f32 %v5847, 1.442695
      %v5874 = vpow.pop %v5873
      %v5875 = vmul.f32 %v5848, 1.442695
      %v5876 = vpow.pop %v5875
      %v5877 = vmul.f32 %v5849, 1.442695
      %v5878 = vpow.pop %v5877
      %v5879 = vmul.f32 %v5850, 1.442695
      %v5880 = vpow.pop %v5879
      %v5881 = vmul.f32 %v5851, 1.442695
      %v5882 = vpow.pop %v5881
      %v5883 = vmul.f32 %v5852, 1.442695
      %v5884 = vpow.pop %v5883
      %v5885 = vmul.f32 %v4369, %v5854
      %v5886 = vmul.f32 %v4370, %v5856
      %v5887 = vmul.f32 %v4371, %v5858
      %v5888 = vmul.f32 %v4372, %v5860
      %v5889 = vmul.f32 %v4373, %v5862
      %v5890 = vmul.f32 %v4374, %v5864
      %v5891 = vmul.f32 %v4375, %v5866
      %v5892 = vmul.f32 %v4376, %v5868
      %v5893 = vmul.f32 %v4377, %v5870
      %v5894 = vmul.f32 %v4378, %v5872
      %v5895 = vmul.f32 %v4379, %v5874
      %v5896 = vmul.f32 %v4380, %v5876
      %v5897 = vmul.f32 %v4381, %v5878
      %v5898 = vmul.f32 %v4382, %v5880
      %v5899 = vmul.f32 %v4383, %v5882
      %v5900 = vmul.f32 %v4384, %v5884
      %v5901 = vpack.c.bf16 %v5885, %v5885
      %v5902 = vpack.c.bf16 %v5886, %v5886
      %v5903 = vpack.c.bf16 %v5887, %v5887
      %v5904 = vpack.c.bf16 %v5888, %v5888
      %v5905 = vpack.c.bf16 %v5889, %v5889
      %v5906 = vpack.c.bf16 %v5890, %v5890
      %v5907 = vpack.c.bf16 %v5891, %v5891
      %v5908 = vpack.c.bf16 %v5892, %v5892
      %v5909 = vpack.c.bf16 %v5893, %v5893
      %v5910 = vpack.c.bf16 %v5894, %v5894
      %v5911 = vpack.c.bf16 %v5895, %v5895
      %v5912 = vpack.c.bf16 %v5896, %v5896
      %v5913 = vpack.c.bf16 %v5897, %v5897
      %v5914 = vpack.c.bf16 %v5898, %v5898
      %v5915 = vpack.c.bf16 %v5899, %v5899
      %v5916 = vpack.c.bf16 %v5900, %v5900
      %5917 = vst [vmem:[#allocation5 + $0x20] sm:$0xf] %v5901
      %5918 = vst [vmem:[#allocation5 + $0x60] sm:$0xf] %v5902
      %5919 = vst [vmem:[#allocation5 + $0xa0] sm:$0xf] %v5903
      %5920 = vst [vmem:[#allocation5 + $0xe0] sm:$0xf] %v5904
      %5921 = vst [vmem:[#allocation5 + $0x120] sm:$0xf] %v5905
      %5922 = vst [vmem:[#allocation5 + $0x160] sm:$0xf] %v5906
      %5923 = vst [vmem:[#allocation5 + $0x1a0] sm:$0xf] %v5907
      %5924 = vst [vmem:[#allocation5 + $0x1e0] sm:$0xf] %v5908
      %5925 = vst [vmem:[#allocation5 + $0x220] sm:$0xf] %v5909
      %5926 = vst [vmem:[#allocation5 + $0x260] sm:$0xf] %v5910
      %5927 = vst [vmem:[#allocation5 + $0x2a0] sm:$0xf] %v5911
      %5928 = vst [vmem:[#allocation5 + $0x2e0] sm:$0xf] %v5912
      %5929 = vst [vmem:[#allocation5 + $0x320] sm:$0xf] %v5913
      %5930 = vst [vmem:[#allocation5 + $0x360] sm:$0xf] %v5914
      %5931 = vst [vmem:[#allocation5 + $0x3a0] sm:$0xf] %v5915
      %5932 = vst [vmem:[#allocation5 + $0x3e0] sm:$0xf] %v5916
      %v5933 = vunpack.c.l.bf16 %v4403
      %v5934 = vperm.slane %v5933, 0
      %v5935 = vmul.f32 %v4386, %v5934
      %v5936 = vmul.f32 %v4387, %v5934
      %v5937 = vmul.f32 %v4388, %v5934
      %v5938 = vmul.f32 %v4389, %v5934
      %v5939 = vmul.f32 %v4390, %v5934
      %v5940 = vmul.f32 %v4391, %v5934
      %v5941 = vmul.f32 %v4392, %v5934
      %v5942 = vmul.f32 %v4393, %v5934
      %v5943 = vmul.f32 %v4394, %v5934
      %v5944 = vmul.f32 %v4395, %v5934
      %v5945 = vmul.f32 %v4396, %v5934
      %v5946 = vmul.f32 %v4397, %v5934
      %v5947 = vmul.f32 %v4398, %v5934
      %v5948 = vmul.f32 %v4399, %v5934
      %v5949 = vmul.f32 %v4400, %v5934
      %v5950 = vmul.f32 %v4401, %v5934
      %v5951 = vpack.c.bf16 %v5935, %v5935
      %v5952 = vpack.c.bf16 %v5936, %v5936
      %v5953 = vpack.c.bf16 %v5937, %v5937
      %v5954 = vpack.c.bf16 %v5938, %v5938
      %v5955 = vpack.c.bf16 %v5939, %v5939
      %v5956 = vpack.c.bf16 %v5940, %v5940
      %v5957 = vpack.c.bf16 %v5941, %v5941
      %v5958 = vpack.c.bf16 %v5942, %v5942
      %v5959 = vpack.c.bf16 %v5943, %v5943
      %v5960 = vpack.c.bf16 %v5944, %v5944
      %v5961 = vpack.c.bf16 %v5945, %v5945
      %v5962 = vpack.c.bf16 %v5946, %v5946
      %v5963 = vpack.c.bf16 %v5947, %v5947
      %v5964 = vpack.c.bf16 %v5948, %v5948
      %v5965 = vpack.c.bf16 %v5949, %v5949
      %v5966 = vpack.c.bf16 %v5950, %v5950
      %5967 = vst [vmem:[#allocation6 + $0x200] sm:$0xf] %v5951
      %5968 = vst [vmem:[#allocation6 + $0x204] sm:$0xf] %v5952
      %5969 = vst [vmem:[#allocation6 + $0x208] sm:$0xf] %v5953
      %5970 = vst [vmem:[#allocation6 + $0x20c] sm:$0xf] %v5954
      %5971 = vst [vmem:[#allocation6 + $0x210] sm:$0xf] %v5955
      %5972 = vst [vmem:[#allocation6 + $0x214] sm:$0xf] %v5956
      %5973 = vst [vmem:[#allocation6 + $0x218] sm:$0xf] %v5957
      %5974 = vst [vmem:[#allocation6 + $0x21c] sm:$0xf] %v5958
      %5975 = vst [vmem:[#allocation6 + $0x220] sm:$0xf] %v5959
      %5976 = vst [vmem:[#allocation6 + $0x224] sm:$0xf] %v5960
      %5977 = vst [vmem:[#allocation6 + $0x228] sm:$0xf] %v5961
      %5978 = vst [vmem:[#allocation6 + $0x22c] sm:$0xf] %v5962
      %5979 = vst [vmem:[#allocation6 + $0x230] sm:$0xf] %v5963
      %5980 = vst [vmem:[#allocation6 + $0x234] sm:$0xf] %v5964
      %5981 = vst [vmem:[#allocation6 + $0x238] sm:$0xf] %v5965
      %5982 = vst [vmem:[#allocation6 + $0x23c] sm:$0xf] %v5966
      %v5983 = vsub.f32 %v1474, 3.0
      %v5984 = vsub.f32 %v1486, 3.0
      %v5985 = vsub.f32 %v1498, 3.0
      %v5986 = vsub.f32 %v1510, 3.0
      %v5987 = vsub.f32 %v1522, 3.0
      %v5988 = vsub.f32 %v1534, 3.0
      %v5989 = vsub.f32 %v1546, 3.0
      %v5990 = vsub.f32 %v1558, 3.0
      %v5991 = vsub.f32 %v1570, 3.0
      %v5992 = vsub.f32 %v1582, 3.0
      %v5993 = vsub.f32 %v1594, 3.0
      %v5994 = vsub.f32 %v1606, 3.0
      %v5995 = vsub.f32 %v1618, 3.0
      %v5996 = vsub.f32 %v1630, 3.0
      %v5997 = vsub.f32 %v1642, 3.0
      %v5998 = vsub.f32 %v1654, 3.0
      %v5999 = vmul.f32 %v5983, -4.5
      %v6000 = vmul.f32 %v5984, -4.5
      %v6001 = vmul.f32 %v5985, -4.5
      %v6002 = vmul.f32 %v5986, -4.5
      %v6003 = vmul.f32 %v5987, -4.5
      %v6004 = vmul.f32 %v5988, -4.5
      %v6005 = vmul.f32 %v5989, -4.5
      %v6006 = vmul.f32 %v5990, -4.5
      %v6007 = vmul.f32 %v5991, -4.5
      %v6008 = vmul.f32 %v5992, -4.5
      %v6009 = vmul.f32 %v5993, -4.5
      %v6010 = vmul.f32 %v5994, -4.5
      %v6011 = vmul.f32 %v5995, -4.5
      %v6012 = vmul.f32 %v5996, -4.5
      %v6013 = vmul.f32 %v5997, -4.5
      %v6014 = vmul.f32 %v5998, -4.5
      %v6015 = vmul.f32 %v5999, %v5983
      %v6016 = vmul.f32 %v6000, %v5984
      %v6017 = vmul.f32 %v6001, %v5985
      %v6018 = vmul.f32 %v6002, %v5986
      %v6019 = vmul.f32 %v6003, %v5987
      %v6020 = vmul.f32 %v6004, %v5988
      %v6021 = vmul.f32 %v6005, %v5989
      %v6022 = vmul.f32 %v6006, %v5990
      %v6023 = vmul.f32 %v6007, %v5991
      %v6024 = vmul.f32 %v6008, %v5992
      %v6025 = vmul.f32 %v6009, %v5993
      %v6026 = vmul.f32 %v6010, %v5994
      %v6027 = vmul.f32 %v6011, %v5995
      %v6028 = vmul.f32 %v6012, %v5996
      %v6029 = vmul.f32 %v6013, %v5997
      %v6030 = vmul.f32 %v6014, %v5998
      %v6031 = vmul.f32 %v6015, 1.442695
      %v6032 = vpow.pop %v6031
      %v6033 = vmul.f32 %v6016, 1.442695
      %v6034 = vpow.pop %v6033
      %v6035 = vmul.f32 %v6017, 1.442695
      %v6036 = vpow.pop %v6035
      %v6037 = vmul.f32 %v6018, 1.442695
      %v6038 = vpow.pop %v6037
      %v6039 = vmul.f32 %v6019, 1.442695
      %v6040 = vpow.pop %v6039
      %v6041 = vmul.f32 %v6020, 1.442695
      %v6042 = vpow.pop %v6041
      %v6043 = vmul.f32 %v6021, 1.442695
      %v6044 = vpow.pop %v6043
      %v6045 = vmul.f32 %v6022, 1.442695
      %v6046 = vpow.pop %v6045
      %v6047 = vmul.f32 %v6023, 1.442695
      %v6048 = vpow.pop %v6047
      %v6049 = vmul.f32 %v6024, 1.442695
      %v6050 = vpow.pop %v6049
      %v6051 = vmul.f32 %v6025, 1.442695
      %v6052 = vpow.pop %v6051
      %v6053 = vmul.f32 %v6026, 1.442695
      %v6054 = vpow.pop %v6053
      %v6055 = vmul.f32 %v6027, 1.442695
      %v6056 = vpow.pop %v6055
      %v6057 = vmul.f32 %v6028, 1.442695
      %v6058 = vpow.pop %v6057
      %v6059 = vmul.f32 %v6029, 1.442695
      %v6060 = vpow.pop %v6059
      %v6061 = vmul.f32 %v6030, 1.442695
      %v6062 = vpow.pop %v6061
      %v6063 = vmul.f32 %v4369, %v6032
      %v6064 = vmul.f32 %v4370, %v6034
      %v6065 = vmul.f32 %v4371, %v6036
      %v6066 = vmul.f32 %v4372, %v6038
      %v6067 = vmul.f32 %v4373, %v6040
      %v6068 = vmul.f32 %v4374, %v6042
      %v6069 = vmul.f32 %v4375, %v6044
      %v6070 = vmul.f32 %v4376, %v6046
      %v6071 = vmul.f32 %v4377, %v6048
      %v6072 = vmul.f32 %v4378, %v6050
      %v6073 = vmul.f32 %v4379, %v6052
      %v6074 = vmul.f32 %v4380, %v6054
      %v6075 = vmul.f32 %v4381, %v6056
      %v6076 = vmul.f32 %v4382, %v6058
      %v6077 = vmul.f32 %v4383, %v6060
      %v6078 = vmul.f32 %v4384, %v6062
      %v6079 = vpack.c.bf16 %v6063, %v6063
      %v6080 = vpack.c.bf16 %v6064, %v6064
      %v6081 = vpack.c.bf16 %v6065, %v6065
      %v6082 = vpack.c.bf16 %v6066, %v6066
      %v6083 = vpack.c.bf16 %v6067, %v6067
      %v6084 = vpack.c.bf16 %v6068, %v6068
      %v6085 = vpack.c.bf16 %v6069, %v6069
      %v6086 = vpack.c.bf16 %v6070, %v6070
      %v6087 = vpack.c.bf16 %v6071, %v6071
      %v6088 = vpack.c.bf16 %v6072, %v6072
      %v6089 = vpack.c.bf16 %v6073, %v6073
      %v6090 = vpack.c.bf16 %v6074, %v6074
      %v6091 = vpack.c.bf16 %v6075, %v6075
      %v6092 = vpack.c.bf16 %v6076, %v6076
      %v6093 = vpack.c.bf16 %v6077, %v6077
      %v6094 = vpack.c.bf16 %v6078, %v6078
      %6095 = vst [vmem:[#allocation5 + $0x24] sm:$0xf] %v6079
      %6096 = vst [vmem:[#allocation5 + $0x64] sm:$0xf] %v6080
      %6097 = vst [vmem:[#allocation5 + $0xa4] sm:$0xf] %v6081
      %6098 = vst [vmem:[#allocation5 + $0xe4] sm:$0xf] %v6082
      %6099 = vst [vmem:[#allocation5 + $0x124] sm:$0xf] %v6083
      %6100 = vst [vmem:[#allocation5 + $0x164] sm:$0xf] %v6084
      %6101 = vst [vmem:[#allocation5 + $0x1a4] sm:$0xf] %v6085
      %6102 = vst [vmem:[#allocation5 + $0x1e4] sm:$0xf] %v6086
      %6103 = vst [vmem:[#allocation5 + $0x224] sm:$0xf] %v6087
      %6104 = vst [vmem:[#allocation5 + $0x264] sm:$0xf] %v6088
      %6105 = vst [vmem:[#allocation5 + $0x2a4] sm:$0xf] %v6089
      %6106 = vst [vmem:[#allocation5 + $0x2e4] sm:$0xf] %v6090
      %6107 = vst [vmem:[#allocation5 + $0x324] sm:$0xf] %v6091
      %6108 = vst [vmem:[#allocation5 + $0x364] sm:$0xf] %v6092
      %6109 = vst [vmem:[#allocation5 + $0x3a4] sm:$0xf] %v6093
      %6110 = vst [vmem:[#allocation5 + $0x3e4] sm:$0xf] %v6094
      %v6111 = vperm.slane %v5933, 1
      %v6112 = vmul.f32 %v4386, %v6111
      %v6113 = vmul.f32 %v4387, %v6111
      %v6114 = vmul.f32 %v4388, %v6111
      %v6115 = vmul.f32 %v4389, %v6111
      %v6116 = vmul.f32 %v4390, %v6111
      %v6117 = vmul.f32 %v4391, %v6111
      %v6118 = vmul.f32 %v4392, %v6111
      %v6119 = vmul.f32 %v4393, %v6111
      %v6120 = vmul.f32 %v4394, %v6111
      %v6121 = vmul.f32 %v4395, %v6111
      %v6122 = vmul.f32 %v4396, %v6111
      %v6123 = vmul.f32 %v4397, %v6111
      %v6124 = vmul.f32 %v4398, %v6111
      %v6125 = vmul.f32 %v4399, %v6111
      %v6126 = vmul.f32 %v4400, %v6111
      %v6127 = vmul.f32 %v4401, %v6111
      %v6128 = vpack.c.bf16 %v6112, %v6112
      %v6129 = vpack.c.bf16 %v6113, %v6113
      %v6130 = vpack.c.bf16 %v6114, %v6114
      %v6131 = vpack.c.bf16 %v6115, %v6115
      %v6132 = vpack.c.bf16 %v6116, %v6116
      %v6133 = vpack.c.bf16 %v6117, %v6117
      %v6134 = vpack.c.bf16 %v6118, %v6118
      %v6135 = vpack.c.bf16 %v6119, %v6119
      %v6136 = vpack.c.bf16 %v6120, %v6120
      %v6137 = vpack.c.bf16 %v6121, %v6121
      %v6138 = vpack.c.bf16 %v6122, %v6122
      %v6139 = vpack.c.bf16 %v6123, %v6123
      %v6140 = vpack.c.bf16 %v6124, %v6124
      %v6141 = vpack.c.bf16 %v6125, %v6125
      %v6142 = vpack.c.bf16 %v6126, %v6126
      %v6143 = vpack.c.bf16 %v6127, %v6127
      %6144 = vst [vmem:[#allocation6 + $0x240] sm:$0xf] %v6128
      %6145 = vst [vmem:[#allocation6 + $0x244] sm:$0xf] %v6129
      %6146 = vst [vmem:[#allocation6 + $0x248] sm:$0xf] %v6130
      %6147 = vst [vmem:[#allocation6 + $0x24c] sm:$0xf] %v6131
      %6148 = vst [vmem:[#allocation6 + $0x250] sm:$0xf] %v6132
      %6149 = vst [vmem:[#allocation6 + $0x254] sm:$0xf] %v6133
      %6150 = vst [vmem:[#allocation6 + $0x258] sm:$0xf] %v6134
      %6151 = vst [vmem:[#allocation6 + $0x25c] sm:$0xf] %v6135
      %6152 = vst [vmem:[#allocation6 + $0x260] sm:$0xf] %v6136
      %6153 = vst [vmem:[#allocation6 + $0x264] sm:$0xf] %v6137
      %6154 = vst [vmem:[#allocation6 + $0x268] sm:$0xf] %v6138
      %6155 = vst [vmem:[#allocation6 + $0x26c] sm:$0xf] %v6139
      %6156 = vst [vmem:[#allocation6 + $0x270] sm:$0xf] %v6140
      %6157 = vst [vmem:[#allocation6 + $0x274] sm:$0xf] %v6141
      %6158 = vst [vmem:[#allocation6 + $0x278] sm:$0xf] %v6142
      %6159 = vst [vmem:[#allocation6 + $0x27c] sm:$0xf] %v6143
      %v6160 = vsub.f32 %v1474, 3.3333333
      %v6161 = vsub.f32 %v1486, 3.3333333
      %v6162 = vsub.f32 %v1498, 3.3333333
      %v6163 = vsub.f32 %v1510, 3.3333333
      %v6164 = vsub.f32 %v1522, 3.3333333
      %v6165 = vsub.f32 %v1534, 3.3333333
      %v6166 = vsub.f32 %v1546, 3.3333333
      %v6167 = vsub.f32 %v1558, 3.3333333
      %v6168 = vsub.f32 %v1570, 3.3333333
      %v6169 = vsub.f32 %v1582, 3.3333333
      %v6170 = vsub.f32 %v1594, 3.3333333
      %v6171 = vsub.f32 %v1606, 3.3333333
      %v6172 = vsub.f32 %v1618, 3.3333333
      %v6173 = vsub.f32 %v1630, 3.3333333
      %v6174 = vsub.f32 %v1642, 3.3333333
      %v6175 = vsub.f32 %v1654, 3.3333333
      %v6176 = vmul.f32 %v6160, -4.5
      %v6177 = vmul.f32 %v6161, -4.5
      %v6178 = vmul.f32 %v6162, -4.5
      %v6179 = vmul.f32 %v6163, -4.5
      %v6180 = vmul.f32 %v6164, -4.5
      %v6181 = vmul.f32 %v6165, -4.5
      %v6182 = vmul.f32 %v6166, -4.5
      %v6183 = vmul.f32 %v6167, -4.5
      %v6184 = vmul.f32 %v6168, -4.5
      %v6185 = vmul.f32 %v6169, -4.5
      %v6186 = vmul.f32 %v6170, -4.5
      %v6187 = vmul.f32 %v6171, -4.5
      %v6188 = vmul.f32 %v6172, -4.5
      %v6189 = vmul.f32 %v6173, -4.5
      %v6190 = vmul.f32 %v6174, -4.5
      %v6191 = vmul.f32 %v6175, -4.5
      %v6192 = vmul.f32 %v6176, %v6160
      %v6193 = vmul.f32 %v6177, %v6161
      %v6194 = vmul.f32 %v6178, %v6162
      %v6195 = vmul.f32 %v6179, %v6163
      %v6196 = vmul.f32 %v6180, %v6164
      %v6197 = vmul.f32 %v6181, %v6165
      %v6198 = vmul.f32 %v6182, %v6166
      %v6199 = vmul.f32 %v6183, %v6167
      %v6200 = vmul.f32 %v6184, %v6168
      %v6201 = vmul.f32 %v6185, %v6169
      %v6202 = vmul.f32 %v6186, %v6170
      %v6203 = vmul.f32 %v6187, %v6171
      %v6204 = vmul.f32 %v6188, %v6172
      %v6205 = vmul.f32 %v6189, %v6173
      %v6206 = vmul.f32 %v6190, %v6174
      %v6207 = vmul.f32 %v6191, %v6175
      %v6208 = vmul.f32 %v6192, 1.442695
      %v6209 = vpow.pop %v6208
      %v6210 = vmul.f32 %v6193, 1.442695
      %v6211 = vpow.pop %v6210
      %v6212 = vmul.f32 %v6194, 1.442695
      %v6213 = vpow.pop %v6212
      %v6214 = vmul.f32 %v6195, 1.442695
      %v6215 = vpow.pop %v6214
      %v6216 = vmul.f32 %v6196, 1.442695
      %v6217 = vpow.pop %v6216
      %v6218 = vmul.f32 %v6197, 1.442695
      %v6219 = vpow.pop %v6218
      %v6220 = vmul.f32 %v6198, 1.442695
      %v6221 = vpow.pop %v6220
      %v6222 = vmul.f32 %v6199, 1.442695
      %v6223 = vpow.pop %v6222
      %v6224 = vmul.f32 %v6200, 1.442695
      %v6225 = vpow.pop %v6224
      %v6226 = vmul.f32 %v6201, 1.442695
      %v6227 = vpow.pop %v6226
      %v6228 = vmul.f32 %v6202, 1.442695
      %v6229 = vpow.pop %v6228
      %v6230 = vmul.f32 %v6203, 1.442695
      %v6231 = vpow.pop %v6230
      %v6232 = vmul.f32 %v6204, 1.442695
      %v6233 = vpow.pop %v6232
      %v6234 = vmul.f32 %v6205, 1.442695
      %v6235 = vpow.pop %v6234
      %v6236 = vmul.f32 %v6206, 1.442695
      %v6237 = vpow.pop %v6236
      %v6238 = vmul.f32 %v6207, 1.442695
      %v6239 = vpow.pop %v6238
      %v6240 = vmul.f32 %v4369, %v6209
      %v6241 = vmul.f32 %v4370, %v6211
      %v6242 = vmul.f32 %v4371, %v6213
      %v6243 = vmul.f32 %v4372, %v6215
      %v6244 = vmul.f32 %v4373, %v6217
      %v6245 = vmul.f32 %v4374, %v6219
      %v6246 = vmul.f32 %v4375, %v6221
      %v6247 = vmul.f32 %v4376, %v6223
      %v6248 = vmul.f32 %v4377, %v6225
      %v6249 = vmul.f32 %v4378, %v6227
      %v6250 = vmul.f32 %v4379, %v6229
      %v6251 = vmul.f32 %v4380, %v6231
      %v6252 = vmul.f32 %v4381, %v6233
      %v6253 = vmul.f32 %v4382, %v6235
      %v6254 = vmul.f32 %v4383, %v6237
      %v6255 = vmul.f32 %v4384, %v6239
      %v6256 = vpack.c.bf16 %v6240, %v6240
      %v6257 = vpack.c.bf16 %v6241, %v6241
      %v6258 = vpack.c.bf16 %v6242, %v6242
      %v6259 = vpack.c.bf16 %v6243, %v6243
      %v6260 = vpack.c.bf16 %v6244, %v6244
      %v6261 = vpack.c.bf16 %v6245, %v6245
      %v6262 = vpack.c.bf16 %v6246, %v6246
      %v6263 = vpack.c.bf16 %v6247, %v6247
      %v6264 = vpack.c.bf16 %v6248, %v6248
      %v6265 = vpack.c.bf16 %v6249, %v6249
      %v6266 = vpack.c.bf16 %v6250, %v6250
      %v6267 = vpack.c.bf16 %v6251, %v6251
      %v6268 = vpack.c.bf16 %v6252, %v6252
      %v6269 = vpack.c.bf16 %v6253, %v6253
      %v6270 = vpack.c.bf16 %v6254, %v6254
      %v6271 = vpack.c.bf16 %v6255, %v6255
      %6272 = vst [vmem:[#allocation5 + $0x28] sm:$0xf] %v6256
      %6273 = vst [vmem:[#allocation5 + $0x68] sm:$0xf] %v6257
      %6274 = vst [vmem:[#allocation5 + $0xa8] sm:$0xf] %v6258
      %6275 = vst [vmem:[#allocation5 + $0xe8] sm:$0xf] %v6259
      %6276 = vst [vmem:[#allocation5 + $0x128] sm:$0xf] %v6260
      %6277 = vst [vmem:[#allocation5 + $0x168] sm:$0xf] %v6261
      %6278 = vst [vmem:[#allocation5 + $0x1a8] sm:$0xf] %v6262
      %6279 = vst [vmem:[#allocation5 + $0x1e8] sm:$0xf] %v6263
      %6280 = vst [vmem:[#allocation5 + $0x228] sm:$0xf] %v6264
      %6281 = vst [vmem:[#allocation5 + $0x268] sm:$0xf] %v6265
      %6282 = vst [vmem:[#allocation5 + $0x2a8] sm:$0xf] %v6266
      %6283 = vst [vmem:[#allocation5 + $0x2e8] sm:$0xf] %v6267
      %6284 = vst [vmem:[#allocation5 + $0x328] sm:$0xf] %v6268
      %6285 = vst [vmem:[#allocation5 + $0x368] sm:$0xf] %v6269
      %6286 = vst [vmem:[#allocation5 + $0x3a8] sm:$0xf] %v6270
      %6287 = vst [vmem:[#allocation5 + $0x3e8] sm:$0xf] %v6271
      %v6288 = vperm.slane %v5933, 2
      %v6289 = vmul.f32 %v4386, %v6288
      %v6290 = vmul.f32 %v4387, %v6288
      %v6291 = vmul.f32 %v4388, %v6288
      %v6292 = vmul.f32 %v4389, %v6288
      %v6293 = vmul.f32 %v4390, %v6288
      %v6294 = vmul.f32 %v4391, %v6288
      %v6295 = vmul.f32 %v4392, %v6288
      %v6296 = vmul.f32 %v4393, %v6288
      %v6297 = vmul.f32 %v4394, %v6288
      %v6298 = vmul.f32 %v4395, %v6288
      %v6299 = vmul.f32 %v4396, %v6288
      %v6300 = vmul.f32 %v4397, %v6288
      %v6301 = vmul.f32 %v4398, %v6288
      %v6302 = vmul.f32 %v4399, %v6288
      %v6303 = vmul.f32 %v4400, %v6288
      %v6304 = vmul.f32 %v4401, %v6288
      %v6305 = vpack.c.bf16 %v6289, %v6289
      %v6306 = vpack.c.bf16 %v6290, %v6290
      %v6307 = vpack.c.bf16 %v6291, %v6291
      %v6308 = vpack.c.bf16 %v6292, %v6292
      %v6309 = vpack.c.bf16 %v6293, %v6293
      %v6310 = vpack.c.bf16 %v6294, %v6294
      %v6311 = vpack.c.bf16 %v6295, %v6295
      %v6312 = vpack.c.bf16 %v6296, %v6296
      %v6313 = vpack.c.bf16 %v6297, %v6297
      %v6314 = vpack.c.bf16 %v6298, %v6298
      %v6315 = vpack.c.bf16 %v6299, %v6299
      %v6316 = vpack.c.bf16 %v6300, %v6300
      %v6317 = vpack.c.bf16 %v6301, %v6301
      %v6318 = vpack.c.bf16 %v6302, %v6302
      %v6319 = vpack.c.bf16 %v6303, %v6303
      %v6320 = vpack.c.bf16 %v6304, %v6304
      %6321 = vst [vmem:[#allocation6 + $0x280] sm:$0xf] %v6305
      %6322 = vst [vmem:[#allocation6 + $0x284] sm:$0xf] %v6306
      %6323 = vst [vmem:[#allocation6 + $0x288] sm:$0xf] %v6307
      %6324 = vst [vmem:[#allocation6 + $0x28c] sm:$0xf] %v6308
      %6325 = vst [vmem:[#allocation6 + $0x290] sm:$0xf] %v6309
      %6326 = vst [vmem:[#allocation6 + $0x294] sm:$0xf] %v6310
      %6327 = vst [vmem:[#allocation6 + $0x298] sm:$0xf] %v6311
      %6328 = vst [vmem:[#allocation6 + $0x29c] sm:$0xf] %v6312
      %6329 = vst [vmem:[#allocation6 + $0x2a0] sm:$0xf] %v6313
      %6330 = vst [vmem:[#allocation6 + $0x2a4] sm:$0xf] %v6314
      %6331 = vst [vmem:[#allocation6 + $0x2a8] sm:$0xf] %v6315
      %6332 = vst [vmem:[#allocation6 + $0x2ac] sm:$0xf] %v6316
      %6333 = vst [vmem:[#allocation6 + $0x2b0] sm:$0xf] %v6317
      %6334 = vst [vmem:[#allocation6 + $0x2b4] sm:$0xf] %v6318
      %6335 = vst [vmem:[#allocation6 + $0x2b8] sm:$0xf] %v6319
      %6336 = vst [vmem:[#allocation6 + $0x2bc] sm:$0xf] %v6320
      %v6337 = vsub.f32 %v1474, 3.6666667
      %v6338 = vsub.f32 %v1486, 3.6666667
      %v6339 = vsub.f32 %v1498, 3.6666667
      %v6340 = vsub.f32 %v1510, 3.6666667
      %v6341 = vsub.f32 %v1522, 3.6666667
      %v6342 = vsub.f32 %v1534, 3.6666667
      %v6343 = vsub.f32 %v1546, 3.6666667
      %v6344 = vsub.f32 %v1558, 3.6666667
      %v6345 = vsub.f32 %v1570, 3.6666667
      %v6346 = vsub.f32 %v1582, 3.6666667
      %v6347 = vsub.f32 %v1594, 3.6666667
      %v6348 = vsub.f32 %v1606, 3.6666667
      %v6349 = vsub.f32 %v1618, 3.6666667
      %v6350 = vsub.f32 %v1630, 3.6666667
      %v6351 = vsub.f32 %v1642, 3.6666667
      %v6352 = vsub.f32 %v1654, 3.6666667
      %v6353 = vmul.f32 %v6337, -4.5
      %v6354 = vmul.f32 %v6338, -4.5
      %v6355 = vmul.f32 %v6339, -4.5
      %v6356 = vmul.f32 %v6340, -4.5
      %v6357 = vmul.f32 %v6341, -4.5
      %v6358 = vmul.f32 %v6342, -4.5
      %v6359 = vmul.f32 %v6343, -4.5
      %v6360 = vmul.f32 %v6344, -4.5
      %v6361 = vmul.f32 %v6345, -4.5
      %v6362 = vmul.f32 %v6346, -4.5
      %v6363 = vmul.f32 %v6347, -4.5
      %v6364 = vmul.f32 %v6348, -4.5
      %v6365 = vmul.f32 %v6349, -4.5
      %v6366 = vmul.f32 %v6350, -4.5
      %v6367 = vmul.f32 %v6351, -4.5
      %v6368 = vmul.f32 %v6352, -4.5
      %v6369 = vmul.f32 %v6353, %v6337
      %v6370 = vmul.f32 %v6354, %v6338
      %v6371 = vmul.f32 %v6355, %v6339
      %v6372 = vmul.f32 %v6356, %v6340
      %v6373 = vmul.f32 %v6357, %v6341
      %v6374 = vmul.f32 %v6358, %v6342
      %v6375 = vmul.f32 %v6359, %v6343
      %v6376 = vmul.f32 %v6360, %v6344
      %v6377 = vmul.f32 %v6361, %v6345
      %v6378 = vmul.f32 %v6362, %v6346
      %v6379 = vmul.f32 %v6363, %v6347
      %v6380 = vmul.f32 %v6364, %v6348
      %v6381 = vmul.f32 %v6365, %v6349
      %v6382 = vmul.f32 %v6366, %v6350
      %v6383 = vmul.f32 %v6367, %v6351
      %v6384 = vmul.f32 %v6368, %v6352
      %v6385 = vmul.f32 %v6369, 1.442695
      %v6386 = vpow.pop %v6385
      %v6387 = vmul.f32 %v6370, 1.442695
      %v6388 = vpow.pop %v6387
      %v6389 = vmul.f32 %v6371, 1.442695
      %v6390 = vpow.pop %v6389
      %v6391 = vmul.f32 %v6372, 1.442695
      %v6392 = vpow.pop %v6391
      %v6393 = vmul.f32 %v6373, 1.442695
      %v6394 = vpow.pop %v6393
      %v6395 = vmul.f32 %v6374, 1.442695
      %v6396 = vpow.pop %v6395
      %v6397 = vmul.f32 %v6375, 1.442695
      %v6398 = vpow.pop %v6397
      %v6399 = vmul.f32 %v6376, 1.442695
      %v6400 = vpow.pop %v6399
      %v6401 = vmul.f32 %v6377, 1.442695
      %v6402 = vpow.pop %v6401
      %v6403 = vmul.f32 %v6378, 1.442695
      %v6404 = vpow.pop %v6403
      %v6405 = vmul.f32 %v6379, 1.442695
      %v6406 = vpow.pop %v6405
      %v6407 = vmul.f32 %v6380, 1.442695
      %v6408 = vpow.pop %v6407
      %v6409 = vmul.f32 %v6381, 1.442695
      %v6410 = vpow.pop %v6409
      %v6411 = vmul.f32 %v6382, 1.442695
      %v6412 = vpow.pop %v6411
      %v6413 = vmul.f32 %v6383, 1.442695
      %v6414 = vpow.pop %v6413
      %v6415 = vmul.f32 %v6384, 1.442695
      %v6416 = vpow.pop %v6415
      %v6417 = vmul.f32 %v4369, %v6386
      %v6418 = vmul.f32 %v4370, %v6388
      %v6419 = vmul.f32 %v4371, %v6390
      %v6420 = vmul.f32 %v4372, %v6392
      %v6421 = vmul.f32 %v4373, %v6394
      %v6422 = vmul.f32 %v4374, %v6396
      %v6423 = vmul.f32 %v4375, %v6398
      %v6424 = vmul.f32 %v4376, %v6400
      %v6425 = vmul.f32 %v4377, %v6402
      %v6426 = vmul.f32 %v4378, %v6404
      %v6427 = vmul.f32 %v4379, %v6406
      %v6428 = vmul.f32 %v4380, %v6408
      %v6429 = vmul.f32 %v4381, %v6410
      %v6430 = vmul.f32 %v4382, %v6412
      %v6431 = vmul.f32 %v4383, %v6414
      %v6432 = vmul.f32 %v4384, %v6416
      %v6433 = vpack.c.bf16 %v6417, %v6417
      %v6434 = vpack.c.bf16 %v6418, %v6418
      %v6435 = vpack.c.bf16 %v6419, %v6419
      %v6436 = vpack.c.bf16 %v6420, %v6420
      %v6437 = vpack.c.bf16 %v6421, %v6421
      %v6438 = vpack.c.bf16 %v6422, %v6422
      %v6439 = vpack.c.bf16 %v6423, %v6423
      %v6440 = vpack.c.bf16 %v6424, %v6424
      %v6441 = vpack.c.bf16 %v6425, %v6425
      %v6442 = vpack.c.bf16 %v6426, %v6426
      %v6443 = vpack.c.bf16 %v6427, %v6427
      %v6444 = vpack.c.bf16 %v6428, %v6428
      %v6445 = vpack.c.bf16 %v6429, %v6429
      %v6446 = vpack.c.bf16 %v6430, %v6430
      %v6447 = vpack.c.bf16 %v6431, %v6431
      %v6448 = vpack.c.bf16 %v6432, %v6432
      %6449 = vst [vmem:[#allocation5 + $0x2c] sm:$0xf] %v6433
      %6450 = vst [vmem:[#allocation5 + $0x6c] sm:$0xf] %v6434
      %6451 = vst [vmem:[#allocation5 + $0xac] sm:$0xf] %v6435
      %6452 = vst [vmem:[#allocation5 + $0xec] sm:$0xf] %v6436
      %6453 = vst [vmem:[#allocation5 + $0x12c] sm:$0xf] %v6437
      %6454 = vst [vmem:[#allocation5 + $0x16c] sm:$0xf] %v6438
      %6455 = vst [vmem:[#allocation5 + $0x1ac] sm:$0xf] %v6439
      %6456 = vst [vmem:[#allocation5 + $0x1ec] sm:$0xf] %v6440
      %6457 = vst [vmem:[#allocation5 + $0x22c] sm:$0xf] %v6441
      %6458 = vst [vmem:[#allocation5 + $0x26c] sm:$0xf] %v6442
      %6459 = vst [vmem:[#allocation5 + $0x2ac] sm:$0xf] %v6443
      %6460 = vst [vmem:[#allocation5 + $0x2ec] sm:$0xf] %v6444
      %6461 = vst [vmem:[#allocation5 + $0x32c] sm:$0xf] %v6445
      %6462 = vst [vmem:[#allocation5 + $0x36c] sm:$0xf] %v6446
      %6463 = vst [vmem:[#allocation5 + $0x3ac] sm:$0xf] %v6447
      %6464 = vst [vmem:[#allocation5 + $0x3ec] sm:$0xf] %v6448
      %v6465 = vperm.slane %v5933, 3
      %v6466 = vmul.f32 %v4386, %v6465
      %v6467 = vmul.f32 %v4387, %v6465
      %v6468 = vmul.f32 %v4388, %v6465
      %v6469 = vmul.f32 %v4389, %v6465
      %v6470 = vmul.f32 %v4390, %v6465
      %v6471 = vmul.f32 %v4391, %v6465
      %v6472 = vmul.f32 %v4392, %v6465
      %v6473 = vmul.f32 %v4393, %v6465
      %v6474 = vmul.f32 %v4394, %v6465
      %v6475 = vmul.f32 %v4395, %v6465
      %v6476 = vmul.f32 %v4396, %v6465
      %v6477 = vmul.f32 %v4397, %v6465
      %v6478 = vmul.f32 %v4398, %v6465
      %v6479 = vmul.f32 %v4399, %v6465
      %v6480 = vmul.f32 %v4400, %v6465
      %v6481 = vmul.f32 %v4401, %v6465
      %v6482 = vpack.c.bf16 %v6466, %v6466
      %v6483 = vpack.c.bf16 %v6467, %v6467
      %v6484 = vpack.c.bf16 %v6468, %v6468
      %v6485 = vpack.c.bf16 %v6469, %v6469
      %v6486 = vpack.c.bf16 %v6470, %v6470
      %v6487 = vpack.c.bf16 %v6471, %v6471
      %v6488 = vpack.c.bf16 %v6472, %v6472
      %v6489 = vpack.c.bf16 %v6473, %v6473
      %v6490 = vpack.c.bf16 %v6474, %v6474
      %v6491 = vpack.c.bf16 %v6475, %v6475
      %v6492 = vpack.c.bf16 %v6476, %v6476
      %v6493 = vpack.c.bf16 %v6477, %v6477
      %v6494 = vpack.c.bf16 %v6478, %v6478
      %v6495 = vpack.c.bf16 %v6479, %v6479
      %v6496 = vpack.c.bf16 %v6480, %v6480
      %v6497 = vpack.c.bf16 %v6481, %v6481
      %6498 = vst [vmem:[#allocation6 + $0x2c0] sm:$0xf] %v6482
      %6499 = vst [vmem:[#allocation6 + $0x2c4] sm:$0xf] %v6483
      %6500 = vst [vmem:[#allocation6 + $0x2c8] sm:$0xf] %v6484
      %6501 = vst [vmem:[#allocation6 + $0x2cc] sm:$0xf] %v6485
      %6502 = vst [vmem:[#allocation6 + $0x2d0] sm:$0xf] %v6486
      %6503 = vst [vmem:[#allocation6 + $0x2d4] sm:$0xf] %v6487
      %6504 = vst [vmem:[#allocation6 + $0x2d8] sm:$0xf] %v6488
      %6505 = vst [vmem:[#allocation6 + $0x2dc] sm:$0xf] %v6489
      %6506 = vst [vmem:[#allocation6 + $0x2e0] sm:$0xf] %v6490
      %6507 = vst [vmem:[#allocation6 + $0x2e4] sm:$0xf] %v6491
      %6508 = vst [vmem:[#allocation6 + $0x2e8] sm:$0xf] %v6492
      %6509 = vst [vmem:[#allocation6 + $0x2ec] sm:$0xf] %v6493
      %6510 = vst [vmem:[#allocation6 + $0x2f0] sm:$0xf] %v6494
      %6511 = vst [vmem:[#allocation6 + $0x2f4] sm:$0xf] %v6495
      %6512 = vst [vmem:[#allocation6 + $0x2f8] sm:$0xf] %v6496
      %6513 = vst [vmem:[#allocation6 + $0x2fc] sm:$0xf] %v6497
      %v6514 = vsub.f32 %v1474, 4.0
      %v6515 = vsub.f32 %v1486, 4.0
      %v6516 = vsub.f32 %v1498, 4.0
      %v6517 = vsub.f32 %v1510, 4.0
      %v6518 = vsub.f32 %v1522, 4.0
      %v6519 = vsub.f32 %v1534, 4.0
      %v6520 = vsub.f32 %v1546, 4.0
      %v6521 = vsub.f32 %v1558, 4.0
      %v6522 = vsub.f32 %v1570, 4.0
      %v6523 = vsub.f32 %v1582, 4.0
      %v6524 = vsub.f32 %v1594, 4.0
      %v6525 = vsub.f32 %v1606, 4.0
      %v6526 = vsub.f32 %v1618, 4.0
      %v6527 = vsub.f32 %v1630, 4.0
      %v6528 = vsub.f32 %v1642, 4.0
      %v6529 = vsub.f32 %v1654, 4.0
      %v6530 = vmul.f32 %v6514, -4.5
      %v6531 = vmul.f32 %v6515, -4.5
      %v6532 = vmul.f32 %v6516, -4.5
      %v6533 = vmul.f32 %v6517, -4.5
      %v6534 = vmul.f32 %v6518, -4.5
      %v6535 = vmul.f32 %v6519, -4.5
      %v6536 = vmul.f32 %v6520, -4.5
      %v6537 = vmul.f32 %v6521, -4.5
      %v6538 = vmul.f32 %v6522, -4.5
      %v6539 = vmul.f32 %v6523, -4.5
      %v6540 = vmul.f32 %v6524, -4.5
      %v6541 = vmul.f32 %v6525, -4.5
      %v6542 = vmul.f32 %v6526, -4.5
      %v6543 = vmul.f32 %v6527, -4.5
      %v6544 = vmul.f32 %v6528, -4.5
      %v6545 = vmul.f32 %v6529, -4.5
      %v6546 = vmul.f32 %v6530, %v6514
      %v6547 = vmul.f32 %v6531, %v6515
      %v6548 = vmul.f32 %v6532, %v6516
      %v6549 = vmul.f32 %v6533, %v6517
      %v6550 = vmul.f32 %v6534, %v6518
      %v6551 = vmul.f32 %v6535, %v6519
      %v6552 = vmul.f32 %v6536, %v6520
      %v6553 = vmul.f32 %v6537, %v6521
      %v6554 = vmul.f32 %v6538, %v6522
      %v6555 = vmul.f32 %v6539, %v6523
      %v6556 = vmul.f32 %v6540, %v6524
      %v6557 = vmul.f32 %v6541, %v6525
      %v6558 = vmul.f32 %v6542, %v6526
      %v6559 = vmul.f32 %v6543, %v6527
      %v6560 = vmul.f32 %v6544, %v6528
      %v6561 = vmul.f32 %v6545, %v6529
      %v6562 = vmul.f32 %v6546, 1.442695
      %v6563 = vpow.pop %v6562
      %v6564 = vmul.f32 %v6547, 1.442695
      %v6565 = vpow.pop %v6564
      %v6566 = vmul.f32 %v6548, 1.442695
      %v6567 = vpow.pop %v6566
      %v6568 = vmul.f32 %v6549, 1.442695
      %v6569 = vpow.pop %v6568
      %v6570 = vmul.f32 %v6550, 1.442695
      %v6571 = vpow.pop %v6570
      %v6572 = vmul.f32 %v6551, 1.442695
      %v6573 = vpow.pop %v6572
      %v6574 = vmul.f32 %v6552, 1.442695
      %v6575 = vpow.pop %v6574
      %v6576 = vmul.f32 %v6553, 1.442695
      %v6577 = vpow.pop %v6576
      %v6578 = vmul.f32 %v6554, 1.442695
      %v6579 = vpow.pop %v6578
      %v6580 = vmul.f32 %v6555, 1.442695
      %v6581 = vpow.pop %v6580
      %v6582 = vmul.f32 %v6556, 1.442695
      %v6583 = vpow.pop %v6582
      %v6584 = vmul.f32 %v6557, 1.442695
      %v6585 = vpow.pop %v6584
      %v6586 = vmul.f32 %v6558, 1.442695
      %v6587 = vpow.pop %v6586
      %v6588 = vmul.f32 %v6559, 1.442695
      %v6589 = vpow.pop %v6588
      %v6590 = vmul.f32 %v6560, 1.442695
      %v6591 = vpow.pop %v6590
      %v6592 = vmul.f32 %v6561, 1.442695
      %v6593 = vpow.pop %v6592
      %v6594 = vmul.f32 %v4369, %v6563
      %v6595 = vmul.f32 %v4370, %v6565
      %v6596 = vmul.f32 %v4371, %v6567
      %v6597 = vmul.f32 %v4372, %v6569
      %v6598 = vmul.f32 %v4373, %v6571
      %v6599 = vmul.f32 %v4374, %v6573
      %v6600 = vmul.f32 %v4375, %v6575
      %v6601 = vmul.f32 %v4376, %v6577
      %v6602 = vmul.f32 %v4377, %v6579
      %v6603 = vmul.f32 %v4378, %v6581
      %v6604 = vmul.f32 %v4379, %v6583
      %v6605 = vmul.f32 %v4380, %v6585
      %v6606 = vmul.f32 %v4381, %v6587
      %v6607 = vmul.f32 %v4382, %v6589
      %v6608 = vmul.f32 %v4383, %v6591
      %v6609 = vmul.f32 %v4384, %v6593
      %v6610 = vpack.c.bf16 %v6594, %v6594
      %v6611 = vpack.c.bf16 %v6595, %v6595
      %v6612 = vpack.c.bf16 %v6596, %v6596
      %v6613 = vpack.c.bf16 %v6597, %v6597
      %v6614 = vpack.c.bf16 %v6598, %v6598
      %v6615 = vpack.c.bf16 %v6599, %v6599
      %v6616 = vpack.c.bf16 %v6600, %v6600
      %v6617 = vpack.c.bf16 %v6601, %v6601
      %v6618 = vpack.c.bf16 %v6602, %v6602
      %v6619 = vpack.c.bf16 %v6603, %v6603
      %v6620 = vpack.c.bf16 %v6604, %v6604
      %v6621 = vpack.c.bf16 %v6605, %v6605
      %v6622 = vpack.c.bf16 %v6606, %v6606
      %v6623 = vpack.c.bf16 %v6607, %v6607
      %v6624 = vpack.c.bf16 %v6608, %v6608
      %v6625 = vpack.c.bf16 %v6609, %v6609
      %6626 = vst [vmem:[#allocation5 + $0x30] sm:$0xf] %v6610
      %6627 = vst [vmem:[#allocation5 + $0x70] sm:$0xf] %v6611
      %6628 = vst [vmem:[#allocation5 + $0xb0] sm:$0xf] %v6612
      %6629 = vst [vmem:[#allocation5 + $0xf0] sm:$0xf] %v6613
      %6630 = vst [vmem:[#allocation5 + $0x130] sm:$0xf] %v6614
      %6631 = vst [vmem:[#allocation5 + $0x170] sm:$0xf] %v6615
      %6632 = vst [vmem:[#allocation5 + $0x1b0] sm:$0xf] %v6616
      %6633 = vst [vmem:[#allocation5 + $0x1f0] sm:$0xf] %v6617
      %6634 = vst [vmem:[#allocation5 + $0x230] sm:$0xf] %v6618
      %6635 = vst [vmem:[#allocation5 + $0x270] sm:$0xf] %v6619
      %6636 = vst [vmem:[#allocation5 + $0x2b0] sm:$0xf] %v6620
      %6637 = vst [vmem:[#allocation5 + $0x2f0] sm:$0xf] %v6621
      %6638 = vst [vmem:[#allocation5 + $0x330] sm:$0xf] %v6622
      %6639 = vst [vmem:[#allocation5 + $0x370] sm:$0xf] %v6623
      %6640 = vst [vmem:[#allocation5 + $0x3b0] sm:$0xf] %v6624
      %6641 = vst [vmem:[#allocation5 + $0x3f0] sm:$0xf] %v6625
      %v6642 = vperm.slane %v5933, 4
      %v6643 = vmul.f32 %v4386, %v6642
      %v6644 = vmul.f32 %v4387, %v6642
      %v6645 = vmul.f32 %v4388, %v6642
      %v6646 = vmul.f32 %v4389, %v6642
      %v6647 = vmul.f32 %v4390, %v6642
      %v6648 = vmul.f32 %v4391, %v6642
      %v6649 = vmul.f32 %v4392, %v6642
      %v6650 = vmul.f32 %v4393, %v6642
      %v6651 = vmul.f32 %v4394, %v6642
      %v6652 = vmul.f32 %v4395, %v6642
      %v6653 = vmul.f32 %v4396, %v6642
      %v6654 = vmul.f32 %v4397, %v6642
      %v6655 = vmul.f32 %v4398, %v6642
      %v6656 = vmul.f32 %v4399, %v6642
      %v6657 = vmul.f32 %v4400, %v6642
      %v6658 = vmul.f32 %v4401, %v6642
      %v6659 = vpack.c.bf16 %v6643, %v6643
      %v6660 = vpack.c.bf16 %v6644, %v6644
      %v6661 = vpack.c.bf16 %v6645, %v6645
      %v6662 = vpack.c.bf16 %v6646, %v6646
      %v6663 = vpack.c.bf16 %v6647, %v6647
      %v6664 = vpack.c.bf16 %v6648, %v6648
      %v6665 = vpack.c.bf16 %v6649, %v6649
      %v6666 = vpack.c.bf16 %v6650, %v6650
      %v6667 = vpack.c.bf16 %v6651, %v6651
      %v6668 = vpack.c.bf16 %v6652, %v6652
      %v6669 = vpack.c.bf16 %v6653, %v6653
      %v6670 = vpack.c.bf16 %v6654, %v6654
      %v6671 = vpack.c.bf16 %v6655, %v6655
      %v6672 = vpack.c.bf16 %v6656, %v6656
      %v6673 = vpack.c.bf16 %v6657, %v6657
      %v6674 = vpack.c.bf16 %v6658, %v6658
      %6675 = vst [vmem:[#allocation6 + $0x300] sm:$0xf] %v6659
      %6676 = vst [vmem:[#allocation6 + $0x304] sm:$0xf] %v6660
      %6677 = vst [vmem:[#allocation6 + $0x308] sm:$0xf] %v6661
      %6678 = vst [vmem:[#allocation6 + $0x30c] sm:$0xf] %v6662
      %6679 = vst [vmem:[#allocation6 + $0x310] sm:$0xf] %v6663
      %6680 = vst [vmem:[#allocation6 + $0x314] sm:$0xf] %v6664
      %6681 = vst [vmem:[#allocation6 + $0x318] sm:$0xf] %v6665
      %6682 = vst [vmem:[#allocation6 + $0x31c] sm:$0xf] %v6666
      %6683 = vst [vmem:[#allocation6 + $0x320] sm:$0xf] %v6667
      %6684 = vst [vmem:[#allocation6 + $0x324] sm:$0xf] %v6668
      %6685 = vst [vmem:[#allocation6 + $0x328] sm:$0xf] %v6669
      %6686 = vst [vmem:[#allocation6 + $0x32c] sm:$0xf] %v6670
      %6687 = vst [vmem:[#allocation6 + $0x330] sm:$0xf] %v6671
      %6688 = vst [vmem:[#allocation6 + $0x334] sm:$0xf] %v6672
      %6689 = vst [vmem:[#allocation6 + $0x338] sm:$0xf] %v6673
      %6690 = vst [vmem:[#allocation6 + $0x33c] sm:$0xf] %v6674
      %v6691 = vsub.f32 %v1474, 4.3333335
      %v6692 = vsub.f32 %v1486, 4.3333335
      %v6693 = vsub.f32 %v1498, 4.3333335
      %v6694 = vsub.f32 %v1510, 4.3333335
      %v6695 = vsub.f32 %v1522, 4.3333335
      %v6696 = vsub.f32 %v1534, 4.3333335
      %v6697 = vsub.f32 %v1546, 4.3333335
      %v6698 = vsub.f32 %v1558, 4.3333335
      %v6699 = vsub.f32 %v1570, 4.3333335
      %v6700 = vsub.f32 %v1582, 4.3333335
      %v6701 = vsub.f32 %v1594, 4.3333335
      %v6702 = vsub.f32 %v1606, 4.3333335
      %v6703 = vsub.f32 %v1618, 4.3333335
      %v6704 = vsub.f32 %v1630, 4.3333335
      %v6705 = vsub.f32 %v1642, 4.3333335
      %v6706 = vsub.f32 %v1654, 4.3333335
      %v6707 = vmul.f32 %v6691, -4.5
      %v6708 = vmul.f32 %v6692, -4.5
      %v6709 = vmul.f32 %v6693, -4.5
      %v6710 = vmul.f32 %v6694, -4.5
      %v6711 = vmul.f32 %v6695, -4.5
      %v6712 = vmul.f32 %v6696, -4.5
      %v6713 = vmul.f32 %v6697, -4.5
      %v6714 = vmul.f32 %v6698, -4.5
      %v6715 = vmul.f32 %v6699, -4.5
      %v6716 = vmul.f32 %v6700, -4.5
      %v6717 = vmul.f32 %v6701, -4.5
      %v6718 = vmul.f32 %v6702, -4.5
      %v6719 = vmul.f32 %v6703, -4.5
      %v6720 = vmul.f32 %v6704, -4.5
      %v6721 = vmul.f32 %v6705, -4.5
      %v6722 = vmul.f32 %v6706, -4.5
      %v6723 = vmul.f32 %v6707, %v6691
      %v6724 = vmul.f32 %v6708, %v6692
      %v6725 = vmul.f32 %v6709, %v6693
      %v6726 = vmul.f32 %v6710, %v6694
      %v6727 = vmul.f32 %v6711, %v6695
      %v6728 = vmul.f32 %v6712, %v6696
      %v6729 = vmul.f32 %v6713, %v6697
      %v6730 = vmul.f32 %v6714, %v6698
      %v6731 = vmul.f32 %v6715, %v6699
      %v6732 = vmul.f32 %v6716, %v6700
      %v6733 = vmul.f32 %v6717, %v6701
      %v6734 = vmul.f32 %v6718, %v6702
      %v6735 = vmul.f32 %v6719, %v6703
      %v6736 = vmul.f32 %v6720, %v6704
      %v6737 = vmul.f32 %v6721, %v6705
      %v6738 = vmul.f32 %v6722, %v6706
      %v6739 = vmul.f32 %v6723, 1.442695
      %v6740 = vpow.pop %v6739
      %v6741 = vmul.f32 %v6724, 1.442695
      %v6742 = vpow.pop %v6741
      %v6743 = vmul.f32 %v6725, 1.442695
      %v6744 = vpow.pop %v6743
      %v6745 = vmul.f32 %v6726, 1.442695
      %v6746 = vpow.pop %v6745
      %v6747 = vmul.f32 %v6727, 1.442695
      %v6748 = vpow.pop %v6747
      %v6749 = vmul.f32 %v6728, 1.442695
      %v6750 = vpow.pop %v6749
      %v6751 = vmul.f32 %v6729, 1.442695
      %v6752 = vpow.pop %v6751
      %v6753 = vmul.f32 %v6730, 1.442695
      %v6754 = vpow.pop %v6753
      %v6755 = vmul.f32 %v6731, 1.442695
      %v6756 = vpow.pop %v6755
      %v6757 = vmul.f32 %v6732, 1.442695
      %v6758 = vpow.pop %v6757
      %v6759 = vmul.f32 %v6733, 1.442695
      %v6760 = vpow.pop %v6759
      %v6761 = vmul.f32 %v6734, 1.442695
      %v6762 = vpow.pop %v6761
      %v6763 = vmul.f32 %v6735, 1.442695
      %v6764 = vpow.pop %v6763
      %v6765 = vmul.f32 %v6736, 1.442695
      %v6766 = vpow.pop %v6765
      %v6767 = vmul.f32 %v6737, 1.442695
      %v6768 = vpow.pop %v6767
      %v6769 = vmul.f32 %v6738, 1.442695
      %v6770 = vpow.pop %v6769
      %v6771 = vmul.f32 %v4369, %v6740
      %v6772 = vmul.f32 %v4370, %v6742
      %v6773 = vmul.f32 %v4371, %v6744
      %v6774 = vmul.f32 %v4372, %v6746
      %v6775 = vmul.f32 %v4373, %v6748
      %v6776 = vmul.f32 %v4374, %v6750
      %v6777 = vmul.f32 %v4375, %v6752
      %v6778 = vmul.f32 %v4376, %v6754
      %v6779 = vmul.f32 %v4377, %v6756
      %v6780 = vmul.f32 %v4378, %v6758
      %v6781 = vmul.f32 %v4379, %v6760
      %v6782 = vmul.f32 %v4380, %v6762
      %v6783 = vmul.f32 %v4381, %v6764
      %v6784 = vmul.f32 %v4382, %v6766
      %v6785 = vmul.f32 %v4383, %v6768
      %v6786 = vmul.f32 %v4384, %v6770
      %v6787 = vpack.c.bf16 %v6771, %v6771
      %v6788 = vpack.c.bf16 %v6772, %v6772
      %v6789 = vpack.c.bf16 %v6773, %v6773
      %v6790 = vpack.c.bf16 %v6774, %v6774
      %v6791 = vpack.c.bf16 %v6775, %v6775
      %v6792 = vpack.c.bf16 %v6776, %v6776
      %v6793 = vpack.c.bf16 %v6777, %v6777
      %v6794 = vpack.c.bf16 %v6778, %v6778
      %v6795 = vpack.c.bf16 %v6779, %v6779
      %v6796 = vpack.c.bf16 %v6780, %v6780
      %v6797 = vpack.c.bf16 %v6781, %v6781
      %v6798 = vpack.c.bf16 %v6782, %v6782
      %v6799 = vpack.c.bf16 %v6783, %v6783
      %v6800 = vpack.c.bf16 %v6784, %v6784
      %v6801 = vpack.c.bf16 %v6785, %v6785
      %v6802 = vpack.c.bf16 %v6786, %v6786
      %6803 = vst [vmem:[#allocation5 + $0x34] sm:$0xf] %v6787
      %6804 = vst [vmem:[#allocation5 + $0x74] sm:$0xf] %v6788
      %6805 = vst [vmem:[#allocation5 + $0xb4] sm:$0xf] %v6789
      %6806 = vst [vmem:[#allocation5 + $0xf4] sm:$0xf] %v6790
      %6807 = vst [vmem:[#allocation5 + $0x134] sm:$0xf] %v6791
      %6808 = vst [vmem:[#allocation5 + $0x174] sm:$0xf] %v6792
      %6809 = vst [vmem:[#allocation5 + $0x1b4] sm:$0xf] %v6793
      %6810 = vst [vmem:[#allocation5 + $0x1f4] sm:$0xf] %v6794
      %6811 = vst [vmem:[#allocation5 + $0x234] sm:$0xf] %v6795
      %6812 = vst [vmem:[#allocation5 + $0x274] sm:$0xf] %v6796
      %6813 = vst [vmem:[#allocation5 + $0x2b4] sm:$0xf] %v6797
      %6814 = vst [vmem:[#allocation5 + $0x2f4] sm:$0xf] %v6798
      %6815 = vst [vmem:[#allocation5 + $0x334] sm:$0xf] %v6799
      %6816 = vst [vmem:[#allocation5 + $0x374] sm:$0xf] %v6800
      %6817 = vst [vmem:[#allocation5 + $0x3b4] sm:$0xf] %v6801
      %6818 = vst [vmem:[#allocation5 + $0x3f4] sm:$0xf] %v6802
      %v6819 = vperm.slane %v5933, 5
      %v6820 = vmul.f32 %v4386, %v6819
      %v6821 = vmul.f32 %v4387, %v6819
      %v6822 = vmul.f32 %v4388, %v6819
      %v6823 = vmul.f32 %v4389, %v6819
      %v6824 = vmul.f32 %v4390, %v6819
      %v6825 = vmul.f32 %v4391, %v6819
      %v6826 = vmul.f32 %v4392, %v6819
      %v6827 = vmul.f32 %v4393, %v6819
      %v6828 = vmul.f32 %v4394, %v6819
      %v6829 = vmul.f32 %v4395, %v6819
      %v6830 = vmul.f32 %v4396, %v6819
      %v6831 = vmul.f32 %v4397, %v6819
      %v6832 = vmul.f32 %v4398, %v6819
      %v6833 = vmul.f32 %v4399, %v6819
      %v6834 = vmul.f32 %v4400, %v6819
      %v6835 = vmul.f32 %v4401, %v6819
      %v6836 = vpack.c.bf16 %v6820, %v6820
      %v6837 = vpack.c.bf16 %v6821, %v6821
      %v6838 = vpack.c.bf16 %v6822, %v6822
      %v6839 = vpack.c.bf16 %v6823, %v6823
      %v6840 = vpack.c.bf16 %v6824, %v6824
      %v6841 = vpack.c.bf16 %v6825, %v6825
      %v6842 = vpack.c.bf16 %v6826, %v6826
      %v6843 = vpack.c.bf16 %v6827, %v6827
      %v6844 = vpack.c.bf16 %v6828, %v6828
      %v6845 = vpack.c.bf16 %v6829, %v6829
      %v6846 = vpack.c.bf16 %v6830, %v6830
      %v6847 = vpack.c.bf16 %v6831, %v6831
      %v6848 = vpack.c.bf16 %v6832, %v6832
      %v6849 = vpack.c.bf16 %v6833, %v6833
      %v6850 = vpack.c.bf16 %v6834, %v6834
      %v6851 = vpack.c.bf16 %v6835, %v6835
      %6852 = vst [vmem:[#allocation6 + $0x340] sm:$0xf] %v6836
      %6853 = vst [vmem:[#allocation6 + $0x344] sm:$0xf] %v6837
      %6854 = vst [vmem:[#allocation6 + $0x348] sm:$0xf] %v6838
      %6855 = vst [vmem:[#allocation6 + $0x34c] sm:$0xf] %v6839
      %6856 = vst [vmem:[#allocation6 + $0x350] sm:$0xf] %v6840
      %6857 = vst [vmem:[#allocation6 + $0x354] sm:$0xf] %v6841
      %6858 = vst [vmem:[#allocation6 + $0x358] sm:$0xf] %v6842
      %6859 = vst [vmem:[#allocation6 + $0x35c] sm:$0xf] %v6843
      %6860 = vst [vmem:[#allocation6 + $0x360] sm:$0xf] %v6844
      %6861 = vst [vmem:[#allocation6 + $0x364] sm:$0xf] %v6845
      %6862 = vst [vmem:[#allocation6 + $0x368] sm:$0xf] %v6846
      %6863 = vst [vmem:[#allocation6 + $0x36c] sm:$0xf] %v6847
      %6864 = vst [vmem:[#allocation6 + $0x370] sm:$0xf] %v6848
      %6865 = vst [vmem:[#allocation6 + $0x374] sm:$0xf] %v6849
      %6866 = vst [vmem:[#allocation6 + $0x378] sm:$0xf] %v6850
      %6867 = vst [vmem:[#allocation6 + $0x37c] sm:$0xf] %v6851
      %v6868 = vsub.f32 %v1474, 4.6666665
      %v6869 = vsub.f32 %v1486, 4.6666665
      %v6870 = vsub.f32 %v1498, 4.6666665
      %v6871 = vsub.f32 %v1510, 4.6666665
      %v6872 = vsub.f32 %v1522, 4.6666665
      %v6873 = vsub.f32 %v1534, 4.6666665
      %v6874 = vsub.f32 %v1546, 4.6666665
      %v6875 = vsub.f32 %v1558, 4.6666665
      %v6876 = vsub.f32 %v1570, 4.6666665
      %v6877 = vsub.f32 %v1582, 4.6666665
      %v6878 = vsub.f32 %v1594, 4.6666665
      %v6879 = vsub.f32 %v1606, 4.6666665
      %v6880 = vsub.f32 %v1618, 4.6666665
      %v6881 = vsub.f32 %v1630, 4.6666665
      %v6882 = vsub.f32 %v1642, 4.6666665
      %v6883 = vsub.f32 %v1654, 4.6666665
      %v6884 = vmul.f32 %v6868, -4.5
      %v6885 = vmul.f32 %v6869, -4.5
      %v6886 = vmul.f32 %v6870, -4.5
      %v6887 = vmul.f32 %v6871, -4.5
      %v6888 = vmul.f32 %v6872, -4.5
      %v6889 = vmul.f32 %v6873, -4.5
      %v6890 = vmul.f32 %v6874, -4.5
      %v6891 = vmul.f32 %v6875, -4.5
      %v6892 = vmul.f32 %v6876, -4.5
      %v6893 = vmul.f32 %v6877, -4.5
      %v6894 = vmul.f32 %v6878, -4.5
      %v6895 = vmul.f32 %v6879, -4.5
      %v6896 = vmul.f32 %v6880, -4.5
      %v6897 = vmul.f32 %v6881, -4.5
      %v6898 = vmul.f32 %v6882, -4.5
      %v6899 = vmul.f32 %v6883, -4.5
      %v6900 = vmul.f32 %v6884, %v6868
      %v6901 = vmul.f32 %v6885, %v6869
      %v6902 = vmul.f32 %v6886, %v6870
      %v6903 = vmul.f32 %v6887, %v6871
      %v6904 = vmul.f32 %v6888, %v6872
      %v6905 = vmul.f32 %v6889, %v6873
      %v6906 = vmul.f32 %v6890, %v6874
      %v6907 = vmul.f32 %v6891, %v6875
      %v6908 = vmul.f32 %v6892, %v6876
      %v6909 = vmul.f32 %v6893, %v6877
      %v6910 = vmul.f32 %v6894, %v6878
      %v6911 = vmul.f32 %v6895, %v6879
      %v6912 = vmul.f32 %v6896, %v6880
      %v6913 = vmul.f32 %v6897, %v6881
      %v6914 = vmul.f32 %v6898, %v6882
      %v6915 = vmul.f32 %v6899, %v6883
      %v6916 = vmul.f32 %v6900, 1.442695
      %v6917 = vpow.pop %v6916
      %v6918 = vmul.f32 %v6901, 1.442695
      %v6919 = vpow.pop %v6918
      %v6920 = vmul.f32 %v6902, 1.442695
      %v6921 = vpow.pop %v6920
      %v6922 = vmul.f32 %v6903, 1.442695
      %v6923 = vpow.pop %v6922
      %v6924 = vmul.f32 %v6904, 1.442695
      %v6925 = vpow.pop %v6924
      %v6926 = vmul.f32 %v6905, 1.442695
      %v6927 = vpow.pop %v6926
      %v6928 = vmul.f32 %v6906, 1.442695
      %v6929 = vpow.pop %v6928
      %v6930 = vmul.f32 %v6907, 1.442695
      %v6931 = vpow.pop %v6930
      %v6932 = vmul.f32 %v6908, 1.442695
      %v6933 = vpow.pop %v6932
      %v6934 = vmul.f32 %v6909, 1.442695
      %v6935 = vpow.pop %v6934
      %v6936 = vmul.f32 %v6910, 1.442695
      %v6937 = vpow.pop %v6936
      %v6938 = vmul.f32 %v6911, 1.442695
      %v6939 = vpow.pop %v6938
      %v6940 = vmul.f32 %v6912, 1.442695
      %v6941 = vpow.pop %v6940
      %v6942 = vmul.f32 %v6913, 1.442695
      %v6943 = vpow.pop %v6942
      %v6944 = vmul.f32 %v6914, 1.442695
      %v6945 = vpow.pop %v6944
      %v6946 = vmul.f32 %v6915, 1.442695
      %v6947 = vpow.pop %v6946
      %v6948 = vmul.f32 %v4369, %v6917
      %v6949 = vmul.f32 %v4370, %v6919
      %v6950 = vmul.f32 %v4371, %v6921
      %v6951 = vmul.f32 %v4372, %v6923
      %v6952 = vmul.f32 %v4373, %v6925
      %v6953 = vmul.f32 %v4374, %v6927
      %v6954 = vmul.f32 %v4375, %v6929
      %v6955 = vmul.f32 %v4376, %v6931
      %v6956 = vmul.f32 %v4377, %v6933
      %v6957 = vmul.f32 %v4378, %v6935
      %v6958 = vmul.f32 %v4379, %v6937
      %v6959 = vmul.f32 %v4380, %v6939
      %v6960 = vmul.f32 %v4381, %v6941
      %v6961 = vmul.f32 %v4382, %v6943
      %v6962 = vmul.f32 %v4383, %v6945
      %v6963 = vmul.f32 %v4384, %v6947
      %v6964 = vpack.c.bf16 %v6948, %v6948
      %v6965 = vpack.c.bf16 %v6949, %v6949
      %v6966 = vpack.c.bf16 %v6950, %v6950
      %v6967 = vpack.c.bf16 %v6951, %v6951
      %v6968 = vpack.c.bf16 %v6952, %v6952
      %v6969 = vpack.c.bf16 %v6953, %v6953
      %v6970 = vpack.c.bf16 %v6954, %v6954
      %v6971 = vpack.c.bf16 %v6955, %v6955
      %v6972 = vpack.c.bf16 %v6956, %v6956
      %v6973 = vpack.c.bf16 %v6957, %v6957
      %v6974 = vpack.c.bf16 %v6958, %v6958
      %v6975 = vpack.c.bf16 %v6959, %v6959
      %v6976 = vpack.c.bf16 %v6960, %v6960
      %v6977 = vpack.c.bf16 %v6961, %v6961
      %v6978 = vpack.c.bf16 %v6962, %v6962
      %v6979 = vpack.c.bf16 %v6963, %v6963
      %6980 = vst [vmem:[#allocation5 + $0x38] sm:$0xf] %v6964
      %6981 = vst [vmem:[#allocation5 + $0x78] sm:$0xf] %v6965
      %6982 = vst [vmem:[#allocation5 + $0xb8] sm:$0xf] %v6966
      %6983 = vst [vmem:[#allocation5 + $0xf8] sm:$0xf] %v6967
      %6984 = vst [vmem:[#allocation5 + $0x138] sm:$0xf] %v6968
      %6985 = vst [vmem:[#allocation5 + $0x178] sm:$0xf] %v6969
      %6986 = vst [vmem:[#allocation5 + $0x1b8] sm:$0xf] %v6970
      %6987 = vst [vmem:[#allocation5 + $0x1f8] sm:$0xf] %v6971
      %6988 = vst [vmem:[#allocation5 + $0x238] sm:$0xf] %v6972
      %6989 = vst [vmem:[#allocation5 + $0x278] sm:$0xf] %v6973
      %6990 = vst [vmem:[#allocation5 + $0x2b8] sm:$0xf] %v6974
      %6991 = vst [vmem:[#allocation5 + $0x2f8] sm:$0xf] %v6975
      %6992 = vst [vmem:[#allocation5 + $0x338] sm:$0xf] %v6976
      %6993 = vst [vmem:[#allocation5 + $0x378] sm:$0xf] %v6977
      %6994 = vst [vmem:[#allocation5 + $0x3b8] sm:$0xf] %v6978
      %6995 = vst [vmem:[#allocation5 + $0x3f8] sm:$0xf] %v6979
      %v6996 = vperm.slane %v5933, 6
      %v6997 = vmul.f32 %v4386, %v6996
      %v6998 = vmul.f32 %v4387, %v6996
      %v6999 = vmul.f32 %v4388, %v6996
      %v7000 = vmul.f32 %v4389, %v6996
      %v7001 = vmul.f32 %v4390, %v6996
      %v7002 = vmul.f32 %v4391, %v6996
      %v7003 = vmul.f32 %v4392, %v6996
      %v7004 = vmul.f32 %v4393, %v6996
      %v7005 = vmul.f32 %v4394, %v6996
      %v7006 = vmul.f32 %v4395, %v6996
      %v7007 = vmul.f32 %v4396, %v6996
      %v7008 = vmul.f32 %v4397, %v6996
      %v7009 = vmul.f32 %v4398, %v6996
      %v7010 = vmul.f32 %v4399, %v6996
      %v7011 = vmul.f32 %v4400, %v6996
      %v7012 = vmul.f32 %v4401, %v6996
      %v7013 = vpack.c.bf16 %v6997, %v6997
      %v7014 = vpack.c.bf16 %v6998, %v6998
      %v7015 = vpack.c.bf16 %v6999, %v6999
      %v7016 = vpack.c.bf16 %v7000, %v7000
      %v7017 = vpack.c.bf16 %v7001, %v7001
      %v7018 = vpack.c.bf16 %v7002, %v7002
      %v7019 = vpack.c.bf16 %v7003, %v7003
      %v7020 = vpack.c.bf16 %v7004, %v7004
      %v7021 = vpack.c.bf16 %v7005, %v7005
      %v7022 = vpack.c.bf16 %v7006, %v7006
      %v7023 = vpack.c.bf16 %v7007, %v7007
      %v7024 = vpack.c.bf16 %v7008, %v7008
      %v7025 = vpack.c.bf16 %v7009, %v7009
      %v7026 = vpack.c.bf16 %v7010, %v7010
      %v7027 = vpack.c.bf16 %v7011, %v7011
      %v7028 = vpack.c.bf16 %v7012, %v7012
      %7029 = vst [vmem:[#allocation6 + $0x380] sm:$0xf] %v7013
      %7030 = vst [vmem:[#allocation6 + $0x384] sm:$0xf] %v7014
      %7031 = vst [vmem:[#allocation6 + $0x388] sm:$0xf] %v7015
      %7032 = vst [vmem:[#allocation6 + $0x38c] sm:$0xf] %v7016
      %7033 = vst [vmem:[#allocation6 + $0x390] sm:$0xf] %v7017
      %7034 = vst [vmem:[#allocation6 + $0x394] sm:$0xf] %v7018
      %7035 = vst [vmem:[#allocation6 + $0x398] sm:$0xf] %v7019
      %7036 = vst [vmem:[#allocation6 + $0x39c] sm:$0xf] %v7020
      %7037 = vst [vmem:[#allocation6 + $0x3a0] sm:$0xf] %v7021
      %7038 = vst [vmem:[#allocation6 + $0x3a4] sm:$0xf] %v7022
      %7039 = vst [vmem:[#allocation6 + $0x3a8] sm:$0xf] %v7023
      %7040 = vst [vmem:[#allocation6 + $0x3ac] sm:$0xf] %v7024
      %7041 = vst [vmem:[#allocation6 + $0x3b0] sm:$0xf] %v7025
      %7042 = vst [vmem:[#allocation6 + $0x3b4] sm:$0xf] %v7026
      %7043 = vst [vmem:[#allocation6 + $0x3b8] sm:$0xf] %v7027
      %7044 = vst [vmem:[#allocation6 + $0x3bc] sm:$0xf] %v7028
      %v7045 = vsub.f32 %v1474, 5.0
      %v7046 = vsub.f32 %v1486, 5.0
      %v7047 = vsub.f32 %v1498, 5.0
      %v7048 = vsub.f32 %v1510, 5.0
      %v7049 = vsub.f32 %v1522, 5.0
      %v7050 = vsub.f32 %v1534, 5.0
      %v7051 = vsub.f32 %v1546, 5.0
      %v7052 = vsub.f32 %v1558, 5.0
      %v7053 = vsub.f32 %v1570, 5.0
      %v7054 = vsub.f32 %v1582, 5.0
      %v7055 = vsub.f32 %v1594, 5.0
      %v7056 = vsub.f32 %v1606, 5.0
      %v7057 = vsub.f32 %v1618, 5.0
      %v7058 = vsub.f32 %v1630, 5.0
      %v7059 = vsub.f32 %v1642, 5.0
      %v7060 = vsub.f32 %v1654, 5.0
      %v7061 = vmul.f32 %v7045, -4.5
      %v7062 = vmul.f32 %v7046, -4.5
      %v7063 = vmul.f32 %v7047, -4.5
      %v7064 = vmul.f32 %v7048, -4.5
      %v7065 = vmul.f32 %v7049, -4.5
      %v7066 = vmul.f32 %v7050, -4.5
      %v7067 = vmul.f32 %v7051, -4.5
      %v7068 = vmul.f32 %v7052, -4.5
      %v7069 = vmul.f32 %v7053, -4.5
      %v7070 = vmul.f32 %v7054, -4.5
      %v7071 = vmul.f32 %v7055, -4.5
      %v7072 = vmul.f32 %v7056, -4.5
      %v7073 = vmul.f32 %v7057, -4.5
      %v7074 = vmul.f32 %v7058, -4.5
      %v7075 = vmul.f32 %v7059, -4.5
      %v7076 = vmul.f32 %v7060, -4.5
      %v7077 = vmul.f32 %v7061, %v7045
      %v7078 = vmul.f32 %v7062, %v7046
      %v7079 = vmul.f32 %v7063, %v7047
      %v7080 = vmul.f32 %v7064, %v7048
      %v7081 = vmul.f32 %v7065, %v7049
      %v7082 = vmul.f32 %v7066, %v7050
      %v7083 = vmul.f32 %v7067, %v7051
      %v7084 = vmul.f32 %v7068, %v7052
      %v7085 = vmul.f32 %v7069, %v7053
      %v7086 = vmul.f32 %v7070, %v7054
      %v7087 = vmul.f32 %v7071, %v7055
      %v7088 = vmul.f32 %v7072, %v7056
      %v7089 = vmul.f32 %v7073, %v7057
      %v7090 = vmul.f32 %v7074, %v7058
      %v7091 = vmul.f32 %v7075, %v7059
      %v7092 = vmul.f32 %v7076, %v7060
      %v7093 = vmul.f32 %v7077, 1.442695
      %v7094 = vpow.pop %v7093
      %v7095 = vmul.f32 %v7078, 1.442695
      %v7096 = vpow.pop %v7095
      %v7097 = vmul.f32 %v7079, 1.442695
      %v7098 = vpow.pop %v7097
      %v7099 = vmul.f32 %v7080, 1.442695
      %v7100 = vpow.pop %v7099
      %v7101 = vmul.f32 %v7081, 1.442695
      %v7102 = vpow.pop %v7101
      %v7103 = vmul.f32 %v7082, 1.442695
      %v7104 = vpow.pop %v7103
      %v7105 = vmul.f32 %v7083, 1.442695
      %v7106 = vpow.pop %v7105
      %v7107 = vmul.f32 %v7084, 1.442695
      %v7108 = vpow.pop %v7107
      %v7109 = vmul.f32 %v7085, 1.442695
      %v7110 = vpow.pop %v7109
      %v7111 = vmul.f32 %v7086, 1.442695
      %v7112 = vpow.pop %v7111
      %v7113 = vmul.f32 %v7087, 1.442695
      %v7114 = vpow.pop %v7113
      %v7115 = vmul.f32 %v7088, 1.442695
      %v7116 = vpow.pop %v7115
      %v7117 = vmul.f32 %v7089, 1.442695
      %v7118 = vpow.pop %v7117
      %v7119 = vmul.f32 %v7090, 1.442695
      %v7120 = vpow.pop %v7119
      %v7121 = vmul.f32 %v7091, 1.442695
      %v7122 = vpow.pop %v7121
      %v7123 = vmul.f32 %v7092, 1.442695
      %v7124 = vpow.pop %v7123
      %v7125 = vmul.f32 %v4369, %v7094
      %v7126 = vmul.f32 %v4370, %v7096
      %v7127 = vmul.f32 %v4371, %v7098
      %v7128 = vmul.f32 %v4372, %v7100
      %v7129 = vmul.f32 %v4373, %v7102
      %v7130 = vmul.f32 %v4374, %v7104
      %v7131 = vmul.f32 %v4375, %v7106
      %v7132 = vmul.f32 %v4376, %v7108
      %v7133 = vmul.f32 %v4377, %v7110
      %v7134 = vmul.f32 %v4378, %v7112
      %v7135 = vmul.f32 %v4379, %v7114
      %v7136 = vmul.f32 %v4380, %v7116
      %v7137 = vmul.f32 %v4381, %v7118
      %v7138 = vmul.f32 %v4382, %v7120
      %v7139 = vmul.f32 %v4383, %v7122
      %v7140 = vmul.f32 %v4384, %v7124
      %v7141 = vpack.c.bf16 %v7125, %v7125
      %v7142 = vpack.c.bf16 %v7126, %v7126
      %v7143 = vpack.c.bf16 %v7127, %v7127
      %v7144 = vpack.c.bf16 %v7128, %v7128
      %v7145 = vpack.c.bf16 %v7129, %v7129
      %v7146 = vpack.c.bf16 %v7130, %v7130
      %v7147 = vpack.c.bf16 %v7131, %v7131
      %v7148 = vpack.c.bf16 %v7132, %v7132
      %v7149 = vpack.c.bf16 %v7133, %v7133
      %v7150 = vpack.c.bf16 %v7134, %v7134
      %v7151 = vpack.c.bf16 %v7135, %v7135
      %v7152 = vpack.c.bf16 %v7136, %v7136
      %v7153 = vpack.c.bf16 %v7137, %v7137
      %v7154 = vpack.c.bf16 %v7138, %v7138
      %v7155 = vpack.c.bf16 %v7139, %v7139
      %v7156 = vpack.c.bf16 %v7140, %v7140
      %7157 = vst [vmem:[#allocation5 + $0x3c] sm:$0xf] %v7141
      %7158 = vst [vmem:[#allocation5 + $0x7c] sm:$0xf] %v7142
      %7159 = vst [vmem:[#allocation5 + $0xbc] sm:$0xf] %v7143
      %7160 = vst [vmem:[#allocation5 + $0xfc] sm:$0xf] %v7144
      %7161 = vst [vmem:[#allocation5 + $0x13c] sm:$0xf] %v7145
      %7162 = vst [vmem:[#allocation5 + $0x17c] sm:$0xf] %v7146
      %7163 = vst [vmem:[#allocation5 + $0x1bc] sm:$0xf] %v7147
      %7164 = vst [vmem:[#allocation5 + $0x1fc] sm:$0xf] %v7148
      %7165 = vst [vmem:[#allocation5 + $0x23c] sm:$0xf] %v7149
      %7166 = vst [vmem:[#allocation5 + $0x27c] sm:$0xf] %v7150
      %7167 = vst [vmem:[#allocation5 + $0x2bc] sm:$0xf] %v7151
      %7168 = vst [vmem:[#allocation5 + $0x2fc] sm:$0xf] %v7152
      %7169 = vst [vmem:[#allocation5 + $0x33c] sm:$0xf] %v7153
      %7170 = vst [vmem:[#allocation5 + $0x37c] sm:$0xf] %v7154
      %7171 = vst [vmem:[#allocation5 + $0x3bc] sm:$0xf] %v7155
      %7172 = vst [vmem:[#allocation5 + $0x3fc] sm:$0xf] %v7156
      %v7173 = vperm.slane %v5933, 7
      %v7174 = vmul.f32 %v4386, %v7173
      %v7175 = vmul.f32 %v4387, %v7173
      %v7176 = vmul.f32 %v4388, %v7173
      %v7177 = vmul.f32 %v4389, %v7173
      %v7178 = vmul.f32 %v4390, %v7173
      %v7179 = vmul.f32 %v4391, %v7173
      %v7180 = vmul.f32 %v4392, %v7173
      %v7181 = vmul.f32 %v4393, %v7173
      %v7182 = vmul.f32 %v4394, %v7173
      %v7183 = vmul.f32 %v4395, %v7173
      %v7184 = vmul.f32 %v4396, %v7173
      %v7185 = vmul.f32 %v4397, %v7173
      %v7186 = vmul.f32 %v4398, %v7173
      %v7187 = vmul.f32 %v4399, %v7173
      %v7188 = vmul.f32 %v4400, %v7173
      %v7189 = vmul.f32 %v4401, %v7173
      %v7190 = vpack.c.bf16 %v7174, %v7174
      %v7191 = vpack.c.bf16 %v7175, %v7175
      %v7192 = vpack.c.bf16 %v7176, %v7176
      %v7193 = vpack.c.bf16 %v7177, %v7177
      %v7194 = vpack.c.bf16 %v7178, %v7178
      %v7195 = vpack.c.bf16 %v7179, %v7179
      %v7196 = vpack.c.bf16 %v7180, %v7180
      %v7197 = vpack.c.bf16 %v7181, %v7181
      %v7198 = vpack.c.bf16 %v7182, %v7182
      %v7199 = vpack.c.bf16 %v7183, %v7183
      %v7200 = vpack.c.bf16 %v7184, %v7184
      %v7201 = vpack.c.bf16 %v7185, %v7185
      %v7202 = vpack.c.bf16 %v7186, %v7186
      %v7203 = vpack.c.bf16 %v7187, %v7187
      %v7204 = vpack.c.bf16 %v7188, %v7188
      %v7205 = vpack.c.bf16 %v7189, %v7189
      %7206 = vst [vmem:[#allocation6 + $0x3c0] sm:$0xf] %v7190
      %7207 = vst [vmem:[#allocation6 + $0x3c4] sm:$0xf] %v7191
      %7208 = vst [vmem:[#allocation6 + $0x3c8] sm:$0xf] %v7192
      %7209 = vst [vmem:[#allocation6 + $0x3cc] sm:$0xf] %v7193
      %7210 = vst [vmem:[#allocation6 + $0x3d0] sm:$0xf] %v7194
      %7211 = vst [vmem:[#allocation6 + $0x3d4] sm:$0xf] %v7195
      %7212 = vst [vmem:[#allocation6 + $0x3d8] sm:$0xf] %v7196
      %7213 = vst [vmem:[#allocation6 + $0x3dc] sm:$0xf] %v7197
      %7214 = vst [vmem:[#allocation6 + $0x3e0] sm:$0xf] %v7198
      %7215 = vst [vmem:[#allocation6 + $0x3e4] sm:$0xf] %v7199
      %7216 = vst [vmem:[#allocation6 + $0x3e8] sm:$0xf] %v7200
      %7217 = vst [vmem:[#allocation6 + $0x3ec] sm:$0xf] %v7201
      %7218 = vst [vmem:[#allocation6 + $0x3f0] sm:$0xf] %v7202
      %7219 = vst [vmem:[#allocation6 + $0x3f4] sm:$0xf] %v7203
      %7220 = vst [vmem:[#allocation6 + $0x3f8] sm:$0xf] %v7204
      %7221 = vst [vmem:[#allocation6 + $0x3fc] sm:$0xf] %v7205
      %v7222 = vld [vmem:[#allocation4] sm:$0xff]
      %v7223 = vld [vmem:[#allocation4 + $0x8] sm:$0xff]
      %v7224 = vld [vmem:[#allocation4 + $0x10] sm:$0xff]
      %v7225 = vld [vmem:[#allocation4 + $0x18] sm:$0xff]
      %v7226 = vld [vmem:[#allocation4 + $0x20] sm:$0xff]
      %v7227 = vld [vmem:[#allocation4 + $0x28] sm:$0xff]
      %v7228 = vld [vmem:[#allocation4 + $0x30] sm:$0xff]
      %v7229 = vld [vmem:[#allocation4 + $0x38] sm:$0xff]
      %v7230 = vld [vmem:[#allocation4 + $0x40] sm:$0xff]
      %v7231 = vld [vmem:[#allocation4 + $0x48] sm:$0xff]
      %v7232 = vld [vmem:[#allocation4 + $0x50] sm:$0xff]
      %v7233 = vld [vmem:[#allocation4 + $0x58] sm:$0xff]
      %v7234 = vld [vmem:[#allocation4 + $0x60] sm:$0xff]
      %v7235 = vld [vmem:[#allocation4 + $0x68] sm:$0xff]
      %v7236 = vld [vmem:[#allocation4 + $0x70] sm:$0xff]
      %v7237 = vld [vmem:[#allocation4 + $0x78] sm:$0xff]
      %v7238 = vld [vmem:[#allocation5] sm:$0xff]
      %v7239 = vld [vmem:[#allocation5 + $0x8] sm:$0xff]
      %v7240 = vld [vmem:[#allocation5 + $0x10] sm:$0xff]
      %v7241 = vld [vmem:[#allocation5 + $0x18] sm:$0xff]
      %v7242 = vld [vmem:[#allocation5 + $0x20] sm:$0xff]
      %v7243 = vld [vmem:[#allocation5 + $0x28] sm:$0xff]
      %v7244 = vld [vmem:[#allocation5 + $0x30] sm:$0xff]
      %v7245 = vld [vmem:[#allocation5 + $0x38] sm:$0xff]
      %v7246 = vld [vmem:[#allocation5 + $0x40] sm:$0xff]
      %v7247 = vld [vmem:[#allocation5 + $0x48] sm:$0xff]
      %v7248 = vld [vmem:[#allocation5 + $0x50] sm:$0xff]
      %v7249 = vld [vmem:[#allocation5 + $0x58] sm:$0xff]
      %v7250 = vld [vmem:[#allocation5 + $0x60] sm:$0xff]
      %v7251 = vld [vmem:[#allocation5 + $0x68] sm:$0xff]
      %v7252 = vld [vmem:[#allocation5 + $0x70] sm:$0xff]
      %v7253 = vld [vmem:[#allocation5 + $0x78] sm:$0xff]
      %v7254 = vld [vmem:[#allocation5 + $0x80] sm:$0xff]
      %v7255 = vld [vmem:[#allocation5 + $0x88] sm:$0xff]
      %v7256 = vld [vmem:[#allocation5 + $0x90] sm:$0xff]
      %v7257 = vld [vmem:[#allocation5 + $0x98] sm:$0xff]
      %v7258 = vld [vmem:[#allocation5 + $0xa0] sm:$0xff]
      %v7259 = vld [vmem:[#allocation5 + $0xa8] sm:$0xff]
      %v7260 = vld [vmem:[#allocation5 + $0xb0] sm:$0xff]
      %v7261 = vld [vmem:[#allocation5 + $0xb8] sm:$0xff]
      %v7262 = vld [vmem:[#allocation5 + $0xc0] sm:$0xff]
      %v7263 = vld [vmem:[#allocation5 + $0xc8] sm:$0xff]
      %v7264 = vld [vmem:[#allocation5 + $0xd0] sm:$0xff]
      %v7265 = vld [vmem:[#allocation5 + $0xd8] sm:$0xff]
      %v7266 = vld [vmem:[#allocation5 + $0xe0] sm:$0xff]
      %v7267 = vld [vmem:[#allocation5 + $0xe8] sm:$0xff]
      %v7268 = vld [vmem:[#allocation5 + $0xf0] sm:$0xff]
      %v7269 = vld [vmem:[#allocation5 + $0xf8] sm:$0xff]
      %v7270 = vld [vmem:[#allocation5 + $0x100] sm:$0xff]
      %v7271 = vld [vmem:[#allocation5 + $0x108] sm:$0xff]
      %v7272 = vld [vmem:[#allocation5 + $0x110] sm:$0xff]
      %v7273 = vld [vmem:[#allocation5 + $0x118] sm:$0xff]
      %v7274 = vld [vmem:[#allocation5 + $0x120] sm:$0xff]
      %v7275 = vld [vmem:[#allocation5 + $0x128] sm:$0xff]
      %v7276 = vld [vmem:[#allocation5 + $0x130] sm:$0xff]
      %v7277 = vld [vmem:[#allocation5 + $0x138] sm:$0xff]
      %v7278 = vld [vmem:[#allocation5 + $0x140] sm:$0xff]
      %v7279 = vld [vmem:[#allocation5 + $0x148] sm:$0xff]
      %v7280 = vld [vmem:[#allocation5 + $0x150] sm:$0xff]
      %v7281 = vld [vmem:[#allocation5 + $0x158] sm:$0xff]
      %v7282 = vld [vmem:[#allocation5 + $0x160] sm:$0xff]
      %v7283 = vld [vmem:[#allocation5 + $0x168] sm:$0xff]
      %v7284 = vld [vmem:[#allocation5 + $0x170] sm:$0xff]
      %v7285 = vld [vmem:[#allocation5 + $0x178] sm:$0xff]
      %v7286 = vld [vmem:[#allocation5 + $0x180] sm:$0xff]
      %v7287 = vld [vmem:[#allocation5 + $0x188] sm:$0xff]
      %v7288 = vld [vmem:[#allocation5 + $0x190] sm:$0xff]
      %v7289 = vld [vmem:[#allocation5 + $0x198] sm:$0xff]
      %v7290 = vld [vmem:[#allocation5 + $0x1a0] sm:$0xff]
      %v7291 = vld [vmem:[#allocation5 + $0x1a8] sm:$0xff]
      %v7292 = vld [vmem:[#allocation5 + $0x1b0] sm:$0xff]
      %v7293 = vld [vmem:[#allocation5 + $0x1b8] sm:$0xff]
      %v7294 = vld [vmem:[#allocation5 + $0x1c0] sm:$0xff]
      %v7295 = vld [vmem:[#allocation5 + $0x1c8] sm:$0xff]
      %v7296 = vld [vmem:[#allocation5 + $0x1d0] sm:$0xff]
      %v7297 = vld [vmem:[#allocation5 + $0x1d8] sm:$0xff]
      %v7298 = vld [vmem:[#allocation5 + $0x1e0] sm:$0xff]
      %v7299 = vld [vmem:[#allocation5 + $0x1e8] sm:$0xff]
      %v7300 = vld [vmem:[#allocation5 + $0x1f0] sm:$0xff]
      %v7301 = vld [vmem:[#allocation5 + $0x1f8] sm:$0xff]
      %v7302 = vld [vmem:[#allocation5 + $0x200] sm:$0xff]
      %v7303 = vld [vmem:[#allocation5 + $0x208] sm:$0xff]
      %v7304 = vld [vmem:[#allocation5 + $0x210] sm:$0xff]
      %v7305 = vld [vmem:[#allocation5 + $0x218] sm:$0xff]
      %v7306 = vld [vmem:[#allocation5 + $0x220] sm:$0xff]
      %v7307 = vld [vmem:[#allocation5 + $0x228] sm:$0xff]
      %v7308 = vld [vmem:[#allocation5 + $0x230] sm:$0xff]
      %v7309 = vld [vmem:[#allocation5 + $0x238] sm:$0xff]
      %v7310 = vld [vmem:[#allocation5 + $0x240] sm:$0xff]
      %v7311 = vld [vmem:[#allocation5 + $0x248] sm:$0xff]
      %v7312 = vld [vmem:[#allocation5 + $0x250] sm:$0xff]
      %v7313 = vld [vmem:[#allocation5 + $0x258] sm:$0xff]
      %v7314 = vld [vmem:[#allocation5 + $0x260] sm:$0xff]
      %v7315 = vld [vmem:[#allocation5 + $0x268] sm:$0xff]
      %v7316 = vld [vmem:[#allocation5 + $0x270] sm:$0xff]
      %v7317 = vld [vmem:[#allocation5 + $0x278] sm:$0xff]
      %v7318 = vld [vmem:[#allocation5 + $0x280] sm:$0xff]
      %v7319 = vld [vmem:[#allocation5 + $0x288] sm:$0xff]
      %v7320 = vld [vmem:[#allocation5 + $0x290] sm:$0xff]
      %v7321 = vld [vmem:[#allocation5 + $0x298] sm:$0xff]
      %v7322 = vld [vmem:[#allocation5 + $0x2a0] sm:$0xff]
      %v7323 = vld [vmem:[#allocation5 + $0x2a8] sm:$0xff]
      %v7324 = vld [vmem:[#allocation5 + $0x2b0] sm:$0xff]
      %v7325 = vld [vmem:[#allocation5 + $0x2b8] sm:$0xff]
      %v7326 = vld [vmem:[#allocation5 + $0x2c0] sm:$0xff]
      %v7327 = vld [vmem:[#allocation5 + $0x2c8] sm:$0xff]
      %v7328 = vld [vmem:[#allocation5 + $0x2d0] sm:$0xff]
      %v7329 = vld [vmem:[#allocation5 + $0x2d8] sm:$0xff]
      %v7330 = vld [vmem:[#allocation5 + $0x2e0] sm:$0xff]
      %v7331 = vld [vmem:[#allocation5 + $0x2e8] sm:$0xff]
      %v7332 = vld [vmem:[#allocation5 + $0x2f0] sm:$0xff]
      %v7333 = vld [vmem:[#allocation5 + $0x2f8] sm:$0xff]
      %v7334 = vld [vmem:[#allocation5 + $0x300] sm:$0xff]
      %v7335 = vld [vmem:[#allocation5 + $0x308] sm:$0xff]
      %v7336 = vld [vmem:[#allocation5 + $0x310] sm:$0xff]
      %v7337 = vld [vmem:[#allocation5 + $0x318] sm:$0xff]
      %v7338 = vld [vmem:[#allocation5 + $0x320] sm:$0xff]
      %v7339 = vld [vmem:[#allocation5 + $0x328] sm:$0xff]
      %v7340 = vld [vmem:[#allocation5 + $0x330] sm:$0xff]
      %v7341 = vld [vmem:[#allocation5 + $0x338] sm:$0xff]
      %v7342 = vld [vmem:[#allocation5 + $0x340] sm:$0xff]
      %v7343 = vld [vmem:[#allocation5 + $0x348] sm:$0xff]
      %v7344 = vld [vmem:[#allocation5 + $0x350] sm:$0xff]
      %v7345 = vld [vmem:[#allocation5 + $0x358] sm:$0xff]
      %v7346 = vld [vmem:[#allocation5 + $0x360] sm:$0xff]
      %v7347 = vld [vmem:[#allocation5 + $0x368] sm:$0xff]
      %v7348 = vld [vmem:[#allocation5 + $0x370] sm:$0xff]
      %v7349 = vld [vmem:[#allocation5 + $0x378] sm:$0xff]
      %v7350 = vld [vmem:[#allocation5 + $0x380] sm:$0xff]
      %v7351 = vld [vmem:[#allocation5 + $0x388] sm:$0xff]
      %v7352 = vld [vmem:[#allocation5 + $0x390] sm:$0xff]
      %v7353 = vld [vmem:[#allocation5 + $0x398] sm:$0xff]
      %v7354 = vld [vmem:[#allocation5 + $0x3a0] sm:$0xff]
      %v7355 = vld [vmem:[#allocation5 + $0x3a8] sm:$0xff]
      %v7356 = vld [vmem:[#allocation5 + $0x3b0] sm:$0xff]
      %v7357 = vld [vmem:[#allocation5 + $0x3b8] sm:$0xff]
      %v7358 = vld [vmem:[#allocation5 + $0x3c0] sm:$0xff]
      %v7359 = vld [vmem:[#allocation5 + $0x3c8] sm:$0xff]
      %v7360 = vld [vmem:[#allocation5 + $0x3d0] sm:$0xff]
      %v7361 = vld [vmem:[#allocation5 + $0x3d8] sm:$0xff]
      %v7362 = vld [vmem:[#allocation5 + $0x3e0] sm:$0xff]
      %v7363 = vld [vmem:[#allocation5 + $0x3e8] sm:$0xff]
      %v7364 = vld [vmem:[#allocation5 + $0x3f0] sm:$0xff]
      %v7365 = vld [vmem:[#allocation5 + $0x3f8] sm:$0xff]
      %v7366 = vld [vmem:[#allocation6] sm:$0xf]
      %v7367 = vld [vmem:[#allocation6 + $0x4] sm:$0xf]
      %v7368 = vld [vmem:[#allocation6 + $0x8] sm:$0xf]
      %v7369 = vld [vmem:[#allocation6 + $0xc] sm:$0xf]
      %v7370 = vld [vmem:[#allocation6 + $0x10] sm:$0xf]
      %v7371 = vld [vmem:[#allocation6 + $0x14] sm:$0xf]
      %v7372 = vld [vmem:[#allocation6 + $0x18] sm:$0xf]
      %v7373 = vld [vmem:[#allocation6 + $0x1c] sm:$0xf]
      %v7374 = vld [vmem:[#allocation6 + $0x20] sm:$0xf]
      %v7375 = vld [vmem:[#allocation6 + $0x24] sm:$0xf]
      %v7376 = vld [vmem:[#allocation6 + $0x28] sm:$0xf]
      %v7377 = vld [vmem:[#allocation6 + $0x2c] sm:$0xf]
      %v7378 = vld [vmem:[#allocation6 + $0x30] sm:$0xf]
      %v7379 = vld [vmem:[#allocation6 + $0x34] sm:$0xf]
      %v7380 = vld [vmem:[#allocation6 + $0x38] sm:$0xf]
      %v7381 = vld [vmem:[#allocation6 + $0x3c] sm:$0xf]
      %v7382 = vld [vmem:[#allocation6 + $0x40] sm:$0xf]
      %v7383 = vld [vmem:[#allocation6 + $0x44] sm:$0xf]
      %v7384 = vld [vmem:[#allocation6 + $0x48] sm:$0xf]
      %v7385 = vld [vmem:[#allocation6 + $0x4c] sm:$0xf]
      %v7386 = vld [vmem:[#allocation6 + $0x50] sm:$0xf]
      %v7387 = vld [vmem:[#allocation6 + $0x54] sm:$0xf]
      %v7388 = vld [vmem:[#allocation6 + $0x58] sm:$0xf]
      %v7389 = vld [vmem:[#allocation6 + $0x5c] sm:$0xf]
      %v7390 = vld [vmem:[#allocation6 + $0x60] sm:$0xf]
      %v7391 = vld [vmem:[#allocation6 + $0x64] sm:$0xf]
      %v7392 = vld [vmem:[#allocation6 + $0x68] sm:$0xf]
      %v7393 = vld [vmem:[#allocation6 + $0x6c] sm:$0xf]
      %v7394 = vld [vmem:[#allocation6 + $0x70] sm:$0xf]
      %v7395 = vld [vmem:[#allocation6 + $0x74] sm:$0xf]
      %v7396 = vld [vmem:[#allocation6 + $0x78] sm:$0xf]
      %v7397 = vld [vmem:[#allocation6 + $0x7c] sm:$0xf]
      %v7398 = vld [vmem:[#allocation6 + $0x80] sm:$0xf]
      %v7399 = vld [vmem:[#allocation6 + $0x84] sm:$0xf]
      %v7400 = vld [vmem:[#allocation6 + $0x88] sm:$0xf]
      %v7401 = vld [vmem:[#allocation6 + $0x8c] sm:$0xf]
      %v7402 = vld [vmem:[#allocation6 + $0x90] sm:$0xf]
      %v7403 = vld [vmem:[#allocation6 + $0x94] sm:$0xf]
      %v7404 = vld [vmem:[#allocation6 + $0x98] sm:$0xf]
      %v7405 = vld [vmem:[#allocation6 + $0x9c] sm:$0xf]
      %v7406 = vld [vmem:[#allocation6 + $0xa0] sm:$0xf]
      %v7407 = vld [vmem:[#allocation6 + $0xa4] sm:$0xf]
      %v7408 = vld [vmem:[#allocation6 + $0xa8] sm:$0xf]
      %v7409 = vld [vmem:[#allocation6 + $0xac] sm:$0xf]
      %v7410 = vld [vmem:[#allocation6 + $0xb0] sm:$0xf]
      %v7411 = vld [vmem:[#allocation6 + $0xb4] sm:$0xf]
      %v7412 = vld [vmem:[#allocation6 + $0xb8] sm:$0xf]
      %v7413 = vld [vmem:[#allocation6 + $0xbc] sm:$0xf]
      %v7414 = vld [vmem:[#allocation6 + $0xc0] sm:$0xf]
      %v7415 = vld [vmem:[#allocation6 + $0xc4] sm:$0xf]
      %v7416 = vld [vmem:[#allocation6 + $0xc8] sm:$0xf]
      %v7417 = vld [vmem:[#allocation6 + $0xcc] sm:$0xf]
      %v7418 = vld [vmem:[#allocation6 + $0xd0] sm:$0xf]
      %v7419 = vld [vmem:[#allocation6 + $0xd4] sm:$0xf]
      %v7420 = vld [vmem:[#allocation6 + $0xd8] sm:$0xf]
      %v7421 = vld [vmem:[#allocation6 + $0xdc] sm:$0xf]
      %v7422 = vld [vmem:[#allocation6 + $0xe0] sm:$0xf]
      %v7423 = vld [vmem:[#allocation6 + $0xe4] sm:$0xf]
      %v7424 = vld [vmem:[#allocation6 + $0xe8] sm:$0xf]
      %v7425 = vld [vmem:[#allocation6 + $0xec] sm:$0xf]
      %v7426 = vld [vmem:[#allocation6 + $0xf0] sm:$0xf]
      %v7427 = vld [vmem:[#allocation6 + $0xf4] sm:$0xf]
      %v7428 = vld [vmem:[#allocation6 + $0xf8] sm:$0xf]
      %v7429 = vld [vmem:[#allocation6 + $0xfc] sm:$0xf]
      %v7430 = vld [vmem:[#allocation6 + $0x100] sm:$0xf]
      %v7431 = vld [vmem:[#allocation6 + $0x104] sm:$0xf]
      %v7432 = vld [vmem:[#allocation6 + $0x108] sm:$0xf]
      %v7433 = vld [vmem:[#allocation6 + $0x10c] sm:$0xf]
      %v7434 = vld [vmem:[#allocation6 + $0x110] sm:$0xf]
      %v7435 = vld [vmem:[#allocation6 + $0x114] sm:$0xf]
      %v7436 = vld [vmem:[#allocation6 + $0x118] sm:$0xf]
      %v7437 = vld [vmem:[#allocation6 + $0x11c] sm:$0xf]
      %v7438 = vld [vmem:[#allocation6 + $0x120] sm:$0xf]
      %v7439 = vld [vmem:[#allocation6 + $0x124] sm:$0xf]
      %v7440 = vld [vmem:[#allocation6 + $0x128] sm:$0xf]
      %v7441 = vld [vmem:[#allocation6 + $0x12c] sm:$0xf]
      %v7442 = vld [vmem:[#allocation6 + $0x130] sm:$0xf]
      %v7443 = vld [vmem:[#allocation6 + $0x134] sm:$0xf]
      %v7444 = vld [vmem:[#allocation6 + $0x138] sm:$0xf]
      %v7445 = vld [vmem:[#allocation6 + $0x13c] sm:$0xf]
      %v7446 = vld [vmem:[#allocation6 + $0x140] sm:$0xf]
      %v7447 = vld [vmem:[#allocation6 + $0x144] sm:$0xf]
      %v7448 = vld [vmem:[#allocation6 + $0x148] sm:$0xf]
      %v7449 = vld [vmem:[#allocation6 + $0x14c] sm:$0xf]
      %v7450 = vld [vmem:[#allocation6 + $0x150] sm:$0xf]
      %v7451 = vld [vmem:[#allocation6 + $0x154] sm:$0xf]
      %v7452 = vld [vmem:[#allocation6 + $0x158] sm:$0xf]
      %v7453 = vld [vmem:[#allocation6 + $0x15c] sm:$0xf]
      %v7454 = vld [vmem:[#allocation6 + $0x160] sm:$0xf]
      %v7455 = vld [vmem:[#allocation6 + $0x164] sm:$0xf]
      %v7456 = vld [vmem:[#allocation6 + $0x168] sm:$0xf]
      %v7457 = vld [vmem:[#allocation6 + $0x16c] sm:$0xf]
      %v7458 = vld [vmem:[#allocation6 + $0x170] sm:$0xf]
      %v7459 = vld [vmem:[#allocation6 + $0x174] sm:$0xf]
      %v7460 = vld [vmem:[#allocation6 + $0x178] sm:$0xf]
      %v7461 = vld [vmem:[#allocation6 + $0x17c] sm:$0xf]
      %v7462 = vld [vmem:[#allocation6 + $0x180] sm:$0xf]
      %v7463 = vld [vmem:[#allocation6 + $0x184] sm:$0xf]
      %v7464 = vld [vmem:[#allocation6 + $0x188] sm:$0xf]
      %v7465 = vld [vmem:[#allocation6 + $0x18c] sm:$0xf]
      %v7466 = vld [vmem:[#allocation6 + $0x190] sm:$0xf]
      %v7467 = vld [vmem:[#allocation6 + $0x194] sm:$0xf]
      %v7468 = vld [vmem:[#allocation6 + $0x198] sm:$0xf]
      %v7469 = vld [vmem:[#allocation6 + $0x19c] sm:$0xf]
      %v7470 = vld [vmem:[#allocation6 + $0x1a0] sm:$0xf]
      %v7471 = vld [vmem:[#allocation6 + $0x1a4] sm:$0xf]
      %v7472 = vld [vmem:[#allocation6 + $0x1a8] sm:$0xf]
      %v7473 = vld [vmem:[#allocation6 + $0x1ac] sm:$0xf]
      %v7474 = vld [vmem:[#allocation6 + $0x1b0] sm:$0xf]
      %v7475 = vld [vmem:[#allocation6 + $0x1b4] sm:$0xf]
      %v7476 = vld [vmem:[#allocation6 + $0x1b8] sm:$0xf]
      %v7477 = vld [vmem:[#allocation6 + $0x1bc] sm:$0xf]
      %v7478 = vld [vmem:[#allocation6 + $0x1c0] sm:$0xf]
      %v7479 = vld [vmem:[#allocation6 + $0x1c4] sm:$0xf]
      %v7480 = vld [vmem:[#allocation6 + $0x1c8] sm:$0xf]
      %v7481 = vld [vmem:[#allocation6 + $0x1cc] sm:$0xf]
      %v7482 = vld [vmem:[#allocation6 + $0x1d0] sm:$0xf]
      %v7483 = vld [vmem:[#allocation6 + $0x1d4] sm:$0xf]
      %v7484 = vld [vmem:[#allocation6 + $0x1d8] sm:$0xf]
      %v7485 = vld [vmem:[#allocation6 + $0x1dc] sm:$0xf]
      %v7486 = vld [vmem:[#allocation6 + $0x1e0] sm:$0xf]
      %v7487 = vld [vmem:[#allocation6 + $0x1e4] sm:$0xf]
      %v7488 = vld [vmem:[#allocation6 + $0x1e8] sm:$0xf]
      %v7489 = vld [vmem:[#allocation6 + $0x1ec] sm:$0xf]
      %v7490 = vld [vmem:[#allocation6 + $0x1f0] sm:$0xf]
      %v7491 = vld [vmem:[#allocation6 + $0x1f4] sm:$0xf]
      %v7492 = vld [vmem:[#allocation6 + $0x1f8] sm:$0xf]
      %v7493 = vld [vmem:[#allocation6 + $0x1fc] sm:$0xf]
      %v7494 = vld [vmem:[#allocation6 + $0x200] sm:$0xf]
      %v7495 = vld [vmem:[#allocation6 + $0x204] sm:$0xf]
      %v7496 = vld [vmem:[#allocation6 + $0x208] sm:$0xf]
      %v7497 = vld [vmem:[#allocation6 + $0x20c] sm:$0xf]
      %v7498 = vld [vmem:[#allocation6 + $0x210] sm:$0xf]
      %v7499 = vld [vmem:[#allocation6 + $0x214] sm:$0xf]
      %v7500 = vld [vmem:[#allocation6 + $0x218] sm:$0xf]
      %v7501 = vld [vmem:[#allocation6 + $0x21c] sm:$0xf]
      %v7502 = vld [vmem:[#allocation6 + $0x220] sm:$0xf]
      %v7503 = vld [vmem:[#allocation6 + $0x224] sm:$0xf]
      %v7504 = vld [vmem:[#allocation6 + $0x228] sm:$0xf]
      %v7505 = vld [vmem:[#allocation6 + $0x22c] sm:$0xf]
      %v7506 = vld [vmem:[#allocation6 + $0x230] sm:$0xf]
      %v7507 = vld [vmem:[#allocation6 + $0x234] sm:$0xf]
      %v7508 = vld [vmem:[#allocation6 + $0x238] sm:$0xf]
      %v7509 = vld [vmem:[#allocation6 + $0x23c] sm:$0xf]
      %v7510 = vld [vmem:[#allocation6 + $0x240] sm:$0xf]
      %v7511 = vld [vmem:[#allocation6 + $0x244] sm:$0xf]
      %v7512 = vld [vmem:[#allocation6 + $0x248] sm:$0xf]
      %v7513 = vld [vmem:[#allocation6 + $0x24c] sm:$0xf]
      %v7514 = vld [vmem:[#allocation6 + $0x250] sm:$0xf]
      %v7515 = vld [vmem:[#allocation6 + $0x254] sm:$0xf]
      %v7516 = vld [vmem:[#allocation6 + $0x258] sm:$0xf]
      %v7517 = vld [vmem:[#allocation6 + $0x25c] sm:$0xf]
      %v7518 = vld [vmem:[#allocation6 + $0x260] sm:$0xf]
      %v7519 = vld [vmem:[#allocation6 + $0x264] sm:$0xf]
      %v7520 = vld [vmem:[#allocation6 + $0x268] sm:$0xf]
      %v7521 = vld [vmem:[#allocation6 + $0x26c] sm:$0xf]
      %v7522 = vld [vmem:[#allocation6 + $0x270] sm:$0xf]
      %v7523 = vld [vmem:[#allocation6 + $0x274] sm:$0xf]
      %v7524 = vld [vmem:[#allocation6 + $0x278] sm:$0xf]
      %v7525 = vld [vmem:[#allocation6 + $0x27c] sm:$0xf]
      %v7526 = vld [vmem:[#allocation6 + $0x280] sm:$0xf]
      %v7527 = vld [vmem:[#allocation6 + $0x284] sm:$0xf]
      %v7528 = vld [vmem:[#allocation6 + $0x288] sm:$0xf]
      %v7529 = vld [vmem:[#allocation6 + $0x28c] sm:$0xf]
      %v7530 = vld [vmem:[#allocation6 + $0x290] sm:$0xf]
      %v7531 = vld [vmem:[#allocation6 + $0x294] sm:$0xf]
      %v7532 = vld [vmem:[#allocation6 + $0x298] sm:$0xf]
      %v7533 = vld [vmem:[#allocation6 + $0x29c] sm:$0xf]
      %v7534 = vld [vmem:[#allocation6 + $0x2a0] sm:$0xf]
      %v7535 = vld [vmem:[#allocation6 + $0x2a4] sm:$0xf]
      %v7536 = vld [vmem:[#allocation6 + $0x2a8] sm:$0xf]
      %v7537 = vld [vmem:[#allocation6 + $0x2ac] sm:$0xf]
      %v7538 = vld [vmem:[#allocation6 + $0x2b0] sm:$0xf]
      %v7539 = vld [vmem:[#allocation6 + $0x2b4] sm:$0xf]
      %v7540 = vld [vmem:[#allocation6 + $0x2b8] sm:$0xf]
      %v7541 = vld [vmem:[#allocation6 + $0x2bc] sm:$0xf]
      %v7542 = vld [vmem:[#allocation6 + $0x2c0] sm:$0xf]
      %v7543 = vld [vmem:[#allocation6 + $0x2c4] sm:$0xf]
      %v7544 = vld [vmem:[#allocation6 + $0x2c8] sm:$0xf]
      %v7545 = vld [vmem:[#allocation6 + $0x2cc] sm:$0xf]
      %v7546 = vld [vmem:[#allocation6 + $0x2d0] sm:$0xf]
      %v7547 = vld [vmem:[#allocation6 + $0x2d4] sm:$0xf]
      %v7548 = vld [vmem:[#allocation6 + $0x2d8] sm:$0xf]
      %v7549 = vld [vmem:[#allocation6 + $0x2dc] sm:$0xf]
      %v7550 = vld [vmem:[#allocation6 + $0x2e0] sm:$0xf]
      %v7551 = vld [vmem:[#allocation6 + $0x2e4] sm:$0xf]
      %v7552 = vld [vmem:[#allocation6 + $0x2e8] sm:$0xf]
      %v7553 = vld [vmem:[#allocation6 + $0x2ec] sm:$0xf]
      %v7554 = vld [vmem:[#allocation6 + $0x2f0] sm:$0xf]
      %v7555 = vld [vmem:[#allocation6 + $0x2f4] sm:$0xf]
      %v7556 = vld [vmem:[#allocation6 + $0x2f8] sm:$0xf]
      %v7557 = vld [vmem:[#allocation6 + $0x2fc] sm:$0xf]
      %v7558 = vld [vmem:[#allocation6 + $0x300] sm:$0xf]
      %v7559 = vld [vmem:[#allocation6 + $0x304] sm:$0xf]
      %v7560 = vld [vmem:[#allocation6 + $0x308] sm:$0xf]
      %v7561 = vld [vmem:[#allocation6 + $0x30c] sm:$0xf]
      %v7562 = vld [vmem:[#allocation6 + $0x310] sm:$0xf]
      %v7563 = vld [vmem:[#allocation6 + $0x314] sm:$0xf]
      %v7564 = vld [vmem:[#allocation6 + $0x318] sm:$0xf]
      %v7565 = vld [vmem:[#allocation6 + $0x31c] sm:$0xf]
      %v7566 = vld [vmem:[#allocation6 + $0x320] sm:$0xf]
      %v7567 = vld [vmem:[#allocation6 + $0x324] sm:$0xf]
      %v7568 = vld [vmem:[#allocation6 + $0x328] sm:$0xf]
      %v7569 = vld [vmem:[#allocation6 + $0x32c] sm:$0xf]
      %v7570 = vld [vmem:[#allocation6 + $0x330] sm:$0xf]
      %v7571 = vld [vmem:[#allocation6 + $0x334] sm:$0xf]
      %v7572 = vld [vmem:[#allocation6 + $0x338] sm:$0xf]
      %v7573 = vld [vmem:[#allocation6 + $0x33c] sm:$0xf]
      %v7574 = vld [vmem:[#allocation6 + $0x340] sm:$0xf]
      %v7575 = vld [vmem:[#allocation6 + $0x344] sm:$0xf]
      %v7576 = vld [vmem:[#allocation6 + $0x348] sm:$0xf]
      %v7577 = vld [vmem:[#allocation6 + $0x34c] sm:$0xf]
      %v7578 = vld [vmem:[#allocation6 + $0x350] sm:$0xf]
      %v7579 = vld [vmem:[#allocation6 + $0x354] sm:$0xf]
      %v7580 = vld [vmem:[#allocation6 + $0x358] sm:$0xf]
      %v7581 = vld [vmem:[#allocation6 + $0x35c] sm:$0xf]
      %v7582 = vld [vmem:[#allocation6 + $0x360] sm:$0xf]
      %v7583 = vld [vmem:[#allocation6 + $0x364] sm:$0xf]
      %v7584 = vld [vmem:[#allocation6 + $0x368] sm:$0xf]
      %v7585 = vld [vmem:[#allocation6 + $0x36c] sm:$0xf]
      %v7586 = vld [vmem:[#allocation6 + $0x370] sm:$0xf]
      %v7587 = vld [vmem:[#allocation6 + $0x374] sm:$0xf]
      %v7588 = vld [vmem:[#allocation6 + $0x378] sm:$0xf]
      %v7589 = vld [vmem:[#allocation6 + $0x37c] sm:$0xf]
      %v7590 = vld [vmem:[#allocation6 + $0x380] sm:$0xf]
      %v7591 = vld [vmem:[#allocation6 + $0x384] sm:$0xf]
      %v7592 = vld [vmem:[#allocation6 + $0x388] sm:$0xf]
      %v7593 = vld [vmem:[#allocation6 + $0x38c] sm:$0xf]
      %v7594 = vld [vmem:[#allocation6 + $0x390] sm:$0xf]
      %v7595 = vld [vmem:[#allocation6 + $0x394] sm:$0xf]
      %v7596 = vld [vmem:[#allocation6 + $0x398] sm:$0xf]
      %v7597 = vld [vmem:[#allocation6 + $0x39c] sm:$0xf]
      %v7598 = vld [vmem:[#allocation6 + $0x3a0] sm:$0xf]
      %v7599 = vld [vmem:[#allocation6 + $0x3a4] sm:$0xf]
      %v7600 = vld [vmem:[#allocation6 + $0x3a8] sm:$0xf]
      %v7601 = vld [vmem:[#allocation6 + $0x3ac] sm:$0xf]
      %v7602 = vld [vmem:[#allocation6 + $0x3b0] sm:$0xf]
      %v7603 = vld [vmem:[#allocation6 + $0x3b4] sm:$0xf]
      %v7604 = vld [vmem:[#allocation6 + $0x3b8] sm:$0xf]
      %v7605 = vld [vmem:[#allocation6 + $0x3bc] sm:$0xf]
      %v7606 = vld [vmem:[#allocation6 + $0x3c0] sm:$0xf]
      %v7607 = vld [vmem:[#allocation6 + $0x3c4] sm:$0xf]
      %v7608 = vld [vmem:[#allocation6 + $0x3c8] sm:$0xf]
      %v7609 = vld [vmem:[#allocation6 + $0x3cc] sm:$0xf]
      %v7610 = vld [vmem:[#allocation6 + $0x3d0] sm:$0xf]
      %v7611 = vld [vmem:[#allocation6 + $0x3d4] sm:$0xf]
      %v7612 = vld [vmem:[#allocation6 + $0x3d8] sm:$0xf]
      %v7613 = vld [vmem:[#allocation6 + $0x3dc] sm:$0xf]
      %v7614 = vld [vmem:[#allocation6 + $0x3e0] sm:$0xf]
      %v7615 = vld [vmem:[#allocation6 + $0x3e4] sm:$0xf]
      %v7616 = vld [vmem:[#allocation6 + $0x3e8] sm:$0xf]
      %v7617 = vld [vmem:[#allocation6 + $0x3ec] sm:$0xf]
      %v7618 = vld [vmem:[#allocation6 + $0x3f0] sm:$0xf]
      %v7619 = vld [vmem:[#allocation6 + $0x3f4] sm:$0xf]
      %v7620 = vld [vmem:[#allocation6 + $0x3f8] sm:$0xf]
      %v7621 = vld [vmem:[#allocation6 + $0x3fc] sm:$0xf]
      %v7750 = vunpack.c.l.b16 %v7238
      %v7751 = vunpack.c.h.b16 %v7238
      %v7752 = vunpack.c.l.b16 %v7239
      %v7753 = vunpack.c.h.b16 %v7239
      %v7754 = vunpack.c.l.b16 %v7240
      %v7755 = vunpack.c.h.b16 %v7240
      %v7756 = vunpack.c.l.b16 %v7241
      %v7757 = vunpack.c.h.b16 %v7241
      %v7758 = vunpack.c.l.b16 %v7242
      %v7759 = vunpack.c.h.b16 %v7242
      %v7760 = vunpack.c.l.b16 %v7243
      %v7761 = vunpack.c.h.b16 %v7243
      %v7762 = vunpack.c.l.b16 %v7244
      %v7763 = vunpack.c.h.b16 %v7244
      %v7764 = vunpack.c.l.b16 %v7245
      %v7765 = vunpack.c.h.b16 %v7245
      %v7766 = vunpack.c.l.b16 %v7246
      %v7767 = vunpack.c.h.b16 %v7246
      %v7768 = vunpack.c.l.b16 %v7247
      %v7769 = vunpack.c.h.b16 %v7247
      %v7770 = vunpack.c.l.b16 %v7248
      %v7771 = vunpack.c.h.b16 %v7248
      %v7772 = vunpack.c.l.b16 %v7249
      %v7773 = vunpack.c.h.b16 %v7249
      %v7774 = vunpack.c.l.b16 %v7250
      %v7775 = vunpack.c.h.b16 %v7250
      %v7776 = vunpack.c.l.b16 %v7251
      %v7777 = vunpack.c.h.b16 %v7251
      %v7778 = vunpack.c.l.b16 %v7252
      %v7779 = vunpack.c.h.b16 %v7252
      %v7780 = vunpack.c.l.b16 %v7253
      %v7781 = vunpack.c.h.b16 %v7253
      %v7782 = vunpack.c.l.b16 %v7254
      %v7783 = vunpack.c.h.b16 %v7254
      %v7784 = vunpack.c.l.b16 %v7255
      %v7785 = vunpack.c.h.b16 %v7255
      %v7786 = vunpack.c.l.b16 %v7256
      %v7787 = vunpack.c.h.b16 %v7256
      %v7788 = vunpack.c.l.b16 %v7257
      %v7789 = vunpack.c.h.b16 %v7257
      %v7790 = vunpack.c.l.b16 %v7258
      %v7791 = vunpack.c.h.b16 %v7258
      %v7792 = vunpack.c.l.b16 %v7259
      %v7793 = vunpack.c.h.b16 %v7259
      %v7794 = vunpack.c.l.b16 %v7260
      %v7795 = vunpack.c.h.b16 %v7260
      %v7796 = vunpack.c.l.b16 %v7261
      %v7797 = vunpack.c.h.b16 %v7261
      %v7798 = vunpack.c.l.b16 %v7262
      %v7799 = vunpack.c.h.b16 %v7262
      %v7800 = vunpack.c.l.b16 %v7263
      %v7801 = vunpack.c.h.b16 %v7263
      %v7802 = vunpack.c.l.b16 %v7264
      %v7803 = vunpack.c.h.b16 %v7264
      %v7804 = vunpack.c.l.b16 %v7265
      %v7805 = vunpack.c.h.b16 %v7265
      %v7806 = vunpack.c.l.b16 %v7266
      %v7807 = vunpack.c.h.b16 %v7266
      %v7808 = vunpack.c.l.b16 %v7267
      %v7809 = vunpack.c.h.b16 %v7267
      %v7810 = vunpack.c.l.b16 %v7268
      %v7811 = vunpack.c.h.b16 %v7268
      %v7812 = vunpack.c.l.b16 %v7269
      %v7813 = vunpack.c.h.b16 %v7269
      %v7814 = vunpack.c.l.b16 %v7270
      %v7815 = vunpack.c.h.b16 %v7270
      %v7816 = vunpack.c.l.b16 %v7271
      %v7817 = vunpack.c.h.b16 %v7271
      %v7818 = vunpack.c.l.b16 %v7272
      %v7819 = vunpack.c.h.b16 %v7272
      %v7820 = vunpack.c.l.b16 %v7273
      %v7821 = vunpack.c.h.b16 %v7273
      %v7822 = vunpack.c.l.b16 %v7274
      %v7823 = vunpack.c.h.b16 %v7274
      %v7824 = vunpack.c.l.b16 %v7275
      %v7825 = vunpack.c.h.b16 %v7275
      %v7826 = vunpack.c.l.b16 %v7276
      %v7827 = vunpack.c.h.b16 %v7276
      %v7828 = vunpack.c.l.b16 %v7277
      %v7829 = vunpack.c.h.b16 %v7277
      %v7830 = vunpack.c.l.b16 %v7278
      %v7831 = vunpack.c.h.b16 %v7278
      %v7832 = vunpack.c.l.b16 %v7279
      %v7833 = vunpack.c.h.b16 %v7279
      %v7834 = vunpack.c.l.b16 %v7280
      %v7835 = vunpack.c.h.b16 %v7280
      %v7836 = vunpack.c.l.b16 %v7281
      %v7837 = vunpack.c.h.b16 %v7281
      %v7838 = vunpack.c.l.b16 %v7282
      %v7839 = vunpack.c.h.b16 %v7282
      %v7840 = vunpack.c.l.b16 %v7283
      %v7841 = vunpack.c.h.b16 %v7283
      %v7842 = vunpack.c.l.b16 %v7284
      %v7843 = vunpack.c.h.b16 %v7284
      %v7844 = vunpack.c.l.b16 %v7285
      %v7845 = vunpack.c.h.b16 %v7285
      %v7846 = vunpack.c.l.b16 %v7286
      %v7847 = vunpack.c.h.b16 %v7286
      %v7848 = vunpack.c.l.b16 %v7287
      %v7849 = vunpack.c.h.b16 %v7287
      %v7850 = vunpack.c.l.b16 %v7288
      %v7851 = vunpack.c.h.b16 %v7288
      %v7852 = vunpack.c.l.b16 %v7289
      %v7853 = vunpack.c.h.b16 %v7289
      %v7854 = vunpack.c.l.b16 %v7290
      %v7855 = vunpack.c.h.b16 %v7290
      %v7856 = vunpack.c.l.b16 %v7291
      %v7857 = vunpack.c.h.b16 %v7291
      %v7858 = vunpack.c.l.b16 %v7292
      %v7859 = vunpack.c.h.b16 %v7292
      %v7860 = vunpack.c.l.b16 %v7293
      %v7861 = vunpack.c.h.b16 %v7293
      %v7862 = vunpack.c.l.b16 %v7294
      %v7863 = vunpack.c.h.b16 %v7294
      %v7864 = vunpack.c.l.b16 %v7295
      %v7865 = vunpack.c.h.b16 %v7295
      %v7866 = vunpack.c.l.b16 %v7296
      %v7867 = vunpack.c.h.b16 %v7296
      %v7868 = vunpack.c.l.b16 %v7297
      %v7869 = vunpack.c.h.b16 %v7297
      %v7870 = vunpack.c.l.b16 %v7298
      %v7871 = vunpack.c.h.b16 %v7298
      %v7872 = vunpack.c.l.b16 %v7299
      %v7873 = vunpack.c.h.b16 %v7299
      %v7874 = vunpack.c.l.b16 %v7300
      %v7875 = vunpack.c.h.b16 %v7300
      %v7876 = vunpack.c.l.b16 %v7301
      %v7877 = vunpack.c.h.b16 %v7301
      %v7878 = vunpack.c.l.b16 %v7302
      %v7879 = vunpack.c.h.b16 %v7302
      %v7880 = vunpack.c.l.b16 %v7303
      %v7881 = vunpack.c.h.b16 %v7303
      %v7882 = vunpack.c.l.b16 %v7304
      %v7883 = vunpack.c.h.b16 %v7304
      %v7884 = vunpack.c.l.b16 %v7305
      %v7885 = vunpack.c.h.b16 %v7305
      %v7886 = vunpack.c.l.b16 %v7306
      %v7887 = vunpack.c.h.b16 %v7306
      %v7888 = vunpack.c.l.b16 %v7307
      %v7889 = vunpack.c.h.b16 %v7307
      %v7890 = vunpack.c.l.b16 %v7308
      %v7891 = vunpack.c.h.b16 %v7308
      %v7892 = vunpack.c.l.b16 %v7309
      %v7893 = vunpack.c.h.b16 %v7309
      %v7894 = vunpack.c.l.b16 %v7310
      %v7895 = vunpack.c.h.b16 %v7310
      %v7896 = vunpack.c.l.b16 %v7311
      %v7897 = vunpack.c.h.b16 %v7311
      %v7898 = vunpack.c.l.b16 %v7312
      %v7899 = vunpack.c.h.b16 %v7312
      %v7900 = vunpack.c.l.b16 %v7313
      %v7901 = vunpack.c.h.b16 %v7313
      %v7902 = vunpack.c.l.b16 %v7314
      %v7903 = vunpack.c.h.b16 %v7314
      %v7904 = vunpack.c.l.b16 %v7315
      %v7905 = vunpack.c.h.b16 %v7315
      %v7906 = vunpack.c.l.b16 %v7316
      %v7907 = vunpack.c.h.b16 %v7316
      %v7908 = vunpack.c.l.b16 %v7317
      %v7909 = vunpack.c.h.b16 %v7317
      %v7910 = vunpack.c.l.b16 %v7318
      %v7911 = vunpack.c.h.b16 %v7318
      %v7912 = vunpack.c.l.b16 %v7319
      %v7913 = vunpack.c.h.b16 %v7319
      %v7914 = vunpack.c.l.b16 %v7320
      %v7915 = vunpack.c.h.b16 %v7320
      %v7916 = vunpack.c.l.b16 %v7321
      %v7917 = vunpack.c.h.b16 %v7321
      %v7918 = vunpack.c.l.b16 %v7322
      %v7919 = vunpack.c.h.b16 %v7322
      %v7920 = vunpack.c.l.b16 %v7323
      %v7921 = vunpack.c.h.b16 %v7323
      %v7922 = vunpack.c.l.b16 %v7324
      %v7923 = vunpack.c.h.b16 %v7324
      %v7924 = vunpack.c.l.b16 %v7325
      %v7925 = vunpack.c.h.b16 %v7325
      %v7926 = vunpack.c.l.b16 %v7326
      %v7927 = vunpack.c.h.b16 %v7326
      %v7928 = vunpack.c.l.b16 %v7327
      %v7929 = vunpack.c.h.b16 %v7327
      %v7930 = vunpack.c.l.b16 %v7328
      %v7931 = vunpack.c.h.b16 %v7328
      %v7932 = vunpack.c.l.b16 %v7329
      %v7933 = vunpack.c.h.b16 %v7329
      %v7934 = vunpack.c.l.b16 %v7330
      %v7935 = vunpack.c.h.b16 %v7330
      %v7936 = vunpack.c.l.b16 %v7331
      %v7937 = vunpack.c.h.b16 %v7331
      %v7938 = vunpack.c.l.b16 %v7332
      %v7939 = vunpack.c.h.b16 %v7332
      %v7940 = vunpack.c.l.b16 %v7333
      %v7941 = vunpack.c.h.b16 %v7333
      %v7942 = vunpack.c.l.b16 %v7334
      %v7943 = vunpack.c.h.b16 %v7334
      %v7944 = vunpack.c.l.b16 %v7335
      %v7945 = vunpack.c.h.b16 %v7335
      %v7946 = vunpack.c.l.b16 %v7336
      %v7947 = vunpack.c.h.b16 %v7336
      %v7948 = vunpack.c.l.b16 %v7337
      %v7949 = vunpack.c.h.b16 %v7337
      %v7950 = vunpack.c.l.b16 %v7338
      %v7951 = vunpack.c.h.b16 %v7338
      %v7952 = vunpack.c.l.b16 %v7339
      %v7953 = vunpack.c.h.b16 %v7339
      %v7954 = vunpack.c.l.b16 %v7340
      %v7955 = vunpack.c.h.b16 %v7340
      %v7956 = vunpack.c.l.b16 %v7341
      %v7957 = vunpack.c.h.b16 %v7341
      %v7958 = vunpack.c.l.b16 %v7342
      %v7959 = vunpack.c.h.b16 %v7342
      %v7960 = vunpack.c.l.b16 %v7343
      %v7961 = vunpack.c.h.b16 %v7343
      %v7962 = vunpack.c.l.b16 %v7344
      %v7963 = vunpack.c.h.b16 %v7344
      %v7964 = vunpack.c.l.b16 %v7345
      %v7965 = vunpack.c.h.b16 %v7345
      %v7966 = vunpack.c.l.b16 %v7346
      %v7967 = vunpack.c.h.b16 %v7346
      %v7968 = vunpack.c.l.b16 %v7347
      %v7969 = vunpack.c.h.b16 %v7347
      %v7970 = vunpack.c.l.b16 %v7348
      %v7971 = vunpack.c.h.b16 %v7348
      %v7972 = vunpack.c.l.b16 %v7349
      %v7973 = vunpack.c.h.b16 %v7349
      %v7974 = vunpack.c.l.b16 %v7350
      %v7975 = vunpack.c.h.b16 %v7350
      %v7976 = vunpack.c.l.b16 %v7351
      %v7977 = vunpack.c.h.b16 %v7351
      %v7978 = vunpack.c.l.b16 %v7352
      %v7979 = vunpack.c.h.b16 %v7352
      %v7980 = vunpack.c.l.b16 %v7353
      %v7981 = vunpack.c.h.b16 %v7353
      %v7982 = vunpack.c.l.b16 %v7354
      %v7983 = vunpack.c.h.b16 %v7354
      %v7984 = vunpack.c.l.b16 %v7355
      %v7985 = vunpack.c.h.b16 %v7355
      %v7986 = vunpack.c.l.b16 %v7356
      %v7987 = vunpack.c.h.b16 %v7356
      %v7988 = vunpack.c.l.b16 %v7357
      %v7989 = vunpack.c.h.b16 %v7357
      %v7990 = vunpack.c.l.b16 %v7358
      %v7991 = vunpack.c.h.b16 %v7358
      %v7992 = vunpack.c.l.b16 %v7359
      %v7993 = vunpack.c.h.b16 %v7359
      %v7994 = vunpack.c.l.b16 %v7360
      %v7995 = vunpack.c.h.b16 %v7360
      %v7996 = vunpack.c.l.b16 %v7361
      %v7997 = vunpack.c.h.b16 %v7361
      %v7998 = vunpack.c.l.b16 %v7362
      %v7999 = vunpack.c.h.b16 %v7362
      %v8000 = vunpack.c.l.b16 %v7363
      %v8001 = vunpack.c.h.b16 %v7363
      %v8002 = vunpack.c.l.b16 %v7364
      %v8003 = vunpack.c.h.b16 %v7364
      %v8004 = vunpack.c.l.b16 %v7365
      %v8005 = vunpack.c.h.b16 %v7365
      %v8006 = vpack.c.b16 %v7766, %v7750
      %v8007 = vpack.c.b16 %v7767, %v7751
      %v8008 = vpack.c.b16 %v7768, %v7752
      %v8009 = vpack.c.b16 %v7769, %v7753
      %v8010 = vpack.c.b16 %v7770, %v7754
      %v8011 = vpack.c.b16 %v7771, %v7755
      %v8012 = vpack.c.b16 %v7772, %v7756
      %v8013 = vpack.c.b16 %v7773, %v7757
      %v8014 = vpack.c.b16 %v7774, %v7758
      %v8015 = vpack.c.b16 %v7775, %v7759
      %v8016 = vpack.c.b16 %v7776, %v7760
      %v8017 = vpack.c.b16 %v7777, %v7761
      %v8018 = vpack.c.b16 %v7778, %v7762
      %v8019 = vpack.c.b16 %v7779, %v7763
      %v8020 = vpack.c.b16 %v7780, %v7764
      %v8021 = vpack.c.b16 %v7781, %v7765
      %v8022 = vpack.c.b16 %v7798, %v7782
      %v8023 = vpack.c.b16 %v7799, %v7783
      %v8024 = vpack.c.b16 %v7800, %v7784
      %v8025 = vpack.c.b16 %v7801, %v7785
      %v8026 = vpack.c.b16 %v7802, %v7786
      %v8027 = vpack.c.b16 %v7803, %v7787
      %v8028 = vpack.c.b16 %v7804, %v7788
      %v8029 = vpack.c.b16 %v7805, %v7789
      %v8030 = vpack.c.b16 %v7806, %v7790
      %v8031 = vpack.c.b16 %v7807, %v7791
      %v8032 = vpack.c.b16 %v7808, %v7792
      %v8033 = vpack.c.b16 %v7809, %v7793
      %v8034 = vpack.c.b16 %v7810, %v7794
      %v8035 = vpack.c.b16 %v7811, %v7795
      %v8036 = vpack.c.b16 %v7812, %v7796
      %v8037 = vpack.c.b16 %v7813, %v7797
      %v8038 = vpack.c.b16 %v7830, %v7814
      %v8039 = vpack.c.b16 %v7831, %v7815
      %v8040 = vpack.c.b16 %v7832, %v7816
      %v8041 = vpack.c.b16 %v7833, %v7817
      %v8042 = vpack.c.b16 %v7834, %v7818
      %v8043 = vpack.c.b16 %v7835, %v7819
      %v8044 = vpack.c.b16 %v7836, %v7820
      %v8045 = vpack.c.b16 %v7837, %v7821
      %v8046 = vpack.c.b16 %v7838, %v7822
      %v8047 = vpack.c.b16 %v7839, %v7823
      %v8048 = vpack.c.b16 %v7840, %v7824
      %v8049 = vpack.c.b16 %v7841, %v7825
      %v8050 = vpack.c.b16 %v7842, %v7826
      %v8051 = vpack.c.b16 %v7843, %v7827
      %v8052 = vpack.c.b16 %v7844, %v7828
      %v8053 = vpack.c.b16 %v7845, %v7829
      %v8054 = vpack.c.b16 %v7862, %v7846
      %v8055 = vpack.c.b16 %v7863, %v7847
      %v8056 = vpack.c.b16 %v7864, %v7848
      %v8057 = vpack.c.b16 %v7865, %v7849
      %v8058 = vpack.c.b16 %v7866, %v7850
      %v8059 = vpack.c.b16 %v7867, %v7851
      %v8060 = vpack.c.b16 %v7868, %v7852
      %v8061 = vpack.c.b16 %v7869, %v7853
      %v8062 = vpack.c.b16 %v7870, %v7854
      %v8063 = vpack.c.b16 %v7871, %v7855
      %v8064 = vpack.c.b16 %v7872, %v7856
      %v8065 = vpack.c.b16 %v7873, %v7857
      %v8066 = vpack.c.b16 %v7874, %v7858
      %v8067 = vpack.c.b16 %v7875, %v7859
      %v8068 = vpack.c.b16 %v7876, %v7860
      %v8069 = vpack.c.b16 %v7877, %v7861
      %v8070 = vpack.c.b16 %v7894, %v7878
      %v8071 = vpack.c.b16 %v7895, %v7879
      %v8072 = vpack.c.b16 %v7896, %v7880
      %v8073 = vpack.c.b16 %v7897, %v7881
      %v8074 = vpack.c.b16 %v7898, %v7882
      %v8075 = vpack.c.b16 %v7899, %v7883
      %v8076 = vpack.c.b16 %v7900, %v7884
      %v8077 = vpack.c.b16 %v7901, %v7885
      %v8078 = vpack.c.b16 %v7902, %v7886
      %v8079 = vpack.c.b16 %v7903, %v7887
      %v8080 = vpack.c.b16 %v7904, %v7888
      %v8081 = vpack.c.b16 %v7905, %v7889
      %v8082 = vpack.c.b16 %v7906, %v7890
      %v8083 = vpack.c.b16 %v7907, %v7891
      %v8084 = vpack.c.b16 %v7908, %v7892
      %v8085 = vpack.c.b16 %v7909, %v7893
      %v8086 = vpack.c.b16 %v7926, %v7910
      %v8087 = vpack.c.b16 %v7927, %v7911
      %v8088 = vpack.c.b16 %v7928, %v7912
      %v8089 = vpack.c.b16 %v7929, %v7913
      %v8090 = vpack.c.b16 %v7930, %v7914
      %v8091 = vpack.c.b16 %v7931, %v7915
      %v8092 = vpack.c.b16 %v7932, %v7916
      %v8093 = vpack.c.b16 %v7933, %v7917
      %v8094 = vpack.c.b16 %v7934, %v7918
      %v8095 = vpack.c.b16 %v7935, %v7919
      %v8096 = vpack.c.b16 %v7936, %v7920
      %v8097 = vpack.c.b16 %v7937, %v7921
      %v8098 = vpack.c.b16 %v7938, %v7922
      %v8099 = vpack.c.b16 %v7939, %v7923
      %v8100 = vpack.c.b16 %v7940, %v7924
      %v8101 = vpack.c.b16 %v7941, %v7925
      %v8102 = vpack.c.b16 %v7958, %v7942
      %v8103 = vpack.c.b16 %v7959, %v7943
      %v8104 = vpack.c.b16 %v7960, %v7944
      %v8105 = vpack.c.b16 %v7961, %v7945
      %v8106 = vpack.c.b16 %v7962, %v7946
      %v8107 = vpack.c.b16 %v7963, %v7947
      %v8108 = vpack.c.b16 %v7964, %v7948
      %v8109 = vpack.c.b16 %v7965, %v7949
      %v8110 = vpack.c.b16 %v7966, %v7950
      %v8111 = vpack.c.b16 %v7967, %v7951
      %v8112 = vpack.c.b16 %v7968, %v7952
      %v8113 = vpack.c.b16 %v7969, %v7953
      %v8114 = vpack.c.b16 %v7970, %v7954
      %v8115 = vpack.c.b16 %v7971, %v7955
      %v8116 = vpack.c.b16 %v7972, %v7956
      %v8117 = vpack.c.b16 %v7973, %v7957
      %v8118 = vpack.c.b16 %v7990, %v7974
      %v8119 = vpack.c.b16 %v7991, %v7975
      %v8120 = vpack.c.b16 %v7992, %v7976
      %v8121 = vpack.c.b16 %v7993, %v7977
      %v8122 = vpack.c.b16 %v7994, %v7978
      %v8123 = vpack.c.b16 %v7995, %v7979
      %v8124 = vpack.c.b16 %v7996, %v7980
      %v8125 = vpack.c.b16 %v7997, %v7981
      %v8126 = vpack.c.b16 %v7998, %v7982
      %v8127 = vpack.c.b16 %v7999, %v7983
      %v8128 = vpack.c.b16 %v8000, %v7984
      %v8129 = vpack.c.b16 %v8001, %v7985
      %v8130 = vpack.c.b16 %v8002, %v7986
      %v8131 = vpack.c.b16 %v8003, %v7987
      %v8132 = vpack.c.b16 %v8004, %v7988
      %v8133 = vpack.c.b16 %v8005, %v7989
      %v8518 = vunpack.c.l.b16 %v7366
      %v8519 = vunpack.c.l.b16 %v7367
      %v8520 = vunpack.c.l.b16 %v7368
      %v8521 = vunpack.c.l.b16 %v7369
      %v8522 = vunpack.c.l.b16 %v7370
      %v8523 = vunpack.c.l.b16 %v7371
      %v8524 = vunpack.c.l.b16 %v7372
      %v8525 = vunpack.c.l.b16 %v7373
      %v8526 = vunpack.c.l.b16 %v7374
      %v8527 = vunpack.c.l.b16 %v7375
      %v8528 = vunpack.c.l.b16 %v7376
      %v8529 = vunpack.c.l.b16 %v7377
      %v8530 = vunpack.c.l.b16 %v7378
      %v8531 = vunpack.c.l.b16 %v7379
      %v8532 = vunpack.c.l.b16 %v7380
      %v8533 = vunpack.c.l.b16 %v7381
      %v8534 = vunpack.c.l.b16 %v7382
      %v8535 = vunpack.c.l.b16 %v7383
      %v8536 = vunpack.c.l.b16 %v7384
      %v8537 = vunpack.c.l.b16 %v7385
      %v8538 = vunpack.c.l.b16 %v7386
      %v8539 = vunpack.c.l.b16 %v7387
      %v8540 = vunpack.c.l.b16 %v7388
      %v8541 = vunpack.c.l.b16 %v7389
      %v8542 = vunpack.c.l.b16 %v7390
      %v8543 = vunpack.c.l.b16 %v7391
      %v8544 = vunpack.c.l.b16 %v7392
      %v8545 = vunpack.c.l.b16 %v7393
      %v8546 = vunpack.c.l.b16 %v7394
      %v8547 = vunpack.c.l.b16 %v7395
      %v8548 = vunpack.c.l.b16 %v7396
      %v8549 = vunpack.c.l.b16 %v7397
      %v8550 = vunpack.c.l.b16 %v7398
      %v8551 = vunpack.c.l.b16 %v7399
      %v8552 = vunpack.c.l.b16 %v7400
      %v8553 = vunpack.c.l.b16 %v7401
      %v8554 = vunpack.c.l.b16 %v7402
      %v8555 = vunpack.c.l.b16 %v7403
      %v8556 = vunpack.c.l.b16 %v7404
      %v8557 = vunpack.c.l.b16 %v7405
      %v8558 = vunpack.c.l.b16 %v7406
      %v8559 = vunpack.c.l.b16 %v7407
      %v8560 = vunpack.c.l.b16 %v7408
      %v8561 = vunpack.c.l.b16 %v7409
      %v8562 = vunpack.c.l.b16 %v7410
      %v8563 = vunpack.c.l.b16 %v7411
      %v8564 = vunpack.c.l.b16 %v7412
      %v8565 = vunpack.c.l.b16 %v7413
      %v8566 = vunpack.c.l.b16 %v7414
      %v8567 = vunpack.c.l.b16 %v7415
      %v8568 = vunpack.c.l.b16 %v7416
      %v8569 = vunpack.c.l.b16 %v7417
      %v8570 = vunpack.c.l.b16 %v7418
      %v8571 = vunpack.c.l.b16 %v7419
      %v8572 = vunpack.c.l.b16 %v7420
      %v8573 = vunpack.c.l.b16 %v7421
      %v8574 = vunpack.c.l.b16 %v7422
      %v8575 = vunpack.c.l.b16 %v7423
      %v8576 = vunpack.c.l.b16 %v7424
      %v8577 = vunpack.c.l.b16 %v7425
      %v8578 = vunpack.c.l.b16 %v7426
      %v8579 = vunpack.c.l.b16 %v7427
      %v8580 = vunpack.c.l.b16 %v7428
      %v8581 = vunpack.c.l.b16 %v7429
      %v8582 = vunpack.c.l.b16 %v7430
      %v8583 = vunpack.c.l.b16 %v7431
      %v8584 = vunpack.c.l.b16 %v7432
      %v8585 = vunpack.c.l.b16 %v7433
      %v8586 = vunpack.c.l.b16 %v7434
      %v8587 = vunpack.c.l.b16 %v7435
      %v8588 = vunpack.c.l.b16 %v7436
      %v8589 = vunpack.c.l.b16 %v7437
      %v8590 = vunpack.c.l.b16 %v7438
      %v8591 = vunpack.c.l.b16 %v7439
      %v8592 = vunpack.c.l.b16 %v7440
      %v8593 = vunpack.c.l.b16 %v7441
      %v8594 = vunpack.c.l.b16 %v7442
      %v8595 = vunpack.c.l.b16 %v7443
      %v8596 = vunpack.c.l.b16 %v7444
      %v8597 = vunpack.c.l.b16 %v7445
      %v8598 = vunpack.c.l.b16 %v7446
      %v8599 = vunpack.c.l.b16 %v7447
      %v8600 = vunpack.c.l.b16 %v7448
      %v8601 = vunpack.c.l.b16 %v7449
      %v8602 = vunpack.c.l.b16 %v7450
      %v8603 = vunpack.c.l.b16 %v7451
      %v8604 = vunpack.c.l.b16 %v7452
      %v8605 = vunpack.c.l.b16 %v7453
      %v8606 = vunpack.c.l.b16 %v7454
      %v8607 = vunpack.c.l.b16 %v7455
      %v8608 = vunpack.c.l.b16 %v7456
      %v8609 = vunpack.c.l.b16 %v7457
      %v8610 = vunpack.c.l.b16 %v7458
      %v8611 = vunpack.c.l.b16 %v7459
      %v8612 = vunpack.c.l.b16 %v7460
      %v8613 = vunpack.c.l.b16 %v7461
      %v8614 = vunpack.c.l.b16 %v7462
      %v8615 = vunpack.c.l.b16 %v7463
      %v8616 = vunpack.c.l.b16 %v7464
      %v8617 = vunpack.c.l.b16 %v7465
      %v8618 = vunpack.c.l.b16 %v7466
      %v8619 = vunpack.c.l.b16 %v7467
      %v8620 = vunpack.c.l.b16 %v7468
      %v8621 = vunpack.c.l.b16 %v7469
      %v8622 = vunpack.c.l.b16 %v7470
      %v8623 = vunpack.c.l.b16 %v7471
      %v8624 = vunpack.c.l.b16 %v7472
      %v8625 = vunpack.c.l.b16 %v7473
      %v8626 = vunpack.c.l.b16 %v7474
      %v8627 = vunpack.c.l.b16 %v7475
      %v8628 = vunpack.c.l.b16 %v7476
      %v8629 = vunpack.c.l.b16 %v7477
      %v8630 = vunpack.c.l.b16 %v7478
      %v8631 = vunpack.c.l.b16 %v7479
      %v8632 = vunpack.c.l.b16 %v7480
      %v8633 = vunpack.c.l.b16 %v7481
      %v8634 = vunpack.c.l.b16 %v7482
      %v8635 = vunpack.c.l.b16 %v7483
      %v8636 = vunpack.c.l.b16 %v7484
      %v8637 = vunpack.c.l.b16 %v7485
      %v8638 = vunpack.c.l.b16 %v7486
      %v8639 = vunpack.c.l.b16 %v7487
      %v8640 = vunpack.c.l.b16 %v7488
      %v8641 = vunpack.c.l.b16 %v7489
      %v8642 = vunpack.c.l.b16 %v7490
      %v8643 = vunpack.c.l.b16 %v7491
      %v8644 = vunpack.c.l.b16 %v7492
      %v8645 = vunpack.c.l.b16 %v7493
      %v8646 = vunpack.c.l.b16 %v7494
      %v8647 = vunpack.c.l.b16 %v7495
      %v8648 = vunpack.c.l.b16 %v7496
      %v8649 = vunpack.c.l.b16 %v7497
      %v8650 = vunpack.c.l.b16 %v7498
      %v8651 = vunpack.c.l.b16 %v7499
      %v8652 = vunpack.c.l.b16 %v7500
      %v8653 = vunpack.c.l.b16 %v7501
      %v8654 = vunpack.c.l.b16 %v7502
      %v8655 = vunpack.c.l.b16 %v7503
      %v8656 = vunpack.c.l.b16 %v7504
      %v8657 = vunpack.c.l.b16 %v7505
      %v8658 = vunpack.c.l.b16 %v7506
      %v8659 = vunpack.c.l.b16 %v7507
      %v8660 = vunpack.c.l.b16 %v7508
      %v8661 = vunpack.c.l.b16 %v7509
      %v8662 = vunpack.c.l.b16 %v7510
      %v8663 = vunpack.c.l.b16 %v7511
      %v8664 = vunpack.c.l.b16 %v7512
      %v8665 = vunpack.c.l.b16 %v7513
      %v8666 = vunpack.c.l.b16 %v7514
      %v8667 = vunpack.c.l.b16 %v7515
      %v8668 = vunpack.c.l.b16 %v7516
      %v8669 = vunpack.c.l.b16 %v7517
      %v8670 = vunpack.c.l.b16 %v7518
      %v8671 = vunpack.c.l.b16 %v7519
      %v8672 = vunpack.c.l.b16 %v7520
      %v8673 = vunpack.c.l.b16 %v7521
      %v8674 = vunpack.c.l.b16 %v7522
      %v8675 = vunpack.c.l.b16 %v7523
      %v8676 = vunpack.c.l.b16 %v7524
      %v8677 = vunpack.c.l.b16 %v7525
      %v8678 = vunpack.c.l.b16 %v7526
      %v8679 = vunpack.c.l.b16 %v7527
      %v8680 = vunpack.c.l.b16 %v7528
      %v8681 = vunpack.c.l.b16 %v7529
      %v8682 = vunpack.c.l.b16 %v7530
      %v8683 = vunpack.c.l.b16 %v7531
      %v8684 = vunpack.c.l.b16 %v7532
      %v8685 = vunpack.c.l.b16 %v7533
      %v8686 = vunpack.c.l.b16 %v7534
      %v8687 = vunpack.c.l.b16 %v7535
      %v8688 = vunpack.c.l.b16 %v7536
      %v8689 = vunpack.c.l.b16 %v7537
      %v8690 = vunpack.c.l.b16 %v7538
      %v8691 = vunpack.c.l.b16 %v7539
      %v8692 = vunpack.c.l.b16 %v7540
      %v8693 = vunpack.c.l.b16 %v7541
      %v8694 = vunpack.c.l.b16 %v7542
      %v8695 = vunpack.c.l.b16 %v7543
      %v8696 = vunpack.c.l.b16 %v7544
      %v8697 = vunpack.c.l.b16 %v7545
      %v8698 = vunpack.c.l.b16 %v7546
      %v8699 = vunpack.c.l.b16 %v7547
      %v8700 = vunpack.c.l.b16 %v7548
      %v8701 = vunpack.c.l.b16 %v7549
      %v8702 = vunpack.c.l.b16 %v7550
      %v8703 = vunpack.c.l.b16 %v7551
      %v8704 = vunpack.c.l.b16 %v7552
      %v8705 = vunpack.c.l.b16 %v7553
      %v8706 = vunpack.c.l.b16 %v7554
      %v8707 = vunpack.c.l.b16 %v7555
      %v8708 = vunpack.c.l.b16 %v7556
      %v8709 = vunpack.c.l.b16 %v7557
      %v8710 = vunpack.c.l.b16 %v7558
      %v8711 = vunpack.c.l.b16 %v7559
      %v8712 = vunpack.c.l.b16 %v7560
      %v8713 = vunpack.c.l.b16 %v7561
      %v8714 = vunpack.c.l.b16 %v7562
      %v8715 = vunpack.c.l.b16 %v7563
      %v8716 = vunpack.c.l.b16 %v7564
      %v8717 = vunpack.c.l.b16 %v7565
      %v8718 = vunpack.c.l.b16 %v7566
      %v8719 = vunpack.c.l.b16 %v7567
      %v8720 = vunpack.c.l.b16 %v7568
      %v8721 = vunpack.c.l.b16 %v7569
      %v8722 = vunpack.c.l.b16 %v7570
      %v8723 = vunpack.c.l.b16 %v7571
      %v8724 = vunpack.c.l.b16 %v7572
      %v8725 = vunpack.c.l.b16 %v7573
      %v8726 = vunpack.c.l.b16 %v7574
      %v8727 = vunpack.c.l.b16 %v7575
      %v8728 = vunpack.c.l.b16 %v7576
      %v8729 = vunpack.c.l.b16 %v7577
      %v8730 = vunpack.c.l.b16 %v7578
      %v8731 = vunpack.c.l.b16 %v7579
      %v8732 = vunpack.c.l.b16 %v7580
      %v8733 = vunpack.c.l.b16 %v7581
      %v8734 = vunpack.c.l.b16 %v7582
      %v8735 = vunpack.c.l.b16 %v7583
      %v8736 = vunpack.c.l.b16 %v7584
      %v8737 = vunpack.c.l.b16 %v7585
      %v8738 = vunpack.c.l.b16 %v7586
      %v8739 = vunpack.c.l.b16 %v7587
      %v8740 = vunpack.c.l.b16 %v7588
      %v8741 = vunpack.c.l.b16 %v7589
      %v8742 = vunpack.c.l.b16 %v7590
      %v8743 = vunpack.c.l.b16 %v7591
      %v8744 = vunpack.c.l.b16 %v7592
      %v8745 = vunpack.c.l.b16 %v7593
      %v8746 = vunpack.c.l.b16 %v7594
      %v8747 = vunpack.c.l.b16 %v7595
      %v8748 = vunpack.c.l.b16 %v7596
      %v8749 = vunpack.c.l.b16 %v7597
      %v8750 = vunpack.c.l.b16 %v7598
      %v8751 = vunpack.c.l.b16 %v7599
      %v8752 = vunpack.c.l.b16 %v7600
      %v8753 = vunpack.c.l.b16 %v7601
      %v8754 = vunpack.c.l.b16 %v7602
      %v8755 = vunpack.c.l.b16 %v7603
      %v8756 = vunpack.c.l.b16 %v7604
      %v8757 = vunpack.c.l.b16 %v7605
      %v8758 = vunpack.c.l.b16 %v7606
      %v8759 = vunpack.c.l.b16 %v7607
      %v8760 = vunpack.c.l.b16 %v7608
      %v8761 = vunpack.c.l.b16 %v7609
      %v8762 = vunpack.c.l.b16 %v7610
      %v8763 = vunpack.c.l.b16 %v7611
      %v8764 = vunpack.c.l.b16 %v7612
      %v8765 = vunpack.c.l.b16 %v7613
      %v8766 = vunpack.c.l.b16 %v7614
      %v8767 = vunpack.c.l.b16 %v7615
      %v8768 = vunpack.c.l.b16 %v7616
      %v8769 = vunpack.c.l.b16 %v7617
      %v8770 = vunpack.c.l.b16 %v7618
      %v8771 = vunpack.c.l.b16 %v7619
      %v8772 = vunpack.c.l.b16 %v7620
      %v8773 = vunpack.c.l.b16 %v7621
      %v8774 = vpack.c.b16 %v8519, %v8518
      %v8775 = vpack.c.b16 %v8521, %v8520
      %v8776 = vpack.c.b16 %v8523, %v8522
      %v8777 = vpack.c.b16 %v8525, %v8524
      %v8778 = vpack.c.b16 %v8527, %v8526
      %v8779 = vpack.c.b16 %v8529, %v8528
      %v8780 = vpack.c.b16 %v8531, %v8530
      %v8781 = vpack.c.b16 %v8533, %v8532
      %v8782 = vpack.c.b16 %v8535, %v8534
      %v8783 = vpack.c.b16 %v8537, %v8536
      %v8784 = vpack.c.b16 %v8539, %v8538
      %v8785 = vpack.c.b16 %v8541, %v8540
      %v8786 = vpack.c.b16 %v8543, %v8542
      %v8787 = vpack.c.b16 %v8545, %v8544
      %v8788 = vpack.c.b16 %v8547, %v8546
      %v8789 = vpack.c.b16 %v8549, %v8548
      %v8790 = vpack.c.b16 %v8551, %v8550
      %v8791 = vpack.c.b16 %v8553, %v8552
      %v8792 = vpack.c.b16 %v8555, %v8554
      %v8793 = vpack.c.b16 %v8557, %v8556
      %v8794 = vpack.c.b16 %v8559, %v8558
      %v8795 = vpack.c.b16 %v8561, %v8560
      %v8796 = vpack.c.b16 %v8563, %v8562
      %v8797 = vpack.c.b16 %v8565, %v8564
      %v8798 = vpack.c.b16 %v8567, %v8566
      %v8799 = vpack.c.b16 %v8569, %v8568
      %v8800 = vpack.c.b16 %v8571, %v8570
      %v8801 = vpack.c.b16 %v8573, %v8572
      %v8802 = vpack.c.b16 %v8575, %v8574
      %v8803 = vpack.c.b16 %v8577, %v8576
      %v8804 = vpack.c.b16 %v8579, %v8578
      %v8805 = vpack.c.b16 %v8581, %v8580
      %v8806 = vpack.c.b16 %v8583, %v8582
      %v8807 = vpack.c.b16 %v8585, %v8584
      %v8808 = vpack.c.b16 %v8587, %v8586
      %v8809 = vpack.c.b16 %v8589, %v8588
      %v8810 = vpack.c.b16 %v8591, %v8590
      %v8811 = vpack.c.b16 %v8593, %v8592
      %v8812 = vpack.c.b16 %v8595, %v8594
      %v8813 = vpack.c.b16 %v8597, %v8596
      %v8814 = vpack.c.b16 %v8599, %v8598
      %v8815 = vpack.c.b16 %v8601, %v8600
      %v8816 = vpack.c.b16 %v8603, %v8602
      %v8817 = vpack.c.b16 %v8605, %v8604
      %v8818 = vpack.c.b16 %v8607, %v8606
      %v8819 = vpack.c.b16 %v8609, %v8608
      %v8820 = vpack.c.b16 %v8611, %v8610
      %v8821 = vpack.c.b16 %v8613, %v8612
      %v8822 = vpack.c.b16 %v8615, %v8614
      %v8823 = vpack.c.b16 %v8617, %v8616
      %v8824 = vpack.c.b16 %v8619, %v8618
      %v8825 = vpack.c.b16 %v8621, %v8620
      %v8826 = vpack.c.b16 %v8623, %v8622
      %v8827 = vpack.c.b16 %v8625, %v8624
      %v8828 = vpack.c.b16 %v8627, %v8626
      %v8829 = vpack.c.b16 %v8629, %v8628
      %v8830 = vpack.c.b16 %v8631, %v8630
      %v8831 = vpack.c.b16 %v8633, %v8632
      %v8832 = vpack.c.b16 %v8635, %v8634
      %v8833 = vpack.c.b16 %v8637, %v8636
      %v8834 = vpack.c.b16 %v8639, %v8638
      %v8835 = vpack.c.b16 %v8641, %v8640
      %v8836 = vpack.c.b16 %v8643, %v8642
      %v8837 = vpack.c.b16 %v8645, %v8644
      %v8838 = vpack.c.b16 %v8647, %v8646
      %v8839 = vpack.c.b16 %v8649, %v8648
      %v8840 = vpack.c.b16 %v8651, %v8650
      %v8841 = vpack.c.b16 %v8653, %v8652
      %v8842 = vpack.c.b16 %v8655, %v8654
      %v8843 = vpack.c.b16 %v8657, %v8656
      %v8844 = vpack.c.b16 %v8659, %v8658
      %v8845 = vpack.c.b16 %v8661, %v8660
      %v8846 = vpack.c.b16 %v8663, %v8662
      %v8847 = vpack.c.b16 %v8665, %v8664
      %v8848 = vpack.c.b16 %v8667, %v8666
      %v8849 = vpack.c.b16 %v8669, %v8668
      %v8850 = vpack.c.b16 %v8671, %v8670
      %v8851 = vpack.c.b16 %v8673, %v8672
      %v8852 = vpack.c.b16 %v8675, %v8674
      %v8853 = vpack.c.b16 %v8677, %v8676
      %v8854 = vpack.c.b16 %v8679, %v8678
      %v8855 = vpack.c.b16 %v8681, %v8680
      %v8856 = vpack.c.b16 %v8683, %v8682
      %v8857 = vpack.c.b16 %v8685, %v8684
      %v8858 = vpack.c.b16 %v8687, %v8686
      %v8859 = vpack.c.b16 %v8689, %v8688
      %v8860 = vpack.c.b16 %v8691, %v8690
      %v8861 = vpack.c.b16 %v8693, %v8692
      %v8862 = vpack.c.b16 %v8695, %v8694
      %v8863 = vpack.c.b16 %v8697, %v8696
      %v8864 = vpack.c.b16 %v8699, %v8698
      %v8865 = vpack.c.b16 %v8701, %v8700
      %v8866 = vpack.c.b16 %v8703, %v8702
      %v8867 = vpack.c.b16 %v8705, %v8704
      %v8868 = vpack.c.b16 %v8707, %v8706
      %v8869 = vpack.c.b16 %v8709, %v8708
      %v8870 = vpack.c.b16 %v8711, %v8710
      %v8871 = vpack.c.b16 %v8713, %v8712
      %v8872 = vpack.c.b16 %v8715, %v8714
      %v8873 = vpack.c.b16 %v8717, %v8716
      %v8874 = vpack.c.b16 %v8719, %v8718
      %v8875 = vpack.c.b16 %v8721, %v8720
      %v8876 = vpack.c.b16 %v8723, %v8722
      %v8877 = vpack.c.b16 %v8725, %v8724
      %v8878 = vpack.c.b16 %v8727, %v8726
      %v8879 = vpack.c.b16 %v8729, %v8728
      %v8880 = vpack.c.b16 %v8731, %v8730
      %v8881 = vpack.c.b16 %v8733, %v8732
      %v8882 = vpack.c.b16 %v8735, %v8734
      %v8883 = vpack.c.b16 %v8737, %v8736
      %v8884 = vpack.c.b16 %v8739, %v8738
      %v8885 = vpack.c.b16 %v8741, %v8740
      %v8886 = vpack.c.b16 %v8743, %v8742
      %v8887 = vpack.c.b16 %v8745, %v8744
      %v8888 = vpack.c.b16 %v8747, %v8746
      %v8889 = vpack.c.b16 %v8749, %v8748
      %v8890 = vpack.c.b16 %v8751, %v8750
      %v8891 = vpack.c.b16 %v8753, %v8752
      %v8892 = vpack.c.b16 %v8755, %v8754
      %v8893 = vpack.c.b16 %v8757, %v8756
      %v8894 = vpack.c.b16 %v8759, %v8758
      %v8895 = vpack.c.b16 %v8761, %v8760
      %v8896 = vpack.c.b16 %v8763, %v8762
      %v8897 = vpack.c.b16 %v8765, %v8764
      %v8898 = vpack.c.b16 %v8767, %v8766
      %v8899 = vpack.c.b16 %v8769, %v8768
      %v8900 = vpack.c.b16 %v8771, %v8770
      %v8901 = vpack.c.b16 %v8773, %v8772
      %9030 = vmatpush.bf16.msra.mxu0 %v8781
      %9031 = vmatpush.bf16.msra.mxu0 %v8780
      %9032 = vmatpush.bf16.msra.mxu0 %v8779
      %9033 = vmatpush.bf16.msra.mxu0 %v8778
      %9034 = vmatpush.bf16.msra.mxu0 %v8777
      %9035 = vmatpush.bf16.msra.mxu0 %v8776
      %9036 = vmatpush.bf16.msra.mxu0 %v8775
      %9037 = vmatpush.bf16.msra.mxu0 %v8774
      %9038 = vmatmul.bf16.gmra.mxu0 %v8006
      %v9039 = vpop.f32.mrf.mxu0
      %v9040 = vadd.f32 0.0, %v9039
      %v9041 = vpop.f32.mrf.mxu0
      %v9042 = vadd.f32 0.0, %v9041
      %9043 = vmatmul.bf16.gmra.mxu0 %v8022
      %v9044 = vpop.f32.mrf.mxu0
      %v9045 = vadd.f32 0.0, %v9044
      %v9046 = vpop.f32.mrf.mxu0
      %v9047 = vadd.f32 0.0, %v9046
      %9048 = vmatmul.bf16.gmra.mxu0 %v8038
      %v9049 = vpop.f32.mrf.mxu0
      %v9050 = vadd.f32 0.0, %v9049
      %v9051 = vpop.f32.mrf.mxu0
      %v9052 = vadd.f32 0.0, %v9051
      %9053 = vmatmul.bf16.gmra.mxu0 %v8054
      %v9054 = vpop.f32.mrf.mxu0
      %v9055 = vadd.f32 0.0, %v9054
      %v9056 = vpop.f32.mrf.mxu0
      %v9057 = vadd.f32 0.0, %v9056
      %9058 = vmatmul.bf16.gmra.mxu0 %v8070
      %v9059 = vpop.f32.mrf.mxu0
      %v9060 = vadd.f32 0.0, %v9059
      %v9061 = vpop.f32.mrf.mxu0
      %v9062 = vadd.f32 0.0, %v9061
      %9063 = vmatmul.bf16.gmra.mxu0 %v8086
      %v9064 = vpop.f32.mrf.mxu0
      %v9065 = vadd.f32 0.0, %v9064
      %v9066 = vpop.f32.mrf.mxu0
      %v9067 = vadd.f32 0.0, %v9066
      %9068 = vmatmul.bf16.gmra.mxu0 %v8102
      %v9069 = vpop.f32.mrf.mxu0
      %v9070 = vadd.f32 0.0, %v9069
      %v9071 = vpop.f32.mrf.mxu0
      %v9072 = vadd.f32 0.0, %v9071
      %9073 = vmatmul.bf16.gmra.mxu0 %v8118
      %v9074 = vpop.f32.mrf.mxu0
      %v9075 = vadd.f32 0.0, %v9074
      %v9076 = vpop.f32.mrf.mxu0
      %v9077 = vadd.f32 0.0, %v9076
      %9078 = vdwg.mxu0
      %9079 = vmatpush.bf16.msra.mxu0 %v8789
      %9080 = vmatpush.bf16.msra.mxu0 %v8788
      %9081 = vmatpush.bf16.msra.mxu0 %v8787
      %9082 = vmatpush.bf16.msra.mxu0 %v8786
      %9083 = vmatpush.bf16.msra.mxu0 %v8785
      %9084 = vmatpush.bf16.msra.mxu0 %v8784
      %9085 = vmatpush.bf16.msra.mxu0 %v8783
      %9086 = vmatpush.bf16.msra.mxu0 %v8782
      %9087 = vmatmul.bf16.gmra.mxu0 %v8007
      %v9088 = vpop.f32.mrf.mxu0
      %v9089 = vadd.f32 %v9040, %v9088
      %v9090 = vpop.f32.mrf.mxu0
      %v9091 = vadd.f32 %v9042, %v9090
      %9092 = vmatmul.bf16.gmra.mxu0 %v8023
      %v9093 = vpop.f32.mrf.mxu0
      %v9094 = vadd.f32 %v9045, %v9093
      %v9095 = vpop.f32.mrf.mxu0
      %v9096 = vadd.f32 %v9047, %v9095
      %9097 = vmatmul.bf16.gmra.mxu0 %v8039
      %v9098 = vpop.f32.mrf.mxu0
      %v9099 = vadd.f32 %v9050, %v9098
      %v9100 = vpop.f32.mrf.mxu0
      %v9101 = vadd.f32 %v9052, %v9100
      %9102 = vmatmul.bf16.gmra.mxu0 %v8055
      %v9103 = vpop.f32.mrf.mxu0
      %v9104 = vadd.f32 %v9055, %v9103
      %v9105 = vpop.f32.mrf.mxu0
      %v9106 = vadd.f32 %v9057, %v9105
      %9107 = vmatmul.bf16.gmra.mxu0 %v8071
      %v9108 = vpop.f32.mrf.mxu0
      %v9109 = vadd.f32 %v9060, %v9108
      %v9110 = vpop.f32.mrf.mxu0
      %v9111 = vadd.f32 %v9062, %v9110
      %9112 = vmatmul.bf16.gmra.mxu0 %v8087
      %v9113 = vpop.f32.mrf.mxu0
      %v9114 = vadd.f32 %v9065, %v9113
      %v9115 = vpop.f32.mrf.mxu0
      %v9116 = vadd.f32 %v9067, %v9115
      %9117 = vmatmul.bf16.gmra.mxu0 %v8103
      %v9118 = vpop.f32.mrf.mxu0
      %v9119 = vadd.f32 %v9070, %v9118
      %v9120 = vpop.f32.mrf.mxu0
      %v9121 = vadd.f32 %v9072, %v9120
      %9122 = vmatmul.bf16.gmra.mxu0 %v8119
      %v9123 = vpop.f32.mrf.mxu0
      %v9124 = vadd.f32 %v9075, %v9123
      %v9125 = vpop.f32.mrf.mxu0
      %v9126 = vadd.f32 %v9077, %v9125
      %9127 = vdwg.mxu0
      %9128 = vmatpush.bf16.msra.mxu0 %v8797
      %9129 = vmatpush.bf16.msra.mxu0 %v8796
      %9130 = vmatpush.bf16.msra.mxu0 %v8795
      %9131 = vmatpush.bf16.msra.mxu0 %v8794
      %9132 = vmatpush.bf16.msra.mxu0 %v8793
      %9133 = vmatpush.bf16.msra.mxu0 %v8792
      %9134 = vmatpush.bf16.msra.mxu0 %v8791
      %9135 = vmatpush.bf16.msra.mxu0 %v8790
      %9136 = vmatmul.bf16.gmra.mxu0 %v8008
      %v9137 = vpop.f32.mrf.mxu0
      %v9138 = vadd.f32 %v9089, %v9137
      %v9139 = vpop.f32.mrf.mxu0
      %v9140 = vadd.f32 %v9091, %v9139
      %9141 = vmatmul.bf16.gmra.mxu0 %v8024
      %v9142 = vpop.f32.mrf.mxu0
      %v9143 = vadd.f32 %v9094, %v9142
      %v9144 = vpop.f32.mrf.mxu0
      %v9145 = vadd.f32 %v9096, %v9144
      %9146 = vmatmul.bf16.gmra.mxu0 %v8040
      %v9147 = vpop.f32.mrf.mxu0
      %v9148 = vadd.f32 %v9099, %v9147
      %v9149 = vpop.f32.mrf.mxu0
      %v9150 = vadd.f32 %v9101, %v9149
      %9151 = vmatmul.bf16.gmra.mxu0 %v8056
      %v9152 = vpop.f32.mrf.mxu0
      %v9153 = vadd.f32 %v9104, %v9152
      %v9154 = vpop.f32.mrf.mxu0
      %v9155 = vadd.f32 %v9106, %v9154
      %9156 = vmatmul.bf16.gmra.mxu0 %v8072
      %v9157 = vpop.f32.mrf.mxu0
      %v9158 = vadd.f32 %v9109, %v9157
      %v9159 = vpop.f32.mrf.mxu0
      %v9160 = vadd.f32 %v9111, %v9159
      %9161 = vmatmul.bf16.gmra.mxu0 %v8088
      %v9162 = vpop.f32.mrf.mxu0
      %v9163 = vadd.f32 %v9114, %v9162
      %v9164 = vpop.f32.mrf.mxu0
      %v9165 = vadd.f32 %v9116, %v9164
      %9166 = vmatmul.bf16.gmra.mxu0 %v8104
      %v9167 = vpop.f32.mrf.mxu0
      %v9168 = vadd.f32 %v9119, %v9167
      %v9169 = vpop.f32.mrf.mxu0
      %v9170 = vadd.f32 %v9121, %v9169
      %9171 = vmatmul.bf16.gmra.mxu0 %v8120
      %v9172 = vpop.f32.mrf.mxu0
      %v9173 = vadd.f32 %v9124, %v9172
      %v9174 = vpop.f32.mrf.mxu0
      %v9175 = vadd.f32 %v9126, %v9174
      %9176 = vdwg.mxu0
      %9177 = vmatpush.bf16.msra.mxu0 %v8805
      %9178 = vmatpush.bf16.msra.mxu0 %v8804
      %9179 = vmatpush.bf16.msra.mxu0 %v8803
      %9180 = vmatpush.bf16.msra.mxu0 %v8802
      %9181 = vmatpush.bf16.msra.mxu0 %v8801
      %9182 = vmatpush.bf16.msra.mxu0 %v8800
      %9183 = vmatpush.bf16.msra.mxu0 %v8799
      %9184 = vmatpush.bf16.msra.mxu0 %v8798
      %9185 = vmatmul.bf16.gmra.mxu0 %v8009
      %v9186 = vpop.f32.mrf.mxu0
      %v9187 = vadd.f32 %v9138, %v9186
      %v9188 = vpop.f32.mrf.mxu0
      %v9189 = vadd.f32 %v9140, %v9188
      %9190 = vmatmul.bf16.gmra.mxu0 %v8025
      %v9191 = vpop.f32.mrf.mxu0
      %v9192 = vadd.f32 %v9143, %v9191
      %v9193 = vpop.f32.mrf.mxu0
      %v9194 = vadd.f32 %v9145, %v9193
      %9195 = vmatmul.bf16.gmra.mxu0 %v8041
      %v9196 = vpop.f32.mrf.mxu0
      %v9197 = vadd.f32 %v9148, %v9196
      %v9198 = vpop.f32.mrf.mxu0
      %v9199 = vadd.f32 %v9150, %v9198
      %9200 = vmatmul.bf16.gmra.mxu0 %v8057
      %v9201 = vpop.f32.mrf.mxu0
      %v9202 = vadd.f32 %v9153, %v9201
      %v9203 = vpop.f32.mrf.mxu0
      %v9204 = vadd.f32 %v9155, %v9203
      %9205 = vmatmul.bf16.gmra.mxu0 %v8073
      %v9206 = vpop.f32.mrf.mxu0
      %v9207 = vadd.f32 %v9158, %v9206
      %v9208 = vpop.f32.mrf.mxu0
      %v9209 = vadd.f32 %v9160, %v9208
      %9210 = vmatmul.bf16.gmra.mxu0 %v8089
      %v9211 = vpop.f32.mrf.mxu0
      %v9212 = vadd.f32 %v9163, %v9211
      %v9213 = vpop.f32.mrf.mxu0
      %v9214 = vadd.f32 %v9165, %v9213
      %9215 = vmatmul.bf16.gmra.mxu0 %v8105
      %v9216 = vpop.f32.mrf.mxu0
      %v9217 = vadd.f32 %v9168, %v9216
      %v9218 = vpop.f32.mrf.mxu0
      %v9219 = vadd.f32 %v9170, %v9218
      %9220 = vmatmul.bf16.gmra.mxu0 %v8121
      %v9221 = vpop.f32.mrf.mxu0
      %v9222 = vadd.f32 %v9173, %v9221
      %v9223 = vpop.f32.mrf.mxu0
      %v9224 = vadd.f32 %v9175, %v9223
      %9225 = vdwg.mxu0
      %9226 = vmatpush.bf16.msra.mxu0 %v8813
      %9227 = vmatpush.bf16.msra.mxu0 %v8812
      %9228 = vmatpush.bf16.msra.mxu0 %v8811
      %9229 = vmatpush.bf16.msra.mxu0 %v8810
      %9230 = vmatpush.bf16.msra.mxu0 %v8809
      %9231 = vmatpush.bf16.msra.mxu0 %v8808
      %9232 = vmatpush.bf16.msra.mxu0 %v8807
      %9233 = vmatpush.bf16.msra.mxu0 %v8806
      %9234 = vmatmul.bf16.gmra.mxu0 %v8010
      %v9235 = vpop.f32.mrf.mxu0
      %v9236 = vadd.f32 %v9187, %v9235
      %v9237 = vpop.f32.mrf.mxu0
      %v9238 = vadd.f32 %v9189, %v9237
      %9239 = vmatmul.bf16.gmra.mxu0 %v8026
      %v9240 = vpop.f32.mrf.mxu0
      %v9241 = vadd.f32 %v9192, %v9240
      %v9242 = vpop.f32.mrf.mxu0
      %v9243 = vadd.f32 %v9194, %v9242
      %9244 = vmatmul.bf16.gmra.mxu0 %v8042
      %v9245 = vpop.f32.mrf.mxu0
      %v9246 = vadd.f32 %v9197, %v9245
      %v9247 = vpop.f32.mrf.mxu0
      %v9248 = vadd.f32 %v9199, %v9247
      %9249 = vmatmul.bf16.gmra.mxu0 %v8058
      %v9250 = vpop.f32.mrf.mxu0
      %v9251 = vadd.f32 %v9202, %v9250
      %v9252 = vpop.f32.mrf.mxu0
      %v9253 = vadd.f32 %v9204, %v9252
      %9254 = vmatmul.bf16.gmra.mxu0 %v8074
      %v9255 = vpop.f32.mrf.mxu0
      %v9256 = vadd.f32 %v9207, %v9255
      %v9257 = vpop.f32.mrf.mxu0
      %v9258 = vadd.f32 %v9209, %v9257
      %9259 = vmatmul.bf16.gmra.mxu0 %v8090
      %v9260 = vpop.f32.mrf.mxu0
      %v9261 = vadd.f32 %v9212, %v9260
      %v9262 = vpop.f32.mrf.mxu0
      %v9263 = vadd.f32 %v9214, %v9262
      %9264 = vmatmul.bf16.gmra.mxu0 %v8106
      %v9265 = vpop.f32.mrf.mxu0
      %v9266 = vadd.f32 %v9217, %v9265
      %v9267 = vpop.f32.mrf.mxu0
      %v9268 = vadd.f32 %v9219, %v9267
      %9269 = vmatmul.bf16.gmra.mxu0 %v8122
      %v9270 = vpop.f32.mrf.mxu0
      %v9271 = vadd.f32 %v9222, %v9270
      %v9272 = vpop.f32.mrf.mxu0
      %v9273 = vadd.f32 %v9224, %v9272
      %9274 = vdwg.mxu0
      %9275 = vmatpush.bf16.msra.mxu0 %v8821
      %9276 = vmatpush.bf16.msra.mxu0 %v8820
      %9277 = vmatpush.bf16.msra.mxu0 %v8819
      %9278 = vmatpush.bf16.msra.mxu0 %v8818
      %9279 = vmatpush.bf16.msra.mxu0 %v8817
      %9280 = vmatpush.bf16.msra.mxu0 %v8816
      %9281 = vmatpush.bf16.msra.mxu0 %v8815
      %9282 = vmatpush.bf16.msra.mxu0 %v8814
      %9283 = vmatmul.bf16.gmra.mxu0 %v8011
      %v9284 = vpop.f32.mrf.mxu0
      %v9285 = vadd.f32 %v9236, %v9284
      %v9286 = vpop.f32.mrf.mxu0
      %v9287 = vadd.f32 %v9238, %v9286
      %9288 = vmatmul.bf16.gmra.mxu0 %v8027
      %v9289 = vpop.f32.mrf.mxu0
      %v9290 = vadd.f32 %v9241, %v9289
      %v9291 = vpop.f32.mrf.mxu0
      %v9292 = vadd.f32 %v9243, %v9291
      %9293 = vmatmul.bf16.gmra.mxu0 %v8043
      %v9294 = vpop.f32.mrf.mxu0
      %v9295 = vadd.f32 %v9246, %v9294
      %v9296 = vpop.f32.mrf.mxu0
      %v9297 = vadd.f32 %v9248, %v9296
      %9298 = vmatmul.bf16.gmra.mxu0 %v8059
      %v9299 = vpop.f32.mrf.mxu0
      %v9300 = vadd.f32 %v9251, %v9299
      %v9301 = vpop.f32.mrf.mxu0
      %v9302 = vadd.f32 %v9253, %v9301
      %9303 = vmatmul.bf16.gmra.mxu0 %v8075
      %v9304 = vpop.f32.mrf.mxu0
      %v9305 = vadd.f32 %v9256, %v9304
      %v9306 = vpop.f32.mrf.mxu0
      %v9307 = vadd.f32 %v9258, %v9306
      %9308 = vmatmul.bf16.gmra.mxu0 %v8091
      %v9309 = vpop.f32.mrf.mxu0
      %v9310 = vadd.f32 %v9261, %v9309
      %v9311 = vpop.f32.mrf.mxu0
      %v9312 = vadd.f32 %v9263, %v9311
      %9313 = vmatmul.bf16.gmra.mxu0 %v8107
      %v9314 = vpop.f32.mrf.mxu0
      %v9315 = vadd.f32 %v9266, %v9314
      %v9316 = vpop.f32.mrf.mxu0
      %v9317 = vadd.f32 %v9268, %v9316
      %9318 = vmatmul.bf16.gmra.mxu0 %v8123
      %v9319 = vpop.f32.mrf.mxu0
      %v9320 = vadd.f32 %v9271, %v9319
      %v9321 = vpop.f32.mrf.mxu0
      %v9322 = vadd.f32 %v9273, %v9321
      %9323 = vdwg.mxu0
      %9324 = vmatpush.bf16.msra.mxu0 %v8829
      %9325 = vmatpush.bf16.msra.mxu0 %v8828
      %9326 = vmatpush.bf16.msra.mxu0 %v8827
      %9327 = vmatpush.bf16.msra.mxu0 %v8826
      %9328 = vmatpush.bf16.msra.mxu0 %v8825
      %9329 = vmatpush.bf16.msra.mxu0 %v8824
      %9330 = vmatpush.bf16.msra.mxu0 %v8823
      %9331 = vmatpush.bf16.msra.mxu0 %v8822
      %9332 = vmatmul.bf16.gmra.mxu0 %v8012
      %v9333 = vpop.f32.mrf.mxu0
      %v9334 = vadd.f32 %v9285, %v9333
      %v9335 = vpop.f32.mrf.mxu0
      %v9336 = vadd.f32 %v9287, %v9335
      %9337 = vmatmul.bf16.gmra.mxu0 %v8028
      %v9338 = vpop.f32.mrf.mxu0
      %v9339 = vadd.f32 %v9290, %v9338
      %v9340 = vpop.f32.mrf.mxu0
      %v9341 = vadd.f32 %v9292, %v9340
      %9342 = vmatmul.bf16.gmra.mxu0 %v8044
      %v9343 = vpop.f32.mrf.mxu0
      %v9344 = vadd.f32 %v9295, %v9343
      %v9345 = vpop.f32.mrf.mxu0
      %v9346 = vadd.f32 %v9297, %v9345
      %9347 = vmatmul.bf16.gmra.mxu0 %v8060
      %v9348 = vpop.f32.mrf.mxu0
      %v9349 = vadd.f32 %v9300, %v9348
      %v9350 = vpop.f32.mrf.mxu0
      %v9351 = vadd.f32 %v9302, %v9350
      %9352 = vmatmul.bf16.gmra.mxu0 %v8076
      %v9353 = vpop.f32.mrf.mxu0
      %v9354 = vadd.f32 %v9305, %v9353
      %v9355 = vpop.f32.mrf.mxu0
      %v9356 = vadd.f32 %v9307, %v9355
      %9357 = vmatmul.bf16.gmra.mxu0 %v8092
      %v9358 = vpop.f32.mrf.mxu0
      %v9359 = vadd.f32 %v9310, %v9358
      %v9360 = vpop.f32.mrf.mxu0
      %v9361 = vadd.f32 %v9312, %v9360
      %9362 = vmatmul.bf16.gmra.mxu0 %v8108
      %v9363 = vpop.f32.mrf.mxu0
      %v9364 = vadd.f32 %v9315, %v9363
      %v9365 = vpop.f32.mrf.mxu0
      %v9366 = vadd.f32 %v9317, %v9365
      %9367 = vmatmul.bf16.gmra.mxu0 %v8124
      %v9368 = vpop.f32.mrf.mxu0
      %v9369 = vadd.f32 %v9320, %v9368
      %v9370 = vpop.f32.mrf.mxu0
      %v9371 = vadd.f32 %v9322, %v9370
      %9372 = vdwg.mxu0
      %9373 = vmatpush.bf16.msra.mxu0 %v8837
      %9374 = vmatpush.bf16.msra.mxu0 %v8836
      %9375 = vmatpush.bf16.msra.mxu0 %v8835
      %9376 = vmatpush.bf16.msra.mxu0 %v8834
      %9377 = vmatpush.bf16.msra.mxu0 %v8833
      %9378 = vmatpush.bf16.msra.mxu0 %v8832
      %9379 = vmatpush.bf16.msra.mxu0 %v8831
      %9380 = vmatpush.bf16.msra.mxu0 %v8830
      %9381 = vmatmul.bf16.gmra.mxu0 %v8013
      %v9382 = vpop.f32.mrf.mxu0
      %v9383 = vadd.f32 %v9334, %v9382
      %v9384 = vpop.f32.mrf.mxu0
      %v9385 = vadd.f32 %v9336, %v9384
      %9386 = vmatmul.bf16.gmra.mxu0 %v8029
      %v9387 = vpop.f32.mrf.mxu0
      %v9388 = vadd.f32 %v9339, %v9387
      %v9389 = vpop.f32.mrf.mxu0
      %v9390 = vadd.f32 %v9341, %v9389
      %9391 = vmatmul.bf16.gmra.mxu0 %v8045
      %v9392 = vpop.f32.mrf.mxu0
      %v9393 = vadd.f32 %v9344, %v9392
      %v9394 = vpop.f32.mrf.mxu0
      %v9395 = vadd.f32 %v9346, %v9394
      %9396 = vmatmul.bf16.gmra.mxu0 %v8061
      %v9397 = vpop.f32.mrf.mxu0
      %v9398 = vadd.f32 %v9349, %v9397
      %v9399 = vpop.f32.mrf.mxu0
      %v9400 = vadd.f32 %v9351, %v9399
      %9401 = vmatmul.bf16.gmra.mxu0 %v8077
      %v9402 = vpop.f32.mrf.mxu0
      %v9403 = vadd.f32 %v9354, %v9402
      %v9404 = vpop.f32.mrf.mxu0
      %v9405 = vadd.f32 %v9356, %v9404
      %9406 = vmatmul.bf16.gmra.mxu0 %v8093
      %v9407 = vpop.f32.mrf.mxu0
      %v9408 = vadd.f32 %v9359, %v9407
      %v9409 = vpop.f32.mrf.mxu0
      %v9410 = vadd.f32 %v9361, %v9409
      %9411 = vmatmul.bf16.gmra.mxu0 %v8109
      %v9412 = vpop.f32.mrf.mxu0
      %v9413 = vadd.f32 %v9364, %v9412
      %v9414 = vpop.f32.mrf.mxu0
      %v9415 = vadd.f32 %v9366, %v9414
      %9416 = vmatmul.bf16.gmra.mxu0 %v8125
      %v9417 = vpop.f32.mrf.mxu0
      %v9418 = vadd.f32 %v9369, %v9417
      %v9419 = vpop.f32.mrf.mxu0
      %v9420 = vadd.f32 %v9371, %v9419
      %9421 = vdwg.mxu0
      %9422 = vmatpush.bf16.msra.mxu0 %v8845
      %9423 = vmatpush.bf16.msra.mxu0 %v8844
      %9424 = vmatpush.bf16.msra.mxu0 %v8843
      %9425 = vmatpush.bf16.msra.mxu0 %v8842
      %9426 = vmatpush.bf16.msra.mxu0 %v8841
      %9427 = vmatpush.bf16.msra.mxu0 %v8840
      %9428 = vmatpush.bf16.msra.mxu0 %v8839
      %9429 = vmatpush.bf16.msra.mxu0 %v8838
      %9430 = vmatmul.bf16.gmra.mxu0 %v8014
      %v9431 = vpop.f32.mrf.mxu0
      %v9432 = vadd.f32 %v9383, %v9431
      %v9433 = vpop.f32.mrf.mxu0
      %v9434 = vadd.f32 %v9385, %v9433
      %9435 = vmatmul.bf16.gmra.mxu0 %v8030
      %v9436 = vpop.f32.mrf.mxu0
      %v9437 = vadd.f32 %v9388, %v9436
      %v9438 = vpop.f32.mrf.mxu0
      %v9439 = vadd.f32 %v9390, %v9438
      %9440 = vmatmul.bf16.gmra.mxu0 %v8046
      %v9441 = vpop.f32.mrf.mxu0
      %v9442 = vadd.f32 %v9393, %v9441
      %v9443 = vpop.f32.mrf.mxu0
      %v9444 = vadd.f32 %v9395, %v9443
      %9445 = vmatmul.bf16.gmra.mxu0 %v8062
      %v9446 = vpop.f32.mrf.mxu0
      %v9447 = vadd.f32 %v9398, %v9446
      %v9448 = vpop.f32.mrf.mxu0
      %v9449 = vadd.f32 %v9400, %v9448
      %9450 = vmatmul.bf16.gmra.mxu0 %v8078
      %v9451 = vpop.f32.mrf.mxu0
      %v9452 = vadd.f32 %v9403, %v9451
      %v9453 = vpop.f32.mrf.mxu0
      %v9454 = vadd.f32 %v9405, %v9453
      %9455 = vmatmul.bf16.gmra.mxu0 %v8094
      %v9456 = vpop.f32.mrf.mxu0
      %v9457 = vadd.f32 %v9408, %v9456
      %v9458 = vpop.f32.mrf.mxu0
      %v9459 = vadd.f32 %v9410, %v9458
      %9460 = vmatmul.bf16.gmra.mxu0 %v8110
      %v9461 = vpop.f32.mrf.mxu0
      %v9462 = vadd.f32 %v9413, %v9461
      %v9463 = vpop.f32.mrf.mxu0
      %v9464 = vadd.f32 %v9415, %v9463
      %9465 = vmatmul.bf16.gmra.mxu0 %v8126
      %v9466 = vpop.f32.mrf.mxu0
      %v9467 = vadd.f32 %v9418, %v9466
      %v9468 = vpop.f32.mrf.mxu0
      %v9469 = vadd.f32 %v9420, %v9468
      %9470 = vdwg.mxu0
      %9471 = vmatpush.bf16.msra.mxu0 %v8853
      %9472 = vmatpush.bf16.msra.mxu0 %v8852
      %9473 = vmatpush.bf16.msra.mxu0 %v8851
      %9474 = vmatpush.bf16.msra.mxu0 %v8850
      %9475 = vmatpush.bf16.msra.mxu0 %v8849
      %9476 = vmatpush.bf16.msra.mxu0 %v8848
      %9477 = vmatpush.bf16.msra.mxu0 %v8847
      %9478 = vmatpush.bf16.msra.mxu0 %v8846
      %9479 = vmatmul.bf16.gmra.mxu0 %v8015
      %v9480 = vpop.f32.mrf.mxu0
      %v9481 = vadd.f32 %v9432, %v9480
      %v9482 = vpop.f32.mrf.mxu0
      %v9483 = vadd.f32 %v9434, %v9482
      %9484 = vmatmul.bf16.gmra.mxu0 %v8031
      %v9485 = vpop.f32.mrf.mxu0
      %v9486 = vadd.f32 %v9437, %v9485
      %v9487 = vpop.f32.mrf.mxu0
      %v9488 = vadd.f32 %v9439, %v9487
      %9489 = vmatmul.bf16.gmra.mxu0 %v8047
      %v9490 = vpop.f32.mrf.mxu0
      %v9491 = vadd.f32 %v9442, %v9490
      %v9492 = vpop.f32.mrf.mxu0
      %v9493 = vadd.f32 %v9444, %v9492
      %9494 = vmatmul.bf16.gmra.mxu0 %v8063
      %v9495 = vpop.f32.mrf.mxu0
      %v9496 = vadd.f32 %v9447, %v9495
      %v9497 = vpop.f32.mrf.mxu0
      %v9498 = vadd.f32 %v9449, %v9497
      %9499 = vmatmul.bf16.gmra.mxu0 %v8079
      %v9500 = vpop.f32.mrf.mxu0
      %v9501 = vadd.f32 %v9452, %v9500
      %v9502 = vpop.f32.mrf.mxu0
      %v9503 = vadd.f32 %v9454, %v9502
      %9504 = vmatmul.bf16.gmra.mxu0 %v8095
      %v9505 = vpop.f32.mrf.mxu0
      %v9506 = vadd.f32 %v9457, %v9505
      %v9507 = vpop.f32.mrf.mxu0
      %v9508 = vadd.f32 %v9459, %v9507
      %9509 = vmatmul.bf16.gmra.mxu0 %v8111
      %v9510 = vpop.f32.mrf.mxu0
      %v9511 = vadd.f32 %v9462, %v9510
      %v9512 = vpop.f32.mrf.mxu0
      %v9513 = vadd.f32 %v9464, %v9512
      %9514 = vmatmul.bf16.gmra.mxu0 %v8127
      %v9515 = vpop.f32.mrf.mxu0
      %v9516 = vadd.f32 %v9467, %v9515
      %v9517 = vpop.f32.mrf.mxu0
      %v9518 = vadd.f32 %v9469, %v9517
      %9519 = vdwg.mxu0
      %9520 = vmatpush.bf16.msra.mxu0 %v8861
      %9521 = vmatpush.bf16.msra.mxu0 %v8860
      %9522 = vmatpush.bf16.msra.mxu0 %v8859
      %9523 = vmatpush.bf16.msra.mxu0 %v8858
      %9524 = vmatpush.bf16.msra.mxu0 %v8857
      %9525 = vmatpush.bf16.msra.mxu0 %v8856
      %9526 = vmatpush.bf16.msra.mxu0 %v8855
      %9527 = vmatpush.bf16.msra.mxu0 %v8854
      %9528 = vmatmul.bf16.gmra.mxu0 %v8016
      %v9529 = vpop.f32.mrf.mxu0
      %v9530 = vadd.f32 %v9481, %v9529
      %v9531 = vpop.f32.mrf.mxu0
      %v9532 = vadd.f32 %v9483, %v9531
      %9533 = vmatmul.bf16.gmra.mxu0 %v8032
      %v9534 = vpop.f32.mrf.mxu0
      %v9535 = vadd.f32 %v9486, %v9534
      %v9536 = vpop.f32.mrf.mxu0
      %v9537 = vadd.f32 %v9488, %v9536
      %9538 = vmatmul.bf16.gmra.mxu0 %v8048
      %v9539 = vpop.f32.mrf.mxu0
      %v9540 = vadd.f32 %v9491, %v9539
      %v9541 = vpop.f32.mrf.mxu0
      %v9542 = vadd.f32 %v9493, %v9541
      %9543 = vmatmul.bf16.gmra.mxu0 %v8064
      %v9544 = vpop.f32.mrf.mxu0
      %v9545 = vadd.f32 %v9496, %v9544
      %v9546 = vpop.f32.mrf.mxu0
      %v9547 = vadd.f32 %v9498, %v9546
      %9548 = vmatmul.bf16.gmra.mxu0 %v8080
      %v9549 = vpop.f32.mrf.mxu0
      %v9550 = vadd.f32 %v9501, %v9549
      %v9551 = vpop.f32.mrf.mxu0
      %v9552 = vadd.f32 %v9503, %v9551
      %9553 = vmatmul.bf16.gmra.mxu0 %v8096
      %v9554 = vpop.f32.mrf.mxu0
      %v9555 = vadd.f32 %v9506, %v9554
      %v9556 = vpop.f32.mrf.mxu0
      %v9557 = vadd.f32 %v9508, %v9556
      %9558 = vmatmul.bf16.gmra.mxu0 %v8112
      %v9559 = vpop.f32.mrf.mxu0
      %v9560 = vadd.f32 %v9511, %v9559
      %v9561 = vpop.f32.mrf.mxu0
      %v9562 = vadd.f32 %v9513, %v9561
      %9563 = vmatmul.bf16.gmra.mxu0 %v8128
      %v9564 = vpop.f32.mrf.mxu0
      %v9565 = vadd.f32 %v9516, %v9564
      %v9566 = vpop.f32.mrf.mxu0
      %v9567 = vadd.f32 %v9518, %v9566
      %9568 = vdwg.mxu0
      %9569 = vmatpush.bf16.msra.mxu0 %v8869
      %9570 = vmatpush.bf16.msra.mxu0 %v8868
      %9571 = vmatpush.bf16.msra.mxu0 %v8867
      %9572 = vmatpush.bf16.msra.mxu0 %v8866
      %9573 = vmatpush.bf16.msra.mxu0 %v8865
      %9574 = vmatpush.bf16.msra.mxu0 %v8864
      %9575 = vmatpush.bf16.msra.mxu0 %v8863
      %9576 = vmatpush.bf16.msra.mxu0 %v8862
      %9577 = vmatmul.bf16.gmra.mxu0 %v8017
      %v9578 = vpop.f32.mrf.mxu0
      %v9579 = vadd.f32 %v9530, %v9578
      %v9580 = vpop.f32.mrf.mxu0
      %v9581 = vadd.f32 %v9532, %v9580
      %9582 = vmatmul.bf16.gmra.mxu0 %v8033
      %v9583 = vpop.f32.mrf.mxu0
      %v9584 = vadd.f32 %v9535, %v9583
      %v9585 = vpop.f32.mrf.mxu0
      %v9586 = vadd.f32 %v9537, %v9585
      %9587 = vmatmul.bf16.gmra.mxu0 %v8049
      %v9588 = vpop.f32.mrf.mxu0
      %v9589 = vadd.f32 %v9540, %v9588
      %v9590 = vpop.f32.mrf.mxu0
      %v9591 = vadd.f32 %v9542, %v9590
      %9592 = vmatmul.bf16.gmra.mxu0 %v8065
      %v9593 = vpop.f32.mrf.mxu0
      %v9594 = vadd.f32 %v9545, %v9593
      %v9595 = vpop.f32.mrf.mxu0
      %v9596 = vadd.f32 %v9547, %v9595
      %9597 = vmatmul.bf16.gmra.mxu0 %v8081
      %v9598 = vpop.f32.mrf.mxu0
      %v9599 = vadd.f32 %v9550, %v9598
      %v9600 = vpop.f32.mrf.mxu0
      %v9601 = vadd.f32 %v9552, %v9600
      %9602 = vmatmul.bf16.gmra.mxu0 %v8097
      %v9603 = vpop.f32.mrf.mxu0
      %v9604 = vadd.f32 %v9555, %v9603
      %v9605 = vpop.f32.mrf.mxu0
      %v9606 = vadd.f32 %v9557, %v9605
      %9607 = vmatmul.bf16.gmra.mxu0 %v8113
      %v9608 = vpop.f32.mrf.mxu0
      %v9609 = vadd.f32 %v9560, %v9608
      %v9610 = vpop.f32.mrf.mxu0
      %v9611 = vadd.f32 %v9562, %v9610
      %9612 = vmatmul.bf16.gmra.mxu0 %v8129
      %v9613 = vpop.f32.mrf.mxu0
      %v9614 = vadd.f32 %v9565, %v9613
      %v9615 = vpop.f32.mrf.mxu0
      %v9616 = vadd.f32 %v9567, %v9615
      %9617 = vdwg.mxu0
      %9618 = vmatpush.bf16.msra.mxu0 %v8877
      %9619 = vmatpush.bf16.msra.mxu0 %v8876
      %9620 = vmatpush.bf16.msra.mxu0 %v8875
      %9621 = vmatpush.bf16.msra.mxu0 %v8874
      %9622 = vmatpush.bf16.msra.mxu0 %v8873
      %9623 = vmatpush.bf16.msra.mxu0 %v8872
      %9624 = vmatpush.bf16.msra.mxu0 %v8871
      %9625 = vmatpush.bf16.msra.mxu0 %v8870
      %9626 = vmatmul.bf16.gmra.mxu0 %v8018
      %v9627 = vpop.f32.mrf.mxu0
      %v9628 = vadd.f32 %v9579, %v9627
      %v9629 = vpop.f32.mrf.mxu0
      %v9630 = vadd.f32 %v9581, %v9629
      %9631 = vmatmul.bf16.gmra.mxu0 %v8034
      %v9632 = vpop.f32.mrf.mxu0
      %v9633 = vadd.f32 %v9584, %v9632
      %v9634 = vpop.f32.mrf.mxu0
      %v9635 = vadd.f32 %v9586, %v9634
      %9636 = vmatmul.bf16.gmra.mxu0 %v8050
      %v9637 = vpop.f32.mrf.mxu0
      %v9638 = vadd.f32 %v9589, %v9637
      %v9639 = vpop.f32.mrf.mxu0
      %v9640 = vadd.f32 %v9591, %v9639
      %9641 = vmatmul.bf16.gmra.mxu0 %v8066
      %v9642 = vpop.f32.mrf.mxu0
      %v9643 = vadd.f32 %v9594, %v9642
      %v9644 = vpop.f32.mrf.mxu0
      %v9645 = vadd.f32 %v9596, %v9644
      %9646 = vmatmul.bf16.gmra.mxu0 %v8082
      %v9647 = vpop.f32.mrf.mxu0
      %v9648 = vadd.f32 %v9599, %v9647
      %v9649 = vpop.f32.mrf.mxu0
      %v9650 = vadd.f32 %v9601, %v9649
      %9651 = vmatmul.bf16.gmra.mxu0 %v8098
      %v9652 = vpop.f32.mrf.mxu0
      %v9653 = vadd.f32 %v9604, %v9652
      %v9654 = vpop.f32.mrf.mxu0
      %v9655 = vadd.f32 %v9606, %v9654
      %9656 = vmatmul.bf16.gmra.mxu0 %v8114
      %v9657 = vpop.f32.mrf.mxu0
      %v9658 = vadd.f32 %v9609, %v9657
      %v9659 = vpop.f32.mrf.mxu0
      %v9660 = vadd.f32 %v9611, %v9659
      %9661 = vmatmul.bf16.gmra.mxu0 %v8130
      %v9662 = vpop.f32.mrf.mxu0
      %v9663 = vadd.f32 %v9614, %v9662
      %v9664 = vpop.f32.mrf.mxu0
      %v9665 = vadd.f32 %v9616, %v9664
      %9666 = vdwg.mxu0
      %9667 = vmatpush.bf16.msra.mxu0 %v8885
      %9668 = vmatpush.bf16.msra.mxu0 %v8884
      %9669 = vmatpush.bf16.msra.mxu0 %v8883
      %9670 = vmatpush.bf16.msra.mxu0 %v8882
      %9671 = vmatpush.bf16.msra.mxu0 %v8881
      %9672 = vmatpush.bf16.msra.mxu0 %v8880
      %9673 = vmatpush.bf16.msra.mxu0 %v8879
      %9674 = vmatpush.bf16.msra.mxu0 %v8878
      %9675 = vmatmul.bf16.gmra.mxu0 %v8019
      %v9676 = vpop.f32.mrf.mxu0
      %v9677 = vadd.f32 %v9628, %v9676
      %v9678 = vpop.f32.mrf.mxu0
      %v9679 = vadd.f32 %v9630, %v9678
      %9680 = vmatmul.bf16.gmra.mxu0 %v8035
      %v9681 = vpop.f32.mrf.mxu0
      %v9682 = vadd.f32 %v9633, %v9681
      %v9683 = vpop.f32.mrf.mxu0
      %v9684 = vadd.f32 %v9635, %v9683
      %9685 = vmatmul.bf16.gmra.mxu0 %v8051
      %v9686 = vpop.f32.mrf.mxu0
      %v9687 = vadd.f32 %v9638, %v9686
      %v9688 = vpop.f32.mrf.mxu0
      %v9689 = vadd.f32 %v9640, %v9688
      %9690 = vmatmul.bf16.gmra.mxu0 %v8067
      %v9691 = vpop.f32.mrf.mxu0
      %v9692 = vadd.f32 %v9643, %v9691
      %v9693 = vpop.f32.mrf.mxu0
      %v9694 = vadd.f32 %v9645, %v9693
      %9695 = vmatmul.bf16.gmra.mxu0 %v8083
      %v9696 = vpop.f32.mrf.mxu0
      %v9697 = vadd.f32 %v9648, %v9696
      %v9698 = vpop.f32.mrf.mxu0
      %v9699 = vadd.f32 %v9650, %v9698
      %9700 = vmatmul.bf16.gmra.mxu0 %v8099
      %v9701 = vpop.f32.mrf.mxu0
      %v9702 = vadd.f32 %v9653, %v9701
      %v9703 = vpop.f32.mrf.mxu0
      %v9704 = vadd.f32 %v9655, %v9703
      %9705 = vmatmul.bf16.gmra.mxu0 %v8115
      %v9706 = vpop.f32.mrf.mxu0
      %v9707 = vadd.f32 %v9658, %v9706
      %v9708 = vpop.f32.mrf.mxu0
      %v9709 = vadd.f32 %v9660, %v9708
      %9710 = vmatmul.bf16.gmra.mxu0 %v8131
      %v9711 = vpop.f32.mrf.mxu0
      %v9712 = vadd.f32 %v9663, %v9711
      %v9713 = vpop.f32.mrf.mxu0
      %v9714 = vadd.f32 %v9665, %v9713
      %9715 = vdwg.mxu0
      %9716 = vmatpush.bf16.msra.mxu0 %v8893
      %9717 = vmatpush.bf16.msra.mxu0 %v8892
      %9718 = vmatpush.bf16.msra.mxu0 %v8891
      %9719 = vmatpush.bf16.msra.mxu0 %v8890
      %9720 = vmatpush.bf16.msra.mxu0 %v8889
      %9721 = vmatpush.bf16.msra.mxu0 %v8888
      %9722 = vmatpush.bf16.msra.mxu0 %v8887
      %9723 = vmatpush.bf16.msra.mxu0 %v8886
      %9724 = vmatmul.bf16.gmra.mxu0 %v8020
      %v9725 = vpop.f32.mrf.mxu0
      %v9726 = vadd.f32 %v9677, %v9725
      %v9727 = vpop.f32.mrf.mxu0
      %v9728 = vadd.f32 %v9679, %v9727
      %9729 = vmatmul.bf16.gmra.mxu0 %v8036
      %v9730 = vpop.f32.mrf.mxu0
      %v9731 = vadd.f32 %v9682, %v9730
      %v9732 = vpop.f32.mrf.mxu0
      %v9733 = vadd.f32 %v9684, %v9732
      %9734 = vmatmul.bf16.gmra.mxu0 %v8052
      %v9735 = vpop.f32.mrf.mxu0
      %v9736 = vadd.f32 %v9687, %v9735
      %v9737 = vpop.f32.mrf.mxu0
      %v9738 = vadd.f32 %v9689, %v9737
      %9739 = vmatmul.bf16.gmra.mxu0 %v8068
      %v9740 = vpop.f32.mrf.mxu0
      %v9741 = vadd.f32 %v9692, %v9740
      %v9742 = vpop.f32.mrf.mxu0
      %v9743 = vadd.f32 %v9694, %v9742
      %9744 = vmatmul.bf16.gmra.mxu0 %v8084
      %v9745 = vpop.f32.mrf.mxu0
      %v9746 = vadd.f32 %v9697, %v9745
      %v9747 = vpop.f32.mrf.mxu0
      %v9748 = vadd.f32 %v9699, %v9747
      %9749 = vmatmul.bf16.gmra.mxu0 %v8100
      %v9750 = vpop.f32.mrf.mxu0
      %v9751 = vadd.f32 %v9702, %v9750
      %v9752 = vpop.f32.mrf.mxu0
      %v9753 = vadd.f32 %v9704, %v9752
      %9754 = vmatmul.bf16.gmra.mxu0 %v8116
      %v9755 = vpop.f32.mrf.mxu0
      %v9756 = vadd.f32 %v9707, %v9755
      %v9757 = vpop.f32.mrf.mxu0
      %v9758 = vadd.f32 %v9709, %v9757
      %9759 = vmatmul.bf16.gmra.mxu0 %v8132
      %v9760 = vpop.f32.mrf.mxu0
      %v9761 = vadd.f32 %v9712, %v9760
      %v9762 = vpop.f32.mrf.mxu0
      %v9763 = vadd.f32 %v9714, %v9762
      %9764 = vdwg.mxu0
      %9765 = vmatpush.bf16.msra.mxu0 %v8901
      %9766 = vmatpush.bf16.msra.mxu0 %v8900
      %9767 = vmatpush.bf16.msra.mxu0 %v8899
      %9768 = vmatpush.bf16.msra.mxu0 %v8898
      %9769 = vmatpush.bf16.msra.mxu0 %v8897
      %9770 = vmatpush.bf16.msra.mxu0 %v8896
      %9771 = vmatpush.bf16.msra.mxu0 %v8895
      %9772 = vmatpush.bf16.msra.mxu0 %v8894
      %9773 = vmatmul.bf16.gmra.mxu0 %v8021
      %v9774 = vpop.f32.mrf.mxu0
      %v9775 = vadd.f32 %v9726, %v9774
      %v9776 = vpop.f32.mrf.mxu0
      %v9777 = vadd.f32 %v9728, %v9776
      %9778 = vmatmul.bf16.gmra.mxu0 %v8037
      %v9779 = vpop.f32.mrf.mxu0
      %v9780 = vadd.f32 %v9731, %v9779
      %v9781 = vpop.f32.mrf.mxu0
      %v9782 = vadd.f32 %v9733, %v9781
      %9783 = vmatmul.bf16.gmra.mxu0 %v8053
      %v9784 = vpop.f32.mrf.mxu0
      %v9785 = vadd.f32 %v9736, %v9784
      %v9786 = vpop.f32.mrf.mxu0
      %v9787 = vadd.f32 %v9738, %v9786
      %9788 = vmatmul.bf16.gmra.mxu0 %v8069
      %v9789 = vpop.f32.mrf.mxu0
      %v9790 = vadd.f32 %v9741, %v9789
      %v9791 = vpop.f32.mrf.mxu0
      %v9792 = vadd.f32 %v9743, %v9791
      %9793 = vmatmul.bf16.gmra.mxu0 %v8085
      %v9794 = vpop.f32.mrf.mxu0
      %v9795 = vadd.f32 %v9746, %v9794
      %v9796 = vpop.f32.mrf.mxu0
      %v9797 = vadd.f32 %v9748, %v9796
      %9798 = vmatmul.bf16.gmra.mxu0 %v8101
      %v9799 = vpop.f32.mrf.mxu0
      %v9800 = vadd.f32 %v9751, %v9799
      %v9801 = vpop.f32.mrf.mxu0
      %v9802 = vadd.f32 %v9753, %v9801
      %9803 = vmatmul.bf16.gmra.mxu0 %v8117
      %v9804 = vpop.f32.mrf.mxu0
      %v9805 = vadd.f32 %v9756, %v9804
      %v9806 = vpop.f32.mrf.mxu0
      %v9807 = vadd.f32 %v9758, %v9806
      %9808 = vmatmul.bf16.gmra.mxu0 %v8133
      %v9809 = vpop.f32.mrf.mxu0
      %v9810 = vadd.f32 %v9761, %v9809
      %v9811 = vpop.f32.mrf.mxu0
      %v9812 = vadd.f32 %v9763, %v9811
      %9813 = vdwg.mxu0
      %v9814 = vadd.f32 %v7222, %v9775
      %v9815 = vadd.f32 %v7223, %v9777
      %v9816 = vadd.f32 %v7224, %v9780
      %v9817 = vadd.f32 %v7225, %v9782
      %v9818 = vadd.f32 %v7226, %v9785
      %v9819 = vadd.f32 %v7227, %v9787
      %v9820 = vadd.f32 %v7228, %v9790
      %v9821 = vadd.f32 %v7229, %v9792
      %v9822 = vadd.f32 %v7230, %v9795
      %v9823 = vadd.f32 %v7231, %v9797
      %v9824 = vadd.f32 %v7232, %v9800
      %v9825 = vadd.f32 %v7233, %v9802
      %v9826 = vadd.f32 %v7234, %v9805
      %v9827 = vadd.f32 %v7235, %v9807
      %v9828 = vadd.f32 %v7236, %v9810
      %v9829 = vadd.f32 %v7237, %v9812
      %9830 = vst [vmem:[#allocation4] sm:$0xff] %v9814
      %9831 = vst [vmem:[#allocation4 + $0x8] sm:$0xff] %v9815
      %9832 = vst [vmem:[#allocation4 + $0x10] sm:$0xff] %v9816
      %9833 = vst [vmem:[#allocation4 + $0x18] sm:$0xff] %v9817
      %9834 = vst [vmem:[#allocation4 + $0x20] sm:$0xff] %v9818
      %9835 = vst [vmem:[#allocation4 + $0x28] sm:$0xff] %v9819
      %9836 = vst [vmem:[#allocation4 + $0x30] sm:$0xff] %v9820
      %9837 = vst [vmem:[#allocation4 + $0x38] sm:$0xff] %v9821
      %9838 = vst [vmem:[#allocation4 + $0x40] sm:$0xff] %v9822
      %9839 = vst [vmem:[#allocation4 + $0x48] sm:$0xff] %v9823
      %9840 = vst [vmem:[#allocation4 + $0x50] sm:$0xff] %v9824
      %9841 = vst [vmem:[#allocation4 + $0x58] sm:$0xff] %v9825
      %9842 = vst [vmem:[#allocation4 + $0x60] sm:$0xff] %v9826
      %9843 = vst [vmem:[#allocation4 + $0x68] sm:$0xff] %v9827
      %9844 = vst [vmem:[#allocation4 + $0x70] sm:$0xff] %v9828
      %9845 = vst [vmem:[#allocation4 + $0x78] sm:$0xff] %v9829
      // Predicated region
      $region101: #{tpu_custom_call.1} parent=91 // pred_check
        %p9846 = pneg %p685
      $region102: #{tpu_custom_call.1} parent=91 // pred_check_branch
        %9848 = sbr.rel (%p9846) target = $region104
      $region103: #{tpu_custom_call.1} parent=91 // pred_region
        %v9849 = vld [vmem:[#allocation4] sm:$0xff]
        %v9850 = vld [vmem:[#allocation4 + $0x8] sm:$0xff]
        %v9851 = vld [vmem:[#allocation4 + $0x10] sm:$0xff]
        %v9852 = vld [vmem:[#allocation4 + $0x18] sm:$0xff]
        %v9853 = vld [vmem:[#allocation4 + $0x20] sm:$0xff]
        %v9854 = vld [vmem:[#allocation4 + $0x28] sm:$0xff]
        %v9855 = vld [vmem:[#allocation4 + $0x30] sm:$0xff]
        %v9856 = vld [vmem:[#allocation4 + $0x38] sm:$0xff]
        %v9857 = vld [vmem:[#allocation4 + $0x40] sm:$0xff]
        %v9858 = vld [vmem:[#allocation4 + $0x48] sm:$0xff]
        %v9859 = vld [vmem:[#allocation4 + $0x50] sm:$0xff]
        %v9860 = vld [vmem:[#allocation4 + $0x58] sm:$0xff]
        %v9861 = vld [vmem:[#allocation4 + $0x60] sm:$0xff]
        %v9862 = vld [vmem:[#allocation4 + $0x68] sm:$0xff]
        %v9863 = vld [vmem:[#allocation4 + $0x70] sm:$0xff]
        %v9864 = vld [vmem:[#allocation4 + $0x78] sm:$0xff]
        %v9865 = vpack.c.bf16 %v9850, %v9849
        %v9866 = vpack.c.bf16 %v9852, %v9851
        %v9867 = vpack.c.bf16 %v9854, %v9853
        %v9868 = vpack.c.bf16 %v9856, %v9855
        %v9869 = vpack.c.bf16 %v9858, %v9857
        %v9870 = vpack.c.bf16 %v9860, %v9859
        %v9871 = vpack.c.bf16 %v9862, %v9861
        %v9872 = vpack.c.bf16 %v9864, %v9863
        %v9873 = vld [vmem:[%s679] sm:$0xf]
        %v9874 = vld [vmem:[%s679 + $0x4] sm:$0xf]
        %v9875 = vld [vmem:[%s679 + $0x8] sm:$0xf]
        %v9876 = vld [vmem:[%s679 + $0xc] sm:$0xf]
        %v9877 = vld [vmem:[%s679 + $0x10] sm:$0xf]
        %v9878 = vld [vmem:[%s679 + $0x14] sm:$0xf]
        %v9879 = vld [vmem:[%s679 + $0x18] sm:$0xf]
        %v9880 = vld [vmem:[%s679 + $0x1c] sm:$0xf]
        %v9881 = vld [vmem:[%s679 + $0x20] sm:$0xf]
        %v9882 = vld [vmem:[%s679 + $0x24] sm:$0xf]
        %v9883 = vld [vmem:[%s679 + $0x28] sm:$0xf]
        %v9884 = vld [vmem:[%s679 + $0x2c] sm:$0xf]
        %v9885 = vld [vmem:[%s679 + $0x30] sm:$0xf]
        %v9886 = vld [vmem:[%s679 + $0x34] sm:$0xf]
        %v9887 = vld [vmem:[%s679 + $0x38] sm:$0xf]
        %v9888 = vld [vmem:[%s679 + $0x3c] sm:$0xf]
        %v9889 = vld [vmem:[%s682] sm:$0x1]
        %v9891 = vperm.slane %v9889, 0
        %v9909 = vunpack.c.l.b16 %v9873
        %v9910 = vunpack.c.l.b16 %v9874
        %v9911 = vunpack.c.l.b16 %v9875
        %v9912 = vunpack.c.l.b16 %v9876
        %v9913 = vunpack.c.l.b16 %v9877
        %v9914 = vunpack.c.l.b16 %v9878
        %v9915 = vunpack.c.l.b16 %v9879
        %v9916 = vunpack.c.l.b16 %v9880
        %v9917 = vunpack.c.l.b16 %v9881
        %v9918 = vunpack.c.l.b16 %v9882
        %v9919 = vunpack.c.l.b16 %v9883
        %v9920 = vunpack.c.l.b16 %v9884
        %v9921 = vunpack.c.l.b16 %v9885
        %v9922 = vunpack.c.l.b16 %v9886
        %v9923 = vunpack.c.l.b16 %v9887
        %v9924 = vunpack.c.l.b16 %v9888
        %v9925 = vpack.c.b16 %v9910, %v9909
        %v9926 = vpack.c.b16 %v9912, %v9911
        %v9927 = vpack.c.b16 %v9914, %v9913
        %v9928 = vpack.c.b16 %v9916, %v9915
        %v9929 = vpack.c.b16 %v9918, %v9917
        %v9930 = vpack.c.b16 %v9920, %v9919
        %v9931 = vpack.c.b16 %v9922, %v9921
        %v9932 = vpack.c.b16 %v9924, %v9923
        %9941 = vmatpush.bf16.msra.mxu0 %v9932
        %9942 = vmatpush.bf16.msra.mxu0 %v9931
        %9943 = vmatpush.bf16.msra.mxu0 %v9930
        %9944 = vmatpush.bf16.msra.mxu0 %v9929
        %9945 = vmatpush.bf16.msra.mxu0 %v9928
        %9946 = vmatpush.bf16.msra.mxu0 %v9927
        %9947 = vmatpush.bf16.msra.mxu0 %v9926
        %9948 = vmatpush.bf16.msra.mxu0 %v9925
        %9949 = vmatmul.bf16.gmra.mxu0 %v9865
        %v9950 = vpop.f32.mrf.mxu0
        %v9951 = vadd.f32 %v9891, %v9950
        %v9952 = vpop.f32.mrf.mxu0
        %v9953 = vadd.f32 %v9891, %v9952
        %9954 = vmatmul.bf16.gmra.mxu0 %v9866
        %v9955 = vpop.f32.mrf.mxu0
        %v9956 = vadd.f32 %v9891, %v9955
        %v9957 = vpop.f32.mrf.mxu0
        %v9958 = vadd.f32 %v9891, %v9957
        %9959 = vmatmul.bf16.gmra.mxu0 %v9867
        %v9960 = vpop.f32.mrf.mxu0
        %v9961 = vadd.f32 %v9891, %v9960
        %v9962 = vpop.f32.mrf.mxu0
        %v9963 = vadd.f32 %v9891, %v9962
        %9964 = vmatmul.bf16.gmra.mxu0 %v9868
        %v9965 = vpop.f32.mrf.mxu0
        %v9966 = vadd.f32 %v9891, %v9965
        %v9967 = vpop.f32.mrf.mxu0
        %v9968 = vadd.f32 %v9891, %v9967
        %9969 = vmatmul.bf16.gmra.mxu0 %v9869
        %v9970 = vpop.f32.mrf.mxu0
        %v9971 = vadd.f32 %v9891, %v9970
        %v9972 = vpop.f32.mrf.mxu0
        %v9973 = vadd.f32 %v9891, %v9972
        %9974 = vmatmul.bf16.gmra.mxu0 %v9870
        %v9975 = vpop.f32.mrf.mxu0
        %v9976 = vadd.f32 %v9891, %v9975
        %v9977 = vpop.f32.mrf.mxu0
        %v9978 = vadd.f32 %v9891, %v9977
        %9979 = vmatmul.bf16.gmra.mxu0 %v9871
        %v9980 = vpop.f32.mrf.mxu0
        %v9981 = vadd.f32 %v9891, %v9980
        %v9982 = vpop.f32.mrf.mxu0
        %v9983 = vadd.f32 %v9891, %v9982
        %9984 = vmatmul.bf16.gmra.mxu0 %v9872
        %v9985 = vpop.f32.mrf.mxu0
        %v9986 = vadd.f32 %v9891, %v9985
        %v9987 = vpop.f32.mrf.mxu0
        %v9988 = vadd.f32 %v9891, %v9987
        %9989 = vdwg.mxu0
        %v9990 = vld [vmem:[#allocation2] sm:$0xff]
        %v9991 = vld [vmem:[#allocation2 + $0x8] sm:$0xff]
        %v9992 = vld [vmem:[#allocation2 + $0x10] sm:$0xff]
        %v9993 = vld [vmem:[#allocation2 + $0x18] sm:$0xff]
        %v9994 = vld [vmem:[#allocation2 + $0x20] sm:$0xff]
        %v9995 = vld [vmem:[#allocation2 + $0x28] sm:$0xff]
        %v9996 = vld [vmem:[#allocation2 + $0x30] sm:$0xff]
        %v9997 = vld [vmem:[#allocation2 + $0x38] sm:$0xff]
        %v9998 = vld [vmem:[#allocation2 + $0x40] sm:$0xff]
        %v9999 = vld [vmem:[#allocation2 + $0x48] sm:$0xff]
        %v10000 = vld [vmem:[#allocation2 + $0x50] sm:$0xff]
        %v10001 = vld [vmem:[#allocation2 + $0x58] sm:$0xff]
        %v10002 = vld [vmem:[#allocation2 + $0x60] sm:$0xff]
        %v10003 = vld [vmem:[#allocation2 + $0x68] sm:$0xff]
        %v10004 = vld [vmem:[#allocation2 + $0x70] sm:$0xff]
        %v10005 = vld [vmem:[#allocation2 + $0x78] sm:$0xff]
        %v10006 = vxor.u32 %v9951, 2147483648
        %v10007 = vxor.u32 %v9953, 2147483648
        %v10008 = vxor.u32 %v9956, 2147483648
        %v10009 = vxor.u32 %v9958, 2147483648
        %v10010 = vxor.u32 %v9961, 2147483648
        %v10011 = vxor.u32 %v9963, 2147483648
        %v10012 = vxor.u32 %v9966, 2147483648
        %v10013 = vxor.u32 %v9968, 2147483648
        %v10014 = vxor.u32 %v9971, 2147483648
        %v10015 = vxor.u32 %v9973, 2147483648
        %v10016 = vxor.u32 %v9976, 2147483648
        %v10017 = vxor.u32 %v9978, 2147483648
        %v10018 = vxor.u32 %v9981, 2147483648
        %v10019 = vxor.u32 %v9983, 2147483648
        %v10020 = vxor.u32 %v9986, 2147483648
        %v10021 = vxor.u32 %v9988, 2147483648
        %v10022 = vmul.f32 %v10006, 1.442695
        %v10023 = vpow.pop %v10022
        %v10024 = vmul.f32 %v10007, 1.442695
        %v10025 = vpow.pop %v10024
        %v10026 = vmul.f32 %v10008, 1.442695
        %v10027 = vpow.pop %v10026
        %v10028 = vmul.f32 %v10009, 1.442695
        %v10029 = vpow.pop %v10028
        %v10030 = vmul.f32 %v10010, 1.442695
        %v10031 = vpow.pop %v10030
        %v10032 = vmul.f32 %v10011, 1.442695
        %v10033 = vpow.pop %v10032
        %v10034 = vmul.f32 %v10012, 1.442695
        %v10035 = vpow.pop %v10034
        %v10036 = vmul.f32 %v10013, 1.442695
        %v10037 = vpow.pop %v10036
        %v10038 = vmul.f32 %v10014, 1.442695
        %v10039 = vpow.pop %v10038
        %v10040 = vmul.f32 %v10015, 1.442695
        %v10041 = vpow.pop %v10040
        %v10042 = vmul.f32 %v10016, 1.442695
        %v10043 = vpow.pop %v10042
        %v10044 = vmul.f32 %v10017, 1.442695
        %v10045 = vpow.pop %v10044
        %v10046 = vmul.f32 %v10018, 1.442695
        %v10047 = vpow.pop %v10046
        %v10048 = vmul.f32 %v10019, 1.442695
        %v10049 = vpow.pop %v10048
        %v10050 = vmul.f32 %v10020, 1.442695
        %v10051 = vpow.pop %v10050
        %v10052 = vmul.f32 %v10021, 1.442695
        %v10053 = vpow.pop %v10052
        %v10054 = vadd.f32 %v10023, 1.0
        %v10055 = vadd.f32 %v10025, 1.0
        %v10056 = vadd.f32 %v10027, 1.0
        %v10057 = vadd.f32 %v10029, 1.0
        %v10058 = vadd.f32 %v10031, 1.0
        %v10059 = vadd.f32 %v10033, 1.0
        %v10060 = vadd.f32 %v10035, 1.0
        %v10061 = vadd.f32 %v10037, 1.0
        %v10062 = vadd.f32 %v10039, 1.0
        %v10063 = vadd.f32 %v10041, 1.0
        %v10064 = vadd.f32 %v10043, 1.0
        %v10065 = vadd.f32 %v10045, 1.0
        %v10066 = vadd.f32 %v10047, 1.0
        %v10067 = vadd.f32 %v10049, 1.0
        %v10068 = vadd.f32 %v10051, 1.0
        %v10069 = vadd.f32 %v10053, 1.0
        %v10070 = vrcp.pop %v10054
        %v10071 = vmul.f32 %v10054, %v10070
        %v10072 = vsub.f32 1.0, %v10071
        %v10073 = vmul.f32 %v10070, %v10072
        %v10074 = vadd.f32 %v10070, %v10073
        %vm10075 = vweird.f32 %v10054
        %vm10076 = vweird.f32 %v10070
        %vm10077 = vmor %vm10075, %vm10076
        %v10078 = vsel %vm10077, %v10070, %v10074
        %v10079 = vand.u32 2147483647, %v10054
        %vm10080 = vcmp.eq.f32.partialorder %v10079, 8.507059e+37
        %v10081 = vand.u32 %v10054, 2147483648
        %v10082 = vor.u32 1.1754944e-38, %v10081
        %v10083 = vsel %vm10080, %v10082, %v10078
        %v10084 = vmul.f32 1.0, %v10083
        %v10085 = vrcp.pop %v10055
        %v10086 = vmul.f32 %v10055, %v10085
        %v10087 = vsub.f32 1.0, %v10086
        %v10088 = vmul.f32 %v10085, %v10087
        %v10089 = vadd.f32 %v10085, %v10088
        %vm10090 = vweird.f32 %v10055
        %vm10091 = vweird.f32 %v10085
        %vm10092 = vmor %vm10090, %vm10091
        %v10093 = vsel %vm10092, %v10085, %v10089
        %v10094 = vand.u32 2147483647, %v10055
        %vm10095 = vcmp.eq.f32.partialorder %v10094, 8.507059e+37
        %v10096 = vand.u32 %v10055, 2147483648
        %v10097 = vor.u32 1.1754944e-38, %v10096
        %v10098 = vsel %vm10095, %v10097, %v10093
        %v10099 = vmul.f32 1.0, %v10098
        %v10100 = vrcp.pop %v10056
        %v10101 = vmul.f32 %v10056, %v10100
        %v10102 = vsub.f32 1.0, %v10101
        %v10103 = vmul.f32 %v10100, %v10102
        %v10104 = vadd.f32 %v10100, %v10103
        %vm10105 = vweird.f32 %v10056
        %vm10106 = vweird.f32 %v10100
        %vm10107 = vmor %vm10105, %vm10106
        %v10108 = vsel %vm10107, %v10100, %v10104
        %v10109 = vand.u32 2147483647, %v10056
        %vm10110 = vcmp.eq.f32.partialorder %v10109, 8.507059e+37
        %v10111 = vand.u32 %v10056, 2147483648
        %v10112 = vor.u32 1.1754944e-38, %v10111
        %v10113 = vsel %vm10110, %v10112, %v10108
        %v10114 = vmul.f32 1.0, %v10113
        %v10115 = vrcp.pop %v10057
        %v10116 = vmul.f32 %v10057, %v10115
        %v10117 = vsub.f32 1.0, %v10116
        %v10118 = vmul.f32 %v10115, %v10117
        %v10119 = vadd.f32 %v10115, %v10118
        %vm10120 = vweird.f32 %v10057
        %vm10121 = vweird.f32 %v10115
        %vm10122 = vmor %vm10120, %vm10121
        %v10123 = vsel %vm10122, %v10115, %v10119
        %v10124 = vand.u32 2147483647, %v10057
        %vm10125 = vcmp.eq.f32.partialorder %v10124, 8.507059e+37
        %v10126 = vand.u32 %v10057, 2147483648
        %v10127 = vor.u32 1.1754944e-38, %v10126
        %v10128 = vsel %vm10125, %v10127, %v10123
        %v10129 = vmul.f32 1.0, %v10128
        %v10130 = vrcp.pop %v10058
        %v10131 = vmul.f32 %v10058, %v10130
        %v10132 = vsub.f32 1.0, %v10131
        %v10133 = vmul.f32 %v10130, %v10132
        %v10134 = vadd.f32 %v10130, %v10133
        %vm10135 = vweird.f32 %v10058
        %vm10136 = vweird.f32 %v10130
        %vm10137 = vmor %vm10135, %vm10136
        %v10138 = vsel %vm10137, %v10130, %v10134
        %v10139 = vand.u32 2147483647, %v10058
        %vm10140 = vcmp.eq.f32.partialorder %v10139, 8.507059e+37
        %v10141 = vand.u32 %v10058, 2147483648
        %v10142 = vor.u32 1.1754944e-38, %v10141
        %v10143 = vsel %vm10140, %v10142, %v10138
        %v10144 = vmul.f32 1.0, %v10143
        %v10145 = vrcp.pop %v10059
        %v10146 = vmul.f32 %v10059, %v10145
        %v10147 = vsub.f32 1.0, %v10146
        %v10148 = vmul.f32 %v10145, %v10147
        %v10149 = vadd.f32 %v10145, %v10148
        %vm10150 = vweird.f32 %v10059
        %vm10151 = vweird.f32 %v10145
        %vm10152 = vmor %vm10150, %vm10151
        %v10153 = vsel %vm10152, %v10145, %v10149
        %v10154 = vand.u32 2147483647, %v10059
        %vm10155 = vcmp.eq.f32.partialorder %v10154, 8.507059e+37
        %v10156 = vand.u32 %v10059, 2147483648
        %v10157 = vor.u32 1.1754944e-38, %v10156
        %v10158 = vsel %vm10155, %v10157, %v10153
        %v10159 = vmul.f32 1.0, %v10158
        %v10160 = vrcp.pop %v10060
        %v10161 = vmul.f32 %v10060, %v10160
        %v10162 = vsub.f32 1.0, %v10161
        %v10163 = vmul.f32 %v10160, %v10162
        %v10164 = vadd.f32 %v10160, %v10163
        %vm10165 = vweird.f32 %v10060
        %vm10166 = vweird.f32 %v10160
        %vm10167 = vmor %vm10165, %vm10166
        %v10168 = vsel %vm10167, %v10160, %v10164
        %v10169 = vand.u32 2147483647, %v10060
        %vm10170 = vcmp.eq.f32.partialorder %v10169, 8.507059e+37
        %v10171 = vand.u32 %v10060, 2147483648
        %v10172 = vor.u32 1.1754944e-38, %v10171
        %v10173 = vsel %vm10170, %v10172, %v10168
        %v10174 = vmul.f32 1.0, %v10173
        %v10175 = vrcp.pop %v10061
        %v10176 = vmul.f32 %v10061, %v10175
        %v10177 = vsub.f32 1.0, %v10176
        %v10178 = vmul.f32 %v10175, %v10177
        %v10179 = vadd.f32 %v10175, %v10178
        %vm10180 = vweird.f32 %v10061
        %vm10181 = vweird.f32 %v10175
        %vm10182 = vmor %vm10180, %vm10181
        %v10183 = vsel %vm10182, %v10175, %v10179
        %v10184 = vand.u32 2147483647, %v10061
        %vm10185 = vcmp.eq.f32.partialorder %v10184, 8.507059e+37
        %v10186 = vand.u32 %v10061, 2147483648
        %v10187 = vor.u32 1.1754944e-38, %v10186
        %v10188 = vsel %vm10185, %v10187, %v10183
        %v10189 = vmul.f32 1.0, %v10188
        %v10190 = vrcp.pop %v10062
        %v10191 = vmul.f32 %v10062, %v10190
        %v10192 = vsub.f32 1.0, %v10191
        %v10193 = vmul.f32 %v10190, %v10192
        %v10194 = vadd.f32 %v10190, %v10193
        %vm10195 = vweird.f32 %v10062
        %vm10196 = vweird.f32 %v10190
        %vm10197 = vmor %vm10195, %vm10196
        %v10198 = vsel %vm10197, %v10190, %v10194
        %v10199 = vand.u32 2147483647, %v10062
        %vm10200 = vcmp.eq.f32.partialorder %v10199, 8.507059e+37
        %v10201 = vand.u32 %v10062, 2147483648
        %v10202 = vor.u32 1.1754944e-38, %v10201
        %v10203 = vsel %vm10200, %v10202, %v10198
        %v10204 = vmul.f32 1.0, %v10203
        %v10205 = vrcp.pop %v10063
        %v10206 = vmul.f32 %v10063, %v10205
        %v10207 = vsub.f32 1.0, %v10206
        %v10208 = vmul.f32 %v10205, %v10207
        %v10209 = vadd.f32 %v10205, %v10208
        %vm10210 = vweird.f32 %v10063
        %vm10211 = vweird.f32 %v10205
        %vm10212 = vmor %vm10210, %vm10211
        %v10213 = vsel %vm10212, %v10205, %v10209
        %v10214 = vand.u32 2147483647, %v10063
        %vm10215 = vcmp.eq.f32.partialorder %v10214, 8.507059e+37
        %v10216 = vand.u32 %v10063, 2147483648
        %v10217 = vor.u32 1.1754944e-38, %v10216
        %v10218 = vsel %vm10215, %v10217, %v10213
        %v10219 = vmul.f32 1.0, %v10218
        %v10220 = vrcp.pop %v10064
        %v10221 = vmul.f32 %v10064, %v10220
        %v10222 = vsub.f32 1.0, %v10221
        %v10223 = vmul.f32 %v10220, %v10222
        %v10224 = vadd.f32 %v10220, %v10223
        %vm10225 = vweird.f32 %v10064
        %vm10226 = vweird.f32 %v10220
        %vm10227 = vmor %vm10225, %vm10226
        %v10228 = vsel %vm10227, %v10220, %v10224
        %v10229 = vand.u32 2147483647, %v10064
        %vm10230 = vcmp.eq.f32.partialorder %v10229, 8.507059e+37
        %v10231 = vand.u32 %v10064, 2147483648
        %v10232 = vor.u32 1.1754944e-38, %v10231
        %v10233 = vsel %vm10230, %v10232, %v10228
        %v10234 = vmul.f32 1.0, %v10233
        %v10235 = vrcp.pop %v10065
        %v10236 = vmul.f32 %v10065, %v10235
        %v10237 = vsub.f32 1.0, %v10236
        %v10238 = vmul.f32 %v10235, %v10237
        %v10239 = vadd.f32 %v10235, %v10238
        %vm10240 = vweird.f32 %v10065
        %vm10241 = vweird.f32 %v10235
        %vm10242 = vmor %vm10240, %vm10241
        %v10243 = vsel %vm10242, %v10235, %v10239
        %v10244 = vand.u32 2147483647, %v10065
        %vm10245 = vcmp.eq.f32.partialorder %v10244, 8.507059e+37
        %v10246 = vand.u32 %v10065, 2147483648
        %v10247 = vor.u32 1.1754944e-38, %v10246
        %v10248 = vsel %vm10245, %v10247, %v10243
        %v10249 = vmul.f32 1.0, %v10248
        %v10250 = vrcp.pop %v10066
        %v10251 = vmul.f32 %v10066, %v10250
        %v10252 = vsub.f32 1.0, %v10251
        %v10253 = vmul.f32 %v10250, %v10252
        %v10254 = vadd.f32 %v10250, %v10253
        %vm10255 = vweird.f32 %v10066
        %vm10256 = vweird.f32 %v10250
        %vm10257 = vmor %vm10255, %vm10256
        %v10258 = vsel %vm10257, %v10250, %v10254
        %v10259 = vand.u32 2147483647, %v10066
        %vm10260 = vcmp.eq.f32.partialorder %v10259, 8.507059e+37
        %v10261 = vand.u32 %v10066, 2147483648
        %v10262 = vor.u32 1.1754944e-38, %v10261
        %v10263 = vsel %vm10260, %v10262, %v10258
        %v10264 = vmul.f32 1.0, %v10263
        %v10265 = vrcp.pop %v10067
        %v10266 = vmul.f32 %v10067, %v10265
        %v10267 = vsub.f32 1.0, %v10266
        %v10268 = vmul.f32 %v10265, %v10267
        %v10269 = vadd.f32 %v10265, %v10268
        %vm10270 = vweird.f32 %v10067
        %vm10271 = vweird.f32 %v10265
        %vm10272 = vmor %vm10270, %vm10271
        %v10273 = vsel %vm10272, %v10265, %v10269
        %v10274 = vand.u32 2147483647, %v10067
        %vm10275 = vcmp.eq.f32.partialorder %v10274, 8.507059e+37
        %v10276 = vand.u32 %v10067, 2147483648
        %v10277 = vor.u32 1.1754944e-38, %v10276
        %v10278 = vsel %vm10275, %v10277, %v10273
        %v10279 = vmul.f32 1.0, %v10278
        %v10280 = vrcp.pop %v10068
        %v10281 = vmul.f32 %v10068, %v10280
        %v10282 = vsub.f32 1.0, %v10281
        %v10283 = vmul.f32 %v10280, %v10282
        %v10284 = vadd.f32 %v10280, %v10283
        %vm10285 = vweird.f32 %v10068
        %vm10286 = vweird.f32 %v10280
        %vm10287 = vmor %vm10285, %vm10286
        %v10288 = vsel %vm10287, %v10280, %v10284
        %v10289 = vand.u32 2147483647, %v10068
        %vm10290 = vcmp.eq.f32.partialorder %v10289, 8.507059e+37
        %v10291 = vand.u32 %v10068, 2147483648
        %v10292 = vor.u32 1.1754944e-38, %v10291
        %v10293 = vsel %vm10290, %v10292, %v10288
        %v10294 = vmul.f32 1.0, %v10293
        %v10295 = vrcp.pop %v10069
        %v10296 = vmul.f32 %v10069, %v10295
        %v10297 = vsub.f32 1.0, %v10296
        %v10298 = vmul.f32 %v10295, %v10297
        %v10299 = vadd.f32 %v10295, %v10298
        %vm10300 = vweird.f32 %v10069
        %vm10301 = vweird.f32 %v10295
        %vm10302 = vmor %vm10300, %vm10301
        %v10303 = vsel %vm10302, %v10295, %v10299
        %v10304 = vand.u32 2147483647, %v10069
        %vm10305 = vcmp.eq.f32.partialorder %v10304, 8.507059e+37
        %v10306 = vand.u32 %v10069, 2147483648
        %v10307 = vor.u32 1.1754944e-38, %v10306
        %v10308 = vsel %vm10305, %v10307, %v10303
        %v10309 = vmul.f32 1.0, %v10308
        %v10310 = vmul.f32 %v9951, %v10084
        %v10311 = vmul.f32 %v9953, %v10099
        %v10312 = vmul.f32 %v9956, %v10114
        %v10313 = vmul.f32 %v9958, %v10129
        %v10314 = vmul.f32 %v9961, %v10144
        %v10315 = vmul.f32 %v9963, %v10159
        %v10316 = vmul.f32 %v9966, %v10174
        %v10317 = vmul.f32 %v9968, %v10189
        %v10318 = vmul.f32 %v9971, %v10204
        %v10319 = vmul.f32 %v9973, %v10219
        %v10320 = vmul.f32 %v9976, %v10234
        %v10321 = vmul.f32 %v9978, %v10249
        %v10322 = vmul.f32 %v9981, %v10264
        %v10323 = vmul.f32 %v9983, %v10279
        %v10324 = vmul.f32 %v9986, %v10294
        %v10325 = vmul.f32 %v9988, %v10309
        %v10326 = vadd.f32 %v9990, %v10310
        %v10327 = vadd.f32 %v9991, %v10311
        %v10328 = vadd.f32 %v9992, %v10312
        %v10329 = vadd.f32 %v9993, %v10313
        %v10330 = vadd.f32 %v9994, %v10314
        %v10331 = vadd.f32 %v9995, %v10315
        %v10332 = vadd.f32 %v9996, %v10316
        %v10333 = vadd.f32 %v9997, %v10317
        %v10334 = vadd.f32 %v9998, %v10318
        %v10335 = vadd.f32 %v9999, %v10319
        %v10336 = vadd.f32 %v10000, %v10320
        %v10337 = vadd.f32 %v10001, %v10321
        %v10338 = vadd.f32 %v10002, %v10322
        %v10339 = vadd.f32 %v10003, %v10323
        %v10340 = vadd.f32 %v10004, %v10324
        %v10341 = vadd.f32 %v10005, %v10325
        %10342 = vst [vmem:[#allocation2] sm:$0xff] %v10326
        %10343 = vst [vmem:[#allocation2 + $0x8] sm:$0xff] %v10327
        %10344 = vst [vmem:[#allocation2 + $0x10] sm:$0xff] %v10328
        %10345 = vst [vmem:[#allocation2 + $0x18] sm:$0xff] %v10329
        %10346 = vst [vmem:[#allocation2 + $0x20] sm:$0xff] %v10330
        %10347 = vst [vmem:[#allocation2 + $0x28] sm:$0xff] %v10331
        %10348 = vst [vmem:[#allocation2 + $0x30] sm:$0xff] %v10332
        %10349 = vst [vmem:[#allocation2 + $0x38] sm:$0xff] %v10333
        %10350 = vst [vmem:[#allocation2 + $0x40] sm:$0xff] %v10334
        %10351 = vst [vmem:[#allocation2 + $0x48] sm:$0xff] %v10335
        %10352 = vst [vmem:[#allocation2 + $0x50] sm:$0xff] %v10336
        %10353 = vst [vmem:[#allocation2 + $0x58] sm:$0xff] %v10337
        %10354 = vst [vmem:[#allocation2 + $0x60] sm:$0xff] %v10338
        %10355 = vst [vmem:[#allocation2 + $0x68] sm:$0xff] %v10339
        %10356 = vst [vmem:[#allocation2 + $0x70] sm:$0xff] %v10340
        %10357 = vst [vmem:[#allocation2 + $0x78] sm:$0xff] %v10341
      $region104: #{tpu_custom_call.1} parent=91 // pred_fallthru
        _
      %p10358 = scmp.eq.s32.totalorder %s33, 1
      %p10359 = pnand %p10358, %p685
      %p10360 = pneg %p10359
      // Predicated region
      $region105: #{tpu_custom_call.1} parent=91 // pred_check
        _
      $region106: #{tpu_custom_call.1} parent=91 // pred_check_branch
        %10362 = sbr.rel (%p10359) target = $region108
      $region107: #{tpu_custom_call.1} parent=91 // pred_region
        %v10363 = vld [vmem:[#allocation2] sm:$0xff]
        %v10364 = vld [vmem:[#allocation2 + $0x8] sm:$0xff]
        %v10365 = vld [vmem:[#allocation2 + $0x10] sm:$0xff]
        %v10366 = vld [vmem:[#allocation2 + $0x18] sm:$0xff]
        %v10367 = vld [vmem:[#allocation2 + $0x20] sm:$0xff]
        %v10368 = vld [vmem:[#allocation2 + $0x28] sm:$0xff]
        %v10369 = vld [vmem:[#allocation2 + $0x30] sm:$0xff]
        %v10370 = vld [vmem:[#allocation2 + $0x38] sm:$0xff]
        %v10371 = vld [vmem:[#allocation2 + $0x40] sm:$0xff]
        %v10372 = vld [vmem:[#allocation2 + $0x48] sm:$0xff]
        %v10373 = vld [vmem:[#allocation2 + $0x50] sm:$0xff]
        %v10374 = vld [vmem:[#allocation2 + $0x58] sm:$0xff]
        %v10375 = vld [vmem:[#allocation2 + $0x60] sm:$0xff]
        %v10376 = vld [vmem:[#allocation2 + $0x68] sm:$0xff]
        %v10377 = vld [vmem:[#allocation2 + $0x70] sm:$0xff]
        %v10378 = vld [vmem:[#allocation2 + $0x78] sm:$0xff]
        %v10379 = vpack.c.bf16 %v10364, %v10363
        %v10380 = vpack.c.bf16 %v10366, %v10365
        %v10381 = vpack.c.bf16 %v10368, %v10367
        %v10382 = vpack.c.bf16 %v10370, %v10369
        %v10383 = vpack.c.bf16 %v10372, %v10371
        %v10384 = vpack.c.bf16 %v10374, %v10373
        %v10385 = vpack.c.bf16 %v10376, %v10375
        %v10386 = vpack.c.bf16 %v10378, %v10377
        %v10387 = vld [vmem:[%s15] sm:$0xf]
        %v10388 = vld [vmem:[%s15 + $0x4] sm:$0xf]
        %v10389 = vld [vmem:[%s15 + $0x8] sm:$0xf]
        %v10390 = vld [vmem:[%s15 + $0xc] sm:$0xf]
        %v10391 = vld [vmem:[%s15 + $0x10] sm:$0xf]
        %v10392 = vld [vmem:[%s15 + $0x14] sm:$0xf]
        %v10393 = vld [vmem:[%s15 + $0x18] sm:$0xf]
        %v10394 = vld [vmem:[%s15 + $0x1c] sm:$0xf]
        %v10395 = vld [vmem:[%s15 + $0x20] sm:$0xf]
        %v10396 = vld [vmem:[%s15 + $0x24] sm:$0xf]
        %v10397 = vld [vmem:[%s15 + $0x28] sm:$0xf]
        %v10398 = vld [vmem:[%s15 + $0x2c] sm:$0xf]
        %v10399 = vld [vmem:[%s15 + $0x30] sm:$0xf]
        %v10400 = vld [vmem:[%s15 + $0x34] sm:$0xf]
        %v10401 = vld [vmem:[%s15 + $0x38] sm:$0xf]
        %v10402 = vld [vmem:[%s15 + $0x3c] sm:$0xf]
        %v10403 = vld [vmem:[%s16] sm:$0x1]
        %v10405 = vperm.slane %v10403, 0
        %v10423 = vunpack.c.l.b16 %v10387
        %v10424 = vunpack.c.l.b16 %v10388
        %v10425 = vunpack.c.l.b16 %v10389
        %v10426 = vunpack.c.l.b16 %v10390
        %v10427 = vunpack.c.l.b16 %v10391
        %v10428 = vunpack.c.l.b16 %v10392
        %v10429 = vunpack.c.l.b16 %v10393
        %v10430 = vunpack.c.l.b16 %v10394
        %v10431 = vunpack.c.l.b16 %v10395
        %v10432 = vunpack.c.l.b16 %v10396
        %v10433 = vunpack.c.l.b16 %v10397
        %v10434 = vunpack.c.l.b16 %v10398
        %v10435 = vunpack.c.l.b16 %v10399
        %v10436 = vunpack.c.l.b16 %v10400
        %v10437 = vunpack.c.l.b16 %v10401
        %v10438 = vunpack.c.l.b16 %v10402
        %v10439 = vpack.c.b16 %v10424, %v10423
        %v10440 = vpack.c.b16 %v10426, %v10425
        %v10441 = vpack.c.b16 %v10428, %v10427
        %v10442 = vpack.c.b16 %v10430, %v10429
        %v10443 = vpack.c.b16 %v10432, %v10431
        %v10444 = vpack.c.b16 %v10434, %v10433
        %v10445 = vpack.c.b16 %v10436, %v10435
        %v10446 = vpack.c.b16 %v10438, %v10437
        %10455 = vmatpush.bf16.msra.mxu0 %v10446
        %10456 = vmatpush.bf16.msra.mxu0 %v10445
        %10457 = vmatpush.bf16.msra.mxu0 %v10444
        %10458 = vmatpush.bf16.msra.mxu0 %v10443
        %10459 = vmatpush.bf16.msra.mxu0 %v10442
        %10460 = vmatpush.bf16.msra.mxu0 %v10441
        %10461 = vmatpush.bf16.msra.mxu0 %v10440
        %10462 = vmatpush.bf16.msra.mxu0 %v10439
        %10463 = vmatmul.bf16.gmra.mxu0 %v10379
        %v10464 = vpop.f32.mrf.mxu0
        %v10465 = vadd.f32 %v10405, %v10464
        %v10466 = vpop.f32.mrf.mxu0
        %v10467 = vadd.f32 %v10405, %v10466
        %10468 = vmatmul.bf16.gmra.mxu0 %v10380
        %v10469 = vpop.f32.mrf.mxu0
        %v10470 = vadd.f32 %v10405, %v10469
        %v10471 = vpop.f32.mrf.mxu0
        %v10472 = vadd.f32 %v10405, %v10471
        %10473 = vmatmul.bf16.gmra.mxu0 %v10381
        %v10474 = vpop.f32.mrf.mxu0
        %v10475 = vadd.f32 %v10405, %v10474
        %v10476 = vpop.f32.mrf.mxu0
        %v10477 = vadd.f32 %v10405, %v10476
        %10478 = vmatmul.bf16.gmra.mxu0 %v10382
        %v10479 = vpop.f32.mrf.mxu0
        %v10480 = vadd.f32 %v10405, %v10479
        %v10481 = vpop.f32.mrf.mxu0
        %v10482 = vadd.f32 %v10405, %v10481
        %10483 = vmatmul.bf16.gmra.mxu0 %v10383
        %v10484 = vpop.f32.mrf.mxu0
        %v10485 = vadd.f32 %v10405, %v10484
        %v10486 = vpop.f32.mrf.mxu0
        %v10487 = vadd.f32 %v10405, %v10486
        %10488 = vmatmul.bf16.gmra.mxu0 %v10384
        %v10489 = vpop.f32.mrf.mxu0
        %v10490 = vadd.f32 %v10405, %v10489
        %v10491 = vpop.f32.mrf.mxu0
        %v10492 = vadd.f32 %v10405, %v10491
        %10493 = vmatmul.bf16.gmra.mxu0 %v10385
        %v10494 = vpop.f32.mrf.mxu0
        %v10495 = vadd.f32 %v10405, %v10494
        %v10496 = vpop.f32.mrf.mxu0
        %v10497 = vadd.f32 %v10405, %v10496
        %10498 = vmatmul.bf16.gmra.mxu0 %v10386
        %v10499 = vpop.f32.mrf.mxu0
        %v10500 = vadd.f32 %v10405, %v10499
        %v10501 = vpop.f32.mrf.mxu0
        %v10502 = vadd.f32 %v10405, %v10501
        %10503 = vdwg.mxu0
        %v10504 = vxor.u32 %v10465, 2147483648
        %v10505 = vxor.u32 %v10467, 2147483648
        %v10506 = vxor.u32 %v10470, 2147483648
        %v10507 = vxor.u32 %v10472, 2147483648
        %v10508 = vxor.u32 %v10475, 2147483648
        %v10509 = vxor.u32 %v10477, 2147483648
        %v10510 = vxor.u32 %v10480, 2147483648
        %v10511 = vxor.u32 %v10482, 2147483648
        %v10512 = vxor.u32 %v10485, 2147483648
        %v10513 = vxor.u32 %v10487, 2147483648
        %v10514 = vxor.u32 %v10490, 2147483648
        %v10515 = vxor.u32 %v10492, 2147483648
        %v10516 = vxor.u32 %v10495, 2147483648
        %v10517 = vxor.u32 %v10497, 2147483648
        %v10518 = vxor.u32 %v10500, 2147483648
        %v10519 = vxor.u32 %v10502, 2147483648
        %v10520 = vmul.f32 %v10504, 1.442695
        %v10521 = vpow.pop %v10520
        %v10522 = vmul.f32 %v10505, 1.442695
        %v10523 = vpow.pop %v10522
        %v10524 = vmul.f32 %v10506, 1.442695
        %v10525 = vpow.pop %v10524
        %v10526 = vmul.f32 %v10507, 1.442695
        %v10527 = vpow.pop %v10526
        %v10528 = vmul.f32 %v10508, 1.442695
        %v10529 = vpow.pop %v10528
        %v10530 = vmul.f32 %v10509, 1.442695
        %v10531 = vpow.pop %v10530
        %v10532 = vmul.f32 %v10510, 1.442695
        %v10533 = vpow.pop %v10532
        %v10534 = vmul.f32 %v10511, 1.442695
        %v10535 = vpow.pop %v10534
        %v10536 = vmul.f32 %v10512, 1.442695
        %v10537 = vpow.pop %v10536
        %v10538 = vmul.f32 %v10513, 1.442695
        %v10539 = vpow.pop %v10538
        %v10540 = vmul.f32 %v10514, 1.442695
        %v10541 = vpow.pop %v10540
        %v10542 = vmul.f32 %v10515, 1.442695
        %v10543 = vpow.pop %v10542
        %v10544 = vmul.f32 %v10516, 1.442695
        %v10545 = vpow.pop %v10544
        %v10546 = vmul.f32 %v10517, 1.442695
        %v10547 = vpow.pop %v10546
        %v10548 = vmul.f32 %v10518, 1.442695
        %v10549 = vpow.pop %v10548
        %v10550 = vmul.f32 %v10519, 1.442695
        %v10551 = vpow.pop %v10550
        %v10552 = vadd.f32 %v10521, 1.0
        %v10553 = vadd.f32 %v10523, 1.0
        %v10554 = vadd.f32 %v10525, 1.0
        %v10555 = vadd.f32 %v10527, 1.0
        %v10556 = vadd.f32 %v10529, 1.0
        %v10557 = vadd.f32 %v10531, 1.0
        %v10558 = vadd.f32 %v10533, 1.0
        %v10559 = vadd.f32 %v10535, 1.0
        %v10560 = vadd.f32 %v10537, 1.0
        %v10561 = vadd.f32 %v10539, 1.0
        %v10562 = vadd.f32 %v10541, 1.0
        %v10563 = vadd.f32 %v10543, 1.0
        %v10564 = vadd.f32 %v10545, 1.0
        %v10565 = vadd.f32 %v10547, 1.0
        %v10566 = vadd.f32 %v10549, 1.0
        %v10567 = vadd.f32 %v10551, 1.0
        %v10568 = vrcp.pop %v10552
        %v10569 = vmul.f32 %v10552, %v10568
        %v10570 = vsub.f32 1.0, %v10569
        %v10571 = vmul.f32 %v10568, %v10570
        %v10572 = vadd.f32 %v10568, %v10571
        %vm10573 = vweird.f32 %v10552
        %vm10574 = vweird.f32 %v10568
        %vm10575 = vmor %vm10573, %vm10574
        %v10576 = vsel %vm10575, %v10568, %v10572
        %v10577 = vand.u32 2147483647, %v10552
        %vm10578 = vcmp.eq.f32.partialorder %v10577, 8.507059e+37
        %v10579 = vand.u32 %v10552, 2147483648
        %v10580 = vor.u32 1.1754944e-38, %v10579
        %v10581 = vsel %vm10578, %v10580, %v10576
        %v10582 = vmul.f32 1.0, %v10581
        %v10583 = vrcp.pop %v10553
        %v10584 = vmul.f32 %v10553, %v10583
        %v10585 = vsub.f32 1.0, %v10584
        %v10586 = vmul.f32 %v10583, %v10585
        %v10587 = vadd.f32 %v10583, %v10586
        %vm10588 = vweird.f32 %v10553
        %vm10589 = vweird.f32 %v10583
        %vm10590 = vmor %vm10588, %vm10589
        %v10591 = vsel %vm10590, %v10583, %v10587
        %v10592 = vand.u32 2147483647, %v10553
        %vm10593 = vcmp.eq.f32.partialorder %v10592, 8.507059e+37
        %v10594 = vand.u32 %v10553, 2147483648
        %v10595 = vor.u32 1.1754944e-38, %v10594
        %v10596 = vsel %vm10593, %v10595, %v10591
        %v10597 = vmul.f32 1.0, %v10596
        %v10598 = vrcp.pop %v10554
        %v10599 = vmul.f32 %v10554, %v10598
        %v10600 = vsub.f32 1.0, %v10599
        %v10601 = vmul.f32 %v10598, %v10600
        %v10602 = vadd.f32 %v10598, %v10601
        %vm10603 = vweird.f32 %v10554
        %vm10604 = vweird.f32 %v10598
        %vm10605 = vmor %vm10603, %vm10604
        %v10606 = vsel %vm10605, %v10598, %v10602
        %v10607 = vand.u32 2147483647, %v10554
        %vm10608 = vcmp.eq.f32.partialorder %v10607, 8.507059e+37
        %v10609 = vand.u32 %v10554, 2147483648
        %v10610 = vor.u32 1.1754944e-38, %v10609
        %v10611 = vsel %vm10608, %v10610, %v10606
        %v10612 = vmul.f32 1.0, %v10611
        %v10613 = vrcp.pop %v10555
        %v10614 = vmul.f32 %v10555, %v10613
        %v10615 = vsub.f32 1.0, %v10614
        %v10616 = vmul.f32 %v10613, %v10615
        %v10617 = vadd.f32 %v10613, %v10616
        %vm10618 = vweird.f32 %v10555
        %vm10619 = vweird.f32 %v10613
        %vm10620 = vmor %vm10618, %vm10619
        %v10621 = vsel %vm10620, %v10613, %v10617
        %v10622 = vand.u32 2147483647, %v10555
        %vm10623 = vcmp.eq.f32.partialorder %v10622, 8.507059e+37
        %v10624 = vand.u32 %v10555, 2147483648
        %v10625 = vor.u32 1.1754944e-38, %v10624
        %v10626 = vsel %vm10623, %v10625, %v10621
        %v10627 = vmul.f32 1.0, %v10626
        %v10628 = vrcp.pop %v10556
        %v10629 = vmul.f32 %v10556, %v10628
        %v10630 = vsub.f32 1.0, %v10629
        %v10631 = vmul.f32 %v10628, %v10630
        %v10632 = vadd.f32 %v10628, %v10631
        %vm10633 = vweird.f32 %v10556
        %vm10634 = vweird.f32 %v10628
        %vm10635 = vmor %vm10633, %vm10634
        %v10636 = vsel %vm10635, %v10628, %v10632
        %v10637 = vand.u32 2147483647, %v10556
        %vm10638 = vcmp.eq.f32.partialorder %v10637, 8.507059e+37
        %v10639 = vand.u32 %v10556, 2147483648
        %v10640 = vor.u32 1.1754944e-38, %v10639
        %v10641 = vsel %vm10638, %v10640, %v10636
        %v10642 = vmul.f32 1.0, %v10641
        %v10643 = vrcp.pop %v10557
        %v10644 = vmul.f32 %v10557, %v10643
        %v10645 = vsub.f32 1.0, %v10644
        %v10646 = vmul.f32 %v10643, %v10645
        %v10647 = vadd.f32 %v10643, %v10646
        %vm10648 = vweird.f32 %v10557
        %vm10649 = vweird.f32 %v10643
        %vm10650 = vmor %vm10648, %vm10649
        %v10651 = vsel %vm10650, %v10643, %v10647
        %v10652 = vand.u32 2147483647, %v10557
        %vm10653 = vcmp.eq.f32.partialorder %v10652, 8.507059e+37
        %v10654 = vand.u32 %v10557, 2147483648
        %v10655 = vor.u32 1.1754944e-38, %v10654
        %v10656 = vsel %vm10653, %v10655, %v10651
        %v10657 = vmul.f32 1.0, %v10656
        %v10658 = vrcp.pop %v10558
        %v10659 = vmul.f32 %v10558, %v10658
        %v10660 = vsub.f32 1.0, %v10659
        %v10661 = vmul.f32 %v10658, %v10660
        %v10662 = vadd.f32 %v10658, %v10661
        %vm10663 = vweird.f32 %v10558
        %vm10664 = vweird.f32 %v10658
        %vm10665 = vmor %vm10663, %vm10664
        %v10666 = vsel %vm10665, %v10658, %v10662
        %v10667 = vand.u32 2147483647, %v10558
        %vm10668 = vcmp.eq.f32.partialorder %v10667, 8.507059e+37
        %v10669 = vand.u32 %v10558, 2147483648
        %v10670 = vor.u32 1.1754944e-38, %v10669
        %v10671 = vsel %vm10668, %v10670, %v10666
        %v10672 = vmul.f32 1.0, %v10671
        %v10673 = vrcp.pop %v10559
        %v10674 = vmul.f32 %v10559, %v10673
        %v10675 = vsub.f32 1.0, %v10674
        %v10676 = vmul.f32 %v10673, %v10675
        %v10677 = vadd.f32 %v10673, %v10676
        %vm10678 = vweird.f32 %v10559
        %vm10679 = vweird.f32 %v10673
        %vm10680 = vmor %vm10678, %vm10679
        %v10681 = vsel %vm10680, %v10673, %v10677
        %v10682 = vand.u32 2147483647, %v10559
        %vm10683 = vcmp.eq.f32.partialorder %v10682, 8.507059e+37
        %v10684 = vand.u32 %v10559, 2147483648
        %v10685 = vor.u32 1.1754944e-38, %v10684
        %v10686 = vsel %vm10683, %v10685, %v10681
        %v10687 = vmul.f32 1.0, %v10686
        %v10688 = vrcp.pop %v10560
        %v10689 = vmul.f32 %v10560, %v10688
        %v10690 = vsub.f32 1.0, %v10689
        %v10691 = vmul.f32 %v10688, %v10690
        %v10692 = vadd.f32 %v10688, %v10691
        %vm10693 = vweird.f32 %v10560
        %vm10694 = vweird.f32 %v10688
        %vm10695 = vmor %vm10693, %vm10694
        %v10696 = vsel %vm10695, %v10688, %v10692
        %v10697 = vand.u32 2147483647, %v10560
        %vm10698 = vcmp.eq.f32.partialorder %v10697, 8.507059e+37
        %v10699 = vand.u32 %v10560, 2147483648
        %v10700 = vor.u32 1.1754944e-38, %v10699
        %v10701 = vsel %vm10698, %v10700, %v10696
        %v10702 = vmul.f32 1.0, %v10701
        %v10703 = vrcp.pop %v10561
        %v10704 = vmul.f32 %v10561, %v10703
        %v10705 = vsub.f32 1.0, %v10704
        %v10706 = vmul.f32 %v10703, %v10705
        %v10707 = vadd.f32 %v10703, %v10706
        %vm10708 = vweird.f32 %v10561
        %vm10709 = vweird.f32 %v10703
        %vm10710 = vmor %vm10708, %vm10709
        %v10711 = vsel %vm10710, %v10703, %v10707
        %v10712 = vand.u32 2147483647, %v10561
        %vm10713 = vcmp.eq.f32.partialorder %v10712, 8.507059e+37
        %v10714 = vand.u32 %v10561, 2147483648
        %v10715 = vor.u32 1.1754944e-38, %v10714
        %v10716 = vsel %vm10713, %v10715, %v10711
        %v10717 = vmul.f32 1.0, %v10716
        %v10718 = vrcp.pop %v10562
        %v10719 = vmul.f32 %v10562, %v10718
        %v10720 = vsub.f32 1.0, %v10719
        %v10721 = vmul.f32 %v10718, %v10720
        %v10722 = vadd.f32 %v10718, %v10721
        %vm10723 = vweird.f32 %v10562
        %vm10724 = vweird.f32 %v10718
        %vm10725 = vmor %vm10723, %vm10724
        %v10726 = vsel %vm10725, %v10718, %v10722
        %v10727 = vand.u32 2147483647, %v10562
        %vm10728 = vcmp.eq.f32.partialorder %v10727, 8.507059e+37
        %v10729 = vand.u32 %v10562, 2147483648
        %v10730 = vor.u32 1.1754944e-38, %v10729
        %v10731 = vsel %vm10728, %v10730, %v10726
        %v10732 = vmul.f32 1.0, %v10731
        %v10733 = vrcp.pop %v10563
        %v10734 = vmul.f32 %v10563, %v10733
        %v10735 = vsub.f32 1.0, %v10734
        %v10736 = vmul.f32 %v10733, %v10735
        %v10737 = vadd.f32 %v10733, %v10736
        %vm10738 = vweird.f32 %v10563
        %vm10739 = vweird.f32 %v10733
        %vm10740 = vmor %vm10738, %vm10739
        %v10741 = vsel %vm10740, %v10733, %v10737
        %v10742 = vand.u32 2147483647, %v10563
        %vm10743 = vcmp.eq.f32.partialorder %v10742, 8.507059e+37
        %v10744 = vand.u32 %v10563, 2147483648
        %v10745 = vor.u32 1.1754944e-38, %v10744
        %v10746 = vsel %vm10743, %v10745, %v10741
        %v10747 = vmul.f32 1.0, %v10746
        %v10748 = vrcp.pop %v10564
        %v10749 = vmul.f32 %v10564, %v10748
        %v10750 = vsub.f32 1.0, %v10749
        %v10751 = vmul.f32 %v10748, %v10750
        %v10752 = vadd.f32 %v10748, %v10751
        %vm10753 = vweird.f32 %v10564
        %vm10754 = vweird.f32 %v10748
        %vm10755 = vmor %vm10753, %vm10754
        %v10756 = vsel %vm10755, %v10748, %v10752
        %v10757 = vand.u32 2147483647, %v10564
        %vm10758 = vcmp.eq.f32.partialorder %v10757, 8.507059e+37
        %v10759 = vand.u32 %v10564, 2147483648
        %v10760 = vor.u32 1.1754944e-38, %v10759
        %v10761 = vsel %vm10758, %v10760, %v10756
        %v10762 = vmul.f32 1.0, %v10761
        %v10763 = vrcp.pop %v10565
        %v10764 = vmul.f32 %v10565, %v10763
        %v10765 = vsub.f32 1.0, %v10764
        %v10766 = vmul.f32 %v10763, %v10765
        %v10767 = vadd.f32 %v10763, %v10766
        %vm10768 = vweird.f32 %v10565
        %vm10769 = vweird.f32 %v10763
        %vm10770 = vmor %vm10768, %vm10769
        %v10771 = vsel %vm10770, %v10763, %v10767
        %v10772 = vand.u32 2147483647, %v10565
        %vm10773 = vcmp.eq.f32.partialorder %v10772, 8.507059e+37
        %v10774 = vand.u32 %v10565, 2147483648
        %v10775 = vor.u32 1.1754944e-38, %v10774
        %v10776 = vsel %vm10773, %v10775, %v10771
        %v10777 = vmul.f32 1.0, %v10776
        %v10778 = vrcp.pop %v10566
        %v10779 = vmul.f32 %v10566, %v10778
        %v10780 = vsub.f32 1.0, %v10779
        %v10781 = vmul.f32 %v10778, %v10780
        %v10782 = vadd.f32 %v10778, %v10781
        %vm10783 = vweird.f32 %v10566
        %vm10784 = vweird.f32 %v10778
        %vm10785 = vmor %vm10783, %vm10784
        %v10786 = vsel %vm10785, %v10778, %v10782
        %v10787 = vand.u32 2147483647, %v10566
        %vm10788 = vcmp.eq.f32.partialorder %v10787, 8.507059e+37
        %v10789 = vand.u32 %v10566, 2147483648
        %v10790 = vor.u32 1.1754944e-38, %v10789
        %v10791 = vsel %vm10788, %v10790, %v10786
        %v10792 = vmul.f32 1.0, %v10791
        %v10793 = vrcp.pop %v10567
        %v10794 = vmul.f32 %v10567, %v10793
        %v10795 = vsub.f32 1.0, %v10794
        %v10796 = vmul.f32 %v10793, %v10795
        %v10797 = vadd.f32 %v10793, %v10796
        %vm10798 = vweird.f32 %v10567
        %vm10799 = vweird.f32 %v10793
        %vm10800 = vmor %vm10798, %vm10799
        %v10801 = vsel %vm10800, %v10793, %v10797
        %v10802 = vand.u32 2147483647, %v10567
        %vm10803 = vcmp.eq.f32.partialorder %v10802, 8.507059e+37
        %v10804 = vand.u32 %v10567, 2147483648
        %v10805 = vor.u32 1.1754944e-38, %v10804
        %v10806 = vsel %vm10803, %v10805, %v10801
        %v10807 = vmul.f32 1.0, %v10806
        %v10808 = vmul.f32 %v10465, %v10582
        %v10809 = vmul.f32 %v10467, %v10597
        %v10810 = vmul.f32 %v10470, %v10612
        %v10811 = vmul.f32 %v10472, %v10627
        %v10812 = vmul.f32 %v10475, %v10642
        %v10813 = vmul.f32 %v10477, %v10657
        %v10814 = vmul.f32 %v10480, %v10672
        %v10815 = vmul.f32 %v10482, %v10687
        %v10816 = vmul.f32 %v10485, %v10702
        %v10817 = vmul.f32 %v10487, %v10717
        %v10818 = vmul.f32 %v10490, %v10732
        %v10819 = vmul.f32 %v10492, %v10747
        %v10820 = vmul.f32 %v10495, %v10762
        %v10821 = vmul.f32 %v10497, %v10777
        %v10822 = vmul.f32 %v10500, %v10792
        %v10823 = vmul.f32 %v10502, %v10807
        %v10824 = vld [vmem:[%s9] sm:$0x1]
        %v10825 = vpack.c.bf16 %v10809, %v10808
        %v10826 = vpack.c.bf16 %v10811, %v10810
        %v10827 = vpack.c.bf16 %v10813, %v10812
        %v10828 = vpack.c.bf16 %v10815, %v10814
        %v10829 = vpack.c.bf16 %v10817, %v10816
        %v10830 = vpack.c.bf16 %v10819, %v10818
        %v10831 = vpack.c.bf16 %v10821, %v10820
        %v10832 = vpack.c.bf16 %v10823, %v10822
        %10833 = vmatpush.bf16.msra.mxu0 %v10832
        %10834 = vmatpush.bf16.msra.mxu0 %v10831
        %10835 = vmatpush.bf16.msra.mxu0 %v10830
        %10836 = vmatpush.bf16.msra.mxu0 %v10829
        %10837 = vmatpush.bf16.msra.mxu0 %v10828
        %10838 = vmatpush.bf16.msra.mxu0 %v10827
        %10839 = vmatpush.bf16.msra.mxu0 %v10826
        %10840 = vmatpush.bf16.msra.mxu0 %v10825
        %10841 = vmatmul.bf16.gmra.mxu0 %v10824
        %v10842 = vpop.f32.mrf.mxu0
        %v10843 = vadd.f32 0.0, %v10842
        %v10844 = vpop.f32.mrf.mxu0
        %10845 = vdwg.mxu0
        %v10846 = vld [vmem:[%s17] sm:$0x1]
        %v10848 = vperm.slane %v10846, 0
        %v10850 = vmul.f32 %v10843, %v10848
        %vm10851 = vcmask 1041408
        %v10852 = vsel %vm10851, %v10850, 0.0
        %10853 = vadd.xlane.f32.xlu0 %v10852
        %v10854 = vpop.xlane.xlu0 %10853
        %vm10855 = vcmask 1024
        %10856 = vst.msk [vmem:[%s18] sm:$0x3] %vm10855, %v10854
      $region108: #{tpu_custom_call.1} parent=91 // pred_fallthru
        _
      // Predicated region
      $region109: #{tpu_custom_call.1} parent=91 // pred_check
        %p10857 = pneg %p472
      $region110: #{tpu_custom_call.1} parent=91 // pred_check_branch
        %10859 = sbr.rel (%p10857) target = $region112
      $region111: #{tpu_custom_call.1} parent=91 // pred_region
        _
      $region112: #{tpu_custom_call.1} parent=91 // pred_fallthru
        _
      // Predicated region
      $region113: #{tpu_custom_call.1} parent=91 // pred_check
        %p10860 = pneg %p472
      $region114: #{tpu_custom_call.1} parent=91 // pred_check_branch
        %10862 = sbr.rel (%p10860) target = $region116
      $region115: #{tpu_custom_call.1} parent=91 // pred_region
        _
      $region116: #{tpu_custom_call.1} parent=91 // pred_fallthru
        _
    $region92: #{tpu_custom_call.1} parent=5 // pred_fallthru
      _
    %p10863 = scmp.le.s32.totalorder 2, %s24
    // Predicated region
    $region117: #{tpu_custom_call.1} parent=5 // pred_check
      %p10864 = pneg %p10863
    $region118: #{tpu_custom_call.1} parent=5 // pred_check_branch
      %10866 = sbr.rel (%p10864) target = $region120
    $region119: #{tpu_custom_call.1} parent=5 // pred_region
      %s10867 = ssub.s32 %s24, 2
    $region120: #{tpu_custom_call.1} parent=5 // pred_fallthru
      _
  $region6: #{tpu_custom_call.1} parent=0 // loop_footer
    %s28 = sadd.s32 1, %s24
  $region7: #{tpu_custom_call.1} parent=0 // loop_footer_branch
    %23 = sbr.rel target = $region3
  $region8: #{tpu_custom_call.1} parent=0 // loop_exit
    _

</llo_original>
